<compile_context>
chip_gen: v7x
topology: tpu7x:2x2x1
jax: 0.10.0
libtpu: 0.0.40
codegen_flags: <defaults>
</compile_context>

<pallas_src>
import functools

import numpy as np

import jax
import jax.numpy as jnp
from jax.experimental import pallas as pl
from jax.experimental.pallas import tpu as pltpu


# ----------------------------------------------------------------------------
# In-kernel helpers.
# ----------------------------------------------------------------------------
def _reflect_pad_into(dst_ref, src):
    """Write ReflectionPad2d(1) of src (H, W, C) into VMEM scratch dst_ref (H+2, W+2, C)."""
    H, W, _ = src.shape
    src = src.astype(dst_ref.dtype)
    dst_ref[1:H + 1, 1:W + 1, :] = src
    dst_ref[0:1, 1:W + 1, :] = src[1:2, :, :]                   # top row    <- row 1
    dst_ref[H + 1:H + 2, 1:W + 1, :] = src[H - 2:H - 1, :, :]   # bottom row <- row H-2
    dst_ref[:, 0:1, :] = dst_ref[:, 2:3, :]                     # left col   <- col 1
    dst_ref[:, W + 1:W + 2, :] = dst_ref[:, W - 1:W, :]         # right col  <- col W-2


def _conv3x3(pad_ref, w_ref, b_ref, H, W, relu):
    """3x3 conv over an already reflection-padded VMEM buffer, taps accumulated on the MXU.

    pad_ref: (H+2, W+2, Cin) f32 scratch, w_ref: (9, Cin, Cout) bf16,
    b_ref: (1, Cout) f32.  Returns (H, W, Cout) f32.
    """
    Cin = w_ref.shape[1]
    Cout = w_ref.shape[2]
    acc = jnp.zeros((H * W, Cout), jnp.float32)
    for kh in range(3):
        for kw in range(3):
            slab = pad_ref[kh:kh + H, kw:kw + W, :]             # shifted tap window
            slab = slab.reshape(H * W, Cin).astype(jnp.bfloat16)
            acc = acc + jnp.dot(slab, w_ref[kh * 3 + kw],
                                preferred_element_type=jnp.float32)
    acc = acc + b_ref[...]
    if relu:
        acc = jnp.maximum(acc, 0.0)
    return acc.reshape(H, W, Cout)


def _resblock_kernel(x1_ref, x2_ref, w1_ref, b1_ref, w2_ref, b2_ref,
                     w3_ref, b3_ref, y_ref, pad_in_ref, pad_mid_ref):
    """Fused residual_block forward (stride=1): y1 = conv3(relu(conv2(relu(conv1(x2))))) + x1."""
    H, W = x2_ref.shape[1], x2_ref.shape[2]

    _reflect_pad_into(pad_in_ref, x2_ref[0])
    h = _conv3x3(pad_in_ref, w1_ref, b1_ref, H, W, relu=True)

    _reflect_pad_into(pad_mid_ref, h)
    h = _conv3x3(pad_mid_ref, w2_ref, b2_ref, H, W, relu=True)

    _reflect_pad_into(pad_mid_ref, h)
    h = _conv3x3(pad_mid_ref, w3_ref, b3_ref, H, W, relu=False)

    y_ref[0] = (h + x1_ref[0]).astype(y_ref.dtype)


# ----------------------------------------------------------------------------
# One fused residual block = one pallas_call.
# ----------------------------------------------------------------------------
def residual_block_apply(x1, x2, bp):
    """x1, x2: (B, H, W, C) f32 NHWC.  Returns y1 = F(x2) + x1 (f32)."""
    B, H, W, C = x2.shape
    KK, _, mid = bp["w1"].shape
    assert KK == 9, "only kernel=3 (reflection pad 1) is implemented"

    flops = int(2 * B * H * W * KK * (C * mid + mid * mid + mid * C))
    bytes_accessed = int(
        3 * B * H * W * C * 4                                            # x1, x2, y (f32)
        + (bp["w1"].size + bp["w2"].size + bp["w3"].size) * 2            # bf16 weights
        + (bp["b1"].size + bp["b2"].size + bp["b3"].size) * 4)           # f32 biases

    return pl.pallas_call(
        _resblock_kernel,
        out_shape=jax.ShapeDtypeStruct((B, H, W, C), jnp.float32),
        grid=(B,),
        in_specs=[
            pl.BlockSpec((1, H, W, C), lambda b: (b, 0, 0, 0)),      # x1 (residual)
            pl.BlockSpec((1, H, W, C), lambda b: (b, 0, 0, 0)),      # x2 (conv input)
            pl.BlockSpec((KK, C, mid), lambda b: (0, 0, 0)),         # w1 (bf16)
            pl.BlockSpec((1, mid), lambda b: (0, 0)),                # b1
            pl.BlockSpec((KK, mid, mid), lambda b: (0, 0, 0)),       # w2 (bf16)
            pl.BlockSpec((1, mid), lambda b: (0, 0)),                # b2
            pl.BlockSpec((KK, mid, C), lambda b: (0, 0, 0)),         # w3 (bf16)
            pl.BlockSpec((1, C), lambda b: (0, 0)),                  # b3
        ],
        out_specs=pl.BlockSpec((1, H, W, C), lambda b: (b, 0, 0, 0)),
        scratch_shapes=[
            pltpu.VMEM((H + 2, W + 2, C), jnp.float32),     # padded conv1 input
            pltpu.VMEM((H + 2, W + 2, mid), jnp.float32),   # padded mid activations (reused)
        ],
        compiler_params=pltpu.CompilerParams(
            dimension_semantics=("parallel",)),
        cost_estimate=pl.CostEstimate(flops=flops, transcendentals=0,
                                      bytes_accessed=bytes_accessed),
    )(x1, x2, bp["w1"], bp["b1"], bp["w2"], bp["b2"], bp["w3"], bp["b3"])


# ----------------------------------------------------------------------------
# NHWC equivalent of the spatial up-shuffle used in channel_reduction.forward.
# ----------------------------------------------------------------------------
def unsqueeze_nhwc(x, size=2):
    B, H, W, C = x.shape
    nc = C // (size * size)
    x = x.reshape(B, H, W, size, size, nc)          # channel c = s1*size*nc + s2*nc + d
    x = jnp.transpose(x, (0, 1, 3, 2, 4, 5))        # (B, H, s1, W, s2, nc)
    return x.reshape(B, H * size, W * size, nc)


# ----------------------------------------------------------------------------
# Parameters (deterministic synthetic weights; biases zeroed like init_layers).
# ----------------------------------------------------------------------------
def init_channel_reduction(key, in_ch, out_ch, sp_steps=2, n_blocks=2,
                           kernel=3, mult=4):
    assert kernel == 3, "only kernel=3 implemented"
    channel = out_ch * 4 ** sp_steps
    pad = channel - in_ch
    assert pad >= 0, "out_ch * 4**sp_steps must be >= in_ch"
    KK = kernel * kernel
    mid = channel // mult

    def winit(k, cin, cout):
        fan_in = cin * KK
        w = jax.random.normal(k, (KK, cin, cout), jnp.float32) / np.sqrt(fan_in)
        return w.astype(jnp.bfloat16)                # weights stored bf16 for the MXU

    blocks = []
    for _ in range(n_blocks):
        key, k1, k2, k3 = jax.random.split(key, 4)
        blocks.append({
            "w1": winit(k1, channel, mid), "b1": jnp.zeros((1, mid), jnp.float32),
            "w2": winit(k2, mid, mid),     "b2": jnp.zeros((1, mid), jnp.float32),
            "w3": winit(k3, mid, channel), "b3": jnp.zeros((1, channel), jnp.float32),
        })
    cfg = {"pad": pad, "sp_steps": sp_steps, "channel": channel}
    return {"blocks": blocks}, cfg


# ----------------------------------------------------------------------------
# channel_reduction forward (inputs/outputs NCHW, compute NHWC).
# ----------------------------------------------------------------------------
def channel_reduction_forward(x_nchw, params, cfg):
    x = jnp.transpose(x_nchw, (0, 2, 3, 1)).astype(jnp.float32)   # NCHW -> NHWC

    # split + injective_pad (append zero channels to each half)
    n = x.shape[-1] // 2
    pad = cfg["pad"]
    x1 = jnp.pad(x[..., :n], ((0, 0), (0, 0), (0, 0), (0, pad)))
    x2 = jnp.pad(x[..., n:], ((0, 0), (0, 0), (0, 0), (0, pad)))

    # reversible residual blocks: (x1, x2) -> (x2, F(x2) + x1)
    for bp in params["blocks"]:
        y1 = residual_block_apply(x1, x2, bp)
        x1, x2 = x2, y1

    x = jnp.concatenate((x1, x2), axis=-1)                        # merge

    for _ in range(cfg["sp_steps"]):                              # spatial up-shuffle
        x = unsqueeze_nhwc(x)

    return jnp.transpose(x, (0, 3, 1, 2))                         # NHWC -> NCHW


# ----------------------------------------------------------------------------
if __name__ == "__main__":
    B, H, W = 2, 16, 16
    out_ch = 8          # "hidden_dim"
    sp_steps = 2
    n_blocks = 2
    kernel = 3
    in_ch = 96          # per-half input channels -> inj pad = 8*16 - 96 = 32

    # input has 2*in_ch channels (each half carries in_ch channels)
    x = jax.random.normal(jax.random.PRNGKey(0), (B, 2 * in_ch, H, W), jnp.float32)

    params, cfg = init_channel_reduction(jax.random.PRNGKey(1), in_ch, out_ch,
                                         sp_steps=sp_steps, n_blocks=n_blocks,
                                         kernel=kernel)

    fwd = jax.jit(functools.partial(channel_reduction_forward, params=params, cfg=cfg))
    out = fwd(x)
    jax.block_until_ready(out)

    assert out.shape == (B, 2 * out_ch, H * 2 ** sp_steps, W * 2 ** sp_steps), out.shape
    assert bool(jnp.all(jnp.isfinite(out)))
    print("KERNEL_OK")
</pallas_src>

<mosaic_0001>
module attributes {stable_mosaic.version = 11 : i64} {
  func.func @_resblock_kernel(%arg0: i32, %arg1: memref<1x16x16x128xf32, #tpu.memory_space<vmem>>, %arg2: memref<1x16x16x128xf32, #tpu.memory_space<vmem>>, %arg3: memref<9x128x32xbf16, #tpu.memory_space<vmem>>, %arg4: memref<1x32xf32, #tpu.memory_space<vmem>>, %arg5: memref<9x32x32xbf16, #tpu.memory_space<vmem>>, %arg6: memref<1x32xf32, #tpu.memory_space<vmem>>, %arg7: memref<9x32x128xbf16, #tpu.memory_space<vmem>>, %arg8: memref<1x128xf32, #tpu.memory_space<vmem>>, %arg9: memref<1x16x16x128xf32, #tpu.memory_space<vmem>>, %arg10: memref<18x18x128xf32, #tpu.memory_space<vmem>>, %arg11: memref<18x18x32xf32, #tpu.memory_space<vmem>>) attributes {dimension_semantics = [#tpu.dimension_semantics<parallel>], iteration_bounds = array<i64: 2>, scalar_prefetch = 0 : i64, scratch_operands = 2 : i64, tpu.core_type = #tpu.core_type<tc>, window_params = [{transform_indices = @transform_0, window_bounds = array<i64: 1, 16, 16, 128>}, {transform_indices = @transform_1, window_bounds = array<i64: 1, 16, 16, 128>}, {pipeline_mode = #tpu.pipeline_mode<synchronous>, transform_indices = @transform_2, window_bounds = array<i64: 9, 128, 32>}, {pipeline_mode = #tpu.pipeline_mode<synchronous>, transform_indices = @transform_3, window_bounds = array<i64: 1, 32>}, {pipeline_mode = #tpu.pipeline_mode<synchronous>, transform_indices = @transform_4, window_bounds = array<i64: 9, 32, 32>}, {pipeline_mode = #tpu.pipeline_mode<synchronous>, transform_indices = @transform_5, window_bounds = array<i64: 1, 32>}, {pipeline_mode = #tpu.pipeline_mode<synchronous>, transform_indices = @transform_6, window_bounds = array<i64: 9, 32, 128>}, {pipeline_mode = #tpu.pipeline_mode<synchronous>, transform_indices = @transform_7, window_bounds = array<i64: 1, 128>}, {transform_indices = @transform_8, window_bounds = array<i64: 1, 16, 16, 128>}]} {
    %c0 = arith.constant 0 : index
    %c0_0 = arith.constant 0 : index
    %c0_1 = arith.constant 0 : index
    %c0_2 = arith.constant 0 : index
    %0 = vector.load %arg2[%c0, %c0_0, %c0_1, %c0_2] : memref<1x16x16x128xf32, #tpu.memory_space<vmem>>, vector<1x16x16x128xf32>
    %1 = vector.shape_cast %0 : vector<1x16x16x128xf32> to vector<16x16x128xf32>
    %c1 = arith.constant 1 : index
    %c1_3 = arith.constant 1 : index
    %c0_4 = arith.constant 0 : index
    %2 = vector.load %arg10[%c1, %c1_3, %c0_4] : memref<18x18x128xf32, #tpu.memory_space<vmem>>, vector<16x16x128xf32>
    tpu.vector_store %arg10[%c1, %c1_3, %c0_4], %1 {strides = array<i32>} : memref<18x18x128xf32, #tpu.memory_space<vmem>>, vector<16x16x128xf32>,
    %3 = vector.extract_strided_slice %1 {offsets = [1, 0, 0], sizes = [1, 16, 128], strides = [1, 1, 1]} : vector<16x16x128xf32> to vector<1x16x128xf32>
    %c0_5 = arith.constant 0 : index
    %c1_6 = arith.constant 1 : index
    %c0_7 = arith.constant 0 : index
    %4 = vector.load %arg10[%c0_5, %c1_6, %c0_7] : memref<18x18x128xf32, #tpu.memory_space<vmem>>, vector<1x16x128xf32>
    tpu.vector_store %arg10[%c0_5, %c1_6, %c0_7], %3 {strides = array<i32>} : memref<18x18x128xf32, #tpu.memory_space<vmem>>, vector<1x16x128xf32>,
    %5 = vector.extract_strided_slice %1 {offsets = [14, 0, 0], sizes = [1, 16, 128], strides = [1, 1, 1]} : vector<16x16x128xf32> to vector<1x16x128xf32>
    %c17 = arith.constant 17 : index
    %c1_8 = arith.constant 1 : index
    %c0_9 = arith.constant 0 : index
    %6 = vector.load %arg10[%c17, %c1_8, %c0_9] : memref<18x18x128xf32, #tpu.memory_space<vmem>>, vector<1x16x128xf32>
    tpu.vector_store %arg10[%c17, %c1_8, %c0_9], %5 {strides = array<i32>} : memref<18x18x128xf32, #tpu.memory_space<vmem>>, vector<1x16x128xf32>,
    %c0_10 = arith.constant 0 : index
    %c2 = arith.constant 2 : index
    %c0_11 = arith.constant 0 : index
    %7 = vector.load %arg10[%c0_10, %c2, %c0_11] : memref<18x18x128xf32, #tpu.memory_space<vmem>>, vector<18x1x128xf32>
    %c0_12 = arith.constant 0 : index
    %c0_13 = arith.constant 0 : index
    %c0_14 = arith.constant 0 : index
    %8 = vector.load %arg10[%c0_12, %c0_13, %c0_14] : memref<18x18x128xf32, #tpu.memory_space<vmem>>, vector<18x1x128xf32>
    tpu.vector_store %arg10[%c0_12, %c0_13, %c0_14], %7 {strides = array<i32>} : memref<18x18x128xf32, #tpu.memory_space<vmem>>, vector<18x1x128xf32>,
    %c0_15 = arith.constant 0 : index
    %c15 = arith.constant 15 : index
    %c0_16 = arith.constant 0 : index
    %9 = vector.load %arg10[%c0_15, %c15, %c0_16] : memref<18x18x128xf32, #tpu.memory_space<vmem>>, vector<18x1x128xf32>
    %c0_17 = arith.constant 0 : index
    %c17_18 = arith.constant 17 : index
    %c0_19 = arith.constant 0 : index
    %10 = vector.load %arg10[%c0_17, %c17_18, %c0_19] : memref<18x18x128xf32, #tpu.memory_space<vmem>>, vector<18x1x128xf32>
    tpu.vector_store %arg10[%c0_17, %c17_18, %c0_19], %9 {strides = array<i32>} : memref<18x18x128xf32, #tpu.memory_space<vmem>>, vector<18x1x128xf32>,
    %cst = arith.constant 0.000000e+00 : f32
    %11 = vector.broadcast %cst : f32 to vector<256x32xf32>
    %c0_20 = arith.constant 0 : index
    %c0_21 = arith.constant 0 : index
    %c0_22 = arith.constant 0 : index
    %12 = vector.load %arg10[%c0_20, %c0_21, %c0_22] : memref<18x18x128xf32, #tpu.memory_space<vmem>>, vector<16x16x128xf32>
    %13 = vector.shape_cast %12 : vector<16x16x128xf32> to vector<256x128xf32>
    %14 = arith.truncf %13 : vector<256x128xf32> to vector<256x128xbf16>
    %c0_23 = arith.constant 0 : index
    %c0_24 = arith.constant 0 : index
    %c0_25 = arith.constant 0 : index
    %15 = vector.load %arg3[%c0_23, %c0_24, %c0_25] : memref<9x128x32xbf16, #tpu.memory_space<vmem>>, vector<1x128x32xbf16>
    %16 = vector.shape_cast %15 : vector<1x128x32xbf16> to vector<128x32xbf16>
    %cst_26 = arith.constant dense<0.000000e+00> : vector<256x32xf32>
    %17 = tpu.matmul %14, %16, %cst_26 {dimension_numbers = #tpu.dot_dimension_numbers<[1], [0], [0], [1], [0, 0, 1, 1], [], []>} : vector<256x128xbf16>, vector<128x32xbf16>, vector<256x32xf32> -> vector<256x32xf32>
    %18 = arith.addf %11, %17 : vector<256x32xf32>
    %c0_27 = arith.constant 0 : index
    %c1_28 = arith.constant 1 : index
    %c0_29 = arith.constant 0 : index
    %19 = vector.load %arg10[%c0_27, %c1_28, %c0_29] : memref<18x18x128xf32, #tpu.memory_space<vmem>>, vector<16x16x128xf32>
    %20 = vector.shape_cast %19 : vector<16x16x128xf32> to vector<256x128xf32>
    %21 = arith.truncf %20 : vector<256x128xf32> to vector<256x128xbf16>
    %c1_30 = arith.constant 1 : index
    %c0_31 = arith.constant 0 : index
    %c0_32 = arith.constant 0 : index
    %22 = vector.load %arg3[%c1_30, %c0_31, %c0_32] : memref<9x128x32xbf16, #tpu.memory_space<vmem>>, vector<1x128x32xbf16>
    %23 = vector.shape_cast %22 : vector<1x128x32xbf16> to vector<128x32xbf16>
    %cst_33 = arith.constant dense<0.000000e+00> : vector<256x32xf32>
    %24 = tpu.matmul %21, %23, %cst_33 {dimension_numbers = #tpu.dot_dimension_numbers<[1], [0], [0], [1], [0, 0, 1, 1], [], []>} : vector<256x128xbf16>, vector<128x32xbf16>, vector<256x32xf32> -> vector<256x32xf32>
    %25 = arith.addf %18, %24 : vector<256x32xf32>
    %c0_34 = arith.constant 0 : index
    %c2_35 = arith.constant 2 : index
    %c0_36 = arith.constant 0 : index
    %26 = vector.load %arg10[%c0_34, %c2_35, %c0_36] : memref<18x18x128xf32, #tpu.memory_space<vmem>>, vector<16x16x128xf32>
    %27 = vector.shape_cast %26 : vector<16x16x128xf32> to vector<256x128xf32>
    %28 = arith.truncf %27 : vector<256x128xf32> to vector<256x128xbf16>
    %c2_37 = arith.constant 2 : index
    %c0_38 = arith.constant 0 : index
    %c0_39 = arith.constant 0 : index
    %29 = vector.load %arg3[%c2_37, %c0_38, %c0_39] : memref<9x128x32xbf16, #tpu.memory_space<vmem>>, vector<1x128x32xbf16>
    %30 = vector.shape_cast %29 : vector<1x128x32xbf16> to vector<128x32xbf16>
    %cst_40 = arith.constant dense<0.000000e+00> : vector<256x32xf32>
    %31 = tpu.matmul %28, %30, %cst_40 {dimension_numbers = #tpu.dot_dimension_numbers<[1], [0], [0], [1], [0, 0, 1, 1], [], []>} : vector<256x128xbf16>, vector<128x32xbf16>, vector<256x32xf32> -> vector<256x32xf32>
    %32 = arith.addf %25, %31 : vector<256x32xf32>
    %c1_41 = arith.constant 1 : index
    %c0_42 = arith.constant 0 : index
    %c0_43 = arith.constant 0 : index
    %33 = vector.load %arg10[%c1_41, %c0_42, %c0_43] : memref<18x18x128xf32, #tpu.memory_space<vmem>>, vector<16x16x128xf32>
    %34 = vector.shape_cast %33 : vector<16x16x128xf32> to vector<256x128xf32>
    %35 = arith.truncf %34 : vector<256x128xf32> to vector<256x128xbf16>
    %c3 = arith.constant 3 : index
    %c0_44 = arith.constant 0 : index
    %c0_45 = arith.constant 0 : index
    %36 = vector.load %arg3[%c3, %c0_44, %c0_45] : memref<9x128x32xbf16, #tpu.memory_space<vmem>>, vector<1x128x32xbf16>
    %37 = vector.shape_cast %36 : vector<1x128x32xbf16> to vector<128x32xbf16>
    %cst_46 = arith.constant dense<0.000000e+00> : vector<256x32xf32>
    %38 = tpu.matmul %35, %37, %cst_46 {dimension_numbers = #tpu.dot_dimension_numbers<[1], [0], [0], [1], [0, 0, 1, 1], [], []>} : vector<256x128xbf16>, vector<128x32xbf16>, vector<256x32xf32> -> vector<256x32xf32>
    %39 = arith.addf %32, %38 : vector<256x32xf32>
    %c1_47 = arith.constant 1 : index
    %c1_48 = arith.constant 1 : index
    %c0_49 = arith.constant 0 : index
    %40 = vector.load %arg10[%c1_47, %c1_48, %c0_49] : memref<18x18x128xf32, #tpu.memory_space<vmem>>, vector<16x16x128xf32>
    %41 = vector.shape_cast %40 : vector<16x16x128xf32> to vector<256x128xf32>
    %42 = arith.truncf %41 : vector<256x128xf32> to vector<256x128xbf16>
    %c4 = arith.constant 4 : index
    %c0_50 = arith.constant 0 : index
    %c0_51 = arith.constant 0 : index
    %43 = vector.load %arg3[%c4, %c0_50, %c0_51] : memref<9x128x32xbf16, #tpu.memory_space<vmem>>, vector<1x128x32xbf16>
    %44 = vector.shape_cast %43 : vector<1x128x32xbf16> to vector<128x32xbf16>
    %cst_52 = arith.constant dense<0.000000e+00> : vector<256x32xf32>
    %45 = tpu.matmul %42, %44, %cst_52 {dimension_numbers = #tpu.dot_dimension_numbers<[1], [0], [0], [1], [0, 0, 1, 1], [], []>} : vector<256x128xbf16>, vector<128x32xbf16>, vector<256x32xf32> -> vector<256x32xf32>
    %46 = arith.addf %39, %45 : vector<256x32xf32>
    %c1_53 = arith.constant 1 : index
    %c2_54 = arith.constant 2 : index
    %c0_55 = arith.constant 0 : index
    %47 = vector.load %arg10[%c1_53, %c2_54, %c0_55] : memref<18x18x128xf32, #tpu.memory_space<vmem>>, vector<16x16x128xf32>
    %48 = vector.shape_cast %47 : vector<16x16x128xf32> to vector<256x128xf32>
    %49 = arith.truncf %48 : vector<256x128xf32> to vector<256x128xbf16>
    %c5 = arith.constant 5 : index
    %c0_56 = arith.constant 0 : index
    %c0_57 = arith.constant 0 : index
    %50 = vector.load %arg3[%c5, %c0_56, %c0_57] : memref<9x128x32xbf16, #tpu.memory_space<vmem>>, vector<1x128x32xbf16>
    %51 = vector.shape_cast %50 : vector<1x128x32xbf16> to vector<128x32xbf16>
    %cst_58 = arith.constant dense<0.000000e+00> : vector<256x32xf32>
    %52 = tpu.matmul %49, %51, %cst_58 {dimension_numbers = #tpu.dot_dimension_numbers<[1], [0], [0], [1], [0, 0, 1, 1], [], []>} : vector<256x128xbf16>, vector<128x32xbf16>, vector<256x32xf32> -> vector<256x32xf32>
    %53 = arith.addf %46, %52 : vector<256x32xf32>
    %c2_59 = arith.constant 2 : index
    %c0_60 = arith.constant 0 : index
    %c0_61 = arith.constant 0 : index
    %54 = vector.load %arg10[%c2_59, %c0_60, %c0_61] : memref<18x18x128xf32, #tpu.memory_space<vmem>>, vector<16x16x128xf32>
    %55 = vector.shape_cast %54 : vector<16x16x128xf32> to vector<256x128xf32>
    %56 = arith.truncf %55 : vector<256x128xf32> to vector<256x128xbf16>
    %c6 = arith.constant 6 : index
    %c0_62 = arith.constant 0 : index
    %c0_63 = arith.constant 0 : index
    %57 = vector.load %arg3[%c6, %c0_62, %c0_63] : memref<9x128x32xbf16, #tpu.memory_space<vmem>>, vector<1x128x32xbf16>
    %58 = vector.shape_cast %57 : vector<1x128x32xbf16> to vector<128x32xbf16>
    %cst_64 = arith.constant dense<0.000000e+00> : vector<256x32xf32>
    %59 = tpu.matmul %56, %58, %cst_64 {dimension_numbers = #tpu.dot_dimension_numbers<[1], [0], [0], [1], [0, 0, 1, 1], [], []>} : vector<256x128xbf16>, vector<128x32xbf16>, vector<256x32xf32> -> vector<256x32xf32>
    %60 = arith.addf %53, %59 : vector<256x32xf32>
    %c2_65 = arith.constant 2 : index
    %c1_66 = arith.constant 1 : index
    %c0_67 = arith.constant 0 : index
    %61 = vector.load %arg10[%c2_65, %c1_66, %c0_67] : memref<18x18x128xf32, #tpu.memory_space<vmem>>, vector<16x16x128xf32>
    %62 = vector.shape_cast %61 : vector<16x16x128xf32> to vector<256x128xf32>
    %63 = arith.truncf %62 : vector<256x128xf32> to vector<256x128xbf16>
    %c7 = arith.constant 7 : index
    %c0_68 = arith.constant 0 : index
    %c0_69 = arith.constant 0 : index
    %64 = vector.load %arg3[%c7, %c0_68, %c0_69] : memref<9x128x32xbf16, #tpu.memory_space<vmem>>, vector<1x128x32xbf16>
    %65 = vector.shape_cast %64 : vector<1x128x32xbf16> to vector<128x32xbf16>
    %cst_70 = arith.constant dense<0.000000e+00> : vector<256x32xf32>
    %66 = tpu.matmul %63, %65, %cst_70 {dimension_numbers = #tpu.dot_dimension_numbers<[1], [0], [0], [1], [0, 0, 1, 1], [], []>} : vector<256x128xbf16>, vector<128x32xbf16>, vector<256x32xf32> -> vector<256x32xf32>
    %67 = arith.addf %60, %66 : vector<256x32xf32>
    %c2_71 = arith.constant 2 : index
    %c2_72 = arith.constant 2 : index
    %c0_73 = arith.constant 0 : index
    %68 = vector.load %arg10[%c2_71, %c2_72, %c0_73] : memref<18x18x128xf32, #tpu.memory_space<vmem>>, vector<16x16x128xf32>
    %69 = vector.shape_cast %68 : vector<16x16x128xf32> to vector<256x128xf32>
    %70 = arith.truncf %69 : vector<256x128xf32> to vector<256x128xbf16>
    %c8 = arith.constant 8 : index
    %c0_74 = arith.constant 0 : index
    %c0_75 = arith.constant 0 : index
    %71 = vector.load %arg3[%c8, %c0_74, %c0_75] : memref<9x128x32xbf16, #tpu.memory_space<vmem>>, vector<1x128x32xbf16>
    %72 = vector.shape_cast %71 : vector<1x128x32xbf16> to vector<128x32xbf16>
    %cst_76 = arith.constant dense<0.000000e+00> : vector<256x32xf32>
    %73 = tpu.matmul %70, %72, %cst_76 {dimension_numbers = #tpu.dot_dimension_numbers<[1], [0], [0], [1], [0, 0, 1, 1], [], []>} : vector<256x128xbf16>, vector<128x32xbf16>, vector<256x32xf32> -> vector<256x32xf32>
    %74 = arith.addf %67, %73 : vector<256x32xf32>
    %c0_77 = arith.constant 0 : index
    %c0_78 = arith.constant 0 : index
    %75 = vector.load %arg4[%c0_77, %c0_78] : memref<1x32xf32, #tpu.memory_space<vmem>>, vector<1x32xf32>
    %76 = vector.broadcast %75 : vector<1x32xf32> to vector<256x32xf32>
    %77 = arith.addf %74, %76 : vector<256x32xf32>
    %cst_79 = arith.constant 0.000000e+00 : f32
    %78 = vector.broadcast %cst_79 : f32 to vector<256x32xf32>
    %79 = arith.maximumf %77, %78 : vector<256x32xf32>
    %80 = vector.shape_cast %79 : vector<256x32xf32> to vector<16x16x32xf32>
    %c1_80 = arith.constant 1 : index
    %c1_81 = arith.constant 1 : index
    %c0_82 = arith.constant 0 : index
    %81 = vector.load %arg11[%c1_80, %c1_81, %c0_82] : memref<18x18x32xf32, #tpu.memory_space<vmem>>, vector<16x16x32xf32>
    tpu.vector_store %arg11[%c1_80, %c1_81, %c0_82], %80 {strides = array<i32>} : memref<18x18x32xf32, #tpu.memory_space<vmem>>, vector<16x16x32xf32>,
    %82 = vector.extract_strided_slice %80 {offsets = [1, 0, 0], sizes = [1, 16, 32], strides = [1, 1, 1]} : vector<16x16x32xf32> to vector<1x16x32xf32>
    %c0_83 = arith.constant 0 : index
    %c1_84 = arith.constant 1 : index
    %c0_85 = arith.constant 0 : index
    %83 = vector.load %arg11[%c0_83, %c1_84, %c0_85] : memref<18x18x32xf32, #tpu.memory_space<vmem>>, vector<1x16x32xf32>
    tpu.vector_store %arg11[%c0_83, %c1_84, %c0_85], %82 {strides = array<i32>} : memref<18x18x32xf32, #tpu.memory_space<vmem>>, vector<1x16x32xf32>,
    %84 = vector.extract_strided_slice %80 {offsets = [14, 0, 0], sizes = [1, 16, 32], strides = [1, 1, 1]} : vector<16x16x32xf32> to vector<1x16x32xf32>
    %c17_86 = arith.constant 17 : index
    %c1_87 = arith.constant 1 : index
    %c0_88 = arith.constant 0 : index
    %85 = vector.load %arg11[%c17_86, %c1_87, %c0_88] : memref<18x18x32xf32, #tpu.memory_space<vmem>>, vector<1x16x32xf32>
    tpu.vector_store %arg11[%c17_86, %c1_87, %c0_88], %84 {strides = array<i32>} : memref<18x18x32xf32, #tpu.memory_space<vmem>>, vector<1x16x32xf32>,
    %c0_89 = arith.constant 0 : index
    %c2_90 = arith.constant 2 : index
    %c0_91 = arith.constant 0 : index
    %86 = vector.load %arg11[%c0_89, %c2_90, %c0_91] : memref<18x18x32xf32, #tpu.memory_space<vmem>>, vector<18x1x32xf32>
    %c0_92 = arith.constant 0 : index
    %c0_93 = arith.constant 0 : index
    %c0_94 = arith.constant 0 : index
    %87 = vector.load %arg11[%c0_92, %c0_93, %c0_94] : memref<18x18x32xf32, #tpu.memory_space<vmem>>, vector<18x1x32xf32>
    tpu.vector_store %arg11[%c0_92, %c0_93, %c0_94], %86 {strides = array<i32>} : memref<18x18x32xf32, #tpu.memory_space<vmem>>, vector<18x1x32xf32>,
    %c0_95 = arith.constant 0 : index
    %c15_96 = arith.constant 15 : index
    %c0_97 = arith.constant 0 : index
    %88 = vector.load %arg11[%c0_95, %c15_96, %c0_97] : memref<18x18x32xf32, #tpu.memory_space<vmem>>, vector<18x1x32xf32>
    %c0_98 = arith.constant 0 : index
    %c17_99 = arith.constant 17 : index
    %c0_100 = arith.constant 0 : index
    %89 = vector.load %arg11[%c0_98, %c17_99, %c0_100] : memref<18x18x32xf32, #tpu.memory_space<vmem>>, vector<18x1x32xf32>
    tpu.vector_store %arg11[%c0_98, %c17_99, %c0_100], %88 {strides = array<i32>} : memref<18x18x32xf32, #tpu.memory_space<vmem>>, vector<18x1x32xf32>,
    %cst_101 = arith.constant 0.000000e+00 : f32
    %90 = vector.broadcast %cst_101 : f32 to vector<256x32xf32>
    %c0_102 = arith.constant 0 : index
    %c0_103 = arith.constant 0 : index
    %c0_104 = arith.constant 0 : index
    %91 = vector.load %arg11[%c0_102, %c0_103, %c0_104] : memref<18x18x32xf32, #tpu.memory_space<vmem>>, vector<16x16x32xf32>
    %92 = vector.shape_cast %91 : vector<16x16x32xf32> to vector<256x32xf32>
    %93 = arith.truncf %92 : vector<256x32xf32> to vector<256x32xbf16>
    %c0_105 = arith.constant 0 : index
    %c0_106 = arith.constant 0 : index
    %c0_107 = arith.constant 0 : index
    %94 = vector.load %arg5[%c0_105, %c0_106, %c0_107] : memref<9x32x32xbf16, #tpu.memory_space<vmem>>, vector<1x32x32xbf16>
    %95 = vector.shape_cast %94 : vector<1x32x32xbf16> to vector<32x32xbf16>
    %cst_108 = arith.constant dense<0.000000e+00> : vector<256x32xf32>
    %96 = tpu.matmul %93, %95, %cst_108 {dimension_numbers = #tpu.dot_dimension_numbers<[1], [0], [0], [1], [0, 0, 1, 1], [], []>} : vector<256x32xbf16>, vector<32x32xbf16>, vector<256x32xf32> -> vector<256x32xf32>
    %97 = arith.addf %90, %96 : vector<256x32xf32>
    %c0_109 = arith.constant 0 : index
    %c1_110 = arith.constant 1 : index
    %c0_111 = arith.constant 0 : index
    %98 = vector.load %arg11[%c0_109, %c1_110, %c0_111] : memref<18x18x32xf32, #tpu.memory_space<vmem>>, vector<16x16x32xf32>
    %99 = vector.shape_cast %98 : vector<16x16x32xf32> to vector<256x32xf32>
    %100 = arith.truncf %99 : vector<256x32xf32> to vector<256x32xbf16>
    %c1_112 = arith.constant 1 : index
    %c0_113 = arith.constant 0 : index
    %c0_114 = arith.constant 0 : index
    %101 = vector.load %arg5[%c1_112, %c0_113, %c0_114] : memref<9x32x32xbf16, #tpu.memory_space<vmem>>, vector<1x32x32xbf16>
    %102 = vector.shape_cast %101 : vector<1x32x32xbf16> to vector<32x32xbf16>
    %cst_115 = arith.constant dense<0.000000e+00> : vector<256x32xf32>
    %103 = tpu.matmul %100, %102, %cst_115 {dimension_numbers = #tpu.dot_dimension_numbers<[1], [0], [0], [1], [0, 0, 1, 1], [], []>} : vector<256x32xbf16>, vector<32x32xbf16>, vector<256x32xf32> -> vector<256x32xf32>
    %104 = arith.addf %97, %103 : vector<256x32xf32>
    %c0_116 = arith.constant 0 : index
    %c2_117 = arith.constant 2 : index
    %c0_118 = arith.constant 0 : index
    %105 = vector.load %arg11[%c0_116, %c2_117, %c0_118] : memref<18x18x32xf32, #tpu.memory_space<vmem>>, vector<16x16x32xf32>
    %106 = vector.shape_cast %105 : vector<16x16x32xf32> to vector<256x32xf32>
    %107 = arith.truncf %106 : vector<256x32xf32> to vector<256x32xbf16>
    %c2_119 = arith.constant 2 : index
    %c0_120 = arith.constant 0 : index
    %c0_121 = arith.constant 0 : index
    %108 = vector.load %arg5[%c2_119, %c0_120, %c0_121] : memref<9x32x32xbf16, #tpu.memory_space<vmem>>, vector<1x32x32xbf16>
    %109 = vector.shape_cast %108 : vector<1x32x32xbf16> to vector<32x32xbf16>
    %cst_122 = arith.constant dense<0.000000e+00> : vector<256x32xf32>
    %110 = tpu.matmul %107, %109, %cst_122 {dimension_numbers = #tpu.dot_dimension_numbers<[1], [0], [0], [1], [0, 0, 1, 1], [], []>} : vector<256x32xbf16>, vector<32x32xbf16>, vector<256x32xf32> -> vector<256x32xf32>
    %111 = arith.addf %104, %110 : vector<256x32xf32>
    %c1_123 = arith.constant 1 : index
    %c0_124 = arith.constant 0 : index
    %c0_125 = arith.constant 0 : index
    %112 = vector.load %arg11[%c1_123, %c0_124, %c0_125] : memref<18x18x32xf32, #tpu.memory_space<vmem>>, vector<16x16x32xf32>
    %113 = vector.shape_cast %112 : vector<16x16x32xf32> to vector<256x32xf32>
    %114 = arith.truncf %113 : vector<256x32xf32> to vector<256x32xbf16>
    %c3_126 = arith.constant 3 : index
    %c0_127 = arith.constant 0 : index
    %c0_128 = arith.constant 0 : index
    %115 = vector.load %arg5[%c3_126, %c0_127, %c0_128] : memref<9x32x32xbf16, #tpu.memory_space<vmem>>, vector<1x32x32xbf16>
    %116 = vector.shape_cast %115 : vector<1x32x32xbf16> to vector<32x32xbf16>
    %cst_129 = arith.constant dense<0.000000e+00> : vector<256x32xf32>
    %117 = tpu.matmul %114, %116, %cst_129 {dimension_numbers = #tpu.dot_dimension_numbers<[1], [0], [0], [1], [0, 0, 1, 1], [], []>} : vector<256x32xbf16>, vector<32x32xbf16>, vector<256x32xf32> -> vector<256x32xf32>
    %118 = arith.addf %111, %117 : vector<256x32xf32>
    %c1_130 = arith.constant 1 : index
    %c1_131 = arith.constant 1 : index
    %c0_132 = arith.constant 0 : index
    %119 = vector.load %arg11[%c1_130, %c1_131, %c0_132] : memref<18x18x32xf32, #tpu.memory_space<vmem>>, vector<16x16x32xf32>
    %120 = vector.shape_cast %119 : vector<16x16x32xf32> to vector<256x32xf32>
    %121 = arith.truncf %120 : vector<256x32xf32> to vector<256x32xbf16>
    %c4_133 = arith.constant 4 : index
    %c0_134 = arith.constant 0 : index
    %c0_135 = arith.constant 0 : index
    %122 = vector.load %arg5[%c4_133, %c0_134, %c0_135] : memref<9x32x32xbf16, #tpu.memory_space<vmem>>, vector<1x32x32xbf16>
    %123 = vector.shape_cast %122 : vector<1x32x32xbf16> to vector<32x32xbf16>
    %cst_136 = arith.constant dense<0.000000e+00> : vector<256x32xf32>
    %124 = tpu.matmul %121, %123, %cst_136 {dimension_numbers = #tpu.dot_dimension_numbers<[1], [0], [0], [1], [0, 0, 1, 1], [], []>} : vector<256x32xbf16>, vector<32x32xbf16>, vector<256x32xf32> -> vector<256x32xf32>
    %125 = arith.addf %118, %124 : vector<256x32xf32>
    %c1_137 = arith.constant 1 : index
    %c2_138 = arith.constant 2 : index
    %c0_139 = arith.constant 0 : index
    %126 = vector.load %arg11[%c1_137, %c2_138, %c0_139] : memref<18x18x32xf32, #tpu.memory_space<vmem>>, vector<16x16x32xf32>
    %127 = vector.shape_cast %126 : vector<16x16x32xf32> to vector<256x32xf32>
    %128 = arith.truncf %127 : vector<256x32xf32> to vector<256x32xbf16>
    %c5_140 = arith.constant 5 : index
    %c0_141 = arith.constant 0 : index
    %c0_142 = arith.constant 0 : index
    %129 = vector.load %arg5[%c5_140, %c0_141, %c0_142] : memref<9x32x32xbf16, #tpu.memory_space<vmem>>, vector<1x32x32xbf16>
    %130 = vector.shape_cast %129 : vector<1x32x32xbf16> to vector<32x32xbf16>
    %cst_143 = arith.constant dense<0.000000e+00> : vector<256x32xf32>
    %131 = tpu.matmul %128, %130, %cst_143 {dimension_numbers = #tpu.dot_dimension_numbers<[1], [0], [0], [1], [0, 0, 1, 1], [], []>} : vector<256x32xbf16>, vector<32x32xbf16>, vector<256x32xf32> -> vector<256x32xf32>
    %132 = arith.addf %125, %131 : vector<256x32xf32>
    %c2_144 = arith.constant 2 : index
    %c0_145 = arith.constant 0 : index
    %c0_146 = arith.constant 0 : index
    %133 = vector.load %arg11[%c2_144, %c0_145, %c0_146] : memref<18x18x32xf32, #tpu.memory_space<vmem>>, vector<16x16x32xf32>
    %134 = vector.shape_cast %133 : vector<16x16x32xf32> to vector<256x32xf32>
    %135 = arith.truncf %134 : vector<256x32xf32> to vector<256x32xbf16>
    %c6_147 = arith.constant 6 : index
    %c0_148 = arith.constant 0 : index
    %c0_149 = arith.constant 0 : index
    %136 = vector.load %arg5[%c6_147, %c0_148, %c0_149] : memref<9x32x32xbf16, #tpu.memory_space<vmem>>, vector<1x32x32xbf16>
    %137 = vector.shape_cast %136 : vector<1x32x32xbf16> to vector<32x32xbf16>
    %cst_150 = arith.constant dense<0.000000e+00> : vector<256x32xf32>
    %138 = tpu.matmul %135, %137, %cst_150 {dimension_numbers = #tpu.dot_dimension_numbers<[1], [0], [0], [1], [0, 0, 1, 1], [], []>} : vector<256x32xbf16>, vector<32x32xbf16>, vector<256x32xf32> -> vector<256x32xf32>
    %139 = arith.addf %132, %138 : vector<256x32xf32>
    %c2_151 = arith.constant 2 : index
    %c1_152 = arith.constant 1 : index
    %c0_153 = arith.constant 0 : index
    %140 = vector.load %arg11[%c2_151, %c1_152, %c0_153] : memref<18x18x32xf32, #tpu.memory_space<vmem>>, vector<16x16x32xf32>
    %141 = vector.shape_cast %140 : vector<16x16x32xf32> to vector<256x32xf32>
    %142 = arith.truncf %141 : vector<256x32xf32> to vector<256x32xbf16>
    %c7_154 = arith.constant 7 : index
    %c0_155 = arith.constant 0 : index
    %c0_156 = arith.constant 0 : index
    %143 = vector.load %arg5[%c7_154, %c0_155, %c0_156] : memref<9x32x32xbf16, #tpu.memory_space<vmem>>, vector<1x32x32xbf16>
    %144 = vector.shape_cast %143 : vector<1x32x32xbf16> to vector<32x32xbf16>
    %cst_157 = arith.constant dense<0.000000e+00> : vector<256x32xf32>
    %145 = tpu.matmul %142, %144, %cst_157 {dimension_numbers = #tpu.dot_dimension_numbers<[1], [0], [0], [1], [0, 0, 1, 1], [], []>} : vector<256x32xbf16>, vector<32x32xbf16>, vector<256x32xf32> -> vector<256x32xf32>
    %146 = arith.addf %139, %145 : vector<256x32xf32>
    %c2_158 = arith.constant 2 : index
    %c2_159 = arith.constant 2 : index
    %c0_160 = arith.constant 0 : index
    %147 = vector.load %arg11[%c2_158, %c2_159, %c0_160] : memref<18x18x32xf32, #tpu.memory_space<vmem>>, vector<16x16x32xf32>
    %148 = vector.shape_cast %147 : vector<16x16x32xf32> to vector<256x32xf32>
    %149 = arith.truncf %148 : vector<256x32xf32> to vector<256x32xbf16>
    %c8_161 = arith.constant 8 : index
    %c0_162 = arith.constant 0 : index
    %c0_163 = arith.constant 0 : index
    %150 = vector.load %arg5[%c8_161, %c0_162, %c0_163] : memref<9x32x32xbf16, #tpu.memory_space<vmem>>, vector<1x32x32xbf16>
    %151 = vector.shape_cast %150 : vector<1x32x32xbf16> to vector<32x32xbf16>
    %cst_164 = arith.constant dense<0.000000e+00> : vector<256x32xf32>
    %152 = tpu.matmul %149, %151, %cst_164 {dimension_numbers = #tpu.dot_dimension_numbers<[1], [0], [0], [1], [0, 0, 1, 1], [], []>} : vector<256x32xbf16>, vector<32x32xbf16>, vector<256x32xf32> -> vector<256x32xf32>
    %153 = arith.addf %146, %152 : vector<256x32xf32>
    %c0_165 = arith.constant 0 : index
    %c0_166 = arith.constant 0 : index
    %154 = vector.load %arg6[%c0_165, %c0_166] : memref<1x32xf32, #tpu.memory_space<vmem>>, vector<1x32xf32>
    %155 = vector.broadcast %154 : vector<1x32xf32> to vector<256x32xf32>
    %156 = arith.addf %153, %155 : vector<256x32xf32>
    %cst_167 = arith.constant 0.000000e+00 : f32
    %157 = vector.broadcast %cst_167 : f32 to vector<256x32xf32>
    %158 = arith.maximumf %156, %157 : vector<256x32xf32>
    %159 = vector.shape_cast %158 : vector<256x32xf32> to vector<16x16x32xf32>
    %c1_168 = arith.constant 1 : index
    %c1_169 = arith.constant 1 : index
    %c0_170 = arith.constant 0 : index
    %160 = vector.load %arg11[%c1_168, %c1_169, %c0_170] : memref<18x18x32xf32, #tpu.memory_space<vmem>>, vector<16x16x32xf32>
    tpu.vector_store %arg11[%c1_168, %c1_169, %c0_170], %159 {strides = array<i32>} : memref<18x18x32xf32, #tpu.memory_space<vmem>>, vector<16x16x32xf32>,
    %161 = vector.extract_strided_slice %159 {offsets = [1, 0, 0], sizes = [1, 16, 32], strides = [1, 1, 1]} : vector<16x16x32xf32> to vector<1x16x32xf32>
    %c0_171 = arith.constant 0 : index
    %c1_172 = arith.constant 1 : index
    %c0_173 = arith.constant 0 : index
    %162 = vector.load %arg11[%c0_171, %c1_172, %c0_173] : memref<18x18x32xf32, #tpu.memory_space<vmem>>, vector<1x16x32xf32>
    tpu.vector_store %arg11[%c0_171, %c1_172, %c0_173], %161 {strides = array<i32>} : memref<18x18x32xf32, #tpu.memory_space<vmem>>, vector<1x16x32xf32>,
    %163 = vector.extract_strided_slice %159 {offsets = [14, 0, 0], sizes = [1, 16, 32], strides = [1, 1, 1]} : vector<16x16x32xf32> to vector<1x16x32xf32>
    %c17_174 = arith.constant 17 : index
    %c1_175 = arith.constant 1 : index
    %c0_176 = arith.constant 0 : index
    %164 = vector.load %arg11[%c17_174, %c1_175, %c0_176] : memref<18x18x32xf32, #tpu.memory_space<vmem>>, vector<1x16x32xf32>
    tpu.vector_store %arg11[%c17_174, %c1_175, %c0_176], %163 {strides = array<i32>} : memref<18x18x32xf32, #tpu.memory_space<vmem>>, vector<1x16x32xf32>,
    %c0_177 = arith.constant 0 : index
    %c2_178 = arith.constant 2 : index
    %c0_179 = arith.constant 0 : index
    %165 = vector.load %arg11[%c0_177, %c2_178, %c0_179] : memref<18x18x32xf32, #tpu.memory_space<vmem>>, vector<18x1x32xf32>
    %c0_180 = arith.constant 0 : index
    %c0_181 = arith.constant 0 : index
    %c0_182 = arith.constant 0 : index
    %166 = vector.load %arg11[%c0_180, %c0_181, %c0_182] : memref<18x18x32xf32, #tpu.memory_space<vmem>>, vector<18x1x32xf32>
    tpu.vector_store %arg11[%c0_180, %c0_181, %c0_182], %165 {strides = array<i32>} : memref<18x18x32xf32, #tpu.memory_space<vmem>>, vector<18x1x32xf32>,
    %c0_183 = arith.constant 0 : index
    %c15_184 = arith.constant 15 : index
    %c0_185 = arith.constant 0 : index
    %167 = vector.load %arg11[%c0_183, %c15_184, %c0_185] : memref<18x18x32xf32, #tpu.memory_space<vmem>>, vector<18x1x32xf32>
    %c0_186 = arith.constant 0 : index
    %c17_187 = arith.constant 17 : index
    %c0_188 = arith.constant 0 : index
    %168 = vector.load %arg11[%c0_186, %c17_187, %c0_188] : memref<18x18x32xf32, #tpu.memory_space<vmem>>, vector<18x1x32xf32>
    tpu.vector_store %arg11[%c0_186, %c17_187, %c0_188], %167 {strides = array<i32>} : memref<18x18x32xf32, #tpu.memory_space<vmem>>, vector<18x1x32xf32>,
    %cst_189 = arith.constant 0.000000e+00 : f32
    %169 = vector.broadcast %cst_189 : f32 to vector<256x128xf32>
    %c0_190 = arith.constant 0 : index
    %c0_191 = arith.constant 0 : index
    %c0_192 = arith.constant 0 : index
    %170 = vector.load %arg11[%c0_190, %c0_191, %c0_192] : memref<18x18x32xf32, #tpu.memory_space<vmem>>, vector<16x16x32xf32>
    %171 = vector.shape_cast %170 : vector<16x16x32xf32> to vector<256x32xf32>
    %172 = arith.truncf %171 : vector<256x32xf32> to vector<256x32xbf16>
    %c0_193 = arith.constant 0 : index
    %c0_194 = arith.constant 0 : index
    %c0_195 = arith.constant 0 : index
    %173 = vector.load %arg7[%c0_193, %c0_194, %c0_195] : memref<9x32x128xbf16, #tpu.memory_space<vmem>>, vector<1x32x128xbf16>
    %174 = vector.shape_cast %173 : vector<1x32x128xbf16> to vector<32x128xbf16>
    %cst_196 = arith.constant dense<0.000000e+00> : vector<256x128xf32>
    %175 = tpu.matmul %172, %174, %cst_196 {dimension_numbers = #tpu.dot_dimension_numbers<[1], [0], [0], [1], [0, 0, 1, 1], [], []>} : vector<256x32xbf16>, vector<32x128xbf16>, vector<256x128xf32> -> vector<256x128xf32>
    %176 = arith.addf %169, %175 : vector<256x128xf32>
    %c0_197 = arith.constant 0 : index
    %c1_198 = arith.constant 1 : index
    %c0_199 = arith.constant 0 : index
    %177 = vector.load %arg11[%c0_197, %c1_198, %c0_199] : memref<18x18x32xf32, #tpu.memory_space<vmem>>, vector<16x16x32xf32>
    %178 = vector.shape_cast %177 : vector<16x16x32xf32> to vector<256x32xf32>
    %179 = arith.truncf %178 : vector<256x32xf32> to vector<256x32xbf16>
    %c1_200 = arith.constant 1 : index
    %c0_201 = arith.constant 0 : index
    %c0_202 = arith.constant 0 : index
    %180 = vector.load %arg7[%c1_200, %c0_201, %c0_202] : memref<9x32x128xbf16, #tpu.memory_space<vmem>>, vector<1x32x128xbf16>
    %181 = vector.shape_cast %180 : vector<1x32x128xbf16> to vector<32x128xbf16>
    %cst_203 = arith.constant dense<0.000000e+00> : vector<256x128xf32>
    %182 = tpu.matmul %179, %181, %cst_203 {dimension_numbers = #tpu.dot_dimension_numbers<[1], [0], [0], [1], [0, 0, 1, 1], [], []>} : vector<256x32xbf16>, vector<32x128xbf16>, vector<256x128xf32> -> vector<256x128xf32>
    %183 = arith.addf %176, %182 : vector<256x128xf32>
    %c0_204 = arith.constant 0 : index
    %c2_205 = arith.constant 2 : index
    %c0_206 = arith.constant 0 : index
    %184 = vector.load %arg11[%c0_204, %c2_205, %c0_206] : memref<18x18x32xf32, #tpu.memory_space<vmem>>, vector<16x16x32xf32>
    %185 = vector.shape_cast %184 : vector<16x16x32xf32> to vector<256x32xf32>
    %186 = arith.truncf %185 : vector<256x32xf32> to vector<256x32xbf16>
    %c2_207 = arith.constant 2 : index
    %c0_208 = arith.constant 0 : index
    %c0_209 = arith.constant 0 : index
    %187 = vector.load %arg7[%c2_207, %c0_208, %c0_209] : memref<9x32x128xbf16, #tpu.memory_space<vmem>>, vector<1x32x128xbf16>
    %188 = vector.shape_cast %187 : vector<1x32x128xbf16> to vector<32x128xbf16>
    %cst_210 = arith.constant dense<0.000000e+00> : vector<256x128xf32>
    %189 = tpu.matmul %186, %188, %cst_210 {dimension_numbers = #tpu.dot_dimension_numbers<[1], [0], [0], [1], [0, 0, 1, 1], [], []>} : vector<256x32xbf16>, vector<32x128xbf16>, vector<256x128xf32> -> vector<256x128xf32>
    %190 = arith.addf %183, %189 : vector<256x128xf32>
    %c1_211 = arith.constant 1 : index
    %c0_212 = arith.constant 0 : index
    %c0_213 = arith.constant 0 : index
    %191 = vector.load %arg11[%c1_211, %c0_212, %c0_213] : memref<18x18x32xf32, #tpu.memory_space<vmem>>, vector<16x16x32xf32>
    %192 = vector.shape_cast %191 : vector<16x16x32xf32> to vector<256x32xf32>
    %193 = arith.truncf %192 : vector<256x32xf32> to vector<256x32xbf16>
    %c3_214 = arith.constant 3 : index
    %c0_215 = arith.constant 0 : index
    %c0_216 = arith.constant 0 : index
    %194 = vector.load %arg7[%c3_214, %c0_215, %c0_216] : memref<9x32x128xbf16, #tpu.memory_space<vmem>>, vector<1x32x128xbf16>
    %195 = vector.shape_cast %194 : vector<1x32x128xbf16> to vector<32x128xbf16>
    %cst_217 = arith.constant dense<0.000000e+00> : vector<256x128xf32>
    %196 = tpu.matmul %193, %195, %cst_217 {dimension_numbers = #tpu.dot_dimension_numbers<[1], [0], [0], [1], [0, 0, 1, 1], [], []>} : vector<256x32xbf16>, vector<32x128xbf16>, vector<256x128xf32> -> vector<256x128xf32>
    %197 = arith.addf %190, %196 : vector<256x128xf32>
    %c1_218 = arith.constant 1 : index
    %c1_219 = arith.constant 1 : index
    %c0_220 = arith.constant 0 : index
    %198 = vector.load %arg11[%c1_218, %c1_219, %c0_220] : memref<18x18x32xf32, #tpu.memory_space<vmem>>, vector<16x16x32xf32>
    %199 = vector.shape_cast %198 : vector<16x16x32xf32> to vector<256x32xf32>
    %200 = arith.truncf %199 : vector<256x32xf32> to vector<256x32xbf16>
    %c4_221 = arith.constant 4 : index
    %c0_222 = arith.constant 0 : index
    %c0_223 = arith.constant 0 : index
    %201 = vector.load %arg7[%c4_221, %c0_222, %c0_223] : memref<9x32x128xbf16, #tpu.memory_space<vmem>>, vector<1x32x128xbf16>
    %202 = vector.shape_cast %201 : vector<1x32x128xbf16> to vector<32x128xbf16>
    %cst_224 = arith.constant dense<0.000000e+00> : vector<256x128xf32>
    %203 = tpu.matmul %200, %202, %cst_224 {dimension_numbers = #tpu.dot_dimension_numbers<[1], [0], [0], [1], [0, 0, 1, 1], [], []>} : vector<256x32xbf16>, vector<32x128xbf16>, vector<256x128xf32> -> vector<256x128xf32>
    %204 = arith.addf %197, %203 : vector<256x128xf32>
    %c1_225 = arith.constant 1 : index
    %c2_226 = arith.constant 2 : index
    %c0_227 = arith.constant 0 : index
    %205 = vector.load %arg11[%c1_225, %c2_226, %c0_227] : memref<18x18x32xf32, #tpu.memory_space<vmem>>, vector<16x16x32xf32>
    %206 = vector.shape_cast %205 : vector<16x16x32xf32> to vector<256x32xf32>
    %207 = arith.truncf %206 : vector<256x32xf32> to vector<256x32xbf16>
    %c5_228 = arith.constant 5 : index
    %c0_229 = arith.constant 0 : index
    %c0_230 = arith.constant 0 : index
    %208 = vector.load %arg7[%c5_228, %c0_229, %c0_230] : memref<9x32x128xbf16, #tpu.memory_space<vmem>>, vector<1x32x128xbf16>
    %209 = vector.shape_cast %208 : vector<1x32x128xbf16> to vector<32x128xbf16>
    %cst_231 = arith.constant dense<0.000000e+00> : vector<256x128xf32>
    %210 = tpu.matmul %207, %209, %cst_231 {dimension_numbers = #tpu.dot_dimension_numbers<[1], [0], [0], [1], [0, 0, 1, 1], [], []>} : vector<256x32xbf16>, vector<32x128xbf16>, vector<256x128xf32> -> vector<256x128xf32>
    %211 = arith.addf %204, %210 : vector<256x128xf32>
    %c2_232 = arith.constant 2 : index
    %c0_233 = arith.constant 0 : index
    %c0_234 = arith.constant 0 : index
    %212 = vector.load %arg11[%c2_232, %c0_233, %c0_234] : memref<18x18x32xf32, #tpu.memory_space<vmem>>, vector<16x16x32xf32>
    %213 = vector.shape_cast %212 : vector<16x16x32xf32> to vector<256x32xf32>
    %214 = arith.truncf %213 : vector<256x32xf32> to vector<256x32xbf16>
    %c6_235 = arith.constant 6 : index
    %c0_236 = arith.constant 0 : index
    %c0_237 = arith.constant 0 : index
    %215 = vector.load %arg7[%c6_235, %c0_236, %c0_237] : memref<9x32x128xbf16, #tpu.memory_space<vmem>>, vector<1x32x128xbf16>
    %216 = vector.shape_cast %215 : vector<1x32x128xbf16> to vector<32x128xbf16>
    %cst_238 = arith.constant dense<0.000000e+00> : vector<256x128xf32>
    %217 = tpu.matmul %214, %216, %cst_238 {dimension_numbers = #tpu.dot_dimension_numbers<[1], [0], [0], [1], [0, 0, 1, 1], [], []>} : vector<256x32xbf16>, vector<32x128xbf16>, vector<256x128xf32> -> vector<256x128xf32>
    %218 = arith.addf %211, %217 : vector<256x128xf32>
    %c2_239 = arith.constant 2 : index
    %c1_240 = arith.constant 1 : index
    %c0_241 = arith.constant 0 : index
    %219 = vector.load %arg11[%c2_239, %c1_240, %c0_241] : memref<18x18x32xf32, #tpu.memory_space<vmem>>, vector<16x16x32xf32>
    %220 = vector.shape_cast %219 : vector<16x16x32xf32> to vector<256x32xf32>
    %221 = arith.truncf %220 : vector<256x32xf32> to vector<256x32xbf16>
    %c7_242 = arith.constant 7 : index
    %c0_243 = arith.constant 0 : index
    %c0_244 = arith.constant 0 : index
    %222 = vector.load %arg7[%c7_242, %c0_243, %c0_244] : memref<9x32x128xbf16, #tpu.memory_space<vmem>>, vector<1x32x128xbf16>
    %223 = vector.shape_cast %222 : vector<1x32x128xbf16> to vector<32x128xbf16>
    %cst_245 = arith.constant dense<0.000000e+00> : vector<256x128xf32>
    %224 = tpu.matmul %221, %223, %cst_245 {dimension_numbers = #tpu.dot_dimension_numbers<[1], [0], [0], [1], [0, 0, 1, 1], [], []>} : vector<256x32xbf16>, vector<32x128xbf16>, vector<256x128xf32> -> vector<256x128xf32>
    %225 = arith.addf %218, %224 : vector<256x128xf32>
    %c2_246 = arith.constant 2 : index
    %c2_247 = arith.constant 2 : index
    %c0_248 = arith.constant 0 : index
    %226 = vector.load %arg11[%c2_246, %c2_247, %c0_248] : memref<18x18x32xf32, #tpu.memory_space<vmem>>, vector<16x16x32xf32>
    %227 = vector.shape_cast %226 : vector<16x16x32xf32> to vector<256x32xf32>
    %228 = arith.truncf %227 : vector<256x32xf32> to vector<256x32xbf16>
    %c8_249 = arith.constant 8 : index
    %c0_250 = arith.constant 0 : index
    %c0_251 = arith.constant 0 : index
    %229 = vector.load %arg7[%c8_249, %c0_250, %c0_251] : memref<9x32x128xbf16, #tpu.memory_space<vmem>>, vector<1x32x128xbf16>
    %230 = vector.shape_cast %229 : vector<1x32x128xbf16> to vector<32x128xbf16>
    %cst_252 = arith.constant dense<0.000000e+00> : vector<256x128xf32>
    %231 = tpu.matmul %228, %230, %cst_252 {dimension_numbers = #tpu.dot_dimension_numbers<[1], [0], [0], [1], [0, 0, 1, 1], [], []>} : vector<256x32xbf16>, vector<32x128xbf16>, vector<256x128xf32> -> vector<256x128xf32>
    %232 = arith.addf %225, %231 : vector<256x128xf32>
    %c0_253 = arith.constant 0 : index
    %c0_254 = arith.constant 0 : index
    %233 = vector.load %arg8[%c0_253, %c0_254] : memref<1x128xf32, #tpu.memory_space<vmem>>, vector<1x128xf32>
    %234 = vector.broadcast %233 : vector<1x128xf32> to vector<256x128xf32>
    %235 = arith.addf %232, %234 : vector<256x128xf32>
    %236 = vector.shape_cast %235 : vector<256x128xf32> to vector<16x16x128xf32>
    %c0_255 = arith.constant 0 : index
    %c0_256 = arith.constant 0 : index
    %c0_257 = arith.constant 0 : index
    %c0_258 = arith.constant 0 : index
    %237 = vector.load %arg1[%c0_255, %c0_256, %c0_257, %c0_258] : memref<1x16x16x128xf32, #tpu.memory_space<vmem>>, vector<1x16x16x128xf32>
    %238 = vector.shape_cast %237 : vector<1x16x16x128xf32> to vector<16x16x128xf32>
    %239 = arith.addf %236, %238 : vector<16x16x128xf32>
    %c0_259 = arith.constant 0 : index
    %c0_260 = arith.constant 0 : index
    %c0_261 = arith.constant 0 : index
    %c0_262 = arith.constant 0 : index
    %240 = vector.load %arg9[%c0_259, %c0_260, %c0_261, %c0_262] : memref<1x16x16x128xf32, #tpu.memory_space<vmem>>, vector<1x16x16x128xf32>
    %241 = vector.shape_cast %240 : vector<1x16x16x128xf32> to vector<16x16x128xf32>
    %242 = vector.shape_cast %239 : vector<16x16x128xf32> to vector<1x16x16x128xf32>
    tpu.vector_store %arg9[%c0_259, %c0_260, %c0_261, %c0_262], %242 {strides = array<i32>} : memref<1x16x16x128xf32, #tpu.memory_space<vmem>>, vector<1x16x16x128xf32>,
    return
  }
  func.func @transform_0(%arg0: i32) -> (i32, i32, i32, i32) {
    %c0_i32 = arith.constant 0 : i32
    %c0_i32_0 = arith.constant 0 : i32
    %c0_i32_1 = arith.constant 0 : i32
    %c0_i32_2 = arith.constant 0 : i32
    return %arg0, %c0_i32, %c0_i32_0, %c0_i32_1 : i32, i32, i32, i32
  }
  func.func @transform_1(%arg0: i32) -> (i32, i32, i32, i32) {
    %c0_i32 = arith.constant 0 : i32
    %c0_i32_0 = arith.constant 0 : i32
    %c0_i32_1 = arith.constant 0 : i32
    %c0_i32_2 = arith.constant 0 : i32
    return %arg0, %c0_i32, %c0_i32_0, %c0_i32_1 : i32, i32, i32, i32
  }
  func.func @transform_2(%arg0: i32) -> (i32, i32, i32) {
    %c0_i32 = arith.constant 0 : i32
    %c0_i32_0 = arith.constant 0 : i32
    %c0_i32_1 = arith.constant 0 : i32
    %c0_i32_2 = arith.constant 0 : i32
    return %c0_i32, %c0_i32_0, %c0_i32_1 : i32, i32, i32
  }
  func.func @transform_3(%arg0: i32) -> (i32, i32) {
    %c0_i32 = arith.constant 0 : i32
    %c0_i32_0 = arith.constant 0 : i32
    %c0_i32_1 = arith.constant 0 : i32
    return %c0_i32, %c0_i32_0 : i32, i32
  }
  func.func @transform_4(%arg0: i32) -> (i32, i32, i32) {
    %c0_i32 = arith.constant 0 : i32
    %c0_i32_0 = arith.constant 0 : i32
    %c0_i32_1 = arith.constant 0 : i32
    %c0_i32_2 = arith.constant 0 : i32
    return %c0_i32, %c0_i32_0, %c0_i32_1 : i32, i32, i32
  }
  func.func @transform_5(%arg0: i32) -> (i32, i32) {
    %c0_i32 = arith.constant 0 : i32
    %c0_i32_0 = arith.constant 0 : i32
    %c0_i32_1 = arith.constant 0 : i32
    return %c0_i32, %c0_i32_0 : i32, i32
  }
  func.func @transform_6(%arg0: i32) -> (i32, i32, i32) {
    %c0_i32 = arith.constant 0 : i32
    %c0_i32_0 = arith.constant 0 : i32
    %c0_i32_1 = arith.constant 0 : i32
    %c0_i32_2 = arith.constant 0 : i32
    return %c0_i32, %c0_i32_0, %c0_i32_1 : i32, i32, i32
  }
  func.func @transform_7(%arg0: i32) -> (i32, i32) {
    %c0_i32 = arith.constant 0 : i32
    %c0_i32_0 = arith.constant 0 : i32
    %c0_i32_1 = arith.constant 0 : i32
    return %c0_i32, %c0_i32_0 : i32, i32
  }
  func.func @transform_8(%arg0: i32) -> (i32, i32, i32, i32) {
    %c0_i32 = arith.constant 0 : i32
    %c0_i32_0 = arith.constant 0 : i32
    %c0_i32_1 = arith.constant 0 : i32
    %c0_i32_2 = arith.constant 0 : i32
    return %arg0, %c0_i32, %c0_i32_0, %c0_i32_1 : i32, i32, i32, i32
  }
}

</mosaic_0001>

<llo_original>
// kernel: channel_reduction_forward.2
$region0: #{channel_reduction_forward.2}
  #allocation0 [shape = 'u32[]', space=smem, size = 0x4, offset = 0x4, fixed_abs, tag = 'smem constant byte address 0x4 - core index']
  #allocation1 [shape = 'u32[144,128]{1,0:T(1,128)}', space=vmem, size = 0x12000, scoped, tag = 'internal scratch']
  #allocation2 [shape = 'f32[18,18,128]{2,1,0:T(8,128)}', space=vmem, size = 0x36000, scoped, tag = 'scratch operand']
  #allocation3 [shape = 'f32[18,18,32]{2,1,0:T(8,128)}', space=vmem, size = 0x36000, scoped, tag = 'scratch operand']
  %s0 = inlined_call_operand.vmem [shape: f32[2,16,16,128], index: 0, kind: input, shape index: {}]
  %s1 = inlined_call_operand.vmem [shape: f32[2,16,16,128], index: 1, kind: input, shape index: {}]
  %s2 = inlined_call_operand.hbm [shape: bf16[9,128,32], index: 2, kind: input, shape index: {}]
  %s3 = inlined_call_operand.vmem [shape: f32[1,32], index: 3, kind: input, shape index: {}, may-alias: {3,5}]
  %s4 = inlined_call_operand.hbm [shape: bf16[9,32,32], index: 4, kind: input, shape index: {}]
  %s5 = inlined_call_operand.vmem [shape: f32[1,32], index: 5, kind: input, shape index: {}, may-alias: {3,5}]
  %s6 = inlined_call_operand.hbm [shape: bf16[9,32,128], index: 6, kind: input, shape index: {}]
  %s7 = inlined_call_operand.vmem [shape: f32[1,128], index: 7, kind: input, shape index: {}]
  %s8 = inlined_call_operand.vmem [shape: f32[2,16,16,128], index: 8, kind: output, shape index: {}]
  %s9 = sld [smem:[#allocation0]]
  $region77: #{channel_reduction_forward.2} parent=0
    _
  %s11 = ssub.s32 1, %s9
  %s12 = scalar_select 0, %s11, %s9
  $region1: #{channel_reduction_forward.2} parent=0
    #allocation4 [shape = 'u8[294912]{0}', space=vmem, size = 0x48000, scoped, tag = 'input window, operand 2, single buffered']
    #allocation5 [shape = 's32[2]{0}', space=sflag, size = 0x8, scoped, tag = 'scoped memory for channel_reduction_forward.2']
    #allocation6 [shape = 'u8[73728]{0}', space=vmem, size = 0x12000, scoped, tag = 'input window, operand 4, single buffered']
    #allocation7 [shape = 's32[1]{0}', space=sflag, size = 0x4, scoped, tag = 'scoped memory for channel_reduction_forward.2']
    #allocation8 [shape = 'u8[73728]{0}', space=vmem, size = 0x12000, scoped, tag = 'input window, operand 6, single buffered']
    %13 = vsyncpa [#allocation5], 0
    %14 = vsyncpa [#allocation7], 0
    loop: start=0, step=1, limit=4
    $region2: #{channel_reduction_forward.2} parent=1 // loop_pre_header
      _
    $region3: #{channel_reduction_forward.2} parent=1 // loop_header
      %s16 = sphi 0, %s20
      %p17 = scmp.ge.s32.totalorder %s16, 4
      %s26 = sphi 0, %s28
      %s29 = sphi 0, %s26
      %s30 = sphi 0, %s29
      %s46 = sphi 0, %s30
      %s52 = sphi 0, %s54
      %s55 = sphi 0, %s52
      %s56 = sphi 0, %s55
      %s72 = sphi 0, %s56
      %s76 = sphi 0, %s76
      %s78 = sphi 0, %s76
      %s79 = sphi 0, %s78
      %s93 = sphi 0, %s79
      %s97 = sphi 0, %s97
      %s99 = sphi 0, %s97
      %s100 = sphi 0, %s99
      %s114 = sphi 0, %s100
      %s118 = sphi 0, %s118
      %s120 = sphi 0, %s118
      %s121 = sphi 0, %s120
      %s135 = sphi 0, %s121
      %s139 = sphi 0, %s139
      %s141 = sphi 0, %s139
      %s142 = sphi 0, %s141
      %s156 = sphi 0, %s142
      %s160 = sphi 0, %s160
      %s162 = sphi 0, %s160
      %s163 = sphi 0, %s162
      %s177 = sphi 0, %s163
      %s181 = sphi 0, %s181
      %s183 = sphi 0, %s181
      %s184 = sphi 0, %s183
      %s198 = sphi 0, %s184
      %s204 = sphi 0, %s206
      %s207 = sphi 0, %s204
      %s208 = sphi 0, %s207
      %s224 = sphi 0, %s208
    $region4: #{channel_reduction_forward.2} parent=1 // loop_header_branch
      %19 = sbr.rel (%p17) target = $region8
    $region5: #{channel_reduction_forward.2} parent=1 // loop_body
      %s21 = ssub.s32 %s16, 1
      %s22 = ssub.s32 %s16, 2
      %s23 = sadd.s32 %s16, 1
      %s24 = ssub.s32 %s16, %s23
      %p25 = scmp.eq.s32.totalorder %s24, 0
      %s27 = sadd.s32 %s26, 1
      %s28 = scalar_select %p25, %s26, %s27
      %p31 = pneg %p25
      %p32 = scmp.eq.s32.totalorder %s16, 1
      %p33 = por %p31, %p32
      %p34 = scmp.ne.s32.totalorder %s26, %s29
      %p35 = scmp.eq.s32.totalorder %s16, 0
      %p36 = por %p34, %p35
      %p37 = scmp.ne.s32.totalorder %s26, %s29
      %p38 = scmp.eq.s32.totalorder %s21, 1
      %p39 = por %p37, %p38
      %p40 = scmp.ne.s32.totalorder %s29, %s30
      %p41 = scmp.eq.s32.totalorder %s21, 0
      %p42 = por %p40, %p41
      %p43 = scmp.ne.s32.totalorder %s29, %s30
      %p44 = scmp.eq.s32.totalorder %s22, 1
      %p45 = por %p43, %p44
      %p47 = scmp.ne.s32.totalorder %s30, %s46
      %p48 = scmp.eq.s32.totalorder %s22, 0
      %p49 = por %p47, %p48
      %s50 = ssub.s32 %s16, %s23
      %p51 = scmp.eq.s32.totalorder %s50, 0
      %s53 = sadd.s32 %s52, 1
      %s54 = scalar_select %p51, %s52, %s53
      %p57 = pneg %p51
      %p58 = scmp.eq.s32.totalorder %s16, 1
      %p59 = por %p57, %p58
      %p60 = scmp.ne.s32.totalorder %s52, %s55
      %p61 = scmp.eq.s32.totalorder %s16, 0
      %p62 = por %p60, %p61
      %p63 = scmp.ne.s32.totalorder %s52, %s55
      %p64 = scmp.eq.s32.totalorder %s21, 1
      %p65 = por %p63, %p64
      %p66 = scmp.ne.s32.totalorder %s55, %s56
      %p67 = scmp.eq.s32.totalorder %s21, 0
      %p68 = por %p66, %p67
      %p69 = scmp.ne.s32.totalorder %s55, %s56
      %p70 = scmp.eq.s32.totalorder %s22, 1
      %p71 = por %p69, %p70
      %p73 = scmp.ne.s32.totalorder %s56, %s72
      %p74 = scmp.eq.s32.totalorder %s22, 0
      %p75 = por %p73, %p74
      %s77 = sadd.s32 %s76, 1
      %p80 = scmp.eq.s32.totalorder %s16, 1
      %p81 = scmp.ne.s32.totalorder %s76, %s78
      %p82 = scmp.eq.s32.totalorder %s16, 0
      %p83 = por %p81, %p82
      %p84 = scmp.ne.s32.totalorder %s76, %s78
      %p85 = scmp.eq.s32.totalorder %s21, 1
      %p86 = por %p84, %p85
      %p87 = scmp.ne.s32.totalorder %s78, %s79
      %p88 = scmp.eq.s32.totalorder %s21, 0
      %p89 = por %p87, %p88
      %p90 = scmp.ne.s32.totalorder %s78, %s79
      %p91 = scmp.eq.s32.totalorder %s22, 1
      %p92 = por %p90, %p91
      %p94 = scmp.ne.s32.totalorder %s79, %s93
      %p95 = scmp.eq.s32.totalorder %s22, 0
      %p96 = por %p94, %p95
      %s98 = sadd.s32 %s97, 1
      %p101 = scmp.eq.s32.totalorder %s16, 1
      %p102 = scmp.ne.s32.totalorder %s97, %s99
      %p103 = scmp.eq.s32.totalorder %s16, 0
      %p104 = por %p102, %p103
      %p105 = scmp.ne.s32.totalorder %s97, %s99
      %p106 = scmp.eq.s32.totalorder %s21, 1
      %p107 = por %p105, %p106
      %p108 = scmp.ne.s32.totalorder %s99, %s100
      %p109 = scmp.eq.s32.totalorder %s21, 0
      %p110 = por %p108, %p109
      %p111 = scmp.ne.s32.totalorder %s99, %s100
      %p112 = scmp.eq.s32.totalorder %s22, 1
      %p113 = por %p111, %p112
      %p115 = scmp.ne.s32.totalorder %s100, %s114
      %p116 = scmp.eq.s32.totalorder %s22, 0
      %p117 = por %p115, %p116
      %s119 = sadd.s32 %s118, 1
      %p122 = scmp.eq.s32.totalorder %s16, 1
      %p123 = scmp.ne.s32.totalorder %s118, %s120
      %p124 = scmp.eq.s32.totalorder %s16, 0
      %p125 = por %p123, %p124
      %p126 = scmp.ne.s32.totalorder %s118, %s120
      %p127 = scmp.eq.s32.totalorder %s21, 1
      %p128 = por %p126, %p127
      %p129 = scmp.ne.s32.totalorder %s120, %s121
      %p130 = scmp.eq.s32.totalorder %s21, 0
      %p131 = por %p129, %p130
      %p132 = scmp.ne.s32.totalorder %s120, %s121
      %p133 = scmp.eq.s32.totalorder %s22, 1
      %p134 = por %p132, %p133
      %p136 = scmp.ne.s32.totalorder %s121, %s135
      %p137 = scmp.eq.s32.totalorder %s22, 0
      %p138 = por %p136, %p137
      %s140 = sadd.s32 %s139, 1
      %p143 = scmp.eq.s32.totalorder %s16, 1
      %p144 = scmp.ne.s32.totalorder %s139, %s141
      %p145 = scmp.eq.s32.totalorder %s16, 0
      %p146 = por %p144, %p145
      %p147 = scmp.ne.s32.totalorder %s139, %s141
      %p148 = scmp.eq.s32.totalorder %s21, 1
      %p149 = por %p147, %p148
      %p150 = scmp.ne.s32.totalorder %s141, %s142
      %p151 = scmp.eq.s32.totalorder %s21, 0
      %p152 = por %p150, %p151
      %p153 = scmp.ne.s32.totalorder %s141, %s142
      %p154 = scmp.eq.s32.totalorder %s22, 1
      %p155 = por %p153, %p154
      %p157 = scmp.ne.s32.totalorder %s142, %s156
      %p158 = scmp.eq.s32.totalorder %s22, 0
      %p159 = por %p157, %p158
      %s161 = sadd.s32 %s160, 1
      %p164 = scmp.eq.s32.totalorder %s16, 1
      %p165 = scmp.ne.s32.totalorder %s160, %s162
      %p166 = scmp.eq.s32.totalorder %s16, 0
      %p167 = por %p165, %p166
      %p168 = scmp.ne.s32.totalorder %s160, %s162
      %p169 = scmp.eq.s32.totalorder %s21, 1
      %p170 = por %p168, %p169
      %p171 = scmp.ne.s32.totalorder %s162, %s163
      %p172 = scmp.eq.s32.totalorder %s21, 0
      %p173 = por %p171, %p172
      %p174 = scmp.ne.s32.totalorder %s162, %s163
      %p175 = scmp.eq.s32.totalorder %s22, 1
      %p176 = por %p174, %p175
      %p178 = scmp.ne.s32.totalorder %s163, %s177
      %p179 = scmp.eq.s32.totalorder %s22, 0
      %p180 = por %p178, %p179
      %s182 = sadd.s32 %s181, 1
      %p185 = scmp.eq.s32.totalorder %s16, 1
      %p186 = scmp.ne.s32.totalorder %s181, %s183
      %p187 = scmp.eq.s32.totalorder %s16, 0
      %p188 = por %p186, %p187
      %p189 = scmp.ne.s32.totalorder %s181, %s183
      %p190 = scmp.eq.s32.totalorder %s21, 1
      %p191 = por %p189, %p190
      %p192 = scmp.ne.s32.totalorder %s183, %s184
      %p193 = scmp.eq.s32.totalorder %s21, 0
      %p194 = por %p192, %p193
      %p195 = scmp.ne.s32.totalorder %s183, %s184
      %p196 = scmp.eq.s32.totalorder %s22, 1
      %p197 = por %p195, %p196
      %p199 = scmp.ne.s32.totalorder %s184, %s198
      %p200 = scmp.eq.s32.totalorder %s22, 0
      %p201 = por %p199, %p200
      %s202 = ssub.s32 %s16, %s23
      %p203 = scmp.eq.s32.totalorder %s202, 0
      %s205 = sadd.s32 %s204, 1
      %s206 = scalar_select %p203, %s204, %s205
      %p209 = pneg %p203
      %p210 = scmp.eq.s32.totalorder %s16, 1
      %p211 = por %p209, %p210
      %p212 = scmp.ne.s32.totalorder %s204, %s207
      %p213 = scmp.eq.s32.totalorder %s16, 0
      %p214 = por %p212, %p213
      %p215 = scmp.ne.s32.totalorder %s204, %s207
      %p216 = scmp.eq.s32.totalorder %s21, 1
      %p217 = por %p215, %p216
      %p218 = scmp.ne.s32.totalorder %s207, %s208
      %p219 = scmp.eq.s32.totalorder %s21, 0
      %p220 = por %p218, %p219
      %p221 = scmp.ne.s32.totalorder %s207, %s208
      %p222 = scmp.eq.s32.totalorder %s22, 1
      %p223 = por %p221, %p222
      %p225 = scmp.ne.s32.totalorder %s208, %s224
      %p226 = scmp.eq.s32.totalorder %s22, 0
      %p227 = por %p225, %p226
      %p228 = scmp.le.s32.totalorder 1, %s16
      %p229 = scmp.lt.s32.totalorder %s16, 3
      %p230 = pnand %p228, %p229
      %p231 = pneg %p230
      // Predicated region
      $region9: #{channel_reduction_forward.2} parent=5 // pred_check
        _
      $region10: #{channel_reduction_forward.2} parent=5 // pred_check_branch
        %233 = sbr.rel (%p230) target = $region12
      $region11: #{channel_reduction_forward.2} parent=5 // pred_region
        %s234 = ssub.s32 %s16, 1
        // Predicated region
        $region13: #{channel_reduction_forward.2} parent=11 // pred_check
          %p235 = pneg %p89
        $region14: #{channel_reduction_forward.2} parent=11 // pred_check_branch
          %237 = sbr.rel (%p235) target = $region16
        $region15: #{channel_reduction_forward.2} parent=11 // pred_region
          %s239 = ssub.s32 9216, 9216
          %240 = vsyncadd [#allocation5], %s239
          %s241 = sshll.u32 [#allocation4], 4
          %s242 = int_to_ptr.vmem [resolvable:$true] %s241
          %247 = dma.hbm_to_vmem [thread:$0]  %s2, 9216, %s242, [#allocation5], 64, 64, 4
        $region16: #{channel_reduction_forward.2} parent=11 // pred_fallthru
          _
        // Predicated region
        $region17: #{channel_reduction_forward.2} parent=11 // pred_check
          %p248 = pneg %p110
        $region18: #{channel_reduction_forward.2} parent=11 // pred_check_branch
          %250 = sbr.rel (%p248) target = $region20
        $region19: #{channel_reduction_forward.2} parent=11 // pred_region
          _
        $region20: #{channel_reduction_forward.2} parent=11 // pred_fallthru
          _
        // Predicated region
        $region21: #{channel_reduction_forward.2} parent=11 // pred_check
          %p251 = pneg %p131
        $region22: #{channel_reduction_forward.2} parent=11 // pred_check_branch
          %253 = sbr.rel (%p251) target = $region24
        $region23: #{channel_reduction_forward.2} parent=11 // pred_region
          %s255 = ssub.s32 2304, 2304
          %256 = vsyncadd [#allocation7], %s255
          %s257 = sshll.u32 [#allocation6], 4
          %s258 = int_to_ptr.vmem [resolvable:$true] %s257
          %263 = dma.hbm_to_vmem [thread:$0]  %s4, 2304, %s258, [#allocation7], 64, 64, 4
        $region24: #{channel_reduction_forward.2} parent=11 // pred_fallthru
          _
        // Predicated region
        $region25: #{channel_reduction_forward.2} parent=11 // pred_check
          %p264 = pneg %p152
        $region26: #{channel_reduction_forward.2} parent=11 // pred_check_branch
          %266 = sbr.rel (%p264) target = $region28
        $region27: #{channel_reduction_forward.2} parent=11 // pred_region
          _
        $region28: #{channel_reduction_forward.2} parent=11 // pred_fallthru
          _
        // Predicated region
        $region29: #{channel_reduction_forward.2} parent=11 // pred_check
          %p267 = pneg %p173
        $region30: #{channel_reduction_forward.2} parent=11 // pred_check_branch
          %269 = sbr.rel (%p267) target = $region32
        $region31: #{channel_reduction_forward.2} parent=11 // pred_region
          %s271 = ssub.s32 2304, 2304
          %272 = vsyncadd [#allocation7], %s271
          %s273 = sshll.u32 [#allocation8], 4
          %s274 = int_to_ptr.vmem [resolvable:$true] %s273
          %279 = dma.hbm_to_vmem [thread:$0]  %s6, 2304, %s274, [#allocation7], 64, 64, 4
        $region32: #{channel_reduction_forward.2} parent=11 // pred_fallthru
          _
        // Predicated region
        $region33: #{channel_reduction_forward.2} parent=11 // pred_check
          %p280 = pneg %p194
        $region34: #{channel_reduction_forward.2} parent=11 // pred_check_branch
          %282 = sbr.rel (%p280) target = $region36
        $region35: #{channel_reduction_forward.2} parent=11 // pred_region
          _
        $region36: #{channel_reduction_forward.2} parent=11 // pred_fallthru
          _
      $region12: #{channel_reduction_forward.2} parent=5 // pred_fallthru
        _
      %p283 = scmp.lt.s32.totalorder %s16, 2
      // Predicated region
      $region37: #{channel_reduction_forward.2} parent=5 // pred_check
        %p284 = pneg %p283
      $region38: #{channel_reduction_forward.2} parent=5 // pred_check_branch
        %286 = sbr.rel (%p284) target = $region40
      $region39: #{channel_reduction_forward.2} parent=5 // pred_region
        // Predicated region
        $region41: #{channel_reduction_forward.2} parent=39 // pred_check
          %p287 = pneg %p36
        $region42: #{channel_reduction_forward.2} parent=39 // pred_check_branch
          %289 = sbr.rel (%p287) target = $region44
        $region43: #{channel_reduction_forward.2} parent=39 // pred_region
          %p290 = scmp.lt.s32.totalorder %s16, 1
          %s291 = scalar_select %p290, %s16, 1
          %s292 = smul.addr %s291, 32
          %s293 = smul.addr %s292, 8
          %s294 = scalar_lea.vmem %s0, %s293
        $region44: #{channel_reduction_forward.2} parent=39 // pred_fallthru
          _
        // Predicated region
        $region45: #{channel_reduction_forward.2} parent=39 // pred_check
          %p295 = pneg %p62
        $region46: #{channel_reduction_forward.2} parent=39 // pred_check_branch
          %297 = sbr.rel (%p295) target = $region48
        $region47: #{channel_reduction_forward.2} parent=39 // pred_region
          %p298 = scmp.lt.s32.totalorder %s16, 1
          %s299 = scalar_select %p298, %s16, 1
          %s300 = smul.addr %s299, 32
          %s301 = smul.addr %s300, 8
          %s302 = scalar_lea.vmem %s1, %s301
        $region48: #{channel_reduction_forward.2} parent=39 // pred_fallthru
          _
      $region40: #{channel_reduction_forward.2} parent=5 // pred_fallthru
        _
      %p303 = scmp.le.s32.totalorder 1, %s16
      %p304 = scmp.lt.s32.totalorder %s16, 3
      %p305 = pnand %p303, %p304
      %p306 = pneg %p305
      // Predicated region
      $region49: #{channel_reduction_forward.2} parent=5 // pred_check
        _
      $region50: #{channel_reduction_forward.2} parent=5 // pred_check_branch
        %308 = sbr.rel (%p305) target = $region52
      $region51: #{channel_reduction_forward.2} parent=5 // pred_region
        %s309 = ssub.s32 %s16, 1
        // Predicated region
        $region53: #{channel_reduction_forward.2} parent=51 // pred_check
          %p310 = pneg %p89
        $region54: #{channel_reduction_forward.2} parent=51 // pred_check_branch
          %312 = sbr.rel (%p310) target = $region56
        $region55: #{channel_reduction_forward.2} parent=51 // pred_region
          %313 = dma.done [#allocation5], 9216
        $region56: #{channel_reduction_forward.2} parent=51 // pred_fallthru
          _
        // Predicated region
        $region57: #{channel_reduction_forward.2} parent=51 // pred_check
          %p314 = pneg %p131
        $region58: #{channel_reduction_forward.2} parent=51 // pred_check_branch
          %316 = sbr.rel (%p314) target = $region60
        $region59: #{channel_reduction_forward.2} parent=51 // pred_region
          %317 = dma.done [#allocation7], 2304
        $region60: #{channel_reduction_forward.2} parent=51 // pred_fallthru
          _
        // Predicated region
        $region61: #{channel_reduction_forward.2} parent=51 // pred_check
          %p318 = pneg %p173
        $region62: #{channel_reduction_forward.2} parent=51 // pred_check_branch
          %320 = sbr.rel (%p318) target = $region64
        $region63: #{channel_reduction_forward.2} parent=51 // pred_region
          %321 = dma.done [#allocation7], 2304
        $region64: #{channel_reduction_forward.2} parent=51 // pred_fallthru
          _
        %p322 = scmp.lt.s32.totalorder %s21, 1
        %s323 = scalar_select %p322, %s21, 1
        %s324 = smul.addr %s323, 32
        %s325 = smul.addr %s324, 8
        %s326 = scalar_lea.vmem %s0, %s325
        %p327 = pneg %p42
        %p328 = pneg %p39
        %p329 = scmp.lt.s32.totalorder %s21, 1
        %s330 = scalar_select %p329, %s21, 1
        %s331 = smul.addr %s330, 32
        %s332 = smul.addr %s331, 8
        %s333 = scalar_lea.vmem %s1, %s332
        %p334 = pneg %p68
        %p335 = pneg %p65
        %p336 = pneg %p89
        %p337 = pneg %p86
        %p338 = pneg %p110
        %p339 = pneg %p107
        %p340 = pneg %p131
        %p341 = pneg %p128
        %p342 = pneg %p152
        %p343 = pneg %p149
        %p344 = pneg %p173
        %p345 = pneg %p170
        %p346 = pneg %p194
        %p347 = pneg %p191
        %p348 = pneg %p220
        %p349 = pneg %p217
        %p350 = scmp.lt.s32.totalorder %s21, 1
        %s351 = scalar_select %p350, %s21, 1
        %s352 = smul.addr %s351, 32
        %s353 = smul.addr %s352, 8
        %s354 = scalar_lea.vmem %s8, %s353
        %p355 = scmp.lt.s32.totalorder %s21, 1
        %s356 = scalar_select %p355, %s21, 1
        %s357 = smul.addr %s356, 32
        %s358 = smul.addr %s357, 8
        %s359 = scalar_lea.vmem %s0, %s358
        %p360 = scmp.lt.s32.totalorder %s21, 1
        %s361 = scalar_select %p360, %s21, 1
        %s362 = smul.addr %s361, 32
        %s363 = smul.addr %s362, 8
        %s364 = scalar_lea.vmem %s1, %s363
        %p365 = scmp.lt.s32.totalorder %s21, 1
        %s366 = scalar_select %p365, %s21, 1
        %s367 = smul.addr %s366, 32
        %s368 = smul.addr %s367, 8
        %s369 = scalar_lea.vmem %s8, %s368
        %v371 = vld [vmem:[%s364] sm:$0xff]
        %v372 = vld [vmem:[%s364 + $0x8] sm:$0xff]
        %v373 = vld [vmem:[%s364 + $0x10] sm:$0xff]
        %v374 = vld [vmem:[%s364 + $0x18] sm:$0xff]
        %v375 = vld [vmem:[%s364 + $0x20] sm:$0xff]
        %v376 = vld [vmem:[%s364 + $0x28] sm:$0xff]
        %v377 = vld [vmem:[%s364 + $0x30] sm:$0xff]
        %v378 = vld [vmem:[%s364 + $0x38] sm:$0xff]
        %v379 = vld [vmem:[%s364 + $0x40] sm:$0xff]
        %v380 = vld [vmem:[%s364 + $0x48] sm:$0xff]
        %v381 = vld [vmem:[%s364 + $0x50] sm:$0xff]
        %v382 = vld [vmem:[%s364 + $0x58] sm:$0xff]
        %v383 = vld [vmem:[%s364 + $0x60] sm:$0xff]
        %v384 = vld [vmem:[%s364 + $0x68] sm:$0xff]
        %v385 = vld [vmem:[%s364 + $0x70] sm:$0xff]
        %v386 = vld [vmem:[%s364 + $0x78] sm:$0xff]
        %v387 = vld [vmem:[%s364 + $0x80] sm:$0xff]
        %v388 = vld [vmem:[%s364 + $0x88] sm:$0xff]
        %v389 = vld [vmem:[%s364 + $0x90] sm:$0xff]
        %v390 = vld [vmem:[%s364 + $0x98] sm:$0xff]
        %v391 = vld [vmem:[%s364 + $0xa0] sm:$0xff]
        %v392 = vld [vmem:[%s364 + $0xa8] sm:$0xff]
        %v393 = vld [vmem:[%s364 + $0xb0] sm:$0xff]
        %v394 = vld [vmem:[%s364 + $0xb8] sm:$0xff]
        %v395 = vld [vmem:[%s364 + $0xc0] sm:$0xff]
        %v396 = vld [vmem:[%s364 + $0xc8] sm:$0xff]
        %v397 = vld [vmem:[%s364 + $0xd0] sm:$0xff]
        %v398 = vld [vmem:[%s364 + $0xd8] sm:$0xff]
        %v399 = vld [vmem:[%s364 + $0xe0] sm:$0xff]
        %v400 = vld [vmem:[%s364 + $0xe8] sm:$0xff]
        %v401 = vld [vmem:[%s364 + $0xf0] sm:$0xff]
        %v402 = vld [vmem:[%s364 + $0xf8] sm:$0xff]
        %s403 = scalar_lea.vmem [#allocation2], 24
        %404 = vst [vmem:[%s403 + $0x1] sm:$0xff] %v371
        %405 = vst [vmem:[%s403 + $0x9] sm:$0xff] %v372
        %406 = vst [vmem:[%s403 + $0x19] sm:$0xff] %v373
        %407 = vst [vmem:[%s403 + $0x21] sm:$0xff] %v374
        %408 = vst [vmem:[%s403 + $0x31] sm:$0xff] %v375
        %409 = vst [vmem:[%s403 + $0x39] sm:$0xff] %v376
        %410 = vst [vmem:[%s403 + $0x49] sm:$0xff] %v377
        %411 = vst [vmem:[%s403 + $0x51] sm:$0xff] %v378
        %412 = vst [vmem:[%s403 + $0x61] sm:$0xff] %v379
        %413 = vst [vmem:[%s403 + $0x69] sm:$0xff] %v380
        %414 = vst [vmem:[%s403 + $0x79] sm:$0xff] %v381
        %415 = vst [vmem:[%s403 + $0x81] sm:$0xff] %v382
        %416 = vst [vmem:[%s403 + $0x91] sm:$0xff] %v383
        %417 = vst [vmem:[%s403 + $0x99] sm:$0xff] %v384
        %418 = vst [vmem:[%s403 + $0xa9] sm:$0xff] %v385
        %419 = vst [vmem:[%s403 + $0xb1] sm:$0xff] %v386
        %420 = vst [vmem:[%s403 + $0xc1] sm:$0xff] %v387
        %421 = vst [vmem:[%s403 + $0xc9] sm:$0xff] %v388
        %422 = vst [vmem:[%s403 + $0xd9] sm:$0xff] %v389
        %423 = vst [vmem:[%s403 + $0xe1] sm:$0xff] %v390
        %424 = vst [vmem:[%s403 + $0xf1] sm:$0xff] %v391
        %425 = vst [vmem:[%s403 + $0xf9] sm:$0xff] %v392
        %426 = vst [vmem:[%s403 + $0x109] sm:$0xff] %v393
        %427 = vst [vmem:[%s403 + $0x111] sm:$0xff] %v394
        %428 = vst [vmem:[%s403 + $0x121] sm:$0xff] %v395
        %429 = vst [vmem:[%s403 + $0x129] sm:$0xff] %v396
        %430 = vst [vmem:[%s403 + $0x139] sm:$0xff] %v397
        %431 = vst [vmem:[%s403 + $0x141] sm:$0xff] %v398
        %432 = vst [vmem:[%s403 + $0x151] sm:$0xff] %v399
        %433 = vst [vmem:[%s403 + $0x159] sm:$0xff] %v400
        %434 = vst [vmem:[%s403 + $0x169] sm:$0xff] %v401
        %435 = vst [vmem:[%s403 + $0x171] sm:$0xff] %v402
        %436 = vst [vmem:[#allocation2 + $0x1] sm:$0xff] %v373
        %437 = vst [vmem:[#allocation2 + $0x9] sm:$0xff] %v374
        %s438 = scalar_lea.vmem [#allocation2], 408
        %439 = vst [vmem:[%s438 + $0x1] sm:$0xff] %v399
        %440 = vst [vmem:[%s438 + $0x9] sm:$0xff] %v400
        %v441 = vld [vmem:[#allocation2 + $0x2] sm:$0x1]
        %v442 = vld [vmem:[#allocation2 + $0x1a] sm:$0x1]
        %v443 = vld [vmem:[#allocation2 + $0x32] sm:$0x1]
        %v444 = vld [vmem:[#allocation2 + $0x4a] sm:$0x1]
        %v445 = vld [vmem:[#allocation2 + $0x62] sm:$0x1]
        %v446 = vld [vmem:[#allocation2 + $0x7a] sm:$0x1]
        %v447 = vld [vmem:[#allocation2 + $0x92] sm:$0x1]
        %v448 = vld [vmem:[#allocation2 + $0xaa] sm:$0x1]
        %v449 = vld [vmem:[#allocation2 + $0xc2] sm:$0x1]
        %v450 = vld [vmem:[#allocation2 + $0xda] sm:$0x1]
        %v451 = vld [vmem:[#allocation2 + $0xf2] sm:$0x1]
        %v452 = vld [vmem:[#allocation2 + $0x10a] sm:$0x1]
        %v453 = vld [vmem:[#allocation2 + $0x122] sm:$0x1]
        %v454 = vld [vmem:[#allocation2 + $0x13a] sm:$0x1]
        %v455 = vld [vmem:[#allocation2 + $0x152] sm:$0x1]
        %v456 = vld [vmem:[#allocation2 + $0x16a] sm:$0x1]
        %v457 = vld [vmem:[#allocation2 + $0x182] sm:$0x1]
        %v458 = vld [vmem:[#allocation2 + $0x19a] sm:$0x1]
        %459 = vst [vmem:[#allocation2] sm:$0x1] %v441
        %460 = vst [vmem:[#allocation2 + $0x18] sm:$0x1] %v442
        %461 = vst [vmem:[#allocation2 + $0x30] sm:$0x1] %v443
        %462 = vst [vmem:[#allocation2 + $0x48] sm:$0x1] %v444
        %463 = vst [vmem:[#allocation2 + $0x60] sm:$0x1] %v445
        %464 = vst [vmem:[#allocation2 + $0x78] sm:$0x1] %v446
        %465 = vst [vmem:[#allocation2 + $0x90] sm:$0x1] %v447
        %466 = vst [vmem:[#allocation2 + $0xa8] sm:$0x1] %v448
        %467 = vst [vmem:[#allocation2 + $0xc0] sm:$0x1] %v449
        %468 = vst [vmem:[#allocation2 + $0xd8] sm:$0x1] %v450
        %469 = vst [vmem:[#allocation2 + $0xf0] sm:$0x1] %v451
        %470 = vst [vmem:[#allocation2 + $0x108] sm:$0x1] %v452
        %471 = vst [vmem:[#allocation2 + $0x120] sm:$0x1] %v453
        %472 = vst [vmem:[#allocation2 + $0x138] sm:$0x1] %v454
        %473 = vst [vmem:[#allocation2 + $0x150] sm:$0x1] %v455
        %474 = vst [vmem:[#allocation2 + $0x168] sm:$0x1] %v456
        %475 = vst [vmem:[#allocation2 + $0x180] sm:$0x1] %v457
        %476 = vst [vmem:[#allocation2 + $0x198] sm:$0x1] %v458
        %v477 = vld [vmem:[#allocation2 + $0xf] sm:$0x1]
        %v478 = vld [vmem:[#allocation2 + $0x27] sm:$0x1]
        %v479 = vld [vmem:[#allocation2 + $0x3f] sm:$0x1]
        %v480 = vld [vmem:[#allocation2 + $0x57] sm:$0x1]
        %v481 = vld [vmem:[#allocation2 + $0x6f] sm:$0x1]
        %v482 = vld [vmem:[#allocation2 + $0x87] sm:$0x1]
        %v483 = vld [vmem:[#allocation2 + $0x9f] sm:$0x1]
        %v484 = vld [vmem:[#allocation2 + $0xb7] sm:$0x1]
        %v485 = vld [vmem:[#allocation2 + $0xcf] sm:$0x1]
        %v486 = vld [vmem:[#allocation2 + $0xe7] sm:$0x1]
        %v487 = vld [vmem:[#allocation2 + $0xff] sm:$0x1]
        %v488 = vld [vmem:[#allocation2 + $0x117] sm:$0x1]
        %v489 = vld [vmem:[#allocation2 + $0x12f] sm:$0x1]
        %v490 = vld [vmem:[#allocation2 + $0x147] sm:$0x1]
        %v491 = vld [vmem:[#allocation2 + $0x15f] sm:$0x1]
        %v492 = vld [vmem:[#allocation2 + $0x177] sm:$0x1]
        %v493 = vld [vmem:[#allocation2 + $0x18f] sm:$0x1]
        %v494 = vld [vmem:[#allocation2 + $0x1a7] sm:$0x1]
        %495 = vst [vmem:[#allocation2 + $0x11] sm:$0x1] %v477
        %496 = vst [vmem:[#allocation2 + $0x29] sm:$0x1] %v478
        %497 = vst [vmem:[#allocation2 + $0x41] sm:$0x1] %v479
        %498 = vst [vmem:[#allocation2 + $0x59] sm:$0x1] %v480
        %499 = vst [vmem:[#allocation2 + $0x71] sm:$0x1] %v481
        %500 = vst [vmem:[#allocation2 + $0x89] sm:$0x1] %v482
        %501 = vst [vmem:[#allocation2 + $0xa1] sm:$0x1] %v483
        %502 = vst [vmem:[#allocation2 + $0xb9] sm:$0x1] %v484
        %503 = vst [vmem:[#allocation2 + $0xd1] sm:$0x1] %v485
        %504 = vst [vmem:[#allocation2 + $0xe9] sm:$0x1] %v486
        %505 = vst [vmem:[#allocation2 + $0x101] sm:$0x1] %v487
        %506 = vst [vmem:[#allocation2 + $0x119] sm:$0x1] %v488
        %507 = vst [vmem:[#allocation2 + $0x131] sm:$0x1] %v489
        %508 = vst [vmem:[#allocation2 + $0x149] sm:$0x1] %v490
        %509 = vst [vmem:[#allocation2 + $0x161] sm:$0x1] %v491
        %510 = vst [vmem:[#allocation2 + $0x179] sm:$0x1] %v492
        %511 = vst [vmem:[#allocation2 + $0x191] sm:$0x1] %v493
        %512 = vst [vmem:[#allocation2 + $0x1a9] sm:$0x1] %v494
        %v513 = vld [vmem:[#allocation2] sm:$0xff]
        %v514 = vld [vmem:[#allocation2 + $0x8] sm:$0xff]
        %v515 = vld [vmem:[#allocation2 + $0x18] sm:$0xff]
        %v516 = vld [vmem:[#allocation2 + $0x20] sm:$0xff]
        %v517 = vld [vmem:[#allocation2 + $0x30] sm:$0xff]
        %v518 = vld [vmem:[#allocation2 + $0x38] sm:$0xff]
        %v519 = vld [vmem:[#allocation2 + $0x48] sm:$0xff]
        %v520 = vld [vmem:[#allocation2 + $0x50] sm:$0xff]
        %v521 = vld [vmem:[#allocation2 + $0x60] sm:$0xff]
        %v522 = vld [vmem:[#allocation2 + $0x68] sm:$0xff]
        %v523 = vld [vmem:[#allocation2 + $0x78] sm:$0xff]
        %v524 = vld [vmem:[#allocation2 + $0x80] sm:$0xff]
        %v525 = vld [vmem:[#allocation2 + $0x90] sm:$0xff]
        %v526 = vld [vmem:[#allocation2 + $0x98] sm:$0xff]
        %v527 = vld [vmem:[#allocation2 + $0xa8] sm:$0xff]
        %v528 = vld [vmem:[#allocation2 + $0xb0] sm:$0xff]
        %v529 = vld [vmem:[#allocation2 + $0xc0] sm:$0xff]
        %v530 = vld [vmem:[#allocation2 + $0xc8] sm:$0xff]
        %v531 = vld [vmem:[#allocation2 + $0xd8] sm:$0xff]
        %v532 = vld [vmem:[#allocation2 + $0xe0] sm:$0xff]
        %v533 = vld [vmem:[#allocation2 + $0xf0] sm:$0xff]
        %v534 = vld [vmem:[#allocation2 + $0xf8] sm:$0xff]
        %v535 = vld [vmem:[#allocation2 + $0x108] sm:$0xff]
        %v536 = vld [vmem:[#allocation2 + $0x110] sm:$0xff]
        %v537 = vld [vmem:[#allocation2 + $0x120] sm:$0xff]
        %v538 = vld [vmem:[#allocation2 + $0x128] sm:$0xff]
        %v539 = vld [vmem:[#allocation2 + $0x138] sm:$0xff]
        %v540 = vld [vmem:[#allocation2 + $0x140] sm:$0xff]
        %v541 = vld [vmem:[#allocation2 + $0x150] sm:$0xff]
        %v542 = vld [vmem:[#allocation2 + $0x158] sm:$0xff]
        %v543 = vld [vmem:[#allocation2 + $0x168] sm:$0xff]
        %v544 = vld [vmem:[#allocation2 + $0x170] sm:$0xff]
        %v545 = vpack.c.bf16 %v514, %v513
        %v546 = vpack.c.bf16 %v516, %v515
        %v547 = vpack.c.bf16 %v518, %v517
        %v548 = vpack.c.bf16 %v520, %v519
        %v549 = vpack.c.bf16 %v522, %v521
        %v550 = vpack.c.bf16 %v524, %v523
        %v551 = vpack.c.bf16 %v526, %v525
        %v552 = vpack.c.bf16 %v528, %v527
        %v553 = vpack.c.bf16 %v530, %v529
        %v554 = vpack.c.bf16 %v532, %v531
        %v555 = vpack.c.bf16 %v534, %v533
        %v556 = vpack.c.bf16 %v536, %v535
        %v557 = vpack.c.bf16 %v538, %v537
        %v558 = vpack.c.bf16 %v540, %v539
        %v559 = vpack.c.bf16 %v542, %v541
        %v560 = vpack.c.bf16 %v544, %v543
        %v561 = vld [vmem:[#allocation4] sm:$0xf]
        %v562 = vld [vmem:[#allocation4 + $0x4] sm:$0xf]
        %v563 = vld [vmem:[#allocation4 + $0x8] sm:$0xf]
        %v564 = vld [vmem:[#allocation4 + $0xc] sm:$0xf]
        %v565 = vld [vmem:[#allocation4 + $0x10] sm:$0xf]
        %v566 = vld [vmem:[#allocation4 + $0x14] sm:$0xf]
        %v567 = vld [vmem:[#allocation4 + $0x18] sm:$0xf]
        %v568 = vld [vmem:[#allocation4 + $0x1c] sm:$0xf]
        %v569 = vld [vmem:[#allocation4 + $0x20] sm:$0xf]
        %v570 = vld [vmem:[#allocation4 + $0x24] sm:$0xf]
        %v571 = vld [vmem:[#allocation4 + $0x28] sm:$0xf]
        %v572 = vld [vmem:[#allocation4 + $0x2c] sm:$0xf]
        %v573 = vld [vmem:[#allocation4 + $0x30] sm:$0xf]
        %v574 = vld [vmem:[#allocation4 + $0x34] sm:$0xf]
        %v575 = vld [vmem:[#allocation4 + $0x38] sm:$0xf]
        %v576 = vld [vmem:[#allocation4 + $0x3c] sm:$0xf]
        %v577 = vld [vmem:[#allocation2 + $0x1] sm:$0xff]
        %v578 = vld [vmem:[#allocation2 + $0x9] sm:$0xff]
        %v579 = vld [vmem:[#allocation2 + $0x19] sm:$0xff]
        %v580 = vld [vmem:[#allocation2 + $0x21] sm:$0xff]
        %v581 = vld [vmem:[#allocation2 + $0x31] sm:$0xff]
        %v582 = vld [vmem:[#allocation2 + $0x39] sm:$0xff]
        %v583 = vld [vmem:[#allocation2 + $0x49] sm:$0xff]
        %v584 = vld [vmem:[#allocation2 + $0x51] sm:$0xff]
        %v585 = vld [vmem:[#allocation2 + $0x61] sm:$0xff]
        %v586 = vld [vmem:[#allocation2 + $0x69] sm:$0xff]
        %v587 = vld [vmem:[#allocation2 + $0x79] sm:$0xff]
        %v588 = vld [vmem:[#allocation2 + $0x81] sm:$0xff]
        %v589 = vld [vmem:[#allocation2 + $0x91] sm:$0xff]
        %v590 = vld [vmem:[#allocation2 + $0x99] sm:$0xff]
        %v591 = vld [vmem:[#allocation2 + $0xa9] sm:$0xff]
        %v592 = vld [vmem:[#allocation2 + $0xb1] sm:$0xff]
        %v593 = vld [vmem:[#allocation2 + $0xc1] sm:$0xff]
        %v594 = vld [vmem:[#allocation2 + $0xc9] sm:$0xff]
        %v595 = vld [vmem:[#allocation2 + $0xd9] sm:$0xff]
        %v596 = vld [vmem:[#allocation2 + $0xe1] sm:$0xff]
        %v597 = vld [vmem:[#allocation2 + $0xf1] sm:$0xff]
        %v598 = vld [vmem:[#allocation2 + $0xf9] sm:$0xff]
        %v599 = vld [vmem:[#allocation2 + $0x109] sm:$0xff]
        %v600 = vld [vmem:[#allocation2 + $0x111] sm:$0xff]
        %v601 = vld [vmem:[#allocation2 + $0x121] sm:$0xff]
        %v602 = vld [vmem:[#allocation2 + $0x129] sm:$0xff]
        %v603 = vld [vmem:[#allocation2 + $0x139] sm:$0xff]
        %v604 = vld [vmem:[#allocation2 + $0x141] sm:$0xff]
        %v605 = vld [vmem:[#allocation2 + $0x151] sm:$0xff]
        %v606 = vld [vmem:[#allocation2 + $0x159] sm:$0xff]
        %v607 = vld [vmem:[#allocation2 + $0x169] sm:$0xff]
        %v608 = vld [vmem:[#allocation2 + $0x171] sm:$0xff]
        %v609 = vpack.c.bf16 %v578, %v577
        %v610 = vpack.c.bf16 %v580, %v579
        %v611 = vpack.c.bf16 %v582, %v581
        %v612 = vpack.c.bf16 %v584, %v583
        %v613 = vpack.c.bf16 %v586, %v585
        %v614 = vpack.c.bf16 %v588, %v587
        %v615 = vpack.c.bf16 %v590, %v589
        %v616 = vpack.c.bf16 %v592, %v591
        %v617 = vpack.c.bf16 %v594, %v593
        %v618 = vpack.c.bf16 %v596, %v595
        %v619 = vpack.c.bf16 %v598, %v597
        %v620 = vpack.c.bf16 %v600, %v599
        %v621 = vpack.c.bf16 %v602, %v601
        %v622 = vpack.c.bf16 %v604, %v603
        %v623 = vpack.c.bf16 %v606, %v605
        %v624 = vpack.c.bf16 %v608, %v607
        %s625 = scalar_lea.vmem [#allocation4], 64
        %v626 = vld [vmem:[%s625] sm:$0xf]
        %v627 = vld [vmem:[%s625 + $0x4] sm:$0xf]
        %v628 = vld [vmem:[%s625 + $0x8] sm:$0xf]
        %v629 = vld [vmem:[%s625 + $0xc] sm:$0xf]
        %v630 = vld [vmem:[%s625 + $0x10] sm:$0xf]
        %v631 = vld [vmem:[%s625 + $0x14] sm:$0xf]
        %v632 = vld [vmem:[%s625 + $0x18] sm:$0xf]
        %v633 = vld [vmem:[%s625 + $0x1c] sm:$0xf]
        %v634 = vld [vmem:[%s625 + $0x20] sm:$0xf]
        %v635 = vld [vmem:[%s625 + $0x24] sm:$0xf]
        %v636 = vld [vmem:[%s625 + $0x28] sm:$0xf]
        %v637 = vld [vmem:[%s625 + $0x2c] sm:$0xf]
        %v638 = vld [vmem:[%s625 + $0x30] sm:$0xf]
        %v639 = vld [vmem:[%s625 + $0x34] sm:$0xf]
        %v640 = vld [vmem:[%s625 + $0x38] sm:$0xf]
        %v641 = vld [vmem:[%s625 + $0x3c] sm:$0xf]
        %v658 = vunpack.c.l.b16 %v626
        %v659 = vunpack.c.l.b16 %v627
        %v660 = vunpack.c.l.b16 %v628
        %v661 = vunpack.c.l.b16 %v629
        %v662 = vunpack.c.l.b16 %v630
        %v663 = vunpack.c.l.b16 %v631
        %v664 = vunpack.c.l.b16 %v632
        %v665 = vunpack.c.l.b16 %v633
        %v666 = vunpack.c.l.b16 %v634
        %v667 = vunpack.c.l.b16 %v635
        %v668 = vunpack.c.l.b16 %v636
        %v669 = vunpack.c.l.b16 %v637
        %v670 = vunpack.c.l.b16 %v638
        %v671 = vunpack.c.l.b16 %v639
        %v672 = vunpack.c.l.b16 %v640
        %v673 = vunpack.c.l.b16 %v641
        %v674 = vpack.c.b16 %v659, %v658
        %v675 = vpack.c.b16 %v661, %v660
        %v676 = vpack.c.b16 %v663, %v662
        %v677 = vpack.c.b16 %v665, %v664
        %v678 = vpack.c.b16 %v667, %v666
        %v679 = vpack.c.b16 %v669, %v668
        %v680 = vpack.c.b16 %v671, %v670
        %v681 = vpack.c.b16 %v673, %v672
        %690 = vmatprep.subr.bf16.mxu0 0
        %691 = vmatpush1.bf16.msra.mxu0 %v674
        %692 = vmatprep.subr.bf16.mxu0 0
        %693 = vmatpush1.bf16.msra.mxu0 %v675
        %694 = vmatprep.subr.bf16.mxu0 0
        %695 = vmatpush1.bf16.msra.mxu0 %v676
        %696 = vmatprep.subr.bf16.mxu0 0
        %697 = vmatpush1.bf16.msra.mxu0 %v677
        %698 = vmatprep.subr.bf16.mxu0 0
        %699 = vmatpush1.bf16.msra.mxu0 %v678
        %700 = vmatprep.subr.bf16.mxu0 0
        %701 = vmatpush1.bf16.msra.mxu0 %v679
        %702 = vmatprep.subr.bf16.mxu0 0
        %703 = vmatpush1.bf16.msra.mxu0 %v680
        %704 = vmatprep.subr.bf16.mxu0 0
        %705 = vmatpush1.bf16.msra.mxu0 %v681
        %706 = vmatprep.subr.bf16.mxu0 0
        %707 = vmatpush1.bf16.msra.mxu0 0
        %708 = vmatprep.subr.bf16.mxu0 0
        %709 = vmatpush1.bf16.msra.mxu0 0
        %710 = vmatprep.subr.bf16.mxu0 0
        %711 = vmatpush1.bf16.msra.mxu0 0
        %712 = vmatprep.subr.bf16.mxu0 0
        %713 = vmatpush1.bf16.msra.mxu0 0
        %714 = vmatprep.subr.bf16.mxu0 0
        %715 = vmatpush1.bf16.msra.mxu0 0
        %716 = vmatprep.subr.bf16.mxu0 0
        %717 = vmatpush1.bf16.msra.mxu0 0
        %718 = vmatprep.subr.bf16.mxu0 0
        %719 = vmatpush1.bf16.msra.mxu0 0
        %720 = vmatprep.subr.bf16.mxu0 0
        %721 = vmatpush1.bf16.msra.mxu0 0
        %722 = vmatprep.mubr.bf16.mxu0 0
        %723 = vmatmul.mubr.bf16.gmra.mrb[0].mxu0 %v609
        %v724 = vpop.f32.mrb[0].mxu0
        %v725 = vadd.f32 0.0, %v724
        %v726 = vpop.f32.mrb[0].mxu0
        %v727 = vpop.f32.mrb[0].mxu0
        %v728 = vadd.f32 0.0, %v727
        %v729 = vpop.f32.mrb[0].mxu0
        %730 = vmatprep.mubr.bf16.mxu0 0
        %731 = vmatmul.mubr.bf16.gmra.mrb[0].mxu0 %v610
        %v732 = vpop.f32.mrb[0].mxu0
        %v733 = vadd.f32 0.0, %v732
        %v734 = vpop.f32.mrb[0].mxu0
        %v735 = vpop.f32.mrb[0].mxu0
        %v736 = vadd.f32 0.0, %v735
        %v737 = vpop.f32.mrb[0].mxu0
        %738 = vmatprep.mubr.bf16.mxu0 0
        %739 = vmatmul.mubr.bf16.gmra.mrb[0].mxu0 %v611
        %v740 = vpop.f32.mrb[0].mxu0
        %v741 = vadd.f32 0.0, %v740
        %v742 = vpop.f32.mrb[0].mxu0
        %v743 = vpop.f32.mrb[0].mxu0
        %v744 = vadd.f32 0.0, %v743
        %v745 = vpop.f32.mrb[0].mxu0
        %746 = vmatprep.mubr.bf16.mxu0 0
        %747 = vmatmul.mubr.bf16.gmra.mrb[0].mxu0 %v612
        %v748 = vpop.f32.mrb[0].mxu0
        %v749 = vadd.f32 0.0, %v748
        %v750 = vpop.f32.mrb[0].mxu0
        %v751 = vpop.f32.mrb[0].mxu0
        %v752 = vadd.f32 0.0, %v751
        %v753 = vpop.f32.mrb[0].mxu0
        %754 = vmatprep.mubr.bf16.mxu0 0
        %755 = vmatmul.mubr.bf16.gmra.mrb[0].mxu0 %v613
        %v756 = vpop.f32.mrb[0].mxu0
        %v757 = vadd.f32 0.0, %v756
        %v758 = vpop.f32.mrb[0].mxu0
        %v759 = vpop.f32.mrb[0].mxu0
        %v760 = vadd.f32 0.0, %v759
        %v761 = vpop.f32.mrb[0].mxu0
        %762 = vmatprep.mubr.bf16.mxu0 0
        %763 = vmatmul.mubr.bf16.gmra.mrb[0].mxu0 %v614
        %v764 = vpop.f32.mrb[0].mxu0
        %v765 = vadd.f32 0.0, %v764
        %v766 = vpop.f32.mrb[0].mxu0
        %v767 = vpop.f32.mrb[0].mxu0
        %v768 = vadd.f32 0.0, %v767
        %v769 = vpop.f32.mrb[0].mxu0
        %770 = vmatprep.mubr.bf16.mxu0 0
        %771 = vmatmul.mubr.bf16.gmra.mrb[0].mxu0 %v615
        %v772 = vpop.f32.mrb[0].mxu0
        %v773 = vadd.f32 0.0, %v772
        %v774 = vpop.f32.mrb[0].mxu0
        %v775 = vpop.f32.mrb[0].mxu0
        %v776 = vadd.f32 0.0, %v775
        %v777 = vpop.f32.mrb[0].mxu0
        %778 = vmatprep.mubr.bf16.mxu0 0
        %779 = vmatmul.mubr.bf16.gmra.mrb[0].mxu0 %v616
        %v780 = vpop.f32.mrb[0].mxu0
        %v781 = vadd.f32 0.0, %v780
        %v782 = vpop.f32.mrb[0].mxu0
        %v783 = vpop.f32.mrb[0].mxu0
        %v784 = vadd.f32 0.0, %v783
        %v785 = vpop.f32.mrb[0].mxu0
        %786 = vmatprep.mubr.bf16.mxu0 0
        %787 = vmatmul.mubr.bf16.gmra.mrb[0].mxu0 %v617
        %v788 = vpop.f32.mrb[0].mxu0
        %v789 = vadd.f32 0.0, %v788
        %v790 = vpop.f32.mrb[0].mxu0
        %v791 = vpop.f32.mrb[0].mxu0
        %v792 = vadd.f32 0.0, %v791
        %v793 = vpop.f32.mrb[0].mxu0
        %794 = vmatprep.mubr.bf16.mxu0 0
        %795 = vmatmul.mubr.bf16.gmra.mrb[0].mxu0 %v618
        %v796 = vpop.f32.mrb[0].mxu0
        %v797 = vadd.f32 0.0, %v796
        %v798 = vpop.f32.mrb[0].mxu0
        %v799 = vpop.f32.mrb[0].mxu0
        %v800 = vadd.f32 0.0, %v799
        %v801 = vpop.f32.mrb[0].mxu0
        %802 = vmatprep.mubr.bf16.mxu0 0
        %803 = vmatmul.mubr.bf16.gmra.mrb[0].mxu0 %v619
        %v804 = vpop.f32.mrb[0].mxu0
        %v805 = vadd.f32 0.0, %v804
        %v806 = vpop.f32.mrb[0].mxu0
        %v807 = vpop.f32.mrb[0].mxu0
        %v808 = vadd.f32 0.0, %v807
        %v809 = vpop.f32.mrb[0].mxu0
        %810 = vmatprep.mubr.bf16.mxu0 0
        %811 = vmatmul.mubr.bf16.gmra.mrb[0].mxu0 %v620
        %v812 = vpop.f32.mrb[0].mxu0
        %v813 = vadd.f32 0.0, %v812
        %v814 = vpop.f32.mrb[0].mxu0
        %v815 = vpop.f32.mrb[0].mxu0
        %v816 = vadd.f32 0.0, %v815
        %v817 = vpop.f32.mrb[0].mxu0
        %818 = vmatprep.mubr.bf16.mxu0 0
        %819 = vmatmul.mubr.bf16.gmra.mrb[0].mxu0 %v621
        %v820 = vpop.f32.mrb[0].mxu0
        %v821 = vadd.f32 0.0, %v820
        %v822 = vpop.f32.mrb[0].mxu0
        %v823 = vpop.f32.mrb[0].mxu0
        %v824 = vadd.f32 0.0, %v823
        %v825 = vpop.f32.mrb[0].mxu0
        %826 = vmatprep.mubr.bf16.mxu0 0
        %827 = vmatmul.mubr.bf16.gmra.mrb[0].mxu0 %v622
        %v828 = vpop.f32.mrb[0].mxu0
        %v829 = vadd.f32 0.0, %v828
        %v830 = vpop.f32.mrb[0].mxu0
        %v831 = vpop.f32.mrb[0].mxu0
        %v832 = vadd.f32 0.0, %v831
        %v833 = vpop.f32.mrb[0].mxu0
        %834 = vmatprep.mubr.bf16.mxu0 0
        %835 = vmatmul.mubr.bf16.gmra.mrb[0].mxu0 %v623
        %v836 = vpop.f32.mrb[0].mxu0
        %v837 = vadd.f32 0.0, %v836
        %v838 = vpop.f32.mrb[0].mxu0
        %v839 = vpop.f32.mrb[0].mxu0
        %v840 = vadd.f32 0.0, %v839
        %v841 = vpop.f32.mrb[0].mxu0
        %842 = vmatprep.mubr.bf16.mxu0 0
        %843 = vmatmul.mubr.bf16.gmra.mrb[0].mxu0 %v624
        %v844 = vpop.f32.mrb[0].mxu0
        %v845 = vadd.f32 0.0, %v844
        %v846 = vpop.f32.mrb[0].mxu0
        %v847 = vpop.f32.mrb[0].mxu0
        %v848 = vadd.f32 0.0, %v847
        %v849 = vpop.f32.mrb[0].mxu0
        %850 = vdwg.mxu0
        %v867 = vunpack.c.l.b16 %v561
        %v868 = vunpack.c.l.b16 %v562
        %v869 = vunpack.c.l.b16 %v563
        %v870 = vunpack.c.l.b16 %v564
        %v871 = vunpack.c.l.b16 %v565
        %v872 = vunpack.c.l.b16 %v566
        %v873 = vunpack.c.l.b16 %v567
        %v874 = vunpack.c.l.b16 %v568
        %v875 = vunpack.c.l.b16 %v569
        %v876 = vunpack.c.l.b16 %v570
        %v877 = vunpack.c.l.b16 %v571
        %v878 = vunpack.c.l.b16 %v572
        %v879 = vunpack.c.l.b16 %v573
        %v880 = vunpack.c.l.b16 %v574
        %v881 = vunpack.c.l.b16 %v575
        %v882 = vunpack.c.l.b16 %v576
        %v883 = vpack.c.b16 %v868, %v867
        %v884 = vpack.c.b16 %v870, %v869
        %v885 = vpack.c.b16 %v872, %v871
        %v886 = vpack.c.b16 %v874, %v873
        %v887 = vpack.c.b16 %v876, %v875
        %v888 = vpack.c.b16 %v878, %v877
        %v889 = vpack.c.b16 %v880, %v879
        %v890 = vpack.c.b16 %v882, %v881
        %899 = vmatprep.subr.bf16.mxu0 0
        %900 = vmatpush1.bf16.msra.mxu0 %v883
        %901 = vmatprep.subr.bf16.mxu0 0
        %902 = vmatpush1.bf16.msra.mxu0 %v884
        %903 = vmatprep.subr.bf16.mxu0 0
        %904 = vmatpush1.bf16.msra.mxu0 %v885
        %905 = vmatprep.subr.bf16.mxu0 0
        %906 = vmatpush1.bf16.msra.mxu0 %v886
        %907 = vmatprep.subr.bf16.mxu0 0
        %908 = vmatpush1.bf16.msra.mxu0 %v887
        %909 = vmatprep.subr.bf16.mxu0 0
        %910 = vmatpush1.bf16.msra.mxu0 %v888
        %911 = vmatprep.subr.bf16.mxu0 0
        %912 = vmatpush1.bf16.msra.mxu0 %v889
        %913 = vmatprep.subr.bf16.mxu0 0
        %914 = vmatpush1.bf16.msra.mxu0 %v890
        %915 = vmatprep.subr.bf16.mxu0 0
        %916 = vmatpush1.bf16.msra.mxu0 0
        %917 = vmatprep.subr.bf16.mxu0 0
        %918 = vmatpush1.bf16.msra.mxu0 0
        %919 = vmatprep.subr.bf16.mxu0 0
        %920 = vmatpush1.bf16.msra.mxu0 0
        %921 = vmatprep.subr.bf16.mxu0 0
        %922 = vmatpush1.bf16.msra.mxu0 0
        %923 = vmatprep.subr.bf16.mxu0 0
        %924 = vmatpush1.bf16.msra.mxu0 0
        %925 = vmatprep.subr.bf16.mxu0 0
        %926 = vmatpush1.bf16.msra.mxu0 0
        %927 = vmatprep.subr.bf16.mxu0 0
        %928 = vmatpush1.bf16.msra.mxu0 0
        %929 = vmatprep.subr.bf16.mxu0 0
        %930 = vmatpush1.bf16.msra.mxu0 0
        %931 = vmatprep.mubr.bf16.mxu0 0
        %932 = vmatmul.mubr.bf16.gmra.mrb[0].mxu0 %v545
        %v933 = vpop.f32.mrb[0].mxu0
        %v934 = vadd.f32 %v725, %v933
        %v935 = vpop.f32.mrb[0].mxu0
        %v936 = vpop.f32.mrb[0].mxu0
        %v937 = vadd.f32 %v728, %v936
        %v938 = vpop.f32.mrb[0].mxu0
        %939 = vmatprep.mubr.bf16.mxu0 0
        %940 = vmatmul.mubr.bf16.gmra.mrb[0].mxu0 %v546
        %v941 = vpop.f32.mrb[0].mxu0
        %v942 = vadd.f32 %v733, %v941
        %v943 = vpop.f32.mrb[0].mxu0
        %v944 = vpop.f32.mrb[0].mxu0
        %v945 = vadd.f32 %v736, %v944
        %v946 = vpop.f32.mrb[0].mxu0
        %947 = vmatprep.mubr.bf16.mxu0 0
        %948 = vmatmul.mubr.bf16.gmra.mrb[0].mxu0 %v547
        %v949 = vpop.f32.mrb[0].mxu0
        %v950 = vadd.f32 %v741, %v949
        %v951 = vpop.f32.mrb[0].mxu0
        %v952 = vpop.f32.mrb[0].mxu0
        %v953 = vadd.f32 %v744, %v952
        %v954 = vpop.f32.mrb[0].mxu0
        %955 = vmatprep.mubr.bf16.mxu0 0
        %956 = vmatmul.mubr.bf16.gmra.mrb[0].mxu0 %v548
        %v957 = vpop.f32.mrb[0].mxu0
        %v958 = vadd.f32 %v749, %v957
        %v959 = vpop.f32.mrb[0].mxu0
        %v960 = vpop.f32.mrb[0].mxu0
        %v961 = vadd.f32 %v752, %v960
        %v962 = vpop.f32.mrb[0].mxu0
        %963 = vmatprep.mubr.bf16.mxu0 0
        %964 = vmatmul.mubr.bf16.gmra.mrb[0].mxu0 %v549
        %v965 = vpop.f32.mrb[0].mxu0
        %v966 = vadd.f32 %v757, %v965
        %v967 = vpop.f32.mrb[0].mxu0
        %v968 = vpop.f32.mrb[0].mxu0
        %v969 = vadd.f32 %v760, %v968
        %v970 = vpop.f32.mrb[0].mxu0
        %971 = vmatprep.mubr.bf16.mxu0 0
        %972 = vmatmul.mubr.bf16.gmra.mrb[0].mxu0 %v550
        %v973 = vpop.f32.mrb[0].mxu0
        %v974 = vadd.f32 %v765, %v973
        %v975 = vpop.f32.mrb[0].mxu0
        %v976 = vpop.f32.mrb[0].mxu0
        %v977 = vadd.f32 %v768, %v976
        %v978 = vpop.f32.mrb[0].mxu0
        %979 = vmatprep.mubr.bf16.mxu0 0
        %980 = vmatmul.mubr.bf16.gmra.mrb[0].mxu0 %v551
        %v981 = vpop.f32.mrb[0].mxu0
        %v982 = vadd.f32 %v773, %v981
        %v983 = vpop.f32.mrb[0].mxu0
        %v984 = vpop.f32.mrb[0].mxu0
        %v985 = vadd.f32 %v776, %v984
        %v986 = vpop.f32.mrb[0].mxu0
        %987 = vmatprep.mubr.bf16.mxu0 0
        %988 = vmatmul.mubr.bf16.gmra.mrb[0].mxu0 %v552
        %v989 = vpop.f32.mrb[0].mxu0
        %v990 = vadd.f32 %v781, %v989
        %v991 = vpop.f32.mrb[0].mxu0
        %v992 = vpop.f32.mrb[0].mxu0
        %v993 = vadd.f32 %v784, %v992
        %v994 = vpop.f32.mrb[0].mxu0
        %995 = vmatprep.mubr.bf16.mxu0 0
        %996 = vmatmul.mubr.bf16.gmra.mrb[0].mxu0 %v553
        %v997 = vpop.f32.mrb[0].mxu0
        %v998 = vadd.f32 %v789, %v997
        %v999 = vpop.f32.mrb[0].mxu0
        %v1000 = vpop.f32.mrb[0].mxu0
        %v1001 = vadd.f32 %v792, %v1000
        %v1002 = vpop.f32.mrb[0].mxu0
        %1003 = vmatprep.mubr.bf16.mxu0 0
        %1004 = vmatmul.mubr.bf16.gmra.mrb[0].mxu0 %v554
        %v1005 = vpop.f32.mrb[0].mxu0
        %v1006 = vadd.f32 %v797, %v1005
        %v1007 = vpop.f32.mrb[0].mxu0
        %v1008 = vpop.f32.mrb[0].mxu0
        %v1009 = vadd.f32 %v800, %v1008
        %v1010 = vpop.f32.mrb[0].mxu0
        %1011 = vmatprep.mubr.bf16.mxu0 0
        %1012 = vmatmul.mubr.bf16.gmra.mrb[0].mxu0 %v555
        %v1013 = vpop.f32.mrb[0].mxu0
        %v1014 = vadd.f32 %v805, %v1013
        %v1015 = vpop.f32.mrb[0].mxu0
        %v1016 = vpop.f32.mrb[0].mxu0
        %v1017 = vadd.f32 %v808, %v1016
        %v1018 = vpop.f32.mrb[0].mxu0
        %1019 = vmatprep.mubr.bf16.mxu0 0
        %1020 = vmatmul.mubr.bf16.gmra.mrb[0].mxu0 %v556
        %v1021 = vpop.f32.mrb[0].mxu0
        %v1022 = vadd.f32 %v813, %v1021
        %v1023 = vpop.f32.mrb[0].mxu0
        %v1024 = vpop.f32.mrb[0].mxu0
        %v1025 = vadd.f32 %v816, %v1024
        %v1026 = vpop.f32.mrb[0].mxu0
        %1027 = vmatprep.mubr.bf16.mxu0 0
        %1028 = vmatmul.mubr.bf16.gmra.mrb[0].mxu0 %v557
        %v1029 = vpop.f32.mrb[0].mxu0
        %v1030 = vadd.f32 %v821, %v1029
        %v1031 = vpop.f32.mrb[0].mxu0
        %v1032 = vpop.f32.mrb[0].mxu0
        %v1033 = vadd.f32 %v824, %v1032
        %v1034 = vpop.f32.mrb[0].mxu0
        %1035 = vmatprep.mubr.bf16.mxu0 0
        %1036 = vmatmul.mubr.bf16.gmra.mrb[0].mxu0 %v558
        %v1037 = vpop.f32.mrb[0].mxu0
        %v1038 = vadd.f32 %v829, %v1037
        %v1039 = vpop.f32.mrb[0].mxu0
        %v1040 = vpop.f32.mrb[0].mxu0
        %v1041 = vadd.f32 %v832, %v1040
        %v1042 = vpop.f32.mrb[0].mxu0
        %1043 = vmatprep.mubr.bf16.mxu0 0
        %1044 = vmatmul.mubr.bf16.gmra.mrb[0].mxu0 %v559
        %v1045 = vpop.f32.mrb[0].mxu0
        %v1046 = vadd.f32 %v837, %v1045
        %v1047 = vpop.f32.mrb[0].mxu0
        %v1048 = vpop.f32.mrb[0].mxu0
        %v1049 = vadd.f32 %v840, %v1048
        %v1050 = vpop.f32.mrb[0].mxu0
        %1051 = vmatprep.mubr.bf16.mxu0 0
        %1052 = vmatmul.mubr.bf16.gmra.mrb[0].mxu0 %v560
        %v1053 = vpop.f32.mrb[0].mxu0
        %v1054 = vadd.f32 %v845, %v1053
        %v1055 = vpop.f32.mrb[0].mxu0
        %v1056 = vpop.f32.mrb[0].mxu0
        %v1057 = vadd.f32 %v848, %v1056
        %v1058 = vpop.f32.mrb[0].mxu0
        %1059 = vdwg.mxu0
        %v1060 = vld [vmem:[#allocation2 + $0x2] sm:$0xff]
        %v1061 = vld [vmem:[#allocation2 + $0xa] sm:$0xff]
        %v1062 = vld [vmem:[#allocation2 + $0x1a] sm:$0xff]
        %v1063 = vld [vmem:[#allocation2 + $0x22] sm:$0xff]
        %v1064 = vld [vmem:[#allocation2 + $0x32] sm:$0xff]
        %v1065 = vld [vmem:[#allocation2 + $0x3a] sm:$0xff]
        %v1066 = vld [vmem:[#allocation2 + $0x4a] sm:$0xff]
        %v1067 = vld [vmem:[#allocation2 + $0x52] sm:$0xff]
        %v1068 = vld [vmem:[#allocation2 + $0x62] sm:$0xff]
        %v1069 = vld [vmem:[#allocation2 + $0x6a] sm:$0xff]
        %v1070 = vld [vmem:[#allocation2 + $0x7a] sm:$0xff]
        %v1071 = vld [vmem:[#allocation2 + $0x82] sm:$0xff]
        %v1072 = vld [vmem:[#allocation2 + $0x92] sm:$0xff]
        %v1073 = vld [vmem:[#allocation2 + $0x9a] sm:$0xff]
        %v1074 = vld [vmem:[#allocation2 + $0xaa] sm:$0xff]
        %v1075 = vld [vmem:[#allocation2 + $0xb2] sm:$0xff]
        %v1076 = vld [vmem:[#allocation2 + $0xc2] sm:$0xff]
        %v1077 = vld [vmem:[#allocation2 + $0xca] sm:$0xff]
        %v1078 = vld [vmem:[#allocation2 + $0xda] sm:$0xff]
        %v1079 = vld [vmem:[#allocation2 + $0xe2] sm:$0xff]
        %v1080 = vld [vmem:[#allocation2 + $0xf2] sm:$0xff]
        %v1081 = vld [vmem:[#allocation2 + $0xfa] sm:$0xff]
        %v1082 = vld [vmem:[#allocation2 + $0x10a] sm:$0xff]
        %v1083 = vld [vmem:[#allocation2 + $0x112] sm:$0xff]
        %v1084 = vld [vmem:[#allocation2 + $0x122] sm:$0xff]
        %v1085 = vld [vmem:[#allocation2 + $0x12a] sm:$0xff]
        %v1086 = vld [vmem:[#allocation2 + $0x13a] sm:$0xff]
        %v1087 = vld [vmem:[#allocation2 + $0x142] sm:$0xff]
        %v1088 = vld [vmem:[#allocation2 + $0x152] sm:$0xff]
        %v1089 = vld [vmem:[#allocation2 + $0x15a] sm:$0xff]
        %v1090 = vld [vmem:[#allocation2 + $0x16a] sm:$0xff]
        %v1091 = vld [vmem:[#allocation2 + $0x172] sm:$0xff]
        %v1092 = vpack.c.bf16 %v1061, %v1060
        %v1093 = vpack.c.bf16 %v1063, %v1062
        %v1094 = vpack.c.bf16 %v1065, %v1064
        %v1095 = vpack.c.bf16 %v1067, %v1066
        %v1096 = vpack.c.bf16 %v1069, %v1068
        %v1097 = vpack.c.bf16 %v1071, %v1070
        %v1098 = vpack.c.bf16 %v1073, %v1072
        %v1099 = vpack.c.bf16 %v1075, %v1074
        %v1100 = vpack.c.bf16 %v1077, %v1076
        %v1101 = vpack.c.bf16 %v1079, %v1078
        %v1102 = vpack.c.bf16 %v1081, %v1080
        %v1103 = vpack.c.bf16 %v1083, %v1082
        %v1104 = vpack.c.bf16 %v1085, %v1084
        %v1105 = vpack.c.bf16 %v1087, %v1086
        %v1106 = vpack.c.bf16 %v1089, %v1088
        %v1107 = vpack.c.bf16 %v1091, %v1090
        %s1108 = scalar_lea.vmem [#allocation4], 128
        %v1109 = vld [vmem:[%s1108] sm:$0xf]
        %v1110 = vld [vmem:[%s1108 + $0x4] sm:$0xf]
        %v1111 = vld [vmem:[%s1108 + $0x8] sm:$0xf]
        %v1112 = vld [vmem:[%s1108 + $0xc] sm:$0xf]
        %v1113 = vld [vmem:[%s1108 + $0x10] sm:$0xf]
        %v1114 = vld [vmem:[%s1108 + $0x14] sm:$0xf]
        %v1115 = vld [vmem:[%s1108 + $0x18] sm:$0xf]
        %v1116 = vld [vmem:[%s1108 + $0x1c] sm:$0xf]
        %v1117 = vld [vmem:[%s1108 + $0x20] sm:$0xf]
        %v1118 = vld [vmem:[%s1108 + $0x24] sm:$0xf]
        %v1119 = vld [vmem:[%s1108 + $0x28] sm:$0xf]
        %v1120 = vld [vmem:[%s1108 + $0x2c] sm:$0xf]
        %v1121 = vld [vmem:[%s1108 + $0x30] sm:$0xf]
        %v1122 = vld [vmem:[%s1108 + $0x34] sm:$0xf]
        %v1123 = vld [vmem:[%s1108 + $0x38] sm:$0xf]
        %v1124 = vld [vmem:[%s1108 + $0x3c] sm:$0xf]
        %v1141 = vunpack.c.l.b16 %v1109
        %v1142 = vunpack.c.l.b16 %v1110
        %v1143 = vunpack.c.l.b16 %v1111
        %v1144 = vunpack.c.l.b16 %v1112
        %v1145 = vunpack.c.l.b16 %v1113
        %v1146 = vunpack.c.l.b16 %v1114
        %v1147 = vunpack.c.l.b16 %v1115
        %v1148 = vunpack.c.l.b16 %v1116
        %v1149 = vunpack.c.l.b16 %v1117
        %v1150 = vunpack.c.l.b16 %v1118
        %v1151 = vunpack.c.l.b16 %v1119
        %v1152 = vunpack.c.l.b16 %v1120
        %v1153 = vunpack.c.l.b16 %v1121
        %v1154 = vunpack.c.l.b16 %v1122
        %v1155 = vunpack.c.l.b16 %v1123
        %v1156 = vunpack.c.l.b16 %v1124
        %v1157 = vpack.c.b16 %v1142, %v1141
        %v1158 = vpack.c.b16 %v1144, %v1143
        %v1159 = vpack.c.b16 %v1146, %v1145
        %v1160 = vpack.c.b16 %v1148, %v1147
        %v1161 = vpack.c.b16 %v1150, %v1149
        %v1162 = vpack.c.b16 %v1152, %v1151
        %v1163 = vpack.c.b16 %v1154, %v1153
        %v1164 = vpack.c.b16 %v1156, %v1155
        %1173 = vmatprep.subr.bf16.mxu0 0
        %1174 = vmatpush1.bf16.msra.mxu0 %v1157
        %1175 = vmatprep.subr.bf16.mxu0 0
        %1176 = vmatpush1.bf16.msra.mxu0 %v1158
        %1177 = vmatprep.subr.bf16.mxu0 0
        %1178 = vmatpush1.bf16.msra.mxu0 %v1159
        %1179 = vmatprep.subr.bf16.mxu0 0
        %1180 = vmatpush1.bf16.msra.mxu0 %v1160
        %1181 = vmatprep.subr.bf16.mxu0 0
        %1182 = vmatpush1.bf16.msra.mxu0 %v1161
        %1183 = vmatprep.subr.bf16.mxu0 0
        %1184 = vmatpush1.bf16.msra.mxu0 %v1162
        %1185 = vmatprep.subr.bf16.mxu0 0
        %1186 = vmatpush1.bf16.msra.mxu0 %v1163
        %1187 = vmatprep.subr.bf16.mxu0 0
        %1188 = vmatpush1.bf16.msra.mxu0 %v1164
        %1189 = vmatprep.subr.bf16.mxu0 0
        %1190 = vmatpush1.bf16.msra.mxu0 0
        %1191 = vmatprep.subr.bf16.mxu0 0
        %1192 = vmatpush1.bf16.msra.mxu0 0
        %1193 = vmatprep.subr.bf16.mxu0 0
        %1194 = vmatpush1.bf16.msra.mxu0 0
        %1195 = vmatprep.subr.bf16.mxu0 0
        %1196 = vmatpush1.bf16.msra.mxu0 0
        %1197 = vmatprep.subr.bf16.mxu0 0
        %1198 = vmatpush1.bf16.msra.mxu0 0
        %1199 = vmatprep.subr.bf16.mxu0 0
        %1200 = vmatpush1.bf16.msra.mxu0 0
        %1201 = vmatprep.subr.bf16.mxu0 0
        %1202 = vmatpush1.bf16.msra.mxu0 0
        %1203 = vmatprep.subr.bf16.mxu0 0
        %1204 = vmatpush1.bf16.msra.mxu0 0
        %1205 = vmatprep.mubr.bf16.mxu0 0
        %1206 = vmatmul.mubr.bf16.gmra.mrb[0].mxu0 %v1092
        %v1207 = vpop.f32.mrb[0].mxu0
        %v1208 = vadd.f32 0.0, %v1207
        %v1209 = vpop.f32.mrb[0].mxu0
        %v1210 = vpop.f32.mrb[0].mxu0
        %v1211 = vadd.f32 0.0, %v1210
        %v1212 = vpop.f32.mrb[0].mxu0
        %1213 = vmatprep.mubr.bf16.mxu0 0
        %1214 = vmatmul.mubr.bf16.gmra.mrb[0].mxu0 %v1093
        %v1215 = vpop.f32.mrb[0].mxu0
        %v1216 = vadd.f32 0.0, %v1215
        %v1217 = vpop.f32.mrb[0].mxu0
        %v1218 = vpop.f32.mrb[0].mxu0
        %v1219 = vadd.f32 0.0, %v1218
        %v1220 = vpop.f32.mrb[0].mxu0
        %1221 = vmatprep.mubr.bf16.mxu0 0
        %1222 = vmatmul.mubr.bf16.gmra.mrb[0].mxu0 %v1094
        %v1223 = vpop.f32.mrb[0].mxu0
        %v1224 = vadd.f32 0.0, %v1223
        %v1225 = vpop.f32.mrb[0].mxu0
        %v1226 = vpop.f32.mrb[0].mxu0
        %v1227 = vadd.f32 0.0, %v1226
        %v1228 = vpop.f32.mrb[0].mxu0
        %1229 = vmatprep.mubr.bf16.mxu0 0
        %1230 = vmatmul.mubr.bf16.gmra.mrb[0].mxu0 %v1095
        %v1231 = vpop.f32.mrb[0].mxu0
        %v1232 = vadd.f32 0.0, %v1231
        %v1233 = vpop.f32.mrb[0].mxu0
        %v1234 = vpop.f32.mrb[0].mxu0
        %v1235 = vadd.f32 0.0, %v1234
        %v1236 = vpop.f32.mrb[0].mxu0
        %1237 = vmatprep.mubr.bf16.mxu0 0
        %1238 = vmatmul.mubr.bf16.gmra.mrb[0].mxu0 %v1096
        %v1239 = vpop.f32.mrb[0].mxu0
        %v1240 = vadd.f32 0.0, %v1239
        %v1241 = vpop.f32.mrb[0].mxu0
        %v1242 = vpop.f32.mrb[0].mxu0
        %v1243 = vadd.f32 0.0, %v1242
        %v1244 = vpop.f32.mrb[0].mxu0
        %1245 = vmatprep.mubr.bf16.mxu0 0
        %1246 = vmatmul.mubr.bf16.gmra.mrb[0].mxu0 %v1097
        %v1247 = vpop.f32.mrb[0].mxu0
        %v1248 = vadd.f32 0.0, %v1247
        %v1249 = vpop.f32.mrb[0].mxu0
        %v1250 = vpop.f32.mrb[0].mxu0
        %v1251 = vadd.f32 0.0, %v1250
        %v1252 = vpop.f32.mrb[0].mxu0
        %1253 = vmatprep.mubr.bf16.mxu0 0
        %1254 = vmatmul.mubr.bf16.gmra.mrb[0].mxu0 %v1098
        %v1255 = vpop.f32.mrb[0].mxu0
        %v1256 = vadd.f32 0.0, %v1255
        %v1257 = vpop.f32.mrb[0].mxu0
        %v1258 = vpop.f32.mrb[0].mxu0
        %v1259 = vadd.f32 0.0, %v1258
        %v1260 = vpop.f32.mrb[0].mxu0
        %1261 = vmatprep.mubr.bf16.mxu0 0
        %1262 = vmatmul.mubr.bf16.gmra.mrb[0].mxu0 %v1099
        %v1263 = vpop.f32.mrb[0].mxu0
        %v1264 = vadd.f32 0.0, %v1263
        %v1265 = vpop.f32.mrb[0].mxu0
        %v1266 = vpop.f32.mrb[0].mxu0
        %v1267 = vadd.f32 0.0, %v1266
        %v1268 = vpop.f32.mrb[0].mxu0
        %1269 = vmatprep.mubr.bf16.mxu0 0
        %1270 = vmatmul.mubr.bf16.gmra.mrb[0].mxu0 %v1100
        %v1271 = vpop.f32.mrb[0].mxu0
        %v1272 = vadd.f32 0.0, %v1271
        %v1273 = vpop.f32.mrb[0].mxu0
        %v1274 = vpop.f32.mrb[0].mxu0
        %v1275 = vadd.f32 0.0, %v1274
        %v1276 = vpop.f32.mrb[0].mxu0
        %1277 = vmatprep.mubr.bf16.mxu0 0
        %1278 = vmatmul.mubr.bf16.gmra.mrb[0].mxu0 %v1101
        %v1279 = vpop.f32.mrb[0].mxu0
        %v1280 = vadd.f32 0.0, %v1279
        %v1281 = vpop.f32.mrb[0].mxu0
        %v1282 = vpop.f32.mrb[0].mxu0
        %v1283 = vadd.f32 0.0, %v1282
        %v1284 = vpop.f32.mrb[0].mxu0
        %1285 = vmatprep.mubr.bf16.mxu0 0
        %1286 = vmatmul.mubr.bf16.gmra.mrb[0].mxu0 %v1102
        %v1287 = vpop.f32.mrb[0].mxu0
        %v1288 = vadd.f32 0.0, %v1287
        %v1289 = vpop.f32.mrb[0].mxu0
        %v1290 = vpop.f32.mrb[0].mxu0
        %v1291 = vadd.f32 0.0, %v1290
        %v1292 = vpop.f32.mrb[0].mxu0
        %1293 = vmatprep.mubr.bf16.mxu0 0
        %1294 = vmatmul.mubr.bf16.gmra.mrb[0].mxu0 %v1103
        %v1295 = vpop.f32.mrb[0].mxu0
        %v1296 = vadd.f32 0.0, %v1295
        %v1297 = vpop.f32.mrb[0].mxu0
        %v1298 = vpop.f32.mrb[0].mxu0
        %v1299 = vadd.f32 0.0, %v1298
        %v1300 = vpop.f32.mrb[0].mxu0
        %1301 = vmatprep.mubr.bf16.mxu0 0
        %1302 = vmatmul.mubr.bf16.gmra.mrb[0].mxu0 %v1104
        %v1303 = vpop.f32.mrb[0].mxu0
        %v1304 = vadd.f32 0.0, %v1303
        %v1305 = vpop.f32.mrb[0].mxu0
        %v1306 = vpop.f32.mrb[0].mxu0
        %v1307 = vadd.f32 0.0, %v1306
        %v1308 = vpop.f32.mrb[0].mxu0
        %1309 = vmatprep.mubr.bf16.mxu0 0
        %1310 = vmatmul.mubr.bf16.gmra.mrb[0].mxu0 %v1105
        %v1311 = vpop.f32.mrb[0].mxu0
        %v1312 = vadd.f32 0.0, %v1311
        %v1313 = vpop.f32.mrb[0].mxu0
        %v1314 = vpop.f32.mrb[0].mxu0
        %v1315 = vadd.f32 0.0, %v1314
        %v1316 = vpop.f32.mrb[0].mxu0
        %1317 = vmatprep.mubr.bf16.mxu0 0
        %1318 = vmatmul.mubr.bf16.gmra.mrb[0].mxu0 %v1106
        %v1319 = vpop.f32.mrb[0].mxu0
        %v1320 = vadd.f32 0.0, %v1319
        %v1321 = vpop.f32.mrb[0].mxu0
        %v1322 = vpop.f32.mrb[0].mxu0
        %v1323 = vadd.f32 0.0, %v1322
        %v1324 = vpop.f32.mrb[0].mxu0
        %1325 = vmatprep.mubr.bf16.mxu0 0
        %1326 = vmatmul.mubr.bf16.gmra.mrb[0].mxu0 %v1107
        %v1327 = vpop.f32.mrb[0].mxu0
        %v1328 = vadd.f32 0.0, %v1327
        %v1329 = vpop.f32.mrb[0].mxu0
        %v1330 = vpop.f32.mrb[0].mxu0
        %v1331 = vadd.f32 0.0, %v1330
        %v1332 = vpop.f32.mrb[0].mxu0
        %1333 = vdwg.mxu0
        %v1334 = vadd.f32 %v934, %v1208
        %v1335 = vadd.f32 %v937, %v1211
        %v1336 = vadd.f32 %v942, %v1216
        %v1337 = vadd.f32 %v945, %v1219
        %v1338 = vadd.f32 %v950, %v1224
        %v1339 = vadd.f32 %v953, %v1227
        %v1340 = vadd.f32 %v958, %v1232
        %v1341 = vadd.f32 %v961, %v1235
        %v1342 = vadd.f32 %v966, %v1240
        %v1343 = vadd.f32 %v969, %v1243
        %v1344 = vadd.f32 %v974, %v1248
        %v1345 = vadd.f32 %v977, %v1251
        %v1346 = vadd.f32 %v982, %v1256
        %v1347 = vadd.f32 %v985, %v1259
        %v1348 = vadd.f32 %v990, %v1264
        %v1349 = vadd.f32 %v993, %v1267
        %v1350 = vadd.f32 %v998, %v1272
        %v1351 = vadd.f32 %v1001, %v1275
        %v1352 = vadd.f32 %v1006, %v1280
        %v1353 = vadd.f32 %v1009, %v1283
        %v1354 = vadd.f32 %v1014, %v1288
        %v1355 = vadd.f32 %v1017, %v1291
        %v1356 = vadd.f32 %v1022, %v1296
        %v1357 = vadd.f32 %v1025, %v1299
        %v1358 = vadd.f32 %v1030, %v1304
        %v1359 = vadd.f32 %v1033, %v1307
        %v1360 = vadd.f32 %v1038, %v1312
        %v1361 = vadd.f32 %v1041, %v1315
        %v1362 = vadd.f32 %v1046, %v1320
        %v1363 = vadd.f32 %v1049, %v1323
        %v1364 = vadd.f32 %v1054, %v1328
        %v1365 = vadd.f32 %v1057, %v1331
        %v1366 = vld [vmem:[%s403] sm:$0xff]
        %v1367 = vld [vmem:[%s403 + $0x8] sm:$0xff]
        %v1368 = vld [vmem:[%s403 + $0x18] sm:$0xff]
        %v1369 = vld [vmem:[%s403 + $0x20] sm:$0xff]
        %v1370 = vld [vmem:[%s403 + $0x30] sm:$0xff]
        %v1371 = vld [vmem:[%s403 + $0x38] sm:$0xff]
        %v1372 = vld [vmem:[%s403 + $0x48] sm:$0xff]
        %v1373 = vld [vmem:[%s403 + $0x50] sm:$0xff]
        %v1374 = vld [vmem:[%s403 + $0x60] sm:$0xff]
        %v1375 = vld [vmem:[%s403 + $0x68] sm:$0xff]
        %v1376 = vld [vmem:[%s403 + $0x78] sm:$0xff]
        %v1377 = vld [vmem:[%s403 + $0x80] sm:$0xff]
        %v1378 = vld [vmem:[%s403 + $0x90] sm:$0xff]
        %v1379 = vld [vmem:[%s403 + $0x98] sm:$0xff]
        %v1380 = vld [vmem:[%s403 + $0xa8] sm:$0xff]
        %v1381 = vld [vmem:[%s403 + $0xb0] sm:$0xff]
        %v1382 = vld [vmem:[%s403 + $0xc0] sm:$0xff]
        %v1383 = vld [vmem:[%s403 + $0xc8] sm:$0xff]
        %v1384 = vld [vmem:[%s403 + $0xd8] sm:$0xff]
        %v1385 = vld [vmem:[%s403 + $0xe0] sm:$0xff]
        %v1386 = vld [vmem:[%s403 + $0xf0] sm:$0xff]
        %v1387 = vld [vmem:[%s403 + $0xf8] sm:$0xff]
        %v1388 = vld [vmem:[%s403 + $0x108] sm:$0xff]
        %v1389 = vld [vmem:[%s403 + $0x110] sm:$0xff]
        %v1390 = vld [vmem:[%s403 + $0x120] sm:$0xff]
        %v1391 = vld [vmem:[%s403 + $0x128] sm:$0xff]
        %v1392 = vld [vmem:[%s403 + $0x138] sm:$0xff]
        %v1393 = vld [vmem:[%s403 + $0x140] sm:$0xff]
        %v1394 = vld [vmem:[%s403 + $0x150] sm:$0xff]
        %v1395 = vld [vmem:[%s403 + $0x158] sm:$0xff]
        %v1396 = vld [vmem:[%s403 + $0x168] sm:$0xff]
        %v1397 = vld [vmem:[%s403 + $0x170] sm:$0xff]
        %v1398 = vpack.c.bf16 %v1367, %v1366
        %v1399 = vpack.c.bf16 %v1369, %v1368
        %v1400 = vpack.c.bf16 %v1371, %v1370
        %v1401 = vpack.c.bf16 %v1373, %v1372
        %v1402 = vpack.c.bf16 %v1375, %v1374
        %v1403 = vpack.c.bf16 %v1377, %v1376
        %v1404 = vpack.c.bf16 %v1379, %v1378
        %v1405 = vpack.c.bf16 %v1381, %v1380
        %v1406 = vpack.c.bf16 %v1383, %v1382
        %v1407 = vpack.c.bf16 %v1385, %v1384
        %v1408 = vpack.c.bf16 %v1387, %v1386
        %v1409 = vpack.c.bf16 %v1389, %v1388
        %v1410 = vpack.c.bf16 %v1391, %v1390
        %v1411 = vpack.c.bf16 %v1393, %v1392
        %v1412 = vpack.c.bf16 %v1395, %v1394
        %v1413 = vpack.c.bf16 %v1397, %v1396
        %s1414 = scalar_lea.vmem [#allocation4], 192
        %v1415 = vld [vmem:[%s1414] sm:$0xf]
        %v1416 = vld [vmem:[%s1414 + $0x4] sm:$0xf]
        %v1417 = vld [vmem:[%s1414 + $0x8] sm:$0xf]
        %v1418 = vld [vmem:[%s1414 + $0xc] sm:$0xf]
        %v1419 = vld [vmem:[%s1414 + $0x10] sm:$0xf]
        %v1420 = vld [vmem:[%s1414 + $0x14] sm:$0xf]
        %v1421 = vld [vmem:[%s1414 + $0x18] sm:$0xf]
        %v1422 = vld [vmem:[%s1414 + $0x1c] sm:$0xf]
        %v1423 = vld [vmem:[%s1414 + $0x20] sm:$0xf]
        %v1424 = vld [vmem:[%s1414 + $0x24] sm:$0xf]
        %v1425 = vld [vmem:[%s1414 + $0x28] sm:$0xf]
        %v1426 = vld [vmem:[%s1414 + $0x2c] sm:$0xf]
        %v1427 = vld [vmem:[%s1414 + $0x30] sm:$0xf]
        %v1428 = vld [vmem:[%s1414 + $0x34] sm:$0xf]
        %v1429 = vld [vmem:[%s1414 + $0x38] sm:$0xf]
        %v1430 = vld [vmem:[%s1414 + $0x3c] sm:$0xf]
        %v1447 = vunpack.c.l.b16 %v1415
        %v1448 = vunpack.c.l.b16 %v1416
        %v1449 = vunpack.c.l.b16 %v1417
        %v1450 = vunpack.c.l.b16 %v1418
        %v1451 = vunpack.c.l.b16 %v1419
        %v1452 = vunpack.c.l.b16 %v1420
        %v1453 = vunpack.c.l.b16 %v1421
        %v1454 = vunpack.c.l.b16 %v1422
        %v1455 = vunpack.c.l.b16 %v1423
        %v1456 = vunpack.c.l.b16 %v1424
        %v1457 = vunpack.c.l.b16 %v1425
        %v1458 = vunpack.c.l.b16 %v1426
        %v1459 = vunpack.c.l.b16 %v1427
        %v1460 = vunpack.c.l.b16 %v1428
        %v1461 = vunpack.c.l.b16 %v1429
        %v1462 = vunpack.c.l.b16 %v1430
        %v1463 = vpack.c.b16 %v1448, %v1447
        %v1464 = vpack.c.b16 %v1450, %v1449
        %v1465 = vpack.c.b16 %v1452, %v1451
        %v1466 = vpack.c.b16 %v1454, %v1453
        %v1467 = vpack.c.b16 %v1456, %v1455
        %v1468 = vpack.c.b16 %v1458, %v1457
        %v1469 = vpack.c.b16 %v1460, %v1459
        %v1470 = vpack.c.b16 %v1462, %v1461
        %1479 = vmatprep.subr.bf16.mxu0 0
        %1480 = vmatpush1.bf16.msra.mxu0 %v1463
        %1481 = vmatprep.subr.bf16.mxu0 0
        %1482 = vmatpush1.bf16.msra.mxu0 %v1464
        %1483 = vmatprep.subr.bf16.mxu0 0
        %1484 = vmatpush1.bf16.msra.mxu0 %v1465
        %1485 = vmatprep.subr.bf16.mxu0 0
        %1486 = vmatpush1.bf16.msra.mxu0 %v1466
        %1487 = vmatprep.subr.bf16.mxu0 0
        %1488 = vmatpush1.bf16.msra.mxu0 %v1467
        %1489 = vmatprep.subr.bf16.mxu0 0
        %1490 = vmatpush1.bf16.msra.mxu0 %v1468
        %1491 = vmatprep.subr.bf16.mxu0 0
        %1492 = vmatpush1.bf16.msra.mxu0 %v1469
        %1493 = vmatprep.subr.bf16.mxu0 0
        %1494 = vmatpush1.bf16.msra.mxu0 %v1470
        %1495 = vmatprep.subr.bf16.mxu0 0
        %1496 = vmatpush1.bf16.msra.mxu0 0
        %1497 = vmatprep.subr.bf16.mxu0 0
        %1498 = vmatpush1.bf16.msra.mxu0 0
        %1499 = vmatprep.subr.bf16.mxu0 0
        %1500 = vmatpush1.bf16.msra.mxu0 0
        %1501 = vmatprep.subr.bf16.mxu0 0
        %1502 = vmatpush1.bf16.msra.mxu0 0
        %1503 = vmatprep.subr.bf16.mxu0 0
        %1504 = vmatpush1.bf16.msra.mxu0 0
        %1505 = vmatprep.subr.bf16.mxu0 0
        %1506 = vmatpush1.bf16.msra.mxu0 0
        %1507 = vmatprep.subr.bf16.mxu0 0
        %1508 = vmatpush1.bf16.msra.mxu0 0
        %1509 = vmatprep.subr.bf16.mxu0 0
        %1510 = vmatpush1.bf16.msra.mxu0 0
        %1511 = vmatprep.mubr.bf16.mxu0 0
        %1512 = vmatmul.mubr.bf16.gmra.mrb[0].mxu0 %v1398
        %v1513 = vpop.f32.mrb[0].mxu0
        %v1514 = vadd.f32 0.0, %v1513
        %v1515 = vpop.f32.mrb[0].mxu0
        %v1516 = vpop.f32.mrb[0].mxu0
        %v1517 = vadd.f32 0.0, %v1516
        %v1518 = vpop.f32.mrb[0].mxu0
        %1519 = vmatprep.mubr.bf16.mxu0 0
        %1520 = vmatmul.mubr.bf16.gmra.mrb[0].mxu0 %v1399
        %v1521 = vpop.f32.mrb[0].mxu0
        %v1522 = vadd.f32 0.0, %v1521
        %v1523 = vpop.f32.mrb[0].mxu0
        %v1524 = vpop.f32.mrb[0].mxu0
        %v1525 = vadd.f32 0.0, %v1524
        %v1526 = vpop.f32.mrb[0].mxu0
        %1527 = vmatprep.mubr.bf16.mxu0 0
        %1528 = vmatmul.mubr.bf16.gmra.mrb[0].mxu0 %v1400
        %v1529 = vpop.f32.mrb[0].mxu0
        %v1530 = vadd.f32 0.0, %v1529
        %v1531 = vpop.f32.mrb[0].mxu0
        %v1532 = vpop.f32.mrb[0].mxu0
        %v1533 = vadd.f32 0.0, %v1532
        %v1534 = vpop.f32.mrb[0].mxu0
        %1535 = vmatprep.mubr.bf16.mxu0 0
        %1536 = vmatmul.mubr.bf16.gmra.mrb[0].mxu0 %v1401
        %v1537 = vpop.f32.mrb[0].mxu0
        %v1538 = vadd.f32 0.0, %v1537
        %v1539 = vpop.f32.mrb[0].mxu0
        %v1540 = vpop.f32.mrb[0].mxu0
        %v1541 = vadd.f32 0.0, %v1540
        %v1542 = vpop.f32.mrb[0].mxu0
        %1543 = vmatprep.mubr.bf16.mxu0 0
        %1544 = vmatmul.mubr.bf16.gmra.mrb[0].mxu0 %v1402
        %v1545 = vpop.f32.mrb[0].mxu0
        %v1546 = vadd.f32 0.0, %v1545
        %v1547 = vpop.f32.mrb[0].mxu0
        %v1548 = vpop.f32.mrb[0].mxu0
        %v1549 = vadd.f32 0.0, %v1548
        %v1550 = vpop.f32.mrb[0].mxu0
        %1551 = vmatprep.mubr.bf16.mxu0 0
        %1552 = vmatmul.mubr.bf16.gmra.mrb[0].mxu0 %v1403
        %v1553 = vpop.f32.mrb[0].mxu0
        %v1554 = vadd.f32 0.0, %v1553
        %v1555 = vpop.f32.mrb[0].mxu0
        %v1556 = vpop.f32.mrb[0].mxu0
        %v1557 = vadd.f32 0.0, %v1556
        %v1558 = vpop.f32.mrb[0].mxu0
        %1559 = vmatprep.mubr.bf16.mxu0 0
        %1560 = vmatmul.mubr.bf16.gmra.mrb[0].mxu0 %v1404
        %v1561 = vpop.f32.mrb[0].mxu0
        %v1562 = vadd.f32 0.0, %v1561
        %v1563 = vpop.f32.mrb[0].mxu0
        %v1564 = vpop.f32.mrb[0].mxu0
        %v1565 = vadd.f32 0.0, %v1564
        %v1566 = vpop.f32.mrb[0].mxu0
        %1567 = vmatprep.mubr.bf16.mxu0 0
        %1568 = vmatmul.mubr.bf16.gmra.mrb[0].mxu0 %v1405
        %v1569 = vpop.f32.mrb[0].mxu0
        %v1570 = vadd.f32 0.0, %v1569
        %v1571 = vpop.f32.mrb[0].mxu0
        %v1572 = vpop.f32.mrb[0].mxu0
        %v1573 = vadd.f32 0.0, %v1572
        %v1574 = vpop.f32.mrb[0].mxu0
        %1575 = vmatprep.mubr.bf16.mxu0 0
        %1576 = vmatmul.mubr.bf16.gmra.mrb[0].mxu0 %v1406
        %v1577 = vpop.f32.mrb[0].mxu0
        %v1578 = vadd.f32 0.0, %v1577
        %v1579 = vpop.f32.mrb[0].mxu0
        %v1580 = vpop.f32.mrb[0].mxu0
        %v1581 = vadd.f32 0.0, %v1580
        %v1582 = vpop.f32.mrb[0].mxu0
        %1583 = vmatprep.mubr.bf16.mxu0 0
        %1584 = vmatmul.mubr.bf16.gmra.mrb[0].mxu0 %v1407
        %v1585 = vpop.f32.mrb[0].mxu0
        %v1586 = vadd.f32 0.0, %v1585
        %v1587 = vpop.f32.mrb[0].mxu0
        %v1588 = vpop.f32.mrb[0].mxu0
        %v1589 = vadd.f32 0.0, %v1588
        %v1590 = vpop.f32.mrb[0].mxu0
        %1591 = vmatprep.mubr.bf16.mxu0 0
        %1592 = vmatmul.mubr.bf16.gmra.mrb[0].mxu0 %v1408
        %v1593 = vpop.f32.mrb[0].mxu0
        %v1594 = vadd.f32 0.0, %v1593
        %v1595 = vpop.f32.mrb[0].mxu0
        %v1596 = vpop.f32.mrb[0].mxu0
        %v1597 = vadd.f32 0.0, %v1596
        %v1598 = vpop.f32.mrb[0].mxu0
        %1599 = vmatprep.mubr.bf16.mxu0 0
        %1600 = vmatmul.mubr.bf16.gmra.mrb[0].mxu0 %v1409
        %v1601 = vpop.f32.mrb[0].mxu0
        %v1602 = vadd.f32 0.0, %v1601
        %v1603 = vpop.f32.mrb[0].mxu0
        %v1604 = vpop.f32.mrb[0].mxu0
        %v1605 = vadd.f32 0.0, %v1604
        %v1606 = vpop.f32.mrb[0].mxu0
        %1607 = vmatprep.mubr.bf16.mxu0 0
        %1608 = vmatmul.mubr.bf16.gmra.mrb[0].mxu0 %v1410
        %v1609 = vpop.f32.mrb[0].mxu0
        %v1610 = vadd.f32 0.0, %v1609
        %v1611 = vpop.f32.mrb[0].mxu0
        %v1612 = vpop.f32.mrb[0].mxu0
        %v1613 = vadd.f32 0.0, %v1612
        %v1614 = vpop.f32.mrb[0].mxu0
        %1615 = vmatprep.mubr.bf16.mxu0 0
        %1616 = vmatmul.mubr.bf16.gmra.mrb[0].mxu0 %v1411
        %v1617 = vpop.f32.mrb[0].mxu0
        %v1618 = vadd.f32 0.0, %v1617
        %v1619 = vpop.f32.mrb[0].mxu0
        %v1620 = vpop.f32.mrb[0].mxu0
        %v1621 = vadd.f32 0.0, %v1620
        %v1622 = vpop.f32.mrb[0].mxu0
        %1623 = vmatprep.mubr.bf16.mxu0 0
        %1624 = vmatmul.mubr.bf16.gmra.mrb[0].mxu0 %v1412
        %v1625 = vpop.f32.mrb[0].mxu0
        %v1626 = vadd.f32 0.0, %v1625
        %v1627 = vpop.f32.mrb[0].mxu0
        %v1628 = vpop.f32.mrb[0].mxu0
        %v1629 = vadd.f32 0.0, %v1628
        %v1630 = vpop.f32.mrb[0].mxu0
        %1631 = vmatprep.mubr.bf16.mxu0 0
        %1632 = vmatmul.mubr.bf16.gmra.mrb[0].mxu0 %v1413
        %v1633 = vpop.f32.mrb[0].mxu0
        %v1634 = vadd.f32 0.0, %v1633
        %v1635 = vpop.f32.mrb[0].mxu0
        %v1636 = vpop.f32.mrb[0].mxu0
        %v1637 = vadd.f32 0.0, %v1636
        %v1638 = vpop.f32.mrb[0].mxu0
        %1639 = vdwg.mxu0
        %v1640 = vadd.f32 %v1334, %v1514
        %v1641 = vadd.f32 %v1335, %v1517
        %v1642 = vadd.f32 %v1336, %v1522
        %v1643 = vadd.f32 %v1337, %v1525
        %v1644 = vadd.f32 %v1338, %v1530
        %v1645 = vadd.f32 %v1339, %v1533
        %v1646 = vadd.f32 %v1340, %v1538
        %v1647 = vadd.f32 %v1341, %v1541
        %v1648 = vadd.f32 %v1342, %v1546
        %v1649 = vadd.f32 %v1343, %v1549
        %v1650 = vadd.f32 %v1344, %v1554
        %v1651 = vadd.f32 %v1345, %v1557
        %v1652 = vadd.f32 %v1346, %v1562
        %v1653 = vadd.f32 %v1347, %v1565
        %v1654 = vadd.f32 %v1348, %v1570
        %v1655 = vadd.f32 %v1349, %v1573
        %v1656 = vadd.f32 %v1350, %v1578
        %v1657 = vadd.f32 %v1351, %v1581
        %v1658 = vadd.f32 %v1352, %v1586
        %v1659 = vadd.f32 %v1353, %v1589
        %v1660 = vadd.f32 %v1354, %v1594
        %v1661 = vadd.f32 %v1355, %v1597
        %v1662 = vadd.f32 %v1356, %v1602
        %v1663 = vadd.f32 %v1357, %v1605
        %v1664 = vadd.f32 %v1358, %v1610
        %v1665 = vadd.f32 %v1359, %v1613
        %v1666 = vadd.f32 %v1360, %v1618
        %v1667 = vadd.f32 %v1361, %v1621
        %v1668 = vadd.f32 %v1362, %v1626
        %v1669 = vadd.f32 %v1363, %v1629
        %v1670 = vadd.f32 %v1364, %v1634
        %v1671 = vadd.f32 %v1365, %v1637
        %v1672 = vld [vmem:[%s403 + $0x1] sm:$0xff]
        %v1673 = vld [vmem:[%s403 + $0x9] sm:$0xff]
        %v1674 = vld [vmem:[%s403 + $0x19] sm:$0xff]
        %v1675 = vld [vmem:[%s403 + $0x21] sm:$0xff]
        %v1676 = vld [vmem:[%s403 + $0x31] sm:$0xff]
        %v1677 = vld [vmem:[%s403 + $0x39] sm:$0xff]
        %v1678 = vld [vmem:[%s403 + $0x49] sm:$0xff]
        %v1679 = vld [vmem:[%s403 + $0x51] sm:$0xff]
        %v1680 = vld [vmem:[%s403 + $0x61] sm:$0xff]
        %v1681 = vld [vmem:[%s403 + $0x69] sm:$0xff]
        %v1682 = vld [vmem:[%s403 + $0x79] sm:$0xff]
        %v1683 = vld [vmem:[%s403 + $0x81] sm:$0xff]
        %v1684 = vld [vmem:[%s403 + $0x91] sm:$0xff]
        %v1685 = vld [vmem:[%s403 + $0x99] sm:$0xff]
        %v1686 = vld [vmem:[%s403 + $0xa9] sm:$0xff]
        %v1687 = vld [vmem:[%s403 + $0xb1] sm:$0xff]
        %v1688 = vld [vmem:[%s403 + $0xc1] sm:$0xff]
        %v1689 = vld [vmem:[%s403 + $0xc9] sm:$0xff]
        %v1690 = vld [vmem:[%s403 + $0xd9] sm:$0xff]
        %v1691 = vld [vmem:[%s403 + $0xe1] sm:$0xff]
        %v1692 = vld [vmem:[%s403 + $0xf1] sm:$0xff]
        %v1693 = vld [vmem:[%s403 + $0xf9] sm:$0xff]
        %v1694 = vld [vmem:[%s403 + $0x109] sm:$0xff]
        %v1695 = vld [vmem:[%s403 + $0x111] sm:$0xff]
        %v1696 = vld [vmem:[%s403 + $0x121] sm:$0xff]
        %v1697 = vld [vmem:[%s403 + $0x129] sm:$0xff]
        %v1698 = vld [vmem:[%s403 + $0x139] sm:$0xff]
        %v1699 = vld [vmem:[%s403 + $0x141] sm:$0xff]
        %v1700 = vld [vmem:[%s403 + $0x151] sm:$0xff]
        %v1701 = vld [vmem:[%s403 + $0x159] sm:$0xff]
        %v1702 = vld [vmem:[%s403 + $0x169] sm:$0xff]
        %v1703 = vld [vmem:[%s403 + $0x171] sm:$0xff]
        %v1704 = vpack.c.bf16 %v1673, %v1672
        %v1705 = vpack.c.bf16 %v1675, %v1674
        %v1706 = vpack.c.bf16 %v1677, %v1676
        %v1707 = vpack.c.bf16 %v1679, %v1678
        %v1708 = vpack.c.bf16 %v1681, %v1680
        %v1709 = vpack.c.bf16 %v1683, %v1682
        %v1710 = vpack.c.bf16 %v1685, %v1684
        %v1711 = vpack.c.bf16 %v1687, %v1686
        %v1712 = vpack.c.bf16 %v1689, %v1688
        %v1713 = vpack.c.bf16 %v1691, %v1690
        %v1714 = vpack.c.bf16 %v1693, %v1692
        %v1715 = vpack.c.bf16 %v1695, %v1694
        %v1716 = vpack.c.bf16 %v1697, %v1696
        %v1717 = vpack.c.bf16 %v1699, %v1698
        %v1718 = vpack.c.bf16 %v1701, %v1700
        %v1719 = vpack.c.bf16 %v1703, %v1702
        %s1720 = scalar_lea.vmem [#allocation4], 256
        %v1721 = vld [vmem:[%s1720] sm:$0xf]
        %v1722 = vld [vmem:[%s1720 + $0x4] sm:$0xf]
        %v1723 = vld [vmem:[%s1720 + $0x8] sm:$0xf]
        %v1724 = vld [vmem:[%s1720 + $0xc] sm:$0xf]
        %v1725 = vld [vmem:[%s1720 + $0x10] sm:$0xf]
        %v1726 = vld [vmem:[%s1720 + $0x14] sm:$0xf]
        %v1727 = vld [vmem:[%s1720 + $0x18] sm:$0xf]
        %v1728 = vld [vmem:[%s1720 + $0x1c] sm:$0xf]
        %v1729 = vld [vmem:[%s1720 + $0x20] sm:$0xf]
        %v1730 = vld [vmem:[%s1720 + $0x24] sm:$0xf]
        %v1731 = vld [vmem:[%s1720 + $0x28] sm:$0xf]
        %v1732 = vld [vmem:[%s1720 + $0x2c] sm:$0xf]
        %v1733 = vld [vmem:[%s1720 + $0x30] sm:$0xf]
        %v1734 = vld [vmem:[%s1720 + $0x34] sm:$0xf]
        %v1735 = vld [vmem:[%s1720 + $0x38] sm:$0xf]
        %v1736 = vld [vmem:[%s1720 + $0x3c] sm:$0xf]
        %v1753 = vunpack.c.l.b16 %v1721
        %v1754 = vunpack.c.l.b16 %v1722
        %v1755 = vunpack.c.l.b16 %v1723
        %v1756 = vunpack.c.l.b16 %v1724
        %v1757 = vunpack.c.l.b16 %v1725
        %v1758 = vunpack.c.l.b16 %v1726
        %v1759 = vunpack.c.l.b16 %v1727
        %v1760 = vunpack.c.l.b16 %v1728
        %v1761 = vunpack.c.l.b16 %v1729
        %v1762 = vunpack.c.l.b16 %v1730
        %v1763 = vunpack.c.l.b16 %v1731
        %v1764 = vunpack.c.l.b16 %v1732
        %v1765 = vunpack.c.l.b16 %v1733
        %v1766 = vunpack.c.l.b16 %v1734
        %v1767 = vunpack.c.l.b16 %v1735
        %v1768 = vunpack.c.l.b16 %v1736
        %v1769 = vpack.c.b16 %v1754, %v1753
        %v1770 = vpack.c.b16 %v1756, %v1755
        %v1771 = vpack.c.b16 %v1758, %v1757
        %v1772 = vpack.c.b16 %v1760, %v1759
        %v1773 = vpack.c.b16 %v1762, %v1761
        %v1774 = vpack.c.b16 %v1764, %v1763
        %v1775 = vpack.c.b16 %v1766, %v1765
        %v1776 = vpack.c.b16 %v1768, %v1767
        %1785 = vmatprep.subr.bf16.mxu0 0
        %1786 = vmatpush1.bf16.msra.mxu0 %v1769
        %1787 = vmatprep.subr.bf16.mxu0 0
        %1788 = vmatpush1.bf16.msra.mxu0 %v1770
        %1789 = vmatprep.subr.bf16.mxu0 0
        %1790 = vmatpush1.bf16.msra.mxu0 %v1771
        %1791 = vmatprep.subr.bf16.mxu0 0
        %1792 = vmatpush1.bf16.msra.mxu0 %v1772
        %1793 = vmatprep.subr.bf16.mxu0 0
        %1794 = vmatpush1.bf16.msra.mxu0 %v1773
        %1795 = vmatprep.subr.bf16.mxu0 0
        %1796 = vmatpush1.bf16.msra.mxu0 %v1774
        %1797 = vmatprep.subr.bf16.mxu0 0
        %1798 = vmatpush1.bf16.msra.mxu0 %v1775
        %1799 = vmatprep.subr.bf16.mxu0 0
        %1800 = vmatpush1.bf16.msra.mxu0 %v1776
        %1801 = vmatprep.subr.bf16.mxu0 0
        %1802 = vmatpush1.bf16.msra.mxu0 0
        %1803 = vmatprep.subr.bf16.mxu0 0
        %1804 = vmatpush1.bf16.msra.mxu0 0
        %1805 = vmatprep.subr.bf16.mxu0 0
        %1806 = vmatpush1.bf16.msra.mxu0 0
        %1807 = vmatprep.subr.bf16.mxu0 0
        %1808 = vmatpush1.bf16.msra.mxu0 0
        %1809 = vmatprep.subr.bf16.mxu0 0
        %1810 = vmatpush1.bf16.msra.mxu0 0
        %1811 = vmatprep.subr.bf16.mxu0 0
        %1812 = vmatpush1.bf16.msra.mxu0 0
        %1813 = vmatprep.subr.bf16.mxu0 0
        %1814 = vmatpush1.bf16.msra.mxu0 0
        %1815 = vmatprep.subr.bf16.mxu0 0
        %1816 = vmatpush1.bf16.msra.mxu0 0
        %1817 = vmatprep.mubr.bf16.mxu0 0
        %1818 = vmatmul.mubr.bf16.gmra.mrb[0].mxu0 %v1704
        %v1819 = vpop.f32.mrb[0].mxu0
        %v1820 = vadd.f32 0.0, %v1819
        %v1821 = vpop.f32.mrb[0].mxu0
        %v1822 = vpop.f32.mrb[0].mxu0
        %v1823 = vadd.f32 0.0, %v1822
        %v1824 = vpop.f32.mrb[0].mxu0
        %1825 = vmatprep.mubr.bf16.mxu0 0
        %1826 = vmatmul.mubr.bf16.gmra.mrb[0].mxu0 %v1705
        %v1827 = vpop.f32.mrb[0].mxu0
        %v1828 = vadd.f32 0.0, %v1827
        %v1829 = vpop.f32.mrb[0].mxu0
        %v1830 = vpop.f32.mrb[0].mxu0
        %v1831 = vadd.f32 0.0, %v1830
        %v1832 = vpop.f32.mrb[0].mxu0
        %1833 = vmatprep.mubr.bf16.mxu0 0
        %1834 = vmatmul.mubr.bf16.gmra.mrb[0].mxu0 %v1706
        %v1835 = vpop.f32.mrb[0].mxu0
        %v1836 = vadd.f32 0.0, %v1835
        %v1837 = vpop.f32.mrb[0].mxu0
        %v1838 = vpop.f32.mrb[0].mxu0
        %v1839 = vadd.f32 0.0, %v1838
        %v1840 = vpop.f32.mrb[0].mxu0
        %1841 = vmatprep.mubr.bf16.mxu0 0
        %1842 = vmatmul.mubr.bf16.gmra.mrb[0].mxu0 %v1707
        %v1843 = vpop.f32.mrb[0].mxu0
        %v1844 = vadd.f32 0.0, %v1843
        %v1845 = vpop.f32.mrb[0].mxu0
        %v1846 = vpop.f32.mrb[0].mxu0
        %v1847 = vadd.f32 0.0, %v1846
        %v1848 = vpop.f32.mrb[0].mxu0
        %1849 = vmatprep.mubr.bf16.mxu0 0
        %1850 = vmatmul.mubr.bf16.gmra.mrb[0].mxu0 %v1708
        %v1851 = vpop.f32.mrb[0].mxu0
        %v1852 = vadd.f32 0.0, %v1851
        %v1853 = vpop.f32.mrb[0].mxu0
        %v1854 = vpop.f32.mrb[0].mxu0
        %v1855 = vadd.f32 0.0, %v1854
        %v1856 = vpop.f32.mrb[0].mxu0
        %1857 = vmatprep.mubr.bf16.mxu0 0
        %1858 = vmatmul.mubr.bf16.gmra.mrb[0].mxu0 %v1709
        %v1859 = vpop.f32.mrb[0].mxu0
        %v1860 = vadd.f32 0.0, %v1859
        %v1861 = vpop.f32.mrb[0].mxu0
        %v1862 = vpop.f32.mrb[0].mxu0
        %v1863 = vadd.f32 0.0, %v1862
        %v1864 = vpop.f32.mrb[0].mxu0
        %1865 = vmatprep.mubr.bf16.mxu0 0
        %1866 = vmatmul.mubr.bf16.gmra.mrb[0].mxu0 %v1710
        %v1867 = vpop.f32.mrb[0].mxu0
        %v1868 = vadd.f32 0.0, %v1867
        %v1869 = vpop.f32.mrb[0].mxu0
        %v1870 = vpop.f32.mrb[0].mxu0
        %v1871 = vadd.f32 0.0, %v1870
        %v1872 = vpop.f32.mrb[0].mxu0
        %1873 = vmatprep.mubr.bf16.mxu0 0
        %1874 = vmatmul.mubr.bf16.gmra.mrb[0].mxu0 %v1711
        %v1875 = vpop.f32.mrb[0].mxu0
        %v1876 = vadd.f32 0.0, %v1875
        %v1877 = vpop.f32.mrb[0].mxu0
        %v1878 = vpop.f32.mrb[0].mxu0
        %v1879 = vadd.f32 0.0, %v1878
        %v1880 = vpop.f32.mrb[0].mxu0
        %1881 = vmatprep.mubr.bf16.mxu0 0
        %1882 = vmatmul.mubr.bf16.gmra.mrb[0].mxu0 %v1712
        %v1883 = vpop.f32.mrb[0].mxu0
        %v1884 = vadd.f32 0.0, %v1883
        %v1885 = vpop.f32.mrb[0].mxu0
        %v1886 = vpop.f32.mrb[0].mxu0
        %v1887 = vadd.f32 0.0, %v1886
        %v1888 = vpop.f32.mrb[0].mxu0
        %1889 = vmatprep.mubr.bf16.mxu0 0
        %1890 = vmatmul.mubr.bf16.gmra.mrb[0].mxu0 %v1713
        %v1891 = vpop.f32.mrb[0].mxu0
        %v1892 = vadd.f32 0.0, %v1891
        %v1893 = vpop.f32.mrb[0].mxu0
        %v1894 = vpop.f32.mrb[0].mxu0
        %v1895 = vadd.f32 0.0, %v1894
        %v1896 = vpop.f32.mrb[0].mxu0
        %1897 = vmatprep.mubr.bf16.mxu0 0
        %1898 = vmatmul.mubr.bf16.gmra.mrb[0].mxu0 %v1714
        %v1899 = vpop.f32.mrb[0].mxu0
        %v1900 = vadd.f32 0.0, %v1899
        %v1901 = vpop.f32.mrb[0].mxu0
        %v1902 = vpop.f32.mrb[0].mxu0
        %v1903 = vadd.f32 0.0, %v1902
        %v1904 = vpop.f32.mrb[0].mxu0
        %1905 = vmatprep.mubr.bf16.mxu0 0
        %1906 = vmatmul.mubr.bf16.gmra.mrb[0].mxu0 %v1715
        %v1907 = vpop.f32.mrb[0].mxu0
        %v1908 = vadd.f32 0.0, %v1907
        %v1909 = vpop.f32.mrb[0].mxu0
        %v1910 = vpop.f32.mrb[0].mxu0
        %v1911 = vadd.f32 0.0, %v1910
        %v1912 = vpop.f32.mrb[0].mxu0
        %1913 = vmatprep.mubr.bf16.mxu0 0
        %1914 = vmatmul.mubr.bf16.gmra.mrb[0].mxu0 %v1716
        %v1915 = vpop.f32.mrb[0].mxu0
        %v1916 = vadd.f32 0.0, %v1915
        %v1917 = vpop.f32.mrb[0].mxu0
        %v1918 = vpop.f32.mrb[0].mxu0
        %v1919 = vadd.f32 0.0, %v1918
        %v1920 = vpop.f32.mrb[0].mxu0
        %1921 = vmatprep.mubr.bf16.mxu0 0
        %1922 = vmatmul.mubr.bf16.gmra.mrb[0].mxu0 %v1717
        %v1923 = vpop.f32.mrb[0].mxu0
        %v1924 = vadd.f32 0.0, %v1923
        %v1925 = vpop.f32.mrb[0].mxu0
        %v1926 = vpop.f32.mrb[0].mxu0
        %v1927 = vadd.f32 0.0, %v1926
        %v1928 = vpop.f32.mrb[0].mxu0
        %1929 = vmatprep.mubr.bf16.mxu0 0
        %1930 = vmatmul.mubr.bf16.gmra.mrb[0].mxu0 %v1718
        %v1931 = vpop.f32.mrb[0].mxu0
        %v1932 = vadd.f32 0.0, %v1931
        %v1933 = vpop.f32.mrb[0].mxu0
        %v1934 = vpop.f32.mrb[0].mxu0
        %v1935 = vadd.f32 0.0, %v1934
        %v1936 = vpop.f32.mrb[0].mxu0
        %1937 = vmatprep.mubr.bf16.mxu0 0
        %1938 = vmatmul.mubr.bf16.gmra.mrb[0].mxu0 %v1719
        %v1939 = vpop.f32.mrb[0].mxu0
        %v1940 = vadd.f32 0.0, %v1939
        %v1941 = vpop.f32.mrb[0].mxu0
        %v1942 = vpop.f32.mrb[0].mxu0
        %v1943 = vadd.f32 0.0, %v1942
        %v1944 = vpop.f32.mrb[0].mxu0
        %1945 = vdwg.mxu0
        %v1946 = vadd.f32 %v1640, %v1820
        %v1947 = vadd.f32 %v1641, %v1823
        %v1948 = vadd.f32 %v1642, %v1828
        %v1949 = vadd.f32 %v1643, %v1831
        %v1950 = vadd.f32 %v1644, %v1836
        %v1951 = vadd.f32 %v1645, %v1839
        %v1952 = vadd.f32 %v1646, %v1844
        %v1953 = vadd.f32 %v1647, %v1847
        %v1954 = vadd.f32 %v1648, %v1852
        %v1955 = vadd.f32 %v1649, %v1855
        %v1956 = vadd.f32 %v1650, %v1860
        %v1957 = vadd.f32 %v1651, %v1863
        %v1958 = vadd.f32 %v1652, %v1868
        %v1959 = vadd.f32 %v1653, %v1871
        %v1960 = vadd.f32 %v1654, %v1876
        %v1961 = vadd.f32 %v1655, %v1879
        %v1962 = vadd.f32 %v1656, %v1884
        %v1963 = vadd.f32 %v1657, %v1887
        %v1964 = vadd.f32 %v1658, %v1892
        %v1965 = vadd.f32 %v1659, %v1895
        %v1966 = vadd.f32 %v1660, %v1900
        %v1967 = vadd.f32 %v1661, %v1903
        %v1968 = vadd.f32 %v1662, %v1908
        %v1969 = vadd.f32 %v1663, %v1911
        %v1970 = vadd.f32 %v1664, %v1916
        %v1971 = vadd.f32 %v1665, %v1919
        %v1972 = vadd.f32 %v1666, %v1924
        %v1973 = vadd.f32 %v1667, %v1927
        %v1974 = vadd.f32 %v1668, %v1932
        %v1975 = vadd.f32 %v1669, %v1935
        %v1976 = vadd.f32 %v1670, %v1940
        %v1977 = vadd.f32 %v1671, %v1943
        %v1978 = vld [vmem:[%s403 + $0x2] sm:$0xff]
        %v1979 = vld [vmem:[%s403 + $0xa] sm:$0xff]
        %v1980 = vld [vmem:[%s403 + $0x1a] sm:$0xff]
        %v1981 = vld [vmem:[%s403 + $0x22] sm:$0xff]
        %v1982 = vld [vmem:[%s403 + $0x32] sm:$0xff]
        %v1983 = vld [vmem:[%s403 + $0x3a] sm:$0xff]
        %v1984 = vld [vmem:[%s403 + $0x4a] sm:$0xff]
        %v1985 = vld [vmem:[%s403 + $0x52] sm:$0xff]
        %v1986 = vld [vmem:[%s403 + $0x62] sm:$0xff]
        %v1987 = vld [vmem:[%s403 + $0x6a] sm:$0xff]
        %v1988 = vld [vmem:[%s403 + $0x7a] sm:$0xff]
        %v1989 = vld [vmem:[%s403 + $0x82] sm:$0xff]
        %v1990 = vld [vmem:[%s403 + $0x92] sm:$0xff]
        %v1991 = vld [vmem:[%s403 + $0x9a] sm:$0xff]
        %v1992 = vld [vmem:[%s403 + $0xaa] sm:$0xff]
        %v1993 = vld [vmem:[%s403 + $0xb2] sm:$0xff]
        %v1994 = vld [vmem:[%s403 + $0xc2] sm:$0xff]
        %v1995 = vld [vmem:[%s403 + $0xca] sm:$0xff]
        %v1996 = vld [vmem:[%s403 + $0xda] sm:$0xff]
        %v1997 = vld [vmem:[%s403 + $0xe2] sm:$0xff]
        %v1998 = vld [vmem:[%s403 + $0xf2] sm:$0xff]
        %v1999 = vld [vmem:[%s403 + $0xfa] sm:$0xff]
        %v2000 = vld [vmem:[%s403 + $0x10a] sm:$0xff]
        %v2001 = vld [vmem:[%s403 + $0x112] sm:$0xff]
        %v2002 = vld [vmem:[%s403 + $0x122] sm:$0xff]
        %v2003 = vld [vmem:[%s403 + $0x12a] sm:$0xff]
        %v2004 = vld [vmem:[%s403 + $0x13a] sm:$0xff]
        %v2005 = vld [vmem:[%s403 + $0x142] sm:$0xff]
        %v2006 = vld [vmem:[%s403 + $0x152] sm:$0xff]
        %v2007 = vld [vmem:[%s403 + $0x15a] sm:$0xff]
        %v2008 = vld [vmem:[%s403 + $0x16a] sm:$0xff]
        %v2009 = vld [vmem:[%s403 + $0x172] sm:$0xff]
        %v2010 = vpack.c.bf16 %v1979, %v1978
        %v2011 = vpack.c.bf16 %v1981, %v1980
        %v2012 = vpack.c.bf16 %v1983, %v1982
        %v2013 = vpack.c.bf16 %v1985, %v1984
        %v2014 = vpack.c.bf16 %v1987, %v1986
        %v2015 = vpack.c.bf16 %v1989, %v1988
        %v2016 = vpack.c.bf16 %v1991, %v1990
        %v2017 = vpack.c.bf16 %v1993, %v1992
        %v2018 = vpack.c.bf16 %v1995, %v1994
        %v2019 = vpack.c.bf16 %v1997, %v1996
        %v2020 = vpack.c.bf16 %v1999, %v1998
        %v2021 = vpack.c.bf16 %v2001, %v2000
        %v2022 = vpack.c.bf16 %v2003, %v2002
        %v2023 = vpack.c.bf16 %v2005, %v2004
        %v2024 = vpack.c.bf16 %v2007, %v2006
        %v2025 = vpack.c.bf16 %v2009, %v2008
        %s2026 = scalar_lea.vmem [#allocation4], 320
        %v2027 = vld [vmem:[%s2026] sm:$0xf]
        %v2028 = vld [vmem:[%s2026 + $0x4] sm:$0xf]
        %v2029 = vld [vmem:[%s2026 + $0x8] sm:$0xf]
        %v2030 = vld [vmem:[%s2026 + $0xc] sm:$0xf]
        %v2031 = vld [vmem:[%s2026 + $0x10] sm:$0xf]
        %v2032 = vld [vmem:[%s2026 + $0x14] sm:$0xf]
        %v2033 = vld [vmem:[%s2026 + $0x18] sm:$0xf]
        %v2034 = vld [vmem:[%s2026 + $0x1c] sm:$0xf]
        %v2035 = vld [vmem:[%s2026 + $0x20] sm:$0xf]
        %v2036 = vld [vmem:[%s2026 + $0x24] sm:$0xf]
        %v2037 = vld [vmem:[%s2026 + $0x28] sm:$0xf]
        %v2038 = vld [vmem:[%s2026 + $0x2c] sm:$0xf]
        %v2039 = vld [vmem:[%s2026 + $0x30] sm:$0xf]
        %v2040 = vld [vmem:[%s2026 + $0x34] sm:$0xf]
        %v2041 = vld [vmem:[%s2026 + $0x38] sm:$0xf]
        %v2042 = vld [vmem:[%s2026 + $0x3c] sm:$0xf]
        %v2059 = vunpack.c.l.b16 %v2027
        %v2060 = vunpack.c.l.b16 %v2028
        %v2061 = vunpack.c.l.b16 %v2029
        %v2062 = vunpack.c.l.b16 %v2030
        %v2063 = vunpack.c.l.b16 %v2031
        %v2064 = vunpack.c.l.b16 %v2032
        %v2065 = vunpack.c.l.b16 %v2033
        %v2066 = vunpack.c.l.b16 %v2034
        %v2067 = vunpack.c.l.b16 %v2035
        %v2068 = vunpack.c.l.b16 %v2036
        %v2069 = vunpack.c.l.b16 %v2037
        %v2070 = vunpack.c.l.b16 %v2038
        %v2071 = vunpack.c.l.b16 %v2039
        %v2072 = vunpack.c.l.b16 %v2040
        %v2073 = vunpack.c.l.b16 %v2041
        %v2074 = vunpack.c.l.b16 %v2042
        %v2075 = vpack.c.b16 %v2060, %v2059
        %v2076 = vpack.c.b16 %v2062, %v2061
        %v2077 = vpack.c.b16 %v2064, %v2063
        %v2078 = vpack.c.b16 %v2066, %v2065
        %v2079 = vpack.c.b16 %v2068, %v2067
        %v2080 = vpack.c.b16 %v2070, %v2069
        %v2081 = vpack.c.b16 %v2072, %v2071
        %v2082 = vpack.c.b16 %v2074, %v2073
        %2091 = vmatprep.subr.bf16.mxu0 0
        %2092 = vmatpush1.bf16.msra.mxu0 %v2075
        %2093 = vmatprep.subr.bf16.mxu0 0
        %2094 = vmatpush1.bf16.msra.mxu0 %v2076
        %2095 = vmatprep.subr.bf16.mxu0 0
        %2096 = vmatpush1.bf16.msra.mxu0 %v2077
        %2097 = vmatprep.subr.bf16.mxu0 0
        %2098 = vmatpush1.bf16.msra.mxu0 %v2078
        %2099 = vmatprep.subr.bf16.mxu0 0
        %2100 = vmatpush1.bf16.msra.mxu0 %v2079
        %2101 = vmatprep.subr.bf16.mxu0 0
        %2102 = vmatpush1.bf16.msra.mxu0 %v2080
        %2103 = vmatprep.subr.bf16.mxu0 0
        %2104 = vmatpush1.bf16.msra.mxu0 %v2081
        %2105 = vmatprep.subr.bf16.mxu0 0
        %2106 = vmatpush1.bf16.msra.mxu0 %v2082
        %2107 = vmatprep.subr.bf16.mxu0 0
        %2108 = vmatpush1.bf16.msra.mxu0 0
        %2109 = vmatprep.subr.bf16.mxu0 0
        %2110 = vmatpush1.bf16.msra.mxu0 0
        %2111 = vmatprep.subr.bf16.mxu0 0
        %2112 = vmatpush1.bf16.msra.mxu0 0
        %2113 = vmatprep.subr.bf16.mxu0 0
        %2114 = vmatpush1.bf16.msra.mxu0 0
        %2115 = vmatprep.subr.bf16.mxu0 0
        %2116 = vmatpush1.bf16.msra.mxu0 0
        %2117 = vmatprep.subr.bf16.mxu0 0
        %2118 = vmatpush1.bf16.msra.mxu0 0
        %2119 = vmatprep.subr.bf16.mxu0 0
        %2120 = vmatpush1.bf16.msra.mxu0 0
        %2121 = vmatprep.subr.bf16.mxu0 0
        %2122 = vmatpush1.bf16.msra.mxu0 0
        %2123 = vmatprep.mubr.bf16.mxu0 0
        %2124 = vmatmul.mubr.bf16.gmra.mrb[0].mxu0 %v2010
        %v2125 = vpop.f32.mrb[0].mxu0
        %v2126 = vadd.f32 0.0, %v2125
        %v2127 = vpop.f32.mrb[0].mxu0
        %v2128 = vpop.f32.mrb[0].mxu0
        %v2129 = vadd.f32 0.0, %v2128
        %v2130 = vpop.f32.mrb[0].mxu0
        %2131 = vmatprep.mubr.bf16.mxu0 0
        %2132 = vmatmul.mubr.bf16.gmra.mrb[0].mxu0 %v2011
        %v2133 = vpop.f32.mrb[0].mxu0
        %v2134 = vadd.f32 0.0, %v2133
        %v2135 = vpop.f32.mrb[0].mxu0
        %v2136 = vpop.f32.mrb[0].mxu0
        %v2137 = vadd.f32 0.0, %v2136
        %v2138 = vpop.f32.mrb[0].mxu0
        %2139 = vmatprep.mubr.bf16.mxu0 0
        %2140 = vmatmul.mubr.bf16.gmra.mrb[0].mxu0 %v2012
        %v2141 = vpop.f32.mrb[0].mxu0
        %v2142 = vadd.f32 0.0, %v2141
        %v2143 = vpop.f32.mrb[0].mxu0
        %v2144 = vpop.f32.mrb[0].mxu0
        %v2145 = vadd.f32 0.0, %v2144
        %v2146 = vpop.f32.mrb[0].mxu0
        %2147 = vmatprep.mubr.bf16.mxu0 0
        %2148 = vmatmul.mubr.bf16.gmra.mrb[0].mxu0 %v2013
        %v2149 = vpop.f32.mrb[0].mxu0
        %v2150 = vadd.f32 0.0, %v2149
        %v2151 = vpop.f32.mrb[0].mxu0
        %v2152 = vpop.f32.mrb[0].mxu0
        %v2153 = vadd.f32 0.0, %v2152
        %v2154 = vpop.f32.mrb[0].mxu0
        %2155 = vmatprep.mubr.bf16.mxu0 0
        %2156 = vmatmul.mubr.bf16.gmra.mrb[0].mxu0 %v2014
        %v2157 = vpop.f32.mrb[0].mxu0
        %v2158 = vadd.f32 0.0, %v2157
        %v2159 = vpop.f32.mrb[0].mxu0
        %v2160 = vpop.f32.mrb[0].mxu0
        %v2161 = vadd.f32 0.0, %v2160
        %v2162 = vpop.f32.mrb[0].mxu0
        %2163 = vmatprep.mubr.bf16.mxu0 0
        %2164 = vmatmul.mubr.bf16.gmra.mrb[0].mxu0 %v2015
        %v2165 = vpop.f32.mrb[0].mxu0
        %v2166 = vadd.f32 0.0, %v2165
        %v2167 = vpop.f32.mrb[0].mxu0
        %v2168 = vpop.f32.mrb[0].mxu0
        %v2169 = vadd.f32 0.0, %v2168
        %v2170 = vpop.f32.mrb[0].mxu0
        %2171 = vmatprep.mubr.bf16.mxu0 0
        %2172 = vmatmul.mubr.bf16.gmra.mrb[0].mxu0 %v2016
        %v2173 = vpop.f32.mrb[0].mxu0
        %v2174 = vadd.f32 0.0, %v2173
        %v2175 = vpop.f32.mrb[0].mxu0
        %v2176 = vpop.f32.mrb[0].mxu0
        %v2177 = vadd.f32 0.0, %v2176
        %v2178 = vpop.f32.mrb[0].mxu0
        %2179 = vmatprep.mubr.bf16.mxu0 0
        %2180 = vmatmul.mubr.bf16.gmra.mrb[0].mxu0 %v2017
        %v2181 = vpop.f32.mrb[0].mxu0
        %v2182 = vadd.f32 0.0, %v2181
        %v2183 = vpop.f32.mrb[0].mxu0
        %v2184 = vpop.f32.mrb[0].mxu0
        %v2185 = vadd.f32 0.0, %v2184
        %v2186 = vpop.f32.mrb[0].mxu0
        %2187 = vmatprep.mubr.bf16.mxu0 0
        %2188 = vmatmul.mubr.bf16.gmra.mrb[0].mxu0 %v2018
        %v2189 = vpop.f32.mrb[0].mxu0
        %v2190 = vadd.f32 0.0, %v2189
        %v2191 = vpop.f32.mrb[0].mxu0
        %v2192 = vpop.f32.mrb[0].mxu0
        %v2193 = vadd.f32 0.0, %v2192
        %v2194 = vpop.f32.mrb[0].mxu0
        %2195 = vmatprep.mubr.bf16.mxu0 0
        %2196 = vmatmul.mubr.bf16.gmra.mrb[0].mxu0 %v2019
        %v2197 = vpop.f32.mrb[0].mxu0
        %v2198 = vadd.f32 0.0, %v2197
        %v2199 = vpop.f32.mrb[0].mxu0
        %v2200 = vpop.f32.mrb[0].mxu0
        %v2201 = vadd.f32 0.0, %v2200
        %v2202 = vpop.f32.mrb[0].mxu0
        %2203 = vmatprep.mubr.bf16.mxu0 0
        %2204 = vmatmul.mubr.bf16.gmra.mrb[0].mxu0 %v2020
        %v2205 = vpop.f32.mrb[0].mxu0
        %v2206 = vadd.f32 0.0, %v2205
        %v2207 = vpop.f32.mrb[0].mxu0
        %v2208 = vpop.f32.mrb[0].mxu0
        %v2209 = vadd.f32 0.0, %v2208
        %v2210 = vpop.f32.mrb[0].mxu0
        %2211 = vmatprep.mubr.bf16.mxu0 0
        %2212 = vmatmul.mubr.bf16.gmra.mrb[0].mxu0 %v2021
        %v2213 = vpop.f32.mrb[0].mxu0
        %v2214 = vadd.f32 0.0, %v2213
        %v2215 = vpop.f32.mrb[0].mxu0
        %v2216 = vpop.f32.mrb[0].mxu0
        %v2217 = vadd.f32 0.0, %v2216
        %v2218 = vpop.f32.mrb[0].mxu0
        %2219 = vmatprep.mubr.bf16.mxu0 0
        %2220 = vmatmul.mubr.bf16.gmra.mrb[0].mxu0 %v2022
        %v2221 = vpop.f32.mrb[0].mxu0
        %v2222 = vadd.f32 0.0, %v2221
        %v2223 = vpop.f32.mrb[0].mxu0
        %v2224 = vpop.f32.mrb[0].mxu0
        %v2225 = vadd.f32 0.0, %v2224
        %v2226 = vpop.f32.mrb[0].mxu0
        %2227 = vmatprep.mubr.bf16.mxu0 0
        %2228 = vmatmul.mubr.bf16.gmra.mrb[0].mxu0 %v2023
        %v2229 = vpop.f32.mrb[0].mxu0
        %v2230 = vadd.f32 0.0, %v2229
        %v2231 = vpop.f32.mrb[0].mxu0
        %v2232 = vpop.f32.mrb[0].mxu0
        %v2233 = vadd.f32 0.0, %v2232
        %v2234 = vpop.f32.mrb[0].mxu0
        %2235 = vmatprep.mubr.bf16.mxu0 0
        %2236 = vmatmul.mubr.bf16.gmra.mrb[0].mxu0 %v2024
        %v2237 = vpop.f32.mrb[0].mxu0
        %v2238 = vadd.f32 0.0, %v2237
        %v2239 = vpop.f32.mrb[0].mxu0
        %v2240 = vpop.f32.mrb[0].mxu0
        %v2241 = vadd.f32 0.0, %v2240
        %v2242 = vpop.f32.mrb[0].mxu0
        %2243 = vmatprep.mubr.bf16.mxu0 0
        %2244 = vmatmul.mubr.bf16.gmra.mrb[0].mxu0 %v2025
        %v2245 = vpop.f32.mrb[0].mxu0
        %v2246 = vadd.f32 0.0, %v2245
        %v2247 = vpop.f32.mrb[0].mxu0
        %v2248 = vpop.f32.mrb[0].mxu0
        %v2249 = vadd.f32 0.0, %v2248
        %v2250 = vpop.f32.mrb[0].mxu0
        %2251 = vdwg.mxu0
        %v2252 = vadd.f32 %v1946, %v2126
        %v2253 = vadd.f32 %v1947, %v2129
        %v2254 = vadd.f32 %v1948, %v2134
        %v2255 = vadd.f32 %v1949, %v2137
        %v2256 = vadd.f32 %v1950, %v2142
        %v2257 = vadd.f32 %v1951, %v2145
        %v2258 = vadd.f32 %v1952, %v2150
        %v2259 = vadd.f32 %v1953, %v2153
        %v2260 = vadd.f32 %v1954, %v2158
        %v2261 = vadd.f32 %v1955, %v2161
        %v2262 = vadd.f32 %v1956, %v2166
        %v2263 = vadd.f32 %v1957, %v2169
        %v2264 = vadd.f32 %v1958, %v2174
        %v2265 = vadd.f32 %v1959, %v2177
        %v2266 = vadd.f32 %v1960, %v2182
        %v2267 = vadd.f32 %v1961, %v2185
        %v2268 = vadd.f32 %v1962, %v2190
        %v2269 = vadd.f32 %v1963, %v2193
        %v2270 = vadd.f32 %v1964, %v2198
        %v2271 = vadd.f32 %v1965, %v2201
        %v2272 = vadd.f32 %v1966, %v2206
        %v2273 = vadd.f32 %v1967, %v2209
        %v2274 = vadd.f32 %v1968, %v2214
        %v2275 = vadd.f32 %v1969, %v2217
        %v2276 = vadd.f32 %v1970, %v2222
        %v2277 = vadd.f32 %v1971, %v2225
        %v2278 = vadd.f32 %v1972, %v2230
        %v2279 = vadd.f32 %v1973, %v2233
        %v2280 = vadd.f32 %v1974, %v2238
        %v2281 = vadd.f32 %v1975, %v2241
        %v2282 = vadd.f32 %v1976, %v2246
        %v2283 = vadd.f32 %v1977, %v2249
        %s2284 = scalar_lea.vmem [#allocation2], 48
        %v2285 = vld [vmem:[%s2284] sm:$0xff]
        %v2286 = vld [vmem:[%s2284 + $0x8] sm:$0xff]
        %v2287 = vld [vmem:[%s2284 + $0x18] sm:$0xff]
        %v2288 = vld [vmem:[%s2284 + $0x20] sm:$0xff]
        %v2289 = vld [vmem:[%s2284 + $0x30] sm:$0xff]
        %v2290 = vld [vmem:[%s2284 + $0x38] sm:$0xff]
        %v2291 = vld [vmem:[%s2284 + $0x48] sm:$0xff]
        %v2292 = vld [vmem:[%s2284 + $0x50] sm:$0xff]
        %v2293 = vld [vmem:[%s2284 + $0x60] sm:$0xff]
        %v2294 = vld [vmem:[%s2284 + $0x68] sm:$0xff]
        %v2295 = vld [vmem:[%s2284 + $0x78] sm:$0xff]
        %v2296 = vld [vmem:[%s2284 + $0x80] sm:$0xff]
        %v2297 = vld [vmem:[%s2284 + $0x90] sm:$0xff]
        %v2298 = vld [vmem:[%s2284 + $0x98] sm:$0xff]
        %v2299 = vld [vmem:[%s2284 + $0xa8] sm:$0xff]
        %v2300 = vld [vmem:[%s2284 + $0xb0] sm:$0xff]
        %v2301 = vld [vmem:[%s2284 + $0xc0] sm:$0xff]
        %v2302 = vld [vmem:[%s2284 + $0xc8] sm:$0xff]
        %v2303 = vld [vmem:[%s2284 + $0xd8] sm:$0xff]
        %v2304 = vld [vmem:[%s2284 + $0xe0] sm:$0xff]
        %v2305 = vld [vmem:[%s2284 + $0xf0] sm:$0xff]
        %v2306 = vld [vmem:[%s2284 + $0xf8] sm:$0xff]
        %v2307 = vld [vmem:[%s2284 + $0x108] sm:$0xff]
        %v2308 = vld [vmem:[%s2284 + $0x110] sm:$0xff]
        %v2309 = vld [vmem:[%s2284 + $0x120] sm:$0xff]
        %v2310 = vld [vmem:[%s2284 + $0x128] sm:$0xff]
        %v2311 = vld [vmem:[%s2284 + $0x138] sm:$0xff]
        %v2312 = vld [vmem:[%s2284 + $0x140] sm:$0xff]
        %v2313 = vld [vmem:[%s2284 + $0x150] sm:$0xff]
        %v2314 = vld [vmem:[%s2284 + $0x158] sm:$0xff]
        %v2315 = vld [vmem:[%s2284 + $0x168] sm:$0xff]
        %v2316 = vld [vmem:[%s2284 + $0x170] sm:$0xff]
        %v2317 = vpack.c.bf16 %v2286, %v2285
        %v2318 = vpack.c.bf16 %v2288, %v2287
        %v2319 = vpack.c.bf16 %v2290, %v2289
        %v2320 = vpack.c.bf16 %v2292, %v2291
        %v2321 = vpack.c.bf16 %v2294, %v2293
        %v2322 = vpack.c.bf16 %v2296, %v2295
        %v2323 = vpack.c.bf16 %v2298, %v2297
        %v2324 = vpack.c.bf16 %v2300, %v2299
        %v2325 = vpack.c.bf16 %v2302, %v2301
        %v2326 = vpack.c.bf16 %v2304, %v2303
        %v2327 = vpack.c.bf16 %v2306, %v2305
        %v2328 = vpack.c.bf16 %v2308, %v2307
        %v2329 = vpack.c.bf16 %v2310, %v2309
        %v2330 = vpack.c.bf16 %v2312, %v2311
        %v2331 = vpack.c.bf16 %v2314, %v2313
        %v2332 = vpack.c.bf16 %v2316, %v2315
        %s2333 = scalar_lea.vmem [#allocation4], 384
        %v2334 = vld [vmem:[%s2333] sm:$0xf]
        %v2335 = vld [vmem:[%s2333 + $0x4] sm:$0xf]
        %v2336 = vld [vmem:[%s2333 + $0x8] sm:$0xf]
        %v2337 = vld [vmem:[%s2333 + $0xc] sm:$0xf]
        %v2338 = vld [vmem:[%s2333 + $0x10] sm:$0xf]
        %v2339 = vld [vmem:[%s2333 + $0x14] sm:$0xf]
        %v2340 = vld [vmem:[%s2333 + $0x18] sm:$0xf]
        %v2341 = vld [vmem:[%s2333 + $0x1c] sm:$0xf]
        %v2342 = vld [vmem:[%s2333 + $0x20] sm:$0xf]
        %v2343 = vld [vmem:[%s2333 + $0x24] sm:$0xf]
        %v2344 = vld [vmem:[%s2333 + $0x28] sm:$0xf]
        %v2345 = vld [vmem:[%s2333 + $0x2c] sm:$0xf]
        %v2346 = vld [vmem:[%s2333 + $0x30] sm:$0xf]
        %v2347 = vld [vmem:[%s2333 + $0x34] sm:$0xf]
        %v2348 = vld [vmem:[%s2333 + $0x38] sm:$0xf]
        %v2349 = vld [vmem:[%s2333 + $0x3c] sm:$0xf]
        %v2366 = vunpack.c.l.b16 %v2334
        %v2367 = vunpack.c.l.b16 %v2335
        %v2368 = vunpack.c.l.b16 %v2336
        %v2369 = vunpack.c.l.b16 %v2337
        %v2370 = vunpack.c.l.b16 %v2338
        %v2371 = vunpack.c.l.b16 %v2339
        %v2372 = vunpack.c.l.b16 %v2340
        %v2373 = vunpack.c.l.b16 %v2341
        %v2374 = vunpack.c.l.b16 %v2342
        %v2375 = vunpack.c.l.b16 %v2343
        %v2376 = vunpack.c.l.b16 %v2344
        %v2377 = vunpack.c.l.b16 %v2345
        %v2378 = vunpack.c.l.b16 %v2346
        %v2379 = vunpack.c.l.b16 %v2347
        %v2380 = vunpack.c.l.b16 %v2348
        %v2381 = vunpack.c.l.b16 %v2349
        %v2382 = vpack.c.b16 %v2367, %v2366
        %v2383 = vpack.c.b16 %v2369, %v2368
        %v2384 = vpack.c.b16 %v2371, %v2370
        %v2385 = vpack.c.b16 %v2373, %v2372
        %v2386 = vpack.c.b16 %v2375, %v2374
        %v2387 = vpack.c.b16 %v2377, %v2376
        %v2388 = vpack.c.b16 %v2379, %v2378
        %v2389 = vpack.c.b16 %v2381, %v2380
        %2398 = vmatprep.subr.bf16.mxu0 0
        %2399 = vmatpush1.bf16.msra.mxu0 %v2382
        %2400 = vmatprep.subr.bf16.mxu0 0
        %2401 = vmatpush1.bf16.msra.mxu0 %v2383
        %2402 = vmatprep.subr.bf16.mxu0 0
        %2403 = vmatpush1.bf16.msra.mxu0 %v2384
        %2404 = vmatprep.subr.bf16.mxu0 0
        %2405 = vmatpush1.bf16.msra.mxu0 %v2385
        %2406 = vmatprep.subr.bf16.mxu0 0
        %2407 = vmatpush1.bf16.msra.mxu0 %v2386
        %2408 = vmatprep.subr.bf16.mxu0 0
        %2409 = vmatpush1.bf16.msra.mxu0 %v2387
        %2410 = vmatprep.subr.bf16.mxu0 0
        %2411 = vmatpush1.bf16.msra.mxu0 %v2388
        %2412 = vmatprep.subr.bf16.mxu0 0
        %2413 = vmatpush1.bf16.msra.mxu0 %v2389
        %2414 = vmatprep.subr.bf16.mxu0 0
        %2415 = vmatpush1.bf16.msra.mxu0 0
        %2416 = vmatprep.subr.bf16.mxu0 0
        %2417 = vmatpush1.bf16.msra.mxu0 0
        %2418 = vmatprep.subr.bf16.mxu0 0
        %2419 = vmatpush1.bf16.msra.mxu0 0
        %2420 = vmatprep.subr.bf16.mxu0 0
        %2421 = vmatpush1.bf16.msra.mxu0 0
        %2422 = vmatprep.subr.bf16.mxu0 0
        %2423 = vmatpush1.bf16.msra.mxu0 0
        %2424 = vmatprep.subr.bf16.mxu0 0
        %2425 = vmatpush1.bf16.msra.mxu0 0
        %2426 = vmatprep.subr.bf16.mxu0 0
        %2427 = vmatpush1.bf16.msra.mxu0 0
        %2428 = vmatprep.subr.bf16.mxu0 0
        %2429 = vmatpush1.bf16.msra.mxu0 0
        %2430 = vmatprep.mubr.bf16.mxu0 0
        %2431 = vmatmul.mubr.bf16.gmra.mrb[0].mxu0 %v2317
        %v2432 = vpop.f32.mrb[0].mxu0
        %v2433 = vadd.f32 0.0, %v2432
        %v2434 = vpop.f32.mrb[0].mxu0
        %v2435 = vpop.f32.mrb[0].mxu0
        %v2436 = vadd.f32 0.0, %v2435
        %v2437 = vpop.f32.mrb[0].mxu0
        %2438 = vmatprep.mubr.bf16.mxu0 0
        %2439 = vmatmul.mubr.bf16.gmra.mrb[0].mxu0 %v2318
        %v2440 = vpop.f32.mrb[0].mxu0
        %v2441 = vadd.f32 0.0, %v2440
        %v2442 = vpop.f32.mrb[0].mxu0
        %v2443 = vpop.f32.mrb[0].mxu0
        %v2444 = vadd.f32 0.0, %v2443
        %v2445 = vpop.f32.mrb[0].mxu0
        %2446 = vmatprep.mubr.bf16.mxu0 0
        %2447 = vmatmul.mubr.bf16.gmra.mrb[0].mxu0 %v2319
        %v2448 = vpop.f32.mrb[0].mxu0
        %v2449 = vadd.f32 0.0, %v2448
        %v2450 = vpop.f32.mrb[0].mxu0
        %v2451 = vpop.f32.mrb[0].mxu0
        %v2452 = vadd.f32 0.0, %v2451
        %v2453 = vpop.f32.mrb[0].mxu0
        %2454 = vmatprep.mubr.bf16.mxu0 0
        %2455 = vmatmul.mubr.bf16.gmra.mrb[0].mxu0 %v2320
        %v2456 = vpop.f32.mrb[0].mxu0
        %v2457 = vadd.f32 0.0, %v2456
        %v2458 = vpop.f32.mrb[0].mxu0
        %v2459 = vpop.f32.mrb[0].mxu0
        %v2460 = vadd.f32 0.0, %v2459
        %v2461 = vpop.f32.mrb[0].mxu0
        %2462 = vmatprep.mubr.bf16.mxu0 0
        %2463 = vmatmul.mubr.bf16.gmra.mrb[0].mxu0 %v2321
        %v2464 = vpop.f32.mrb[0].mxu0
        %v2465 = vadd.f32 0.0, %v2464
        %v2466 = vpop.f32.mrb[0].mxu0
        %v2467 = vpop.f32.mrb[0].mxu0
        %v2468 = vadd.f32 0.0, %v2467
        %v2469 = vpop.f32.mrb[0].mxu0
        %2470 = vmatprep.mubr.bf16.mxu0 0
        %2471 = vmatmul.mubr.bf16.gmra.mrb[0].mxu0 %v2322
        %v2472 = vpop.f32.mrb[0].mxu0
        %v2473 = vadd.f32 0.0, %v2472
        %v2474 = vpop.f32.mrb[0].mxu0
        %v2475 = vpop.f32.mrb[0].mxu0
        %v2476 = vadd.f32 0.0, %v2475
        %v2477 = vpop.f32.mrb[0].mxu0
        %2478 = vmatprep.mubr.bf16.mxu0 0
        %2479 = vmatmul.mubr.bf16.gmra.mrb[0].mxu0 %v2323
        %v2480 = vpop.f32.mrb[0].mxu0
        %v2481 = vadd.f32 0.0, %v2480
        %v2482 = vpop.f32.mrb[0].mxu0
        %v2483 = vpop.f32.mrb[0].mxu0
        %v2484 = vadd.f32 0.0, %v2483
        %v2485 = vpop.f32.mrb[0].mxu0
        %2486 = vmatprep.mubr.bf16.mxu0 0
        %2487 = vmatmul.mubr.bf16.gmra.mrb[0].mxu0 %v2324
        %v2488 = vpop.f32.mrb[0].mxu0
        %v2489 = vadd.f32 0.0, %v2488
        %v2490 = vpop.f32.mrb[0].mxu0
        %v2491 = vpop.f32.mrb[0].mxu0
        %v2492 = vadd.f32 0.0, %v2491
        %v2493 = vpop.f32.mrb[0].mxu0
        %2494 = vmatprep.mubr.bf16.mxu0 0
        %2495 = vmatmul.mubr.bf16.gmra.mrb[0].mxu0 %v2325
        %v2496 = vpop.f32.mrb[0].mxu0
        %v2497 = vadd.f32 0.0, %v2496
        %v2498 = vpop.f32.mrb[0].mxu0
        %v2499 = vpop.f32.mrb[0].mxu0
        %v2500 = vadd.f32 0.0, %v2499
        %v2501 = vpop.f32.mrb[0].mxu0
        %2502 = vmatprep.mubr.bf16.mxu0 0
        %2503 = vmatmul.mubr.bf16.gmra.mrb[0].mxu0 %v2326
        %v2504 = vpop.f32.mrb[0].mxu0
        %v2505 = vadd.f32 0.0, %v2504
        %v2506 = vpop.f32.mrb[0].mxu0
        %v2507 = vpop.f32.mrb[0].mxu0
        %v2508 = vadd.f32 0.0, %v2507
        %v2509 = vpop.f32.mrb[0].mxu0
        %2510 = vmatprep.mubr.bf16.mxu0 0
        %2511 = vmatmul.mubr.bf16.gmra.mrb[0].mxu0 %v2327
        %v2512 = vpop.f32.mrb[0].mxu0
        %v2513 = vadd.f32 0.0, %v2512
        %v2514 = vpop.f32.mrb[0].mxu0
        %v2515 = vpop.f32.mrb[0].mxu0
        %v2516 = vadd.f32 0.0, %v2515
        %v2517 = vpop.f32.mrb[0].mxu0
        %2518 = vmatprep.mubr.bf16.mxu0 0
        %2519 = vmatmul.mubr.bf16.gmra.mrb[0].mxu0 %v2328
        %v2520 = vpop.f32.mrb[0].mxu0
        %v2521 = vadd.f32 0.0, %v2520
        %v2522 = vpop.f32.mrb[0].mxu0
        %v2523 = vpop.f32.mrb[0].mxu0
        %v2524 = vadd.f32 0.0, %v2523
        %v2525 = vpop.f32.mrb[0].mxu0
        %2526 = vmatprep.mubr.bf16.mxu0 0
        %2527 = vmatmul.mubr.bf16.gmra.mrb[0].mxu0 %v2329
        %v2528 = vpop.f32.mrb[0].mxu0
        %v2529 = vadd.f32 0.0, %v2528
        %v2530 = vpop.f32.mrb[0].mxu0
        %v2531 = vpop.f32.mrb[0].mxu0
        %v2532 = vadd.f32 0.0, %v2531
        %v2533 = vpop.f32.mrb[0].mxu0
        %2534 = vmatprep.mubr.bf16.mxu0 0
        %2535 = vmatmul.mubr.bf16.gmra.mrb[0].mxu0 %v2330
        %v2536 = vpop.f32.mrb[0].mxu0
        %v2537 = vadd.f32 0.0, %v2536
        %v2538 = vpop.f32.mrb[0].mxu0
        %v2539 = vpop.f32.mrb[0].mxu0
        %v2540 = vadd.f32 0.0, %v2539
        %v2541 = vpop.f32.mrb[0].mxu0
        %2542 = vmatprep.mubr.bf16.mxu0 0
        %2543 = vmatmul.mubr.bf16.gmra.mrb[0].mxu0 %v2331
        %v2544 = vpop.f32.mrb[0].mxu0
        %v2545 = vadd.f32 0.0, %v2544
        %v2546 = vpop.f32.mrb[0].mxu0
        %v2547 = vpop.f32.mrb[0].mxu0
        %v2548 = vadd.f32 0.0, %v2547
        %v2549 = vpop.f32.mrb[0].mxu0
        %2550 = vmatprep.mubr.bf16.mxu0 0
        %2551 = vmatmul.mubr.bf16.gmra.mrb[0].mxu0 %v2332
        %v2552 = vpop.f32.mrb[0].mxu0
        %v2553 = vadd.f32 0.0, %v2552
        %v2554 = vpop.f32.mrb[0].mxu0
        %v2555 = vpop.f32.mrb[0].mxu0
        %v2556 = vadd.f32 0.0, %v2555
        %v2557 = vpop.f32.mrb[0].mxu0
        %2558 = vdwg.mxu0
        %v2559 = vadd.f32 %v2252, %v2433
        %v2560 = vadd.f32 %v2253, %v2436
        %v2561 = vadd.f32 %v2254, %v2441
        %v2562 = vadd.f32 %v2255, %v2444
        %v2563 = vadd.f32 %v2256, %v2449
        %v2564 = vadd.f32 %v2257, %v2452
        %v2565 = vadd.f32 %v2258, %v2457
        %v2566 = vadd.f32 %v2259, %v2460
        %v2567 = vadd.f32 %v2260, %v2465
        %v2568 = vadd.f32 %v2261, %v2468
        %v2569 = vadd.f32 %v2262, %v2473
        %v2570 = vadd.f32 %v2263, %v2476
        %v2571 = vadd.f32 %v2264, %v2481
        %v2572 = vadd.f32 %v2265, %v2484
        %v2573 = vadd.f32 %v2266, %v2489
        %v2574 = vadd.f32 %v2267, %v2492
        %v2575 = vadd.f32 %v2268, %v2497
        %v2576 = vadd.f32 %v2269, %v2500
        %v2577 = vadd.f32 %v2270, %v2505
        %v2578 = vadd.f32 %v2271, %v2508
        %v2579 = vadd.f32 %v2272, %v2513
        %v2580 = vadd.f32 %v2273, %v2516
        %v2581 = vadd.f32 %v2274, %v2521
        %v2582 = vadd.f32 %v2275, %v2524
        %v2583 = vadd.f32 %v2276, %v2529
        %v2584 = vadd.f32 %v2277, %v2532
        %v2585 = vadd.f32 %v2278, %v2537
        %v2586 = vadd.f32 %v2279, %v2540
        %v2587 = vadd.f32 %v2280, %v2545
        %v2588 = vadd.f32 %v2281, %v2548
        %v2589 = vadd.f32 %v2282, %v2553
        %v2590 = vadd.f32 %v2283, %v2556
        %v2591 = vld [vmem:[%s2284 + $0x1] sm:$0xff]
        %v2592 = vld [vmem:[%s2284 + $0x9] sm:$0xff]
        %v2593 = vld [vmem:[%s2284 + $0x19] sm:$0xff]
        %v2594 = vld [vmem:[%s2284 + $0x21] sm:$0xff]
        %v2595 = vld [vmem:[%s2284 + $0x31] sm:$0xff]
        %v2596 = vld [vmem:[%s2284 + $0x39] sm:$0xff]
        %v2597 = vld [vmem:[%s2284 + $0x49] sm:$0xff]
        %v2598 = vld [vmem:[%s2284 + $0x51] sm:$0xff]
        %v2599 = vld [vmem:[%s2284 + $0x61] sm:$0xff]
        %v2600 = vld [vmem:[%s2284 + $0x69] sm:$0xff]
        %v2601 = vld [vmem:[%s2284 + $0x79] sm:$0xff]
        %v2602 = vld [vmem:[%s2284 + $0x81] sm:$0xff]
        %v2603 = vld [vmem:[%s2284 + $0x91] sm:$0xff]
        %v2604 = vld [vmem:[%s2284 + $0x99] sm:$0xff]
        %v2605 = vld [vmem:[%s2284 + $0xa9] sm:$0xff]
        %v2606 = vld [vmem:[%s2284 + $0xb1] sm:$0xff]
        %v2607 = vld [vmem:[%s2284 + $0xc1] sm:$0xff]
        %v2608 = vld [vmem:[%s2284 + $0xc9] sm:$0xff]
        %v2609 = vld [vmem:[%s2284 + $0xd9] sm:$0xff]
        %v2610 = vld [vmem:[%s2284 + $0xe1] sm:$0xff]
        %v2611 = vld [vmem:[%s2284 + $0xf1] sm:$0xff]
        %v2612 = vld [vmem:[%s2284 + $0xf9] sm:$0xff]
        %v2613 = vld [vmem:[%s2284 + $0x109] sm:$0xff]
        %v2614 = vld [vmem:[%s2284 + $0x111] sm:$0xff]
        %v2615 = vld [vmem:[%s2284 + $0x121] sm:$0xff]
        %v2616 = vld [vmem:[%s2284 + $0x129] sm:$0xff]
        %v2617 = vld [vmem:[%s2284 + $0x139] sm:$0xff]
        %v2618 = vld [vmem:[%s2284 + $0x141] sm:$0xff]
        %v2619 = vld [vmem:[%s2284 + $0x151] sm:$0xff]
        %v2620 = vld [vmem:[%s2284 + $0x159] sm:$0xff]
        %v2621 = vld [vmem:[%s2284 + $0x169] sm:$0xff]
        %v2622 = vld [vmem:[%s2284 + $0x171] sm:$0xff]
        %v2623 = vpack.c.bf16 %v2592, %v2591
        %v2624 = vpack.c.bf16 %v2594, %v2593
        %v2625 = vpack.c.bf16 %v2596, %v2595
        %v2626 = vpack.c.bf16 %v2598, %v2597
        %v2627 = vpack.c.bf16 %v2600, %v2599
        %v2628 = vpack.c.bf16 %v2602, %v2601
        %v2629 = vpack.c.bf16 %v2604, %v2603
        %v2630 = vpack.c.bf16 %v2606, %v2605
        %v2631 = vpack.c.bf16 %v2608, %v2607
        %v2632 = vpack.c.bf16 %v2610, %v2609
        %v2633 = vpack.c.bf16 %v2612, %v2611
        %v2634 = vpack.c.bf16 %v2614, %v2613
        %v2635 = vpack.c.bf16 %v2616, %v2615
        %v2636 = vpack.c.bf16 %v2618, %v2617
        %v2637 = vpack.c.bf16 %v2620, %v2619
        %v2638 = vpack.c.bf16 %v2622, %v2621
        %s2639 = scalar_lea.vmem [#allocation4], 448
        %v2640 = vld [vmem:[%s2639] sm:$0xf]
        %v2641 = vld [vmem:[%s2639 + $0x4] sm:$0xf]
        %v2642 = vld [vmem:[%s2639 + $0x8] sm:$0xf]
        %v2643 = vld [vmem:[%s2639 + $0xc] sm:$0xf]
        %v2644 = vld [vmem:[%s2639 + $0x10] sm:$0xf]
        %v2645 = vld [vmem:[%s2639 + $0x14] sm:$0xf]
        %v2646 = vld [vmem:[%s2639 + $0x18] sm:$0xf]
        %v2647 = vld [vmem:[%s2639 + $0x1c] sm:$0xf]
        %v2648 = vld [vmem:[%s2639 + $0x20] sm:$0xf]
        %v2649 = vld [vmem:[%s2639 + $0x24] sm:$0xf]
        %v2650 = vld [vmem:[%s2639 + $0x28] sm:$0xf]
        %v2651 = vld [vmem:[%s2639 + $0x2c] sm:$0xf]
        %v2652 = vld [vmem:[%s2639 + $0x30] sm:$0xf]
        %v2653 = vld [vmem:[%s2639 + $0x34] sm:$0xf]
        %v2654 = vld [vmem:[%s2639 + $0x38] sm:$0xf]
        %v2655 = vld [vmem:[%s2639 + $0x3c] sm:$0xf]
        %v2672 = vunpack.c.l.b16 %v2640
        %v2673 = vunpack.c.l.b16 %v2641
        %v2674 = vunpack.c.l.b16 %v2642
        %v2675 = vunpack.c.l.b16 %v2643
        %v2676 = vunpack.c.l.b16 %v2644
        %v2677 = vunpack.c.l.b16 %v2645
        %v2678 = vunpack.c.l.b16 %v2646
        %v2679 = vunpack.c.l.b16 %v2647
        %v2680 = vunpack.c.l.b16 %v2648
        %v2681 = vunpack.c.l.b16 %v2649
        %v2682 = vunpack.c.l.b16 %v2650
        %v2683 = vunpack.c.l.b16 %v2651
        %v2684 = vunpack.c.l.b16 %v2652
        %v2685 = vunpack.c.l.b16 %v2653
        %v2686 = vunpack.c.l.b16 %v2654
        %v2687 = vunpack.c.l.b16 %v2655
        %v2688 = vpack.c.b16 %v2673, %v2672
        %v2689 = vpack.c.b16 %v2675, %v2674
        %v2690 = vpack.c.b16 %v2677, %v2676
        %v2691 = vpack.c.b16 %v2679, %v2678
        %v2692 = vpack.c.b16 %v2681, %v2680
        %v2693 = vpack.c.b16 %v2683, %v2682
        %v2694 = vpack.c.b16 %v2685, %v2684
        %v2695 = vpack.c.b16 %v2687, %v2686
        %2704 = vmatprep.subr.bf16.mxu0 0
        %2705 = vmatpush1.bf16.msra.mxu0 %v2688
        %2706 = vmatprep.subr.bf16.mxu0 0
        %2707 = vmatpush1.bf16.msra.mxu0 %v2689
        %2708 = vmatprep.subr.bf16.mxu0 0
        %2709 = vmatpush1.bf16.msra.mxu0 %v2690
        %2710 = vmatprep.subr.bf16.mxu0 0
        %2711 = vmatpush1.bf16.msra.mxu0 %v2691
        %2712 = vmatprep.subr.bf16.mxu0 0
        %2713 = vmatpush1.bf16.msra.mxu0 %v2692
        %2714 = vmatprep.subr.bf16.mxu0 0
        %2715 = vmatpush1.bf16.msra.mxu0 %v2693
        %2716 = vmatprep.subr.bf16.mxu0 0
        %2717 = vmatpush1.bf16.msra.mxu0 %v2694
        %2718 = vmatprep.subr.bf16.mxu0 0
        %2719 = vmatpush1.bf16.msra.mxu0 %v2695
        %2720 = vmatprep.subr.bf16.mxu0 0
        %2721 = vmatpush1.bf16.msra.mxu0 0
        %2722 = vmatprep.subr.bf16.mxu0 0
        %2723 = vmatpush1.bf16.msra.mxu0 0
        %2724 = vmatprep.subr.bf16.mxu0 0
        %2725 = vmatpush1.bf16.msra.mxu0 0
        %2726 = vmatprep.subr.bf16.mxu0 0
        %2727 = vmatpush1.bf16.msra.mxu0 0
        %2728 = vmatprep.subr.bf16.mxu0 0
        %2729 = vmatpush1.bf16.msra.mxu0 0
        %2730 = vmatprep.subr.bf16.mxu0 0
        %2731 = vmatpush1.bf16.msra.mxu0 0
        %2732 = vmatprep.subr.bf16.mxu0 0
        %2733 = vmatpush1.bf16.msra.mxu0 0
        %2734 = vmatprep.subr.bf16.mxu0 0
        %2735 = vmatpush1.bf16.msra.mxu0 0
        %2736 = vmatprep.mubr.bf16.mxu0 0
        %2737 = vmatmul.mubr.bf16.gmra.mrb[0].mxu0 %v2623
        %v2738 = vpop.f32.mrb[0].mxu0
        %v2739 = vadd.f32 0.0, %v2738
        %v2740 = vpop.f32.mrb[0].mxu0
        %v2741 = vpop.f32.mrb[0].mxu0
        %v2742 = vadd.f32 0.0, %v2741
        %v2743 = vpop.f32.mrb[0].mxu0
        %2744 = vmatprep.mubr.bf16.mxu0 0
        %2745 = vmatmul.mubr.bf16.gmra.mrb[0].mxu0 %v2624
        %v2746 = vpop.f32.mrb[0].mxu0
        %v2747 = vadd.f32 0.0, %v2746
        %v2748 = vpop.f32.mrb[0].mxu0
        %v2749 = vpop.f32.mrb[0].mxu0
        %v2750 = vadd.f32 0.0, %v2749
        %v2751 = vpop.f32.mrb[0].mxu0
        %2752 = vmatprep.mubr.bf16.mxu0 0
        %2753 = vmatmul.mubr.bf16.gmra.mrb[0].mxu0 %v2625
        %v2754 = vpop.f32.mrb[0].mxu0
        %v2755 = vadd.f32 0.0, %v2754
        %v2756 = vpop.f32.mrb[0].mxu0
        %v2757 = vpop.f32.mrb[0].mxu0
        %v2758 = vadd.f32 0.0, %v2757
        %v2759 = vpop.f32.mrb[0].mxu0
        %2760 = vmatprep.mubr.bf16.mxu0 0
        %2761 = vmatmul.mubr.bf16.gmra.mrb[0].mxu0 %v2626
        %v2762 = vpop.f32.mrb[0].mxu0
        %v2763 = vadd.f32 0.0, %v2762
        %v2764 = vpop.f32.mrb[0].mxu0
        %v2765 = vpop.f32.mrb[0].mxu0
        %v2766 = vadd.f32 0.0, %v2765
        %v2767 = vpop.f32.mrb[0].mxu0
        %2768 = vmatprep.mubr.bf16.mxu0 0
        %2769 = vmatmul.mubr.bf16.gmra.mrb[0].mxu0 %v2627
        %v2770 = vpop.f32.mrb[0].mxu0
        %v2771 = vadd.f32 0.0, %v2770
        %v2772 = vpop.f32.mrb[0].mxu0
        %v2773 = vpop.f32.mrb[0].mxu0
        %v2774 = vadd.f32 0.0, %v2773
        %v2775 = vpop.f32.mrb[0].mxu0
        %2776 = vmatprep.mubr.bf16.mxu0 0
        %2777 = vmatmul.mubr.bf16.gmra.mrb[0].mxu0 %v2628
        %v2778 = vpop.f32.mrb[0].mxu0
        %v2779 = vadd.f32 0.0, %v2778
        %v2780 = vpop.f32.mrb[0].mxu0
        %v2781 = vpop.f32.mrb[0].mxu0
        %v2782 = vadd.f32 0.0, %v2781
        %v2783 = vpop.f32.mrb[0].mxu0
        %2784 = vmatprep.mubr.bf16.mxu0 0
        %2785 = vmatmul.mubr.bf16.gmra.mrb[0].mxu0 %v2629
        %v2786 = vpop.f32.mrb[0].mxu0
        %v2787 = vadd.f32 0.0, %v2786
        %v2788 = vpop.f32.mrb[0].mxu0
        %v2789 = vpop.f32.mrb[0].mxu0
        %v2790 = vadd.f32 0.0, %v2789
        %v2791 = vpop.f32.mrb[0].mxu0
        %2792 = vmatprep.mubr.bf16.mxu0 0
        %2793 = vmatmul.mubr.bf16.gmra.mrb[0].mxu0 %v2630
        %v2794 = vpop.f32.mrb[0].mxu0
        %v2795 = vadd.f32 0.0, %v2794
        %v2796 = vpop.f32.mrb[0].mxu0
        %v2797 = vpop.f32.mrb[0].mxu0
        %v2798 = vadd.f32 0.0, %v2797
        %v2799 = vpop.f32.mrb[0].mxu0
        %2800 = vmatprep.mubr.bf16.mxu0 0
        %2801 = vmatmul.mubr.bf16.gmra.mrb[0].mxu0 %v2631
        %v2802 = vpop.f32.mrb[0].mxu0
        %v2803 = vadd.f32 0.0, %v2802
        %v2804 = vpop.f32.mrb[0].mxu0
        %v2805 = vpop.f32.mrb[0].mxu0
        %v2806 = vadd.f32 0.0, %v2805
        %v2807 = vpop.f32.mrb[0].mxu0
        %2808 = vmatprep.mubr.bf16.mxu0 0
        %2809 = vmatmul.mubr.bf16.gmra.mrb[0].mxu0 %v2632
        %v2810 = vpop.f32.mrb[0].mxu0
        %v2811 = vadd.f32 0.0, %v2810
        %v2812 = vpop.f32.mrb[0].mxu0
        %v2813 = vpop.f32.mrb[0].mxu0
        %v2814 = vadd.f32 0.0, %v2813
        %v2815 = vpop.f32.mrb[0].mxu0
        %2816 = vmatprep.mubr.bf16.mxu0 0
        %2817 = vmatmul.mubr.bf16.gmra.mrb[0].mxu0 %v2633
        %v2818 = vpop.f32.mrb[0].mxu0
        %v2819 = vadd.f32 0.0, %v2818
        %v2820 = vpop.f32.mrb[0].mxu0
        %v2821 = vpop.f32.mrb[0].mxu0
        %v2822 = vadd.f32 0.0, %v2821
        %v2823 = vpop.f32.mrb[0].mxu0
        %2824 = vmatprep.mubr.bf16.mxu0 0
        %2825 = vmatmul.mubr.bf16.gmra.mrb[0].mxu0 %v2634
        %v2826 = vpop.f32.mrb[0].mxu0
        %v2827 = vadd.f32 0.0, %v2826
        %v2828 = vpop.f32.mrb[0].mxu0
        %v2829 = vpop.f32.mrb[0].mxu0
        %v2830 = vadd.f32 0.0, %v2829
        %v2831 = vpop.f32.mrb[0].mxu0
        %2832 = vmatprep.mubr.bf16.mxu0 0
        %2833 = vmatmul.mubr.bf16.gmra.mrb[0].mxu0 %v2635
        %v2834 = vpop.f32.mrb[0].mxu0
        %v2835 = vadd.f32 0.0, %v2834
        %v2836 = vpop.f32.mrb[0].mxu0
        %v2837 = vpop.f32.mrb[0].mxu0
        %v2838 = vadd.f32 0.0, %v2837
        %v2839 = vpop.f32.mrb[0].mxu0
        %2840 = vmatprep.mubr.bf16.mxu0 0
        %2841 = vmatmul.mubr.bf16.gmra.mrb[0].mxu0 %v2636
        %v2842 = vpop.f32.mrb[0].mxu0
        %v2843 = vadd.f32 0.0, %v2842
        %v2844 = vpop.f32.mrb[0].mxu0
        %v2845 = vpop.f32.mrb[0].mxu0
        %v2846 = vadd.f32 0.0, %v2845
        %v2847 = vpop.f32.mrb[0].mxu0
        %2848 = vmatprep.mubr.bf16.mxu0 0
        %2849 = vmatmul.mubr.bf16.gmra.mrb[0].mxu0 %v2637
        %v2850 = vpop.f32.mrb[0].mxu0
        %v2851 = vadd.f32 0.0, %v2850
        %v2852 = vpop.f32.mrb[0].mxu0
        %v2853 = vpop.f32.mrb[0].mxu0
        %v2854 = vadd.f32 0.0, %v2853
        %v2855 = vpop.f32.mrb[0].mxu0
        %2856 = vmatprep.mubr.bf16.mxu0 0
        %2857 = vmatmul.mubr.bf16.gmra.mrb[0].mxu0 %v2638
        %v2858 = vpop.f32.mrb[0].mxu0
        %v2859 = vadd.f32 0.0, %v2858
        %v2860 = vpop.f32.mrb[0].mxu0
        %v2861 = vpop.f32.mrb[0].mxu0
        %v2862 = vadd.f32 0.0, %v2861
        %v2863 = vpop.f32.mrb[0].mxu0
        %2864 = vdwg.mxu0
        %v2865 = vadd.f32 %v2559, %v2739
        %v2866 = vadd.f32 %v2560, %v2742
        %v2867 = vadd.f32 %v2561, %v2747
        %v2868 = vadd.f32 %v2562, %v2750
        %v2869 = vadd.f32 %v2563, %v2755
        %v2870 = vadd.f32 %v2564, %v2758
        %v2871 = vadd.f32 %v2565, %v2763
        %v2872 = vadd.f32 %v2566, %v2766
        %v2873 = vadd.f32 %v2567, %v2771
        %v2874 = vadd.f32 %v2568, %v2774
        %v2875 = vadd.f32 %v2569, %v2779
        %v2876 = vadd.f32 %v2570, %v2782
        %v2877 = vadd.f32 %v2571, %v2787
        %v2878 = vadd.f32 %v2572, %v2790
        %v2879 = vadd.f32 %v2573, %v2795
        %v2880 = vadd.f32 %v2574, %v2798
        %v2881 = vadd.f32 %v2575, %v2803
        %v2882 = vadd.f32 %v2576, %v2806
        %v2883 = vadd.f32 %v2577, %v2811
        %v2884 = vadd.f32 %v2578, %v2814
        %v2885 = vadd.f32 %v2579, %v2819
        %v2886 = vadd.f32 %v2580, %v2822
        %v2887 = vadd.f32 %v2581, %v2827
        %v2888 = vadd.f32 %v2582, %v2830
        %v2889 = vadd.f32 %v2583, %v2835
        %v2890 = vadd.f32 %v2584, %v2838
        %v2891 = vadd.f32 %v2585, %v2843
        %v2892 = vadd.f32 %v2586, %v2846
        %v2893 = vadd.f32 %v2587, %v2851
        %v2894 = vadd.f32 %v2588, %v2854
        %v2895 = vadd.f32 %v2589, %v2859
        %v2896 = vadd.f32 %v2590, %v2862
        %v2897 = vld [vmem:[%s2284 + $0x2] sm:$0xff]
        %v2898 = vld [vmem:[%s2284 + $0xa] sm:$0xff]
        %v2899 = vld [vmem:[%s2284 + $0x1a] sm:$0xff]
        %v2900 = vld [vmem:[%s2284 + $0x22] sm:$0xff]
        %v2901 = vld [vmem:[%s2284 + $0x32] sm:$0xff]
        %v2902 = vld [vmem:[%s2284 + $0x3a] sm:$0xff]
        %v2903 = vld [vmem:[%s2284 + $0x4a] sm:$0xff]
        %v2904 = vld [vmem:[%s2284 + $0x52] sm:$0xff]
        %v2905 = vld [vmem:[%s2284 + $0x62] sm:$0xff]
        %v2906 = vld [vmem:[%s2284 + $0x6a] sm:$0xff]
        %v2907 = vld [vmem:[%s2284 + $0x7a] sm:$0xff]
        %v2908 = vld [vmem:[%s2284 + $0x82] sm:$0xff]
        %v2909 = vld [vmem:[%s2284 + $0x92] sm:$0xff]
        %v2910 = vld [vmem:[%s2284 + $0x9a] sm:$0xff]
        %v2911 = vld [vmem:[%s2284 + $0xaa] sm:$0xff]
        %v2912 = vld [vmem:[%s2284 + $0xb2] sm:$0xff]
        %v2913 = vld [vmem:[%s2284 + $0xc2] sm:$0xff]
        %v2914 = vld [vmem:[%s2284 + $0xca] sm:$0xff]
        %v2915 = vld [vmem:[%s2284 + $0xda] sm:$0xff]
        %v2916 = vld [vmem:[%s2284 + $0xe2] sm:$0xff]
        %v2917 = vld [vmem:[%s2284 + $0xf2] sm:$0xff]
        %v2918 = vld [vmem:[%s2284 + $0xfa] sm:$0xff]
        %v2919 = vld [vmem:[%s2284 + $0x10a] sm:$0xff]
        %v2920 = vld [vmem:[%s2284 + $0x112] sm:$0xff]
        %v2921 = vld [vmem:[%s2284 + $0x122] sm:$0xff]
        %v2922 = vld [vmem:[%s2284 + $0x12a] sm:$0xff]
        %v2923 = vld [vmem:[%s2284 + $0x13a] sm:$0xff]
        %v2924 = vld [vmem:[%s2284 + $0x142] sm:$0xff]
        %v2925 = vld [vmem:[%s2284 + $0x152] sm:$0xff]
        %v2926 = vld [vmem:[%s2284 + $0x15a] sm:$0xff]
        %v2927 = vld [vmem:[%s2284 + $0x16a] sm:$0xff]
        %v2928 = vld [vmem:[%s2284 + $0x172] sm:$0xff]
        %v2929 = vpack.c.bf16 %v2898, %v2897
        %v2930 = vpack.c.bf16 %v2900, %v2899
        %v2931 = vpack.c.bf16 %v2902, %v2901
        %v2932 = vpack.c.bf16 %v2904, %v2903
        %v2933 = vpack.c.bf16 %v2906, %v2905
        %v2934 = vpack.c.bf16 %v2908, %v2907
        %v2935 = vpack.c.bf16 %v2910, %v2909
        %v2936 = vpack.c.bf16 %v2912, %v2911
        %v2937 = vpack.c.bf16 %v2914, %v2913
        %v2938 = vpack.c.bf16 %v2916, %v2915
        %v2939 = vpack.c.bf16 %v2918, %v2917
        %v2940 = vpack.c.bf16 %v2920, %v2919
        %v2941 = vpack.c.bf16 %v2922, %v2921
        %v2942 = vpack.c.bf16 %v2924, %v2923
        %v2943 = vpack.c.bf16 %v2926, %v2925
        %v2944 = vpack.c.bf16 %v2928, %v2927
        %s2945 = scalar_lea.vmem [#allocation4], 512
        %v2946 = vld [vmem:[%s2945] sm:$0xf]
        %v2947 = vld [vmem:[%s2945 + $0x4] sm:$0xf]
        %v2948 = vld [vmem:[%s2945 + $0x8] sm:$0xf]
        %v2949 = vld [vmem:[%s2945 + $0xc] sm:$0xf]
        %v2950 = vld [vmem:[%s2945 + $0x10] sm:$0xf]
        %v2951 = vld [vmem:[%s2945 + $0x14] sm:$0xf]
        %v2952 = vld [vmem:[%s2945 + $0x18] sm:$0xf]
        %v2953 = vld [vmem:[%s2945 + $0x1c] sm:$0xf]
        %v2954 = vld [vmem:[%s2945 + $0x20] sm:$0xf]
        %v2955 = vld [vmem:[%s2945 + $0x24] sm:$0xf]
        %v2956 = vld [vmem:[%s2945 + $0x28] sm:$0xf]
        %v2957 = vld [vmem:[%s2945 + $0x2c] sm:$0xf]
        %v2958 = vld [vmem:[%s2945 + $0x30] sm:$0xf]
        %v2959 = vld [vmem:[%s2945 + $0x34] sm:$0xf]
        %v2960 = vld [vmem:[%s2945 + $0x38] sm:$0xf]
        %v2961 = vld [vmem:[%s2945 + $0x3c] sm:$0xf]
        %v2978 = vunpack.c.l.b16 %v2946
        %v2979 = vunpack.c.l.b16 %v2947
        %v2980 = vunpack.c.l.b16 %v2948
        %v2981 = vunpack.c.l.b16 %v2949
        %v2982 = vunpack.c.l.b16 %v2950
        %v2983 = vunpack.c.l.b16 %v2951
        %v2984 = vunpack.c.l.b16 %v2952
        %v2985 = vunpack.c.l.b16 %v2953
        %v2986 = vunpack.c.l.b16 %v2954
        %v2987 = vunpack.c.l.b16 %v2955
        %v2988 = vunpack.c.l.b16 %v2956
        %v2989 = vunpack.c.l.b16 %v2957
        %v2990 = vunpack.c.l.b16 %v2958
        %v2991 = vunpack.c.l.b16 %v2959
        %v2992 = vunpack.c.l.b16 %v2960
        %v2993 = vunpack.c.l.b16 %v2961
        %v2994 = vpack.c.b16 %v2979, %v2978
        %v2995 = vpack.c.b16 %v2981, %v2980
        %v2996 = vpack.c.b16 %v2983, %v2982
        %v2997 = vpack.c.b16 %v2985, %v2984
        %v2998 = vpack.c.b16 %v2987, %v2986
        %v2999 = vpack.c.b16 %v2989, %v2988
        %v3000 = vpack.c.b16 %v2991, %v2990
        %v3001 = vpack.c.b16 %v2993, %v2992
        %3010 = vmatprep.subr.bf16.mxu0 0
        %3011 = vmatpush1.bf16.msra.mxu0 %v2994
        %3012 = vmatprep.subr.bf16.mxu0 0
        %3013 = vmatpush1.bf16.msra.mxu0 %v2995
        %3014 = vmatprep.subr.bf16.mxu0 0
        %3015 = vmatpush1.bf16.msra.mxu0 %v2996
        %3016 = vmatprep.subr.bf16.mxu0 0
        %3017 = vmatpush1.bf16.msra.mxu0 %v2997
        %3018 = vmatprep.subr.bf16.mxu0 0
        %3019 = vmatpush1.bf16.msra.mxu0 %v2998
        %3020 = vmatprep.subr.bf16.mxu0 0
        %3021 = vmatpush1.bf16.msra.mxu0 %v2999
        %3022 = vmatprep.subr.bf16.mxu0 0
        %3023 = vmatpush1.bf16.msra.mxu0 %v3000
        %3024 = vmatprep.subr.bf16.mxu0 0
        %3025 = vmatpush1.bf16.msra.mxu0 %v3001
        %3026 = vmatprep.subr.bf16.mxu0 0
        %3027 = vmatpush1.bf16.msra.mxu0 0
        %3028 = vmatprep.subr.bf16.mxu0 0
        %3029 = vmatpush1.bf16.msra.mxu0 0
        %3030 = vmatprep.subr.bf16.mxu0 0
        %3031 = vmatpush1.bf16.msra.mxu0 0
        %3032 = vmatprep.subr.bf16.mxu0 0
        %3033 = vmatpush1.bf16.msra.mxu0 0
        %3034 = vmatprep.subr.bf16.mxu0 0
        %3035 = vmatpush1.bf16.msra.mxu0 0
        %3036 = vmatprep.subr.bf16.mxu0 0
        %3037 = vmatpush1.bf16.msra.mxu0 0
        %3038 = vmatprep.subr.bf16.mxu0 0
        %3039 = vmatpush1.bf16.msra.mxu0 0
        %3040 = vmatprep.subr.bf16.mxu0 0
        %3041 = vmatpush1.bf16.msra.mxu0 0
        %3042 = vmatprep.mubr.bf16.mxu0 0
        %3043 = vmatmul.mubr.bf16.gmra.mrb[0].mxu0 %v2929
        %v3044 = vpop.f32.mrb[0].mxu0
        %v3045 = vadd.f32 0.0, %v3044
        %v3046 = vpop.f32.mrb[0].mxu0
        %v3047 = vpop.f32.mrb[0].mxu0
        %v3048 = vadd.f32 0.0, %v3047
        %v3049 = vpop.f32.mrb[0].mxu0
        %3050 = vmatprep.mubr.bf16.mxu0 0
        %3051 = vmatmul.mubr.bf16.gmra.mrb[0].mxu0 %v2930
        %v3052 = vpop.f32.mrb[0].mxu0
        %v3053 = vadd.f32 0.0, %v3052
        %v3054 = vpop.f32.mrb[0].mxu0
        %v3055 = vpop.f32.mrb[0].mxu0
        %v3056 = vadd.f32 0.0, %v3055
        %v3057 = vpop.f32.mrb[0].mxu0
        %3058 = vmatprep.mubr.bf16.mxu0 0
        %3059 = vmatmul.mubr.bf16.gmra.mrb[0].mxu0 %v2931
        %v3060 = vpop.f32.mrb[0].mxu0
        %v3061 = vadd.f32 0.0, %v3060
        %v3062 = vpop.f32.mrb[0].mxu0
        %v3063 = vpop.f32.mrb[0].mxu0
        %v3064 = vadd.f32 0.0, %v3063
        %v3065 = vpop.f32.mrb[0].mxu0
        %3066 = vmatprep.mubr.bf16.mxu0 0
        %3067 = vmatmul.mubr.bf16.gmra.mrb[0].mxu0 %v2932
        %v3068 = vpop.f32.mrb[0].mxu0
        %v3069 = vadd.f32 0.0, %v3068
        %v3070 = vpop.f32.mrb[0].mxu0
        %v3071 = vpop.f32.mrb[0].mxu0
        %v3072 = vadd.f32 0.0, %v3071
        %v3073 = vpop.f32.mrb[0].mxu0
        %3074 = vmatprep.mubr.bf16.mxu0 0
        %3075 = vmatmul.mubr.bf16.gmra.mrb[0].mxu0 %v2933
        %v3076 = vpop.f32.mrb[0].mxu0
        %v3077 = vadd.f32 0.0, %v3076
        %v3078 = vpop.f32.mrb[0].mxu0
        %v3079 = vpop.f32.mrb[0].mxu0
        %v3080 = vadd.f32 0.0, %v3079
        %v3081 = vpop.f32.mrb[0].mxu0
        %3082 = vmatprep.mubr.bf16.mxu0 0
        %3083 = vmatmul.mubr.bf16.gmra.mrb[0].mxu0 %v2934
        %v3084 = vpop.f32.mrb[0].mxu0
        %v3085 = vadd.f32 0.0, %v3084
        %v3086 = vpop.f32.mrb[0].mxu0
        %v3087 = vpop.f32.mrb[0].mxu0
        %v3088 = vadd.f32 0.0, %v3087
        %v3089 = vpop.f32.mrb[0].mxu0
        %3090 = vmatprep.mubr.bf16.mxu0 0
        %3091 = vmatmul.mubr.bf16.gmra.mrb[0].mxu0 %v2935
        %v3092 = vpop.f32.mrb[0].mxu0
        %v3093 = vadd.f32 0.0, %v3092
        %v3094 = vpop.f32.mrb[0].mxu0
        %v3095 = vpop.f32.mrb[0].mxu0
        %v3096 = vadd.f32 0.0, %v3095
        %v3097 = vpop.f32.mrb[0].mxu0
        %3098 = vmatprep.mubr.bf16.mxu0 0
        %3099 = vmatmul.mubr.bf16.gmra.mrb[0].mxu0 %v2936
        %v3100 = vpop.f32.mrb[0].mxu0
        %v3101 = vadd.f32 0.0, %v3100
        %v3102 = vpop.f32.mrb[0].mxu0
        %v3103 = vpop.f32.mrb[0].mxu0
        %v3104 = vadd.f32 0.0, %v3103
        %v3105 = vpop.f32.mrb[0].mxu0
        %3106 = vmatprep.mubr.bf16.mxu0 0
        %3107 = vmatmul.mubr.bf16.gmra.mrb[0].mxu0 %v2937
        %v3108 = vpop.f32.mrb[0].mxu0
        %v3109 = vadd.f32 0.0, %v3108
        %v3110 = vpop.f32.mrb[0].mxu0
        %v3111 = vpop.f32.mrb[0].mxu0
        %v3112 = vadd.f32 0.0, %v3111
        %v3113 = vpop.f32.mrb[0].mxu0
        %3114 = vmatprep.mubr.bf16.mxu0 0
        %3115 = vmatmul.mubr.bf16.gmra.mrb[0].mxu0 %v2938
        %v3116 = vpop.f32.mrb[0].mxu0
        %v3117 = vadd.f32 0.0, %v3116
        %v3118 = vpop.f32.mrb[0].mxu0
        %v3119 = vpop.f32.mrb[0].mxu0
        %v3120 = vadd.f32 0.0, %v3119
        %v3121 = vpop.f32.mrb[0].mxu0
        %3122 = vmatprep.mubr.bf16.mxu0 0
        %3123 = vmatmul.mubr.bf16.gmra.mrb[0].mxu0 %v2939
        %v3124 = vpop.f32.mrb[0].mxu0
        %v3125 = vadd.f32 0.0, %v3124
        %v3126 = vpop.f32.mrb[0].mxu0
        %v3127 = vpop.f32.mrb[0].mxu0
        %v3128 = vadd.f32 0.0, %v3127
        %v3129 = vpop.f32.mrb[0].mxu0
        %3130 = vmatprep.mubr.bf16.mxu0 0
        %3131 = vmatmul.mubr.bf16.gmra.mrb[0].mxu0 %v2940
        %v3132 = vpop.f32.mrb[0].mxu0
        %v3133 = vadd.f32 0.0, %v3132
        %v3134 = vpop.f32.mrb[0].mxu0
        %v3135 = vpop.f32.mrb[0].mxu0
        %v3136 = vadd.f32 0.0, %v3135
        %v3137 = vpop.f32.mrb[0].mxu0
        %3138 = vmatprep.mubr.bf16.mxu0 0
        %3139 = vmatmul.mubr.bf16.gmra.mrb[0].mxu0 %v2941
        %v3140 = vpop.f32.mrb[0].mxu0
        %v3141 = vadd.f32 0.0, %v3140
        %v3142 = vpop.f32.mrb[0].mxu0
        %v3143 = vpop.f32.mrb[0].mxu0
        %v3144 = vadd.f32 0.0, %v3143
        %v3145 = vpop.f32.mrb[0].mxu0
        %3146 = vmatprep.mubr.bf16.mxu0 0
        %3147 = vmatmul.mubr.bf16.gmra.mrb[0].mxu0 %v2942
        %v3148 = vpop.f32.mrb[0].mxu0
        %v3149 = vadd.f32 0.0, %v3148
        %v3150 = vpop.f32.mrb[0].mxu0
        %v3151 = vpop.f32.mrb[0].mxu0
        %v3152 = vadd.f32 0.0, %v3151
        %v3153 = vpop.f32.mrb[0].mxu0
        %3154 = vmatprep.mubr.bf16.mxu0 0
        %3155 = vmatmul.mubr.bf16.gmra.mrb[0].mxu0 %v2943
        %v3156 = vpop.f32.mrb[0].mxu0
        %v3157 = vadd.f32 0.0, %v3156
        %v3158 = vpop.f32.mrb[0].mxu0
        %v3159 = vpop.f32.mrb[0].mxu0
        %v3160 = vadd.f32 0.0, %v3159
        %v3161 = vpop.f32.mrb[0].mxu0
        %3162 = vmatprep.mubr.bf16.mxu0 0
        %3163 = vmatmul.mubr.bf16.gmra.mrb[0].mxu0 %v2944
        %v3164 = vpop.f32.mrb[0].mxu0
        %v3165 = vadd.f32 0.0, %v3164
        %v3166 = vpop.f32.mrb[0].mxu0
        %v3167 = vpop.f32.mrb[0].mxu0
        %v3168 = vadd.f32 0.0, %v3167
        %v3169 = vpop.f32.mrb[0].mxu0
        %3170 = vdwg.mxu0
        %v3171 = vadd.f32 %v2865, %v3045
        %v3172 = vadd.f32 %v2866, %v3048
        %v3173 = vadd.f32 %v2867, %v3053
        %v3174 = vadd.f32 %v2868, %v3056
        %v3175 = vadd.f32 %v2869, %v3061
        %v3176 = vadd.f32 %v2870, %v3064
        %v3177 = vadd.f32 %v2871, %v3069
        %v3178 = vadd.f32 %v2872, %v3072
        %v3179 = vadd.f32 %v2873, %v3077
        %v3180 = vadd.f32 %v2874, %v3080
        %v3181 = vadd.f32 %v2875, %v3085
        %v3182 = vadd.f32 %v2876, %v3088
        %v3183 = vadd.f32 %v2877, %v3093
        %v3184 = vadd.f32 %v2878, %v3096
        %v3185 = vadd.f32 %v2879, %v3101
        %v3186 = vadd.f32 %v2880, %v3104
        %v3187 = vadd.f32 %v2881, %v3109
        %v3188 = vadd.f32 %v2882, %v3112
        %v3189 = vadd.f32 %v2883, %v3117
        %v3190 = vadd.f32 %v2884, %v3120
        %v3191 = vadd.f32 %v2885, %v3125
        %v3192 = vadd.f32 %v2886, %v3128
        %v3193 = vadd.f32 %v2887, %v3133
        %v3194 = vadd.f32 %v2888, %v3136
        %v3195 = vadd.f32 %v2889, %v3141
        %v3196 = vadd.f32 %v2890, %v3144
        %v3197 = vadd.f32 %v2891, %v3149
        %v3198 = vadd.f32 %v2892, %v3152
        %v3199 = vadd.f32 %v2893, %v3157
        %v3200 = vadd.f32 %v2894, %v3160
        %v3201 = vadd.f32 %v2895, %v3165
        %v3202 = vadd.f32 %v2896, %v3168
        %v3203 = vld [vmem:[%s3] sm:$0x1]
        %v3205 = vlaneseq
        %v3206 = vshrl.u32 %v3205, 7
        %v3207 = vsub.s32 0, %v3206
        %v3208 = vrot.slane %v3203, %v3207
        %v3210 = vadd.f32 %v3171, %v3208
        %v3211 = vadd.f32 %v3172, %v3208
        %v3212 = vadd.f32 %v3173, %v3208
        %v3213 = vadd.f32 %v3174, %v3208
        %v3214 = vadd.f32 %v3175, %v3208
        %v3215 = vadd.f32 %v3176, %v3208
        %v3216 = vadd.f32 %v3177, %v3208
        %v3217 = vadd.f32 %v3178, %v3208
        %v3218 = vadd.f32 %v3179, %v3208
        %v3219 = vadd.f32 %v3180, %v3208
        %v3220 = vadd.f32 %v3181, %v3208
        %v3221 = vadd.f32 %v3182, %v3208
        %v3222 = vadd.f32 %v3183, %v3208
        %v3223 = vadd.f32 %v3184, %v3208
        %v3224 = vadd.f32 %v3185, %v3208
        %v3225 = vadd.f32 %v3186, %v3208
        %v3226 = vadd.f32 %v3187, %v3208
        %v3227 = vadd.f32 %v3188, %v3208
        %v3228 = vadd.f32 %v3189, %v3208
        %v3229 = vadd.f32 %v3190, %v3208
        %v3230 = vadd.f32 %v3191, %v3208
        %v3231 = vadd.f32 %v3192, %v3208
        %v3232 = vadd.f32 %v3193, %v3208
        %v3233 = vadd.f32 %v3194, %v3208
        %v3234 = vadd.f32 %v3195, %v3208
        %v3235 = vadd.f32 %v3196, %v3208
        %v3236 = vadd.f32 %v3197, %v3208
        %v3237 = vadd.f32 %v3198, %v3208
        %v3238 = vadd.f32 %v3199, %v3208
        %v3239 = vadd.f32 %v3200, %v3208
        %v3240 = vadd.f32 %v3201, %v3208
        %v3241 = vadd.f32 %v3202, %v3208
        %v3242 = vmax.f32 %v3210, 0.0
        %v3243 = vmax.f32 %v3211, 0.0
        %v3244 = vmax.f32 %v3212, 0.0
        %v3245 = vmax.f32 %v3213, 0.0
        %v3246 = vmax.f32 %v3214, 0.0
        %v3247 = vmax.f32 %v3215, 0.0
        %v3248 = vmax.f32 %v3216, 0.0
        %v3249 = vmax.f32 %v3217, 0.0
        %v3250 = vmax.f32 %v3218, 0.0
        %v3251 = vmax.f32 %v3219, 0.0
        %v3252 = vmax.f32 %v3220, 0.0
        %v3253 = vmax.f32 %v3221, 0.0
        %v3254 = vmax.f32 %v3222, 0.0
        %v3255 = vmax.f32 %v3223, 0.0
        %v3256 = vmax.f32 %v3224, 0.0
        %v3257 = vmax.f32 %v3225, 0.0
        %v3258 = vmax.f32 %v3226, 0.0
        %v3259 = vmax.f32 %v3227, 0.0
        %v3260 = vmax.f32 %v3228, 0.0
        %v3261 = vmax.f32 %v3229, 0.0
        %v3262 = vmax.f32 %v3230, 0.0
        %v3263 = vmax.f32 %v3231, 0.0
        %v3264 = vmax.f32 %v3232, 0.0
        %v3265 = vmax.f32 %v3233, 0.0
        %v3266 = vmax.f32 %v3234, 0.0
        %v3267 = vmax.f32 %v3235, 0.0
        %v3268 = vmax.f32 %v3236, 0.0
        %v3269 = vmax.f32 %v3237, 0.0
        %v3270 = vmax.f32 %v3238, 0.0
        %v3271 = vmax.f32 %v3239, 0.0
        %v3272 = vmax.f32 %v3240, 0.0
        %v3273 = vmax.f32 %v3241, 0.0
        %s3274 = scalar_lea.vmem [#allocation3], 24
        %vm3275 = vcmask 261120
        %3276 = vst.msk [vmem:[%s3274 + $0x1] sm:$0xff] %vm3275, %v3242
        %3277 = vst.msk [vmem:[%s3274 + $0x9] sm:$0xff] %vm3275, %v3243
        %3278 = vst.msk [vmem:[%s3274 + $0x19] sm:$0xff] %vm3275, %v3244
        %3279 = vst.msk [vmem:[%s3274 + $0x21] sm:$0xff] %vm3275, %v3245
        %3280 = vst.msk [vmem:[%s3274 + $0x31] sm:$0xff] %vm3275, %v3246
        %3281 = vst.msk [vmem:[%s3274 + $0x39] sm:$0xff] %vm3275, %v3247
        %3282 = vst.msk [vmem:[%s3274 + $0x49] sm:$0xff] %vm3275, %v3248
        %3283 = vst.msk [vmem:[%s3274 + $0x51] sm:$0xff] %vm3275, %v3249
        %3284 = vst.msk [vmem:[%s3274 + $0x61] sm:$0xff] %vm3275, %v3250
        %3285 = vst.msk [vmem:[%s3274 + $0x69] sm:$0xff] %vm3275, %v3251
        %3286 = vst.msk [vmem:[%s3274 + $0x79] sm:$0xff] %vm3275, %v3252
        %3287 = vst.msk [vmem:[%s3274 + $0x81] sm:$0xff] %vm3275, %v3253
        %3288 = vst.msk [vmem:[%s3274 + $0x91] sm:$0xff] %vm3275, %v3254
        %3289 = vst.msk [vmem:[%s3274 + $0x99] sm:$0xff] %vm3275, %v3255
        %3290 = vst.msk [vmem:[%s3274 + $0xa9] sm:$0xff] %vm3275, %v3256
        %3291 = vst.msk [vmem:[%s3274 + $0xb1] sm:$0xff] %vm3275, %v3257
        %3292 = vst.msk [vmem:[%s3274 + $0xc1] sm:$0xff] %vm3275, %v3258
        %3293 = vst.msk [vmem:[%s3274 + $0xc9] sm:$0xff] %vm3275, %v3259
        %3294 = vst.msk [vmem:[%s3274 + $0xd9] sm:$0xff] %vm3275, %v3260
        %3295 = vst.msk [vmem:[%s3274 + $0xe1] sm:$0xff] %vm3275, %v3261
        %3296 = vst.msk [vmem:[%s3274 + $0xf1] sm:$0xff] %vm3275, %v3262
        %3297 = vst.msk [vmem:[%s3274 + $0xf9] sm:$0xff] %vm3275, %v3263
        %3298 = vst.msk [vmem:[%s3274 + $0x109] sm:$0xff] %vm3275, %v3264
        %3299 = vst.msk [vmem:[%s3274 + $0x111] sm:$0xff] %vm3275, %v3265
        %3300 = vst.msk [vmem:[%s3274 + $0x121] sm:$0xff] %vm3275, %v3266
        %3301 = vst.msk [vmem:[%s3274 + $0x129] sm:$0xff] %vm3275, %v3267
        %3302 = vst.msk [vmem:[%s3274 + $0x139] sm:$0xff] %vm3275, %v3268
        %3303 = vst.msk [vmem:[%s3274 + $0x141] sm:$0xff] %vm3275, %v3269
        %3304 = vst.msk [vmem:[%s3274 + $0x151] sm:$0xff] %vm3275, %v3270
        %3305 = vst.msk [vmem:[%s3274 + $0x159] sm:$0xff] %vm3275, %v3271
        %3306 = vst.msk [vmem:[%s3274 + $0x169] sm:$0xff] %vm3275, %v3272
        %3307 = vst.msk [vmem:[%s3274 + $0x171] sm:$0xff] %vm3275, %v3273
        %3308 = vst.msk [vmem:[#allocation3 + $0x1] sm:$0xff] %vm3275, %v3244
        %3309 = vst.msk [vmem:[#allocation3 + $0x9] sm:$0xff] %vm3275, %v3245
        %s3310 = scalar_lea.vmem [#allocation3], 408
        %3311 = vst.msk [vmem:[%s3310 + $0x1] sm:$0xff] %vm3275, %v3270
        %3312 = vst.msk [vmem:[%s3310 + $0x9] sm:$0xff] %vm3275, %v3271
        %v3313 = vld [vmem:[#allocation3 + $0x2] sm:$0x1]
        %v3314 = vld [vmem:[#allocation3 + $0x1a] sm:$0x1]
        %v3315 = vld [vmem:[#allocation3 + $0x32] sm:$0x1]
        %v3316 = vld [vmem:[#allocation3 + $0x4a] sm:$0x1]
        %v3317 = vld [vmem:[#allocation3 + $0x62] sm:$0x1]
        %v3318 = vld [vmem:[#allocation3 + $0x7a] sm:$0x1]
        %v3319 = vld [vmem:[#allocation3 + $0x92] sm:$0x1]
        %v3320 = vld [vmem:[#allocation3 + $0xaa] sm:$0x1]
        %v3321 = vld [vmem:[#allocation3 + $0xc2] sm:$0x1]
        %v3322 = vld [vmem:[#allocation3 + $0xda] sm:$0x1]
        %v3323 = vld [vmem:[#allocation3 + $0xf2] sm:$0x1]
        %v3324 = vld [vmem:[#allocation3 + $0x10a] sm:$0x1]
        %v3325 = vld [vmem:[#allocation3 + $0x122] sm:$0x1]
        %v3326 = vld [vmem:[#allocation3 + $0x13a] sm:$0x1]
        %v3327 = vld [vmem:[#allocation3 + $0x152] sm:$0x1]
        %v3328 = vld [vmem:[#allocation3 + $0x16a] sm:$0x1]
        %v3329 = vld [vmem:[#allocation3 + $0x182] sm:$0x1]
        %v3330 = vld [vmem:[#allocation3 + $0x19a] sm:$0x1]
        %vm3331 = vcmask 253952
        %3332 = vst.msk [vmem:[#allocation3] sm:$0x1] %vm3331, %v3313
        %3333 = vst.msk [vmem:[#allocation3 + $0x18] sm:$0x1] %vm3331, %v3314
        %3334 = vst.msk [vmem:[#allocation3 + $0x30] sm:$0x1] %vm3331, %v3315
        %3335 = vst.msk [vmem:[#allocation3 + $0x48] sm:$0x1] %vm3331, %v3316
        %3336 = vst.msk [vmem:[#allocation3 + $0x60] sm:$0x1] %vm3331, %v3317
        %3337 = vst.msk [vmem:[#allocation3 + $0x78] sm:$0x1] %vm3331, %v3318
        %3338 = vst.msk [vmem:[#allocation3 + $0x90] sm:$0x1] %vm3331, %v3319
        %3339 = vst.msk [vmem:[#allocation3 + $0xa8] sm:$0x1] %vm3331, %v3320
        %3340 = vst.msk [vmem:[#allocation3 + $0xc0] sm:$0x1] %vm3331, %v3321
        %3341 = vst.msk [vmem:[#allocation3 + $0xd8] sm:$0x1] %vm3331, %v3322
        %3342 = vst.msk [vmem:[#allocation3 + $0xf0] sm:$0x1] %vm3331, %v3323
        %3343 = vst.msk [vmem:[#allocation3 + $0x108] sm:$0x1] %vm3331, %v3324
        %3344 = vst.msk [vmem:[#allocation3 + $0x120] sm:$0x1] %vm3331, %v3325
        %3345 = vst.msk [vmem:[#allocation3 + $0x138] sm:$0x1] %vm3331, %v3326
        %3346 = vst.msk [vmem:[#allocation3 + $0x150] sm:$0x1] %vm3331, %v3327
        %3347 = vst.msk [vmem:[#allocation3 + $0x168] sm:$0x1] %vm3331, %v3328
        %3348 = vst.msk [vmem:[#allocation3 + $0x180] sm:$0x1] %vm3331, %v3329
        %3349 = vst.msk [vmem:[#allocation3 + $0x198] sm:$0x1] %vm3331, %v3330
        %v3350 = vld [vmem:[#allocation3 + $0xf] sm:$0x1]
        %v3351 = vld [vmem:[#allocation3 + $0x27] sm:$0x1]
        %v3352 = vld [vmem:[#allocation3 + $0x3f] sm:$0x1]
        %v3353 = vld [vmem:[#allocation3 + $0x57] sm:$0x1]
        %v3354 = vld [vmem:[#allocation3 + $0x6f] sm:$0x1]
        %v3355 = vld [vmem:[#allocation3 + $0x87] sm:$0x1]
        %v3356 = vld [vmem:[#allocation3 + $0x9f] sm:$0x1]
        %v3357 = vld [vmem:[#allocation3 + $0xb7] sm:$0x1]
        %v3358 = vld [vmem:[#allocation3 + $0xcf] sm:$0x1]
        %v3359 = vld [vmem:[#allocation3 + $0xe7] sm:$0x1]
        %v3360 = vld [vmem:[#allocation3 + $0xff] sm:$0x1]
        %v3361 = vld [vmem:[#allocation3 + $0x117] sm:$0x1]
        %v3362 = vld [vmem:[#allocation3 + $0x12f] sm:$0x1]
        %v3363 = vld [vmem:[#allocation3 + $0x147] sm:$0x1]
        %v3364 = vld [vmem:[#allocation3 + $0x15f] sm:$0x1]
        %v3365 = vld [vmem:[#allocation3 + $0x177] sm:$0x1]
        %v3366 = vld [vmem:[#allocation3 + $0x18f] sm:$0x1]
        %v3367 = vld [vmem:[#allocation3 + $0x1a7] sm:$0x1]
        %3368 = vst.msk [vmem:[#allocation3 + $0x11] sm:$0x1] %vm3331, %v3350
        %3369 = vst.msk [vmem:[#allocation3 + $0x29] sm:$0x1] %vm3331, %v3351
        %3370 = vst.msk [vmem:[#allocation3 + $0x41] sm:$0x1] %vm3331, %v3352
        %3371 = vst.msk [vmem:[#allocation3 + $0x59] sm:$0x1] %vm3331, %v3353
        %3372 = vst.msk [vmem:[#allocation3 + $0x71] sm:$0x1] %vm3331, %v3354
        %3373 = vst.msk [vmem:[#allocation3 + $0x89] sm:$0x1] %vm3331, %v3355
        %3374 = vst.msk [vmem:[#allocation3 + $0xa1] sm:$0x1] %vm3331, %v3356
        %3375 = vst.msk [vmem:[#allocation3 + $0xb9] sm:$0x1] %vm3331, %v3357
        %3376 = vst.msk [vmem:[#allocation3 + $0xd1] sm:$0x1] %vm3331, %v3358
        %3377 = vst.msk [vmem:[#allocation3 + $0xe9] sm:$0x1] %vm3331, %v3359
        %3378 = vst.msk [vmem:[#allocation3 + $0x101] sm:$0x1] %vm3331, %v3360
        %3379 = vst.msk [vmem:[#allocation3 + $0x119] sm:$0x1] %vm3331, %v3361
        %3380 = vst.msk [vmem:[#allocation3 + $0x131] sm:$0x1] %vm3331, %v3362
        %3381 = vst.msk [vmem:[#allocation3 + $0x149] sm:$0x1] %vm3331, %v3363
        %3382 = vst.msk [vmem:[#allocation3 + $0x161] sm:$0x1] %vm3331, %v3364
        %3383 = vst.msk [vmem:[#allocation3 + $0x179] sm:$0x1] %vm3331, %v3365
        %3384 = vst.msk [vmem:[#allocation3 + $0x191] sm:$0x1] %vm3331, %v3366
        %3385 = vst.msk [vmem:[#allocation3 + $0x1a9] sm:$0x1] %vm3331, %v3367
        %v3386 = vld [vmem:[#allocation3] sm:$0xff]
        %v3387 = vld [vmem:[#allocation3 + $0x8] sm:$0xff]
        %v3388 = vld [vmem:[#allocation3 + $0x18] sm:$0xff]
        %v3389 = vld [vmem:[#allocation3 + $0x20] sm:$0xff]
        %v3390 = vld [vmem:[#allocation3 + $0x30] sm:$0xff]
        %v3391 = vld [vmem:[#allocation3 + $0x38] sm:$0xff]
        %v3392 = vld [vmem:[#allocation3 + $0x48] sm:$0xff]
        %v3393 = vld [vmem:[#allocation3 + $0x50] sm:$0xff]
        %v3394 = vld [vmem:[#allocation3 + $0x60] sm:$0xff]
        %v3395 = vld [vmem:[#allocation3 + $0x68] sm:$0xff]
        %v3396 = vld [vmem:[#allocation3 + $0x78] sm:$0xff]
        %v3397 = vld [vmem:[#allocation3 + $0x80] sm:$0xff]
        %v3398 = vld [vmem:[#allocation3 + $0x90] sm:$0xff]
        %v3399 = vld [vmem:[#allocation3 + $0x98] sm:$0xff]
        %v3400 = vld [vmem:[#allocation3 + $0xa8] sm:$0xff]
        %v3401 = vld [vmem:[#allocation3 + $0xb0] sm:$0xff]
        %v3402 = vld [vmem:[#allocation3 + $0xc0] sm:$0xff]
        %v3403 = vld [vmem:[#allocation3 + $0xc8] sm:$0xff]
        %v3404 = vld [vmem:[#allocation3 + $0xd8] sm:$0xff]
        %v3405 = vld [vmem:[#allocation3 + $0xe0] sm:$0xff]
        %v3406 = vld [vmem:[#allocation3 + $0xf0] sm:$0xff]
        %v3407 = vld [vmem:[#allocation3 + $0xf8] sm:$0xff]
        %v3408 = vld [vmem:[#allocation3 + $0x108] sm:$0xff]
        %v3409 = vld [vmem:[#allocation3 + $0x110] sm:$0xff]
        %v3410 = vld [vmem:[#allocation3 + $0x120] sm:$0xff]
        %v3411 = vld [vmem:[#allocation3 + $0x128] sm:$0xff]
        %v3412 = vld [vmem:[#allocation3 + $0x138] sm:$0xff]
        %v3413 = vld [vmem:[#allocation3 + $0x140] sm:$0xff]
        %v3414 = vld [vmem:[#allocation3 + $0x150] sm:$0xff]
        %v3415 = vld [vmem:[#allocation3 + $0x158] sm:$0xff]
        %v3416 = vld [vmem:[#allocation3 + $0x168] sm:$0xff]
        %v3417 = vld [vmem:[#allocation3 + $0x170] sm:$0xff]
        %v3418 = vpack.c.bf16 %v3387, %v3386
        %v3419 = vpack.c.bf16 %v3389, %v3388
        %v3420 = vpack.c.bf16 %v3391, %v3390
        %v3421 = vpack.c.bf16 %v3393, %v3392
        %v3422 = vpack.c.bf16 %v3395, %v3394
        %v3423 = vpack.c.bf16 %v3397, %v3396
        %v3424 = vpack.c.bf16 %v3399, %v3398
        %v3425 = vpack.c.bf16 %v3401, %v3400
        %v3426 = vpack.c.bf16 %v3403, %v3402
        %v3427 = vpack.c.bf16 %v3405, %v3404
        %v3428 = vpack.c.bf16 %v3407, %v3406
        %v3429 = vpack.c.bf16 %v3409, %v3408
        %v3430 = vpack.c.bf16 %v3411, %v3410
        %v3431 = vpack.c.bf16 %v3413, %v3412
        %v3432 = vpack.c.bf16 %v3415, %v3414
        %v3433 = vpack.c.bf16 %v3417, %v3416
        %v3434 = vld [vmem:[#allocation6] sm:$0xf]
        %v3435 = vld [vmem:[#allocation6 + $0x4] sm:$0xf]
        %v3436 = vld [vmem:[#allocation6 + $0x8] sm:$0xf]
        %v3437 = vld [vmem:[#allocation6 + $0xc] sm:$0xf]
        %v3438 = vld [vmem:[#allocation3 + $0x1] sm:$0xff]
        %v3439 = vld [vmem:[#allocation3 + $0x9] sm:$0xff]
        %v3440 = vld [vmem:[#allocation3 + $0x19] sm:$0xff]
        %v3441 = vld [vmem:[#allocation3 + $0x21] sm:$0xff]
        %v3442 = vld [vmem:[#allocation3 + $0x31] sm:$0xff]
        %v3443 = vld [vmem:[#allocation3 + $0x39] sm:$0xff]
        %v3444 = vld [vmem:[#allocation3 + $0x49] sm:$0xff]
        %v3445 = vld [vmem:[#allocation3 + $0x51] sm:$0xff]
        %v3446 = vld [vmem:[#allocation3 + $0x61] sm:$0xff]
        %v3447 = vld [vmem:[#allocation3 + $0x69] sm:$0xff]
        %v3448 = vld [vmem:[#allocation3 + $0x79] sm:$0xff]
        %v3449 = vld [vmem:[#allocation3 + $0x81] sm:$0xff]
        %v3450 = vld [vmem:[#allocation3 + $0x91] sm:$0xff]
        %v3451 = vld [vmem:[#allocation3 + $0x99] sm:$0xff]
        %v3452 = vld [vmem:[#allocation3 + $0xa9] sm:$0xff]
        %v3453 = vld [vmem:[#allocation3 + $0xb1] sm:$0xff]
        %v3454 = vld [vmem:[#allocation3 + $0xc1] sm:$0xff]
        %v3455 = vld [vmem:[#allocation3 + $0xc9] sm:$0xff]
        %v3456 = vld [vmem:[#allocation3 + $0xd9] sm:$0xff]
        %v3457 = vld [vmem:[#allocation3 + $0xe1] sm:$0xff]
        %v3458 = vld [vmem:[#allocation3 + $0xf1] sm:$0xff]
        %v3459 = vld [vmem:[#allocation3 + $0xf9] sm:$0xff]
        %v3460 = vld [vmem:[#allocation3 + $0x109] sm:$0xff]
        %v3461 = vld [vmem:[#allocation3 + $0x111] sm:$0xff]
        %v3462 = vld [vmem:[#allocation3 + $0x121] sm:$0xff]
        %v3463 = vld [vmem:[#allocation3 + $0x129] sm:$0xff]
        %v3464 = vld [vmem:[#allocation3 + $0x139] sm:$0xff]
        %v3465 = vld [vmem:[#allocation3 + $0x141] sm:$0xff]
        %v3466 = vld [vmem:[#allocation3 + $0x151] sm:$0xff]
        %v3467 = vld [vmem:[#allocation3 + $0x159] sm:$0xff]
        %v3468 = vld [vmem:[#allocation3 + $0x169] sm:$0xff]
        %v3469 = vld [vmem:[#allocation3 + $0x171] sm:$0xff]
        %v3470 = vpack.c.bf16 %v3439, %v3438
        %v3471 = vpack.c.bf16 %v3441, %v3440
        %v3472 = vpack.c.bf16 %v3443, %v3442
        %v3473 = vpack.c.bf16 %v3445, %v3444
        %v3474 = vpack.c.bf16 %v3447, %v3446
        %v3475 = vpack.c.bf16 %v3449, %v3448
        %v3476 = vpack.c.bf16 %v3451, %v3450
        %v3477 = vpack.c.bf16 %v3453, %v3452
        %v3478 = vpack.c.bf16 %v3455, %v3454
        %v3479 = vpack.c.bf16 %v3457, %v3456
        %v3480 = vpack.c.bf16 %v3459, %v3458
        %v3481 = vpack.c.bf16 %v3461, %v3460
        %v3482 = vpack.c.bf16 %v3463, %v3462
        %v3483 = vpack.c.bf16 %v3465, %v3464
        %v3484 = vpack.c.bf16 %v3467, %v3466
        %v3485 = vpack.c.bf16 %v3469, %v3468
        %s3486 = scalar_lea.vmem [#allocation6], 16
        %v3487 = vld [vmem:[%s3486] sm:$0xf]
        %v3488 = vld [vmem:[%s3486 + $0x4] sm:$0xf]
        %v3489 = vld [vmem:[%s3486 + $0x8] sm:$0xf]
        %v3490 = vld [vmem:[%s3486 + $0xc] sm:$0xf]
        %v3495 = vunpack.c.l.b16 %v3487
        %v3496 = vunpack.c.l.b16 %v3488
        %v3497 = vunpack.c.l.b16 %v3489
        %v3498 = vunpack.c.l.b16 %v3490
        %v3499 = vpack.c.b16 %v3496, %v3495
        %v3500 = vpack.c.b16 %v3498, %v3497
        %v3504 = vsel %vm3275, %v3470, 0
        %v3507 = vsel %vm3275, %v3471, 0
        %v3510 = vsel %vm3275, %v3472, 0
        %v3513 = vsel %vm3275, %v3473, 0
        %v3516 = vsel %vm3275, %v3474, 0
        %v3519 = vsel %vm3275, %v3475, 0
        %v3522 = vsel %vm3275, %v3476, 0
        %v3525 = vsel %vm3275, %v3477, 0
        %v3528 = vsel %vm3275, %v3478, 0
        %v3531 = vsel %vm3275, %v3479, 0
        %v3534 = vsel %vm3275, %v3480, 0
        %v3537 = vsel %vm3275, %v3481, 0
        %v3540 = vsel %vm3275, %v3482, 0
        %v3543 = vsel %vm3275, %v3483, 0
        %v3546 = vsel %vm3275, %v3484, 0
        %v3549 = vsel %vm3275, %v3485, 0
        %3551 = vmatprep.subr.bf16.mxu0 0
        %3552 = vmatpush1.bf16.msra.mxu0 %v3499
        %3553 = vmatprep.subr.bf16.mxu0 0
        %3554 = vmatpush1.bf16.msra.mxu0 %v3500
        %3555 = vmatprep.subr.bf16.mxu0 0
        %3556 = vmatpush1.bf16.msra.mxu0 0
        %3557 = vmatprep.subr.bf16.mxu0 0
        %3558 = vmatpush1.bf16.msra.mxu0 0
        %3559 = vmatprep.subr.bf16.mxu0 0
        %3560 = vmatpush1.bf16.msra.mxu0 0
        %3561 = vmatprep.subr.bf16.mxu0 0
        %3562 = vmatpush1.bf16.msra.mxu0 0
        %3563 = vmatprep.subr.bf16.mxu0 0
        %3564 = vmatpush1.bf16.msra.mxu0 0
        %3565 = vmatprep.subr.bf16.mxu0 0
        %3566 = vmatpush1.bf16.msra.mxu0 0
        %3567 = vmatprep.subr.bf16.mxu0 0
        %3568 = vmatpush1.bf16.msra.mxu0 0
        %3569 = vmatprep.subr.bf16.mxu0 0
        %3570 = vmatpush1.bf16.msra.mxu0 0
        %3571 = vmatprep.subr.bf16.mxu0 0
        %3572 = vmatpush1.bf16.msra.mxu0 0
        %3573 = vmatprep.subr.bf16.mxu0 0
        %3574 = vmatpush1.bf16.msra.mxu0 0
        %3575 = vmatprep.subr.bf16.mxu0 0
        %3576 = vmatpush1.bf16.msra.mxu0 0
        %3577 = vmatprep.subr.bf16.mxu0 0
        %3578 = vmatpush1.bf16.msra.mxu0 0
        %3579 = vmatprep.subr.bf16.mxu0 0
        %3580 = vmatpush1.bf16.msra.mxu0 0
        %3581 = vmatprep.subr.bf16.mxu0 0
        %3582 = vmatpush1.bf16.msra.mxu0 0
        %3583 = vmatprep.mubr.bf16.mxu0 0
        %3584 = vmatmul.mubr.bf16.gmra.mrb[0].mxu0 %v3504
        %v3585 = vpop.f32.mrb[0].mxu0
        %v3586 = vadd.f32 0.0, %v3585
        %v3587 = vpop.f32.mrb[0].mxu0
        %v3588 = vpop.f32.mrb[0].mxu0
        %v3589 = vadd.f32 0.0, %v3588
        %v3590 = vpop.f32.mrb[0].mxu0
        %3591 = vmatprep.mubr.bf16.mxu0 0
        %3592 = vmatmul.mubr.bf16.gmra.mrb[0].mxu0 %v3507
        %v3593 = vpop.f32.mrb[0].mxu0
        %v3594 = vadd.f32 0.0, %v3593
        %v3595 = vpop.f32.mrb[0].mxu0
        %v3596 = vpop.f32.mrb[0].mxu0
        %v3597 = vadd.f32 0.0, %v3596
        %v3598 = vpop.f32.mrb[0].mxu0
        %3599 = vmatprep.mubr.bf16.mxu0 0
        %3600 = vmatmul.mubr.bf16.gmra.mrb[0].mxu0 %v3510
        %v3601 = vpop.f32.mrb[0].mxu0
        %v3602 = vadd.f32 0.0, %v3601
        %v3603 = vpop.f32.mrb[0].mxu0
        %v3604 = vpop.f32.mrb[0].mxu0
        %v3605 = vadd.f32 0.0, %v3604
        %v3606 = vpop.f32.mrb[0].mxu0
        %3607 = vmatprep.mubr.bf16.mxu0 0
        %3608 = vmatmul.mubr.bf16.gmra.mrb[0].mxu0 %v3513
        %v3609 = vpop.f32.mrb[0].mxu0
        %v3610 = vadd.f32 0.0, %v3609
        %v3611 = vpop.f32.mrb[0].mxu0
        %v3612 = vpop.f32.mrb[0].mxu0
        %v3613 = vadd.f32 0.0, %v3612
        %v3614 = vpop.f32.mrb[0].mxu0
        %3615 = vmatprep.mubr.bf16.mxu0 0
        %3616 = vmatmul.mubr.bf16.gmra.mrb[0].mxu0 %v3516
        %v3617 = vpop.f32.mrb[0].mxu0
        %v3618 = vadd.f32 0.0, %v3617
        %v3619 = vpop.f32.mrb[0].mxu0
        %v3620 = vpop.f32.mrb[0].mxu0
        %v3621 = vadd.f32 0.0, %v3620
        %v3622 = vpop.f32.mrb[0].mxu0
        %3623 = vmatprep.mubr.bf16.mxu0 0
        %3624 = vmatmul.mubr.bf16.gmra.mrb[0].mxu0 %v3519
        %v3625 = vpop.f32.mrb[0].mxu0
        %v3626 = vadd.f32 0.0, %v3625
        %v3627 = vpop.f32.mrb[0].mxu0
        %v3628 = vpop.f32.mrb[0].mxu0
        %v3629 = vadd.f32 0.0, %v3628
        %v3630 = vpop.f32.mrb[0].mxu0
        %3631 = vmatprep.mubr.bf16.mxu0 0
        %3632 = vmatmul.mubr.bf16.gmra.mrb[0].mxu0 %v3522
        %v3633 = vpop.f32.mrb[0].mxu0
        %v3634 = vadd.f32 0.0, %v3633
        %v3635 = vpop.f32.mrb[0].mxu0
        %v3636 = vpop.f32.mrb[0].mxu0
        %v3637 = vadd.f32 0.0, %v3636
        %v3638 = vpop.f32.mrb[0].mxu0
        %3639 = vmatprep.mubr.bf16.mxu0 0
        %3640 = vmatmul.mubr.bf16.gmra.mrb[0].mxu0 %v3525
        %v3641 = vpop.f32.mrb[0].mxu0
        %v3642 = vadd.f32 0.0, %v3641
        %v3643 = vpop.f32.mrb[0].mxu0
        %v3644 = vpop.f32.mrb[0].mxu0
        %v3645 = vadd.f32 0.0, %v3644
        %v3646 = vpop.f32.mrb[0].mxu0
        %3647 = vmatprep.mubr.bf16.mxu0 0
        %3648 = vmatmul.mubr.bf16.gmra.mrb[0].mxu0 %v3528
        %v3649 = vpop.f32.mrb[0].mxu0
        %v3650 = vadd.f32 0.0, %v3649
        %v3651 = vpop.f32.mrb[0].mxu0
        %v3652 = vpop.f32.mrb[0].mxu0
        %v3653 = vadd.f32 0.0, %v3652
        %v3654 = vpop.f32.mrb[0].mxu0
        %3655 = vmatprep.mubr.bf16.mxu0 0
        %3656 = vmatmul.mubr.bf16.gmra.mrb[0].mxu0 %v3531
        %v3657 = vpop.f32.mrb[0].mxu0
        %v3658 = vadd.f32 0.0, %v3657
        %v3659 = vpop.f32.mrb[0].mxu0
        %v3660 = vpop.f32.mrb[0].mxu0
        %v3661 = vadd.f32 0.0, %v3660
        %v3662 = vpop.f32.mrb[0].mxu0
        %3663 = vmatprep.mubr.bf16.mxu0 0
        %3664 = vmatmul.mubr.bf16.gmra.mrb[0].mxu0 %v3534
        %v3665 = vpop.f32.mrb[0].mxu0
        %v3666 = vadd.f32 0.0, %v3665
        %v3667 = vpop.f32.mrb[0].mxu0
        %v3668 = vpop.f32.mrb[0].mxu0
        %v3669 = vadd.f32 0.0, %v3668
        %v3670 = vpop.f32.mrb[0].mxu0
        %3671 = vmatprep.mubr.bf16.mxu0 0
        %3672 = vmatmul.mubr.bf16.gmra.mrb[0].mxu0 %v3537
        %v3673 = vpop.f32.mrb[0].mxu0
        %v3674 = vadd.f32 0.0, %v3673
        %v3675 = vpop.f32.mrb[0].mxu0
        %v3676 = vpop.f32.mrb[0].mxu0
        %v3677 = vadd.f32 0.0, %v3676
        %v3678 = vpop.f32.mrb[0].mxu0
        %3679 = vmatprep.mubr.bf16.mxu0 0
        %3680 = vmatmul.mubr.bf16.gmra.mrb[0].mxu0 %v3540
        %v3681 = vpop.f32.mrb[0].mxu0
        %v3682 = vadd.f32 0.0, %v3681
        %v3683 = vpop.f32.mrb[0].mxu0
        %v3684 = vpop.f32.mrb[0].mxu0
        %v3685 = vadd.f32 0.0, %v3684
        %v3686 = vpop.f32.mrb[0].mxu0
        %3687 = vmatprep.mubr.bf16.mxu0 0
        %3688 = vmatmul.mubr.bf16.gmra.mrb[0].mxu0 %v3543
        %v3689 = vpop.f32.mrb[0].mxu0
        %v3690 = vadd.f32 0.0, %v3689
        %v3691 = vpop.f32.mrb[0].mxu0
        %v3692 = vpop.f32.mrb[0].mxu0
        %v3693 = vadd.f32 0.0, %v3692
        %v3694 = vpop.f32.mrb[0].mxu0
        %3695 = vmatprep.mubr.bf16.mxu0 0
        %3696 = vmatmul.mubr.bf16.gmra.mrb[0].mxu0 %v3546
        %v3697 = vpop.f32.mrb[0].mxu0
        %v3698 = vadd.f32 0.0, %v3697
        %v3699 = vpop.f32.mrb[0].mxu0
        %v3700 = vpop.f32.mrb[0].mxu0
        %v3701 = vadd.f32 0.0, %v3700
        %v3702 = vpop.f32.mrb[0].mxu0
        %3703 = vmatprep.mubr.bf16.mxu0 0
        %3704 = vmatmul.mubr.bf16.gmra.mrb[0].mxu0 %v3549
        %v3705 = vpop.f32.mrb[0].mxu0
        %v3706 = vadd.f32 0.0, %v3705
        %v3707 = vpop.f32.mrb[0].mxu0
        %v3708 = vpop.f32.mrb[0].mxu0
        %v3709 = vadd.f32 0.0, %v3708
        %v3710 = vpop.f32.mrb[0].mxu0
        %3711 = vdwg.mxu0
        %v3716 = vunpack.c.l.b16 %v3434
        %v3717 = vunpack.c.l.b16 %v3435
        %v3718 = vunpack.c.l.b16 %v3436
        %v3719 = vunpack.c.l.b16 %v3437
        %v3720 = vpack.c.b16 %v3717, %v3716
        %v3721 = vpack.c.b16 %v3719, %v3718
        %v3725 = vsel %vm3275, %v3418, 0
        %v3728 = vsel %vm3275, %v3419, 0
        %v3731 = vsel %vm3275, %v3420, 0
        %v3734 = vsel %vm3275, %v3421, 0
        %v3737 = vsel %vm3275, %v3422, 0
        %v3740 = vsel %vm3275, %v3423, 0
        %v3743 = vsel %vm3275, %v3424, 0
        %v3746 = vsel %vm3275, %v3425, 0
        %v3749 = vsel %vm3275, %v3426, 0
        %v3752 = vsel %vm3275, %v3427, 0
        %v3755 = vsel %vm3275, %v3428, 0
        %v3758 = vsel %vm3275, %v3429, 0
        %v3761 = vsel %vm3275, %v3430, 0
        %v3764 = vsel %vm3275, %v3431, 0
        %v3767 = vsel %vm3275, %v3432, 0
        %v3770 = vsel %vm3275, %v3433, 0
        %3772 = vmatprep.subr.bf16.mxu0 0
        %3773 = vmatpush1.bf16.msra.mxu0 %v3720
        %3774 = vmatprep.subr.bf16.mxu0 0
        %3775 = vmatpush1.bf16.msra.mxu0 %v3721
        %3776 = vmatprep.subr.bf16.mxu0 0
        %3777 = vmatpush1.bf16.msra.mxu0 0
        %3778 = vmatprep.subr.bf16.mxu0 0
        %3779 = vmatpush1.bf16.msra.mxu0 0
        %3780 = vmatprep.subr.bf16.mxu0 0
        %3781 = vmatpush1.bf16.msra.mxu0 0
        %3782 = vmatprep.subr.bf16.mxu0 0
        %3783 = vmatpush1.bf16.msra.mxu0 0
        %3784 = vmatprep.subr.bf16.mxu0 0
        %3785 = vmatpush1.bf16.msra.mxu0 0
        %3786 = vmatprep.subr.bf16.mxu0 0
        %3787 = vmatpush1.bf16.msra.mxu0 0
        %3788 = vmatprep.subr.bf16.mxu0 0
        %3789 = vmatpush1.bf16.msra.mxu0 0
        %3790 = vmatprep.subr.bf16.mxu0 0
        %3791 = vmatpush1.bf16.msra.mxu0 0
        %3792 = vmatprep.subr.bf16.mxu0 0
        %3793 = vmatpush1.bf16.msra.mxu0 0
        %3794 = vmatprep.subr.bf16.mxu0 0
        %3795 = vmatpush1.bf16.msra.mxu0 0
        %3796 = vmatprep.subr.bf16.mxu0 0
        %3797 = vmatpush1.bf16.msra.mxu0 0
        %3798 = vmatprep.subr.bf16.mxu0 0
        %3799 = vmatpush1.bf16.msra.mxu0 0
        %3800 = vmatprep.subr.bf16.mxu0 0
        %3801 = vmatpush1.bf16.msra.mxu0 0
        %3802 = vmatprep.subr.bf16.mxu0 0
        %3803 = vmatpush1.bf16.msra.mxu0 0
        %3804 = vmatprep.mubr.bf16.mxu0 0
        %3805 = vmatmul.mubr.bf16.gmra.mrb[0].mxu0 %v3725
        %v3806 = vpop.f32.mrb[0].mxu0
        %v3807 = vadd.f32 %v3586, %v3806
        %v3808 = vpop.f32.mrb[0].mxu0
        %v3809 = vpop.f32.mrb[0].mxu0
        %v3810 = vadd.f32 %v3589, %v3809
        %v3811 = vpop.f32.mrb[0].mxu0
        %3812 = vmatprep.mubr.bf16.mxu0 0
        %3813 = vmatmul.mubr.bf16.gmra.mrb[0].mxu0 %v3728
        %v3814 = vpop.f32.mrb[0].mxu0
        %v3815 = vadd.f32 %v3594, %v3814
        %v3816 = vpop.f32.mrb[0].mxu0
        %v3817 = vpop.f32.mrb[0].mxu0
        %v3818 = vadd.f32 %v3597, %v3817
        %v3819 = vpop.f32.mrb[0].mxu0
        %3820 = vmatprep.mubr.bf16.mxu0 0
        %3821 = vmatmul.mubr.bf16.gmra.mrb[0].mxu0 %v3731
        %v3822 = vpop.f32.mrb[0].mxu0
        %v3823 = vadd.f32 %v3602, %v3822
        %v3824 = vpop.f32.mrb[0].mxu0
        %v3825 = vpop.f32.mrb[0].mxu0
        %v3826 = vadd.f32 %v3605, %v3825
        %v3827 = vpop.f32.mrb[0].mxu0
        %3828 = vmatprep.mubr.bf16.mxu0 0
        %3829 = vmatmul.mubr.bf16.gmra.mrb[0].mxu0 %v3734
        %v3830 = vpop.f32.mrb[0].mxu0
        %v3831 = vadd.f32 %v3610, %v3830
        %v3832 = vpop.f32.mrb[0].mxu0
        %v3833 = vpop.f32.mrb[0].mxu0
        %v3834 = vadd.f32 %v3613, %v3833
        %v3835 = vpop.f32.mrb[0].mxu0
        %3836 = vmatprep.mubr.bf16.mxu0 0
        %3837 = vmatmul.mubr.bf16.gmra.mrb[0].mxu0 %v3737
        %v3838 = vpop.f32.mrb[0].mxu0
        %v3839 = vadd.f32 %v3618, %v3838
        %v3840 = vpop.f32.mrb[0].mxu0
        %v3841 = vpop.f32.mrb[0].mxu0
        %v3842 = vadd.f32 %v3621, %v3841
        %v3843 = vpop.f32.mrb[0].mxu0
        %3844 = vmatprep.mubr.bf16.mxu0 0
        %3845 = vmatmul.mubr.bf16.gmra.mrb[0].mxu0 %v3740
        %v3846 = vpop.f32.mrb[0].mxu0
        %v3847 = vadd.f32 %v3626, %v3846
        %v3848 = vpop.f32.mrb[0].mxu0
        %v3849 = vpop.f32.mrb[0].mxu0
        %v3850 = vadd.f32 %v3629, %v3849
        %v3851 = vpop.f32.mrb[0].mxu0
        %3852 = vmatprep.mubr.bf16.mxu0 0
        %3853 = vmatmul.mubr.bf16.gmra.mrb[0].mxu0 %v3743
        %v3854 = vpop.f32.mrb[0].mxu0
        %v3855 = vadd.f32 %v3634, %v3854
        %v3856 = vpop.f32.mrb[0].mxu0
        %v3857 = vpop.f32.mrb[0].mxu0
        %v3858 = vadd.f32 %v3637, %v3857
        %v3859 = vpop.f32.mrb[0].mxu0
        %3860 = vmatprep.mubr.bf16.mxu0 0
        %3861 = vmatmul.mubr.bf16.gmra.mrb[0].mxu0 %v3746
        %v3862 = vpop.f32.mrb[0].mxu0
        %v3863 = vadd.f32 %v3642, %v3862
        %v3864 = vpop.f32.mrb[0].mxu0
        %v3865 = vpop.f32.mrb[0].mxu0
        %v3866 = vadd.f32 %v3645, %v3865
        %v3867 = vpop.f32.mrb[0].mxu0
        %3868 = vmatprep.mubr.bf16.mxu0 0
        %3869 = vmatmul.mubr.bf16.gmra.mrb[0].mxu0 %v3749
        %v3870 = vpop.f32.mrb[0].mxu0
        %v3871 = vadd.f32 %v3650, %v3870
        %v3872 = vpop.f32.mrb[0].mxu0
        %v3873 = vpop.f32.mrb[0].mxu0
        %v3874 = vadd.f32 %v3653, %v3873
        %v3875 = vpop.f32.mrb[0].mxu0
        %3876 = vmatprep.mubr.bf16.mxu0 0
        %3877 = vmatmul.mubr.bf16.gmra.mrb[0].mxu0 %v3752
        %v3878 = vpop.f32.mrb[0].mxu0
        %v3879 = vadd.f32 %v3658, %v3878
        %v3880 = vpop.f32.mrb[0].mxu0
        %v3881 = vpop.f32.mrb[0].mxu0
        %v3882 = vadd.f32 %v3661, %v3881
        %v3883 = vpop.f32.mrb[0].mxu0
        %3884 = vmatprep.mubr.bf16.mxu0 0
        %3885 = vmatmul.mubr.bf16.gmra.mrb[0].mxu0 %v3755
        %v3886 = vpop.f32.mrb[0].mxu0
        %v3887 = vadd.f32 %v3666, %v3886
        %v3888 = vpop.f32.mrb[0].mxu0
        %v3889 = vpop.f32.mrb[0].mxu0
        %v3890 = vadd.f32 %v3669, %v3889
        %v3891 = vpop.f32.mrb[0].mxu0
        %3892 = vmatprep.mubr.bf16.mxu0 0
        %3893 = vmatmul.mubr.bf16.gmra.mrb[0].mxu0 %v3758
        %v3894 = vpop.f32.mrb[0].mxu0
        %v3895 = vadd.f32 %v3674, %v3894
        %v3896 = vpop.f32.mrb[0].mxu0
        %v3897 = vpop.f32.mrb[0].mxu0
        %v3898 = vadd.f32 %v3677, %v3897
        %v3899 = vpop.f32.mrb[0].mxu0
        %3900 = vmatprep.mubr.bf16.mxu0 0
        %3901 = vmatmul.mubr.bf16.gmra.mrb[0].mxu0 %v3761
        %v3902 = vpop.f32.mrb[0].mxu0
        %v3903 = vadd.f32 %v3682, %v3902
        %v3904 = vpop.f32.mrb[0].mxu0
        %v3905 = vpop.f32.mrb[0].mxu0
        %v3906 = vadd.f32 %v3685, %v3905
        %v3907 = vpop.f32.mrb[0].mxu0
        %3908 = vmatprep.mubr.bf16.mxu0 0
        %3909 = vmatmul.mubr.bf16.gmra.mrb[0].mxu0 %v3764
        %v3910 = vpop.f32.mrb[0].mxu0
        %v3911 = vadd.f32 %v3690, %v3910
        %v3912 = vpop.f32.mrb[0].mxu0
        %v3913 = vpop.f32.mrb[0].mxu0
        %v3914 = vadd.f32 %v3693, %v3913
        %v3915 = vpop.f32.mrb[0].mxu0
        %3916 = vmatprep.mubr.bf16.mxu0 0
        %3917 = vmatmul.mubr.bf16.gmra.mrb[0].mxu0 %v3767
        %v3918 = vpop.f32.mrb[0].mxu0
        %v3919 = vadd.f32 %v3698, %v3918
        %v3920 = vpop.f32.mrb[0].mxu0
        %v3921 = vpop.f32.mrb[0].mxu0
        %v3922 = vadd.f32 %v3701, %v3921
        %v3923 = vpop.f32.mrb[0].mxu0
        %3924 = vmatprep.mubr.bf16.mxu0 0
        %3925 = vmatmul.mubr.bf16.gmra.mrb[0].mxu0 %v3770
        %v3926 = vpop.f32.mrb[0].mxu0
        %v3927 = vadd.f32 %v3706, %v3926
        %v3928 = vpop.f32.mrb[0].mxu0
        %v3929 = vpop.f32.mrb[0].mxu0
        %v3930 = vadd.f32 %v3709, %v3929
        %v3931 = vpop.f32.mrb[0].mxu0
        %3932 = vdwg.mxu0
        %v3933 = vld [vmem:[#allocation3 + $0x2] sm:$0xff]
        %v3934 = vld [vmem:[#allocation3 + $0xa] sm:$0xff]
        %v3935 = vld [vmem:[#allocation3 + $0x1a] sm:$0xff]
        %v3936 = vld [vmem:[#allocation3 + $0x22] sm:$0xff]
        %v3937 = vld [vmem:[#allocation3 + $0x32] sm:$0xff]
        %v3938 = vld [vmem:[#allocation3 + $0x3a] sm:$0xff]
        %v3939 = vld [vmem:[#allocation3 + $0x4a] sm:$0xff]
        %v3940 = vld [vmem:[#allocation3 + $0x52] sm:$0xff]
        %v3941 = vld [vmem:[#allocation3 + $0x62] sm:$0xff]
        %v3942 = vld [vmem:[#allocation3 + $0x6a] sm:$0xff]
        %v3943 = vld [vmem:[#allocation3 + $0x7a] sm:$0xff]
        %v3944 = vld [vmem:[#allocation3 + $0x82] sm:$0xff]
        %v3945 = vld [vmem:[#allocation3 + $0x92] sm:$0xff]
        %v3946 = vld [vmem:[#allocation3 + $0x9a] sm:$0xff]
        %v3947 = vld [vmem:[#allocation3 + $0xaa] sm:$0xff]
        %v3948 = vld [vmem:[#allocation3 + $0xb2] sm:$0xff]
        %v3949 = vld [vmem:[#allocation3 + $0xc2] sm:$0xff]
        %v3950 = vld [vmem:[#allocation3 + $0xca] sm:$0xff]
        %v3951 = vld [vmem:[#allocation3 + $0xda] sm:$0xff]
        %v3952 = vld [vmem:[#allocation3 + $0xe2] sm:$0xff]
        %v3953 = vld [vmem:[#allocation3 + $0xf2] sm:$0xff]
        %v3954 = vld [vmem:[#allocation3 + $0xfa] sm:$0xff]
        %v3955 = vld [vmem:[#allocation3 + $0x10a] sm:$0xff]
        %v3956 = vld [vmem:[#allocation3 + $0x112] sm:$0xff]
        %v3957 = vld [vmem:[#allocation3 + $0x122] sm:$0xff]
        %v3958 = vld [vmem:[#allocation3 + $0x12a] sm:$0xff]
        %v3959 = vld [vmem:[#allocation3 + $0x13a] sm:$0xff]
        %v3960 = vld [vmem:[#allocation3 + $0x142] sm:$0xff]
        %v3961 = vld [vmem:[#allocation3 + $0x152] sm:$0xff]
        %v3962 = vld [vmem:[#allocation3 + $0x15a] sm:$0xff]
        %v3963 = vld [vmem:[#allocation3 + $0x16a] sm:$0xff]
        %v3964 = vld [vmem:[#allocation3 + $0x172] sm:$0xff]
        %v3965 = vpack.c.bf16 %v3934, %v3933
        %v3966 = vpack.c.bf16 %v3936, %v3935
        %v3967 = vpack.c.bf16 %v3938, %v3937
        %v3968 = vpack.c.bf16 %v3940, %v3939
        %v3969 = vpack.c.bf16 %v3942, %v3941
        %v3970 = vpack.c.bf16 %v3944, %v3943
        %v3971 = vpack.c.bf16 %v3946, %v3945
        %v3972 = vpack.c.bf16 %v3948, %v3947
        %v3973 = vpack.c.bf16 %v3950, %v3949
        %v3974 = vpack.c.bf16 %v3952, %v3951
        %v3975 = vpack.c.bf16 %v3954, %v3953
        %v3976 = vpack.c.bf16 %v3956, %v3955
        %v3977 = vpack.c.bf16 %v3958, %v3957
        %v3978 = vpack.c.bf16 %v3960, %v3959
        %v3979 = vpack.c.bf16 %v3962, %v3961
        %v3980 = vpack.c.bf16 %v3964, %v3963
        %s3981 = scalar_lea.vmem [#allocation6], 32
        %v3982 = vld [vmem:[%s3981] sm:$0xf]
        %v3983 = vld [vmem:[%s3981 + $0x4] sm:$0xf]
        %v3984 = vld [vmem:[%s3981 + $0x8] sm:$0xf]
        %v3985 = vld [vmem:[%s3981 + $0xc] sm:$0xf]
        %v3990 = vunpack.c.l.b16 %v3982
        %v3991 = vunpack.c.l.b16 %v3983
        %v3992 = vunpack.c.l.b16 %v3984
        %v3993 = vunpack.c.l.b16 %v3985
        %v3994 = vpack.c.b16 %v3991, %v3990
        %v3995 = vpack.c.b16 %v3993, %v3992
        %v3999 = vsel %vm3275, %v3965, 0
        %v4002 = vsel %vm3275, %v3966, 0
        %v4005 = vsel %vm3275, %v3967, 0
        %v4008 = vsel %vm3275, %v3968, 0
        %v4011 = vsel %vm3275, %v3969, 0
        %v4014 = vsel %vm3275, %v3970, 0
        %v4017 = vsel %vm3275, %v3971, 0
        %v4020 = vsel %vm3275, %v3972, 0
        %v4023 = vsel %vm3275, %v3973, 0
        %v4026 = vsel %vm3275, %v3974, 0
        %v4029 = vsel %vm3275, %v3975, 0
        %v4032 = vsel %vm3275, %v3976, 0
        %v4035 = vsel %vm3275, %v3977, 0
        %v4038 = vsel %vm3275, %v3978, 0
        %v4041 = vsel %vm3275, %v3979, 0
        %v4044 = vsel %vm3275, %v3980, 0
        %4046 = vmatprep.subr.bf16.mxu0 0
        %4047 = vmatpush1.bf16.msra.mxu0 %v3994
        %4048 = vmatprep.subr.bf16.mxu0 0
        %4049 = vmatpush1.bf16.msra.mxu0 %v3995
        %4050 = vmatprep.subr.bf16.mxu0 0
        %4051 = vmatpush1.bf16.msra.mxu0 0
        %4052 = vmatprep.subr.bf16.mxu0 0
        %4053 = vmatpush1.bf16.msra.mxu0 0
        %4054 = vmatprep.subr.bf16.mxu0 0
        %4055 = vmatpush1.bf16.msra.mxu0 0
        %4056 = vmatprep.subr.bf16.mxu0 0
        %4057 = vmatpush1.bf16.msra.mxu0 0
        %4058 = vmatprep.subr.bf16.mxu0 0
        %4059 = vmatpush1.bf16.msra.mxu0 0
        %4060 = vmatprep.subr.bf16.mxu0 0
        %4061 = vmatpush1.bf16.msra.mxu0 0
        %4062 = vmatprep.subr.bf16.mxu0 0
        %4063 = vmatpush1.bf16.msra.mxu0 0
        %4064 = vmatprep.subr.bf16.mxu0 0
        %4065 = vmatpush1.bf16.msra.mxu0 0
        %4066 = vmatprep.subr.bf16.mxu0 0
        %4067 = vmatpush1.bf16.msra.mxu0 0
        %4068 = vmatprep.subr.bf16.mxu0 0
        %4069 = vmatpush1.bf16.msra.mxu0 0
        %4070 = vmatprep.subr.bf16.mxu0 0
        %4071 = vmatpush1.bf16.msra.mxu0 0
        %4072 = vmatprep.subr.bf16.mxu0 0
        %4073 = vmatpush1.bf16.msra.mxu0 0
        %4074 = vmatprep.subr.bf16.mxu0 0
        %4075 = vmatpush1.bf16.msra.mxu0 0
        %4076 = vmatprep.subr.bf16.mxu0 0
        %4077 = vmatpush1.bf16.msra.mxu0 0
        %4078 = vmatprep.mubr.bf16.mxu0 0
        %4079 = vmatmul.mubr.bf16.gmra.mrb[0].mxu0 %v3999
        %v4080 = vpop.f32.mrb[0].mxu0
        %v4081 = vadd.f32 0.0, %v4080
        %v4082 = vpop.f32.mrb[0].mxu0
        %v4083 = vpop.f32.mrb[0].mxu0
        %v4084 = vadd.f32 0.0, %v4083
        %v4085 = vpop.f32.mrb[0].mxu0
        %4086 = vmatprep.mubr.bf16.mxu0 0
        %4087 = vmatmul.mubr.bf16.gmra.mrb[0].mxu0 %v4002
        %v4088 = vpop.f32.mrb[0].mxu0
        %v4089 = vadd.f32 0.0, %v4088
        %v4090 = vpop.f32.mrb[0].mxu0
        %v4091 = vpop.f32.mrb[0].mxu0
        %v4092 = vadd.f32 0.0, %v4091
        %v4093 = vpop.f32.mrb[0].mxu0
        %4094 = vmatprep.mubr.bf16.mxu0 0
        %4095 = vmatmul.mubr.bf16.gmra.mrb[0].mxu0 %v4005
        %v4096 = vpop.f32.mrb[0].mxu0
        %v4097 = vadd.f32 0.0, %v4096
        %v4098 = vpop.f32.mrb[0].mxu0
        %v4099 = vpop.f32.mrb[0].mxu0
        %v4100 = vadd.f32 0.0, %v4099
        %v4101 = vpop.f32.mrb[0].mxu0
        %4102 = vmatprep.mubr.bf16.mxu0 0
        %4103 = vmatmul.mubr.bf16.gmra.mrb[0].mxu0 %v4008
        %v4104 = vpop.f32.mrb[0].mxu0
        %v4105 = vadd.f32 0.0, %v4104
        %v4106 = vpop.f32.mrb[0].mxu0
        %v4107 = vpop.f32.mrb[0].mxu0
        %v4108 = vadd.f32 0.0, %v4107
        %v4109 = vpop.f32.mrb[0].mxu0
        %4110 = vmatprep.mubr.bf16.mxu0 0
        %4111 = vmatmul.mubr.bf16.gmra.mrb[0].mxu0 %v4011
        %v4112 = vpop.f32.mrb[0].mxu0
        %v4113 = vadd.f32 0.0, %v4112
        %v4114 = vpop.f32.mrb[0].mxu0
        %v4115 = vpop.f32.mrb[0].mxu0
        %v4116 = vadd.f32 0.0, %v4115
        %v4117 = vpop.f32.mrb[0].mxu0
        %4118 = vmatprep.mubr.bf16.mxu0 0
        %4119 = vmatmul.mubr.bf16.gmra.mrb[0].mxu0 %v4014
        %v4120 = vpop.f32.mrb[0].mxu0
        %v4121 = vadd.f32 0.0, %v4120
        %v4122 = vpop.f32.mrb[0].mxu0
        %v4123 = vpop.f32.mrb[0].mxu0
        %v4124 = vadd.f32 0.0, %v4123
        %v4125 = vpop.f32.mrb[0].mxu0
        %4126 = vmatprep.mubr.bf16.mxu0 0
        %4127 = vmatmul.mubr.bf16.gmra.mrb[0].mxu0 %v4017
        %v4128 = vpop.f32.mrb[0].mxu0
        %v4129 = vadd.f32 0.0, %v4128
        %v4130 = vpop.f32.mrb[0].mxu0
        %v4131 = vpop.f32.mrb[0].mxu0
        %v4132 = vadd.f32 0.0, %v4131
        %v4133 = vpop.f32.mrb[0].mxu0
        %4134 = vmatprep.mubr.bf16.mxu0 0
        %4135 = vmatmul.mubr.bf16.gmra.mrb[0].mxu0 %v4020
        %v4136 = vpop.f32.mrb[0].mxu0
        %v4137 = vadd.f32 0.0, %v4136
        %v4138 = vpop.f32.mrb[0].mxu0
        %v4139 = vpop.f32.mrb[0].mxu0
        %v4140 = vadd.f32 0.0, %v4139
        %v4141 = vpop.f32.mrb[0].mxu0
        %4142 = vmatprep.mubr.bf16.mxu0 0
        %4143 = vmatmul.mubr.bf16.gmra.mrb[0].mxu0 %v4023
        %v4144 = vpop.f32.mrb[0].mxu0
        %v4145 = vadd.f32 0.0, %v4144
        %v4146 = vpop.f32.mrb[0].mxu0
        %v4147 = vpop.f32.mrb[0].mxu0
        %v4148 = vadd.f32 0.0, %v4147
        %v4149 = vpop.f32.mrb[0].mxu0
        %4150 = vmatprep.mubr.bf16.mxu0 0
        %4151 = vmatmul.mubr.bf16.gmra.mrb[0].mxu0 %v4026
        %v4152 = vpop.f32.mrb[0].mxu0
        %v4153 = vadd.f32 0.0, %v4152
        %v4154 = vpop.f32.mrb[0].mxu0
        %v4155 = vpop.f32.mrb[0].mxu0
        %v4156 = vadd.f32 0.0, %v4155
        %v4157 = vpop.f32.mrb[0].mxu0
        %4158 = vmatprep.mubr.bf16.mxu0 0
        %4159 = vmatmul.mubr.bf16.gmra.mrb[0].mxu0 %v4029
        %v4160 = vpop.f32.mrb[0].mxu0
        %v4161 = vadd.f32 0.0, %v4160
        %v4162 = vpop.f32.mrb[0].mxu0
        %v4163 = vpop.f32.mrb[0].mxu0
        %v4164 = vadd.f32 0.0, %v4163
        %v4165 = vpop.f32.mrb[0].mxu0
        %4166 = vmatprep.mubr.bf16.mxu0 0
        %4167 = vmatmul.mubr.bf16.gmra.mrb[0].mxu0 %v4032
        %v4168 = vpop.f32.mrb[0].mxu0
        %v4169 = vadd.f32 0.0, %v4168
        %v4170 = vpop.f32.mrb[0].mxu0
        %v4171 = vpop.f32.mrb[0].mxu0
        %v4172 = vadd.f32 0.0, %v4171
        %v4173 = vpop.f32.mrb[0].mxu0
        %4174 = vmatprep.mubr.bf16.mxu0 0
        %4175 = vmatmul.mubr.bf16.gmra.mrb[0].mxu0 %v4035
        %v4176 = vpop.f32.mrb[0].mxu0
        %v4177 = vadd.f32 0.0, %v4176
        %v4178 = vpop.f32.mrb[0].mxu0
        %v4179 = vpop.f32.mrb[0].mxu0
        %v4180 = vadd.f32 0.0, %v4179
        %v4181 = vpop.f32.mrb[0].mxu0
        %4182 = vmatprep.mubr.bf16.mxu0 0
        %4183 = vmatmul.mubr.bf16.gmra.mrb[0].mxu0 %v4038
        %v4184 = vpop.f32.mrb[0].mxu0
        %v4185 = vadd.f32 0.0, %v4184
        %v4186 = vpop.f32.mrb[0].mxu0
        %v4187 = vpop.f32.mrb[0].mxu0
        %v4188 = vadd.f32 0.0, %v4187
        %v4189 = vpop.f32.mrb[0].mxu0
        %4190 = vmatprep.mubr.bf16.mxu0 0
        %4191 = vmatmul.mubr.bf16.gmra.mrb[0].mxu0 %v4041
        %v4192 = vpop.f32.mrb[0].mxu0
        %v4193 = vadd.f32 0.0, %v4192
        %v4194 = vpop.f32.mrb[0].mxu0
        %v4195 = vpop.f32.mrb[0].mxu0
        %v4196 = vadd.f32 0.0, %v4195
        %v4197 = vpop.f32.mrb[0].mxu0
        %4198 = vmatprep.mubr.bf16.mxu0 0
        %4199 = vmatmul.mubr.bf16.gmra.mrb[0].mxu0 %v4044
        %v4200 = vpop.f32.mrb[0].mxu0
        %v4201 = vadd.f32 0.0, %v4200
        %v4202 = vpop.f32.mrb[0].mxu0
        %v4203 = vpop.f32.mrb[0].mxu0
        %v4204 = vadd.f32 0.0, %v4203
        %v4205 = vpop.f32.mrb[0].mxu0
        %4206 = vdwg.mxu0
        %v4207 = vadd.f32 %v3807, %v4081
        %v4208 = vadd.f32 %v3810, %v4084
        %v4209 = vadd.f32 %v3815, %v4089
        %v4210 = vadd.f32 %v3818, %v4092
        %v4211 = vadd.f32 %v3823, %v4097
        %v4212 = vadd.f32 %v3826, %v4100
        %v4213 = vadd.f32 %v3831, %v4105
        %v4214 = vadd.f32 %v3834, %v4108
        %v4215 = vadd.f32 %v3839, %v4113
        %v4216 = vadd.f32 %v3842, %v4116
        %v4217 = vadd.f32 %v3847, %v4121
        %v4218 = vadd.f32 %v3850, %v4124
        %v4219 = vadd.f32 %v3855, %v4129
        %v4220 = vadd.f32 %v3858, %v4132
        %v4221 = vadd.f32 %v3863, %v4137
        %v4222 = vadd.f32 %v3866, %v4140
        %v4223 = vadd.f32 %v3871, %v4145
        %v4224 = vadd.f32 %v3874, %v4148
        %v4225 = vadd.f32 %v3879, %v4153
        %v4226 = vadd.f32 %v3882, %v4156
        %v4227 = vadd.f32 %v3887, %v4161
        %v4228 = vadd.f32 %v3890, %v4164
        %v4229 = vadd.f32 %v3895, %v4169
        %v4230 = vadd.f32 %v3898, %v4172
        %v4231 = vadd.f32 %v3903, %v4177
        %v4232 = vadd.f32 %v3906, %v4180
        %v4233 = vadd.f32 %v3911, %v4185
        %v4234 = vadd.f32 %v3914, %v4188
        %v4235 = vadd.f32 %v3919, %v4193
        %v4236 = vadd.f32 %v3922, %v4196
        %v4237 = vadd.f32 %v3927, %v4201
        %v4238 = vadd.f32 %v3930, %v4204
        %v4239 = vld [vmem:[%s3274] sm:$0xff]
        %v4240 = vld [vmem:[%s3274 + $0x8] sm:$0xff]
        %v4241 = vld [vmem:[%s3274 + $0x18] sm:$0xff]
        %v4242 = vld [vmem:[%s3274 + $0x20] sm:$0xff]
        %v4243 = vld [vmem:[%s3274 + $0x30] sm:$0xff]
        %v4244 = vld [vmem:[%s3274 + $0x38] sm:$0xff]
        %v4245 = vld [vmem:[%s3274 + $0x48] sm:$0xff]
        %v4246 = vld [vmem:[%s3274 + $0x50] sm:$0xff]
        %v4247 = vld [vmem:[%s3274 + $0x60] sm:$0xff]
        %v4248 = vld [vmem:[%s3274 + $0x68] sm:$0xff]
        %v4249 = vld [vmem:[%s3274 + $0x78] sm:$0xff]
        %v4250 = vld [vmem:[%s3274 + $0x80] sm:$0xff]
        %v4251 = vld [vmem:[%s3274 + $0x90] sm:$0xff]
        %v4252 = vld [vmem:[%s3274 + $0x98] sm:$0xff]
        %v4253 = vld [vmem:[%s3274 + $0xa8] sm:$0xff]
        %v4254 = vld [vmem:[%s3274 + $0xb0] sm:$0xff]
        %v4255 = vld [vmem:[%s3274 + $0xc0] sm:$0xff]
        %v4256 = vld [vmem:[%s3274 + $0xc8] sm:$0xff]
        %v4257 = vld [vmem:[%s3274 + $0xd8] sm:$0xff]
        %v4258 = vld [vmem:[%s3274 + $0xe0] sm:$0xff]
        %v4259 = vld [vmem:[%s3274 + $0xf0] sm:$0xff]
        %v4260 = vld [vmem:[%s3274 + $0xf8] sm:$0xff]
        %v4261 = vld [vmem:[%s3274 + $0x108] sm:$0xff]
        %v4262 = vld [vmem:[%s3274 + $0x110] sm:$0xff]
        %v4263 = vld [vmem:[%s3274 + $0x120] sm:$0xff]
        %v4264 = vld [vmem:[%s3274 + $0x128] sm:$0xff]
        %v4265 = vld [vmem:[%s3274 + $0x138] sm:$0xff]
        %v4266 = vld [vmem:[%s3274 + $0x140] sm:$0xff]
        %v4267 = vld [vmem:[%s3274 + $0x150] sm:$0xff]
        %v4268 = vld [vmem:[%s3274 + $0x158] sm:$0xff]
        %v4269 = vld [vmem:[%s3274 + $0x168] sm:$0xff]
        %v4270 = vld [vmem:[%s3274 + $0x170] sm:$0xff]
        %v4271 = vpack.c.bf16 %v4240, %v4239
        %v4272 = vpack.c.bf16 %v4242, %v4241
        %v4273 = vpack.c.bf16 %v4244, %v4243
        %v4274 = vpack.c.bf16 %v4246, %v4245
        %v4275 = vpack.c.bf16 %v4248, %v4247
        %v4276 = vpack.c.bf16 %v4250, %v4249
        %v4277 = vpack.c.bf16 %v4252, %v4251
        %v4278 = vpack.c.bf16 %v4254, %v4253
        %v4279 = vpack.c.bf16 %v4256, %v4255
        %v4280 = vpack.c.bf16 %v4258, %v4257
        %v4281 = vpack.c.bf16 %v4260, %v4259
        %v4282 = vpack.c.bf16 %v4262, %v4261
        %v4283 = vpack.c.bf16 %v4264, %v4263
        %v4284 = vpack.c.bf16 %v4266, %v4265
        %v4285 = vpack.c.bf16 %v4268, %v4267
        %v4286 = vpack.c.bf16 %v4270, %v4269
        %s4287 = scalar_lea.vmem [#allocation6], 48
        %v4288 = vld [vmem:[%s4287] sm:$0xf]
        %v4289 = vld [vmem:[%s4287 + $0x4] sm:$0xf]
        %v4290 = vld [vmem:[%s4287 + $0x8] sm:$0xf]
        %v4291 = vld [vmem:[%s4287 + $0xc] sm:$0xf]
        %v4296 = vunpack.c.l.b16 %v4288
        %v4297 = vunpack.c.l.b16 %v4289
        %v4298 = vunpack.c.l.b16 %v4290
        %v4299 = vunpack.c.l.b16 %v4291
        %v4300 = vpack.c.b16 %v4297, %v4296
        %v4301 = vpack.c.b16 %v4299, %v4298
        %v4305 = vsel %vm3275, %v4271, 0
        %v4308 = vsel %vm3275, %v4272, 0
        %v4311 = vsel %vm3275, %v4273, 0
        %v4314 = vsel %vm3275, %v4274, 0
        %v4317 = vsel %vm3275, %v4275, 0
        %v4320 = vsel %vm3275, %v4276, 0
        %v4323 = vsel %vm3275, %v4277, 0
        %v4326 = vsel %vm3275, %v4278, 0
        %v4329 = vsel %vm3275, %v4279, 0
        %v4332 = vsel %vm3275, %v4280, 0
        %v4335 = vsel %vm3275, %v4281, 0
        %v4338 = vsel %vm3275, %v4282, 0
        %v4341 = vsel %vm3275, %v4283, 0
        %v4344 = vsel %vm3275, %v4284, 0
        %v4347 = vsel %vm3275, %v4285, 0
        %v4350 = vsel %vm3275, %v4286, 0
        %4352 = vmatprep.subr.bf16.mxu0 0
        %4353 = vmatpush1.bf16.msra.mxu0 %v4300
        %4354 = vmatprep.subr.bf16.mxu0 0
        %4355 = vmatpush1.bf16.msra.mxu0 %v4301
        %4356 = vmatprep.subr.bf16.mxu0 0
        %4357 = vmatpush1.bf16.msra.mxu0 0
        %4358 = vmatprep.subr.bf16.mxu0 0
        %4359 = vmatpush1.bf16.msra.mxu0 0
        %4360 = vmatprep.subr.bf16.mxu0 0
        %4361 = vmatpush1.bf16.msra.mxu0 0
        %4362 = vmatprep.subr.bf16.mxu0 0
        %4363 = vmatpush1.bf16.msra.mxu0 0
        %4364 = vmatprep.subr.bf16.mxu0 0
        %4365 = vmatpush1.bf16.msra.mxu0 0
        %4366 = vmatprep.subr.bf16.mxu0 0
        %4367 = vmatpush1.bf16.msra.mxu0 0
        %4368 = vmatprep.subr.bf16.mxu0 0
        %4369 = vmatpush1.bf16.msra.mxu0 0
        %4370 = vmatprep.subr.bf16.mxu0 0
        %4371 = vmatpush1.bf16.msra.mxu0 0
        %4372 = vmatprep.subr.bf16.mxu0 0
        %4373 = vmatpush1.bf16.msra.mxu0 0
        %4374 = vmatprep.subr.bf16.mxu0 0
        %4375 = vmatpush1.bf16.msra.mxu0 0
        %4376 = vmatprep.subr.bf16.mxu0 0
        %4377 = vmatpush1.bf16.msra.mxu0 0
        %4378 = vmatprep.subr.bf16.mxu0 0
        %4379 = vmatpush1.bf16.msra.mxu0 0
        %4380 = vmatprep.subr.bf16.mxu0 0
        %4381 = vmatpush1.bf16.msra.mxu0 0
        %4382 = vmatprep.subr.bf16.mxu0 0
        %4383 = vmatpush1.bf16.msra.mxu0 0
        %4384 = vmatprep.mubr.bf16.mxu0 0
        %4385 = vmatmul.mubr.bf16.gmra.mrb[0].mxu0 %v4305
        %v4386 = vpop.f32.mrb[0].mxu0
        %v4387 = vadd.f32 0.0, %v4386
        %v4388 = vpop.f32.mrb[0].mxu0
        %v4389 = vpop.f32.mrb[0].mxu0
        %v4390 = vadd.f32 0.0, %v4389
        %v4391 = vpop.f32.mrb[0].mxu0
        %4392 = vmatprep.mubr.bf16.mxu0 0
        %4393 = vmatmul.mubr.bf16.gmra.mrb[0].mxu0 %v4308
        %v4394 = vpop.f32.mrb[0].mxu0
        %v4395 = vadd.f32 0.0, %v4394
        %v4396 = vpop.f32.mrb[0].mxu0
        %v4397 = vpop.f32.mrb[0].mxu0
        %v4398 = vadd.f32 0.0, %v4397
        %v4399 = vpop.f32.mrb[0].mxu0
        %4400 = vmatprep.mubr.bf16.mxu0 0
        %4401 = vmatmul.mubr.bf16.gmra.mrb[0].mxu0 %v4311
        %v4402 = vpop.f32.mrb[0].mxu0
        %v4403 = vadd.f32 0.0, %v4402
        %v4404 = vpop.f32.mrb[0].mxu0
        %v4405 = vpop.f32.mrb[0].mxu0
        %v4406 = vadd.f32 0.0, %v4405
        %v4407 = vpop.f32.mrb[0].mxu0
        %4408 = vmatprep.mubr.bf16.mxu0 0
        %4409 = vmatmul.mubr.bf16.gmra.mrb[0].mxu0 %v4314
        %v4410 = vpop.f32.mrb[0].mxu0
        %v4411 = vadd.f32 0.0, %v4410
        %v4412 = vpop.f32.mrb[0].mxu0
        %v4413 = vpop.f32.mrb[0].mxu0
        %v4414 = vadd.f32 0.0, %v4413
        %v4415 = vpop.f32.mrb[0].mxu0
        %4416 = vmatprep.mubr.bf16.mxu0 0
        %4417 = vmatmul.mubr.bf16.gmra.mrb[0].mxu0 %v4317
        %v4418 = vpop.f32.mrb[0].mxu0
        %v4419 = vadd.f32 0.0, %v4418
        %v4420 = vpop.f32.mrb[0].mxu0
        %v4421 = vpop.f32.mrb[0].mxu0
        %v4422 = vadd.f32 0.0, %v4421
        %v4423 = vpop.f32.mrb[0].mxu0
        %4424 = vmatprep.mubr.bf16.mxu0 0
        %4425 = vmatmul.mubr.bf16.gmra.mrb[0].mxu0 %v4320
        %v4426 = vpop.f32.mrb[0].mxu0
        %v4427 = vadd.f32 0.0, %v4426
        %v4428 = vpop.f32.mrb[0].mxu0
        %v4429 = vpop.f32.mrb[0].mxu0
        %v4430 = vadd.f32 0.0, %v4429
        %v4431 = vpop.f32.mrb[0].mxu0
        %4432 = vmatprep.mubr.bf16.mxu0 0
        %4433 = vmatmul.mubr.bf16.gmra.mrb[0].mxu0 %v4323
        %v4434 = vpop.f32.mrb[0].mxu0
        %v4435 = vadd.f32 0.0, %v4434
        %v4436 = vpop.f32.mrb[0].mxu0
        %v4437 = vpop.f32.mrb[0].mxu0
        %v4438 = vadd.f32 0.0, %v4437
        %v4439 = vpop.f32.mrb[0].mxu0
        %4440 = vmatprep.mubr.bf16.mxu0 0
        %4441 = vmatmul.mubr.bf16.gmra.mrb[0].mxu0 %v4326
        %v4442 = vpop.f32.mrb[0].mxu0
        %v4443 = vadd.f32 0.0, %v4442
        %v4444 = vpop.f32.mrb[0].mxu0
        %v4445 = vpop.f32.mrb[0].mxu0
        %v4446 = vadd.f32 0.0, %v4445
        %v4447 = vpop.f32.mrb[0].mxu0
        %4448 = vmatprep.mubr.bf16.mxu0 0
        %4449 = vmatmul.mubr.bf16.gmra.mrb[0].mxu0 %v4329
        %v4450 = vpop.f32.mrb[0].mxu0
        %v4451 = vadd.f32 0.0, %v4450
        %v4452 = vpop.f32.mrb[0].mxu0
        %v4453 = vpop.f32.mrb[0].mxu0
        %v4454 = vadd.f32 0.0, %v4453
        %v4455 = vpop.f32.mrb[0].mxu0
        %4456 = vmatprep.mubr.bf16.mxu0 0
        %4457 = vmatmul.mubr.bf16.gmra.mrb[0].mxu0 %v4332
        %v4458 = vpop.f32.mrb[0].mxu0
        %v4459 = vadd.f32 0.0, %v4458
        %v4460 = vpop.f32.mrb[0].mxu0
        %v4461 = vpop.f32.mrb[0].mxu0
        %v4462 = vadd.f32 0.0, %v4461
        %v4463 = vpop.f32.mrb[0].mxu0
        %4464 = vmatprep.mubr.bf16.mxu0 0
        %4465 = vmatmul.mubr.bf16.gmra.mrb[0].mxu0 %v4335
        %v4466 = vpop.f32.mrb[0].mxu0
        %v4467 = vadd.f32 0.0, %v4466
        %v4468 = vpop.f32.mrb[0].mxu0
        %v4469 = vpop.f32.mrb[0].mxu0
        %v4470 = vadd.f32 0.0, %v4469
        %v4471 = vpop.f32.mrb[0].mxu0
        %4472 = vmatprep.mubr.bf16.mxu0 0
        %4473 = vmatmul.mubr.bf16.gmra.mrb[0].mxu0 %v4338
        %v4474 = vpop.f32.mrb[0].mxu0
        %v4475 = vadd.f32 0.0, %v4474
        %v4476 = vpop.f32.mrb[0].mxu0
        %v4477 = vpop.f32.mrb[0].mxu0
        %v4478 = vadd.f32 0.0, %v4477
        %v4479 = vpop.f32.mrb[0].mxu0
        %4480 = vmatprep.mubr.bf16.mxu0 0
        %4481 = vmatmul.mubr.bf16.gmra.mrb[0].mxu0 %v4341
        %v4482 = vpop.f32.mrb[0].mxu0
        %v4483 = vadd.f32 0.0, %v4482
        %v4484 = vpop.f32.mrb[0].mxu0
        %v4485 = vpop.f32.mrb[0].mxu0
        %v4486 = vadd.f32 0.0, %v4485
        %v4487 = vpop.f32.mrb[0].mxu0
        %4488 = vmatprep.mubr.bf16.mxu0 0
        %4489 = vmatmul.mubr.bf16.gmra.mrb[0].mxu0 %v4344
        %v4490 = vpop.f32.mrb[0].mxu0
        %v4491 = vadd.f32 0.0, %v4490
        %v4492 = vpop.f32.mrb[0].mxu0
        %v4493 = vpop.f32.mrb[0].mxu0
        %v4494 = vadd.f32 0.0, %v4493
        %v4495 = vpop.f32.mrb[0].mxu0
        %4496 = vmatprep.mubr.bf16.mxu0 0
        %4497 = vmatmul.mubr.bf16.gmra.mrb[0].mxu0 %v4347
        %v4498 = vpop.f32.mrb[0].mxu0
        %v4499 = vadd.f32 0.0, %v4498
        %v4500 = vpop.f32.mrb[0].mxu0
        %v4501 = vpop.f32.mrb[0].mxu0
        %v4502 = vadd.f32 0.0, %v4501
        %v4503 = vpop.f32.mrb[0].mxu0
        %4504 = vmatprep.mubr.bf16.mxu0 0
        %4505 = vmatmul.mubr.bf16.gmra.mrb[0].mxu0 %v4350
        %v4506 = vpop.f32.mrb[0].mxu0
        %v4507 = vadd.f32 0.0, %v4506
        %v4508 = vpop.f32.mrb[0].mxu0
        %v4509 = vpop.f32.mrb[0].mxu0
        %v4510 = vadd.f32 0.0, %v4509
        %v4511 = vpop.f32.mrb[0].mxu0
        %4512 = vdwg.mxu0
        %v4513 = vadd.f32 %v4207, %v4387
        %v4514 = vadd.f32 %v4208, %v4390
        %v4515 = vadd.f32 %v4209, %v4395
        %v4516 = vadd.f32 %v4210, %v4398
        %v4517 = vadd.f32 %v4211, %v4403
        %v4518 = vadd.f32 %v4212, %v4406
        %v4519 = vadd.f32 %v4213, %v4411
        %v4520 = vadd.f32 %v4214, %v4414
        %v4521 = vadd.f32 %v4215, %v4419
        %v4522 = vadd.f32 %v4216, %v4422
        %v4523 = vadd.f32 %v4217, %v4427
        %v4524 = vadd.f32 %v4218, %v4430
        %v4525 = vadd.f32 %v4219, %v4435
        %v4526 = vadd.f32 %v4220, %v4438
        %v4527 = vadd.f32 %v4221, %v4443
        %v4528 = vadd.f32 %v4222, %v4446
        %v4529 = vadd.f32 %v4223, %v4451
        %v4530 = vadd.f32 %v4224, %v4454
        %v4531 = vadd.f32 %v4225, %v4459
        %v4532 = vadd.f32 %v4226, %v4462
        %v4533 = vadd.f32 %v4227, %v4467
        %v4534 = vadd.f32 %v4228, %v4470
        %v4535 = vadd.f32 %v4229, %v4475
        %v4536 = vadd.f32 %v4230, %v4478
        %v4537 = vadd.f32 %v4231, %v4483
        %v4538 = vadd.f32 %v4232, %v4486
        %v4539 = vadd.f32 %v4233, %v4491
        %v4540 = vadd.f32 %v4234, %v4494
        %v4541 = vadd.f32 %v4235, %v4499
        %v4542 = vadd.f32 %v4236, %v4502
        %v4543 = vadd.f32 %v4237, %v4507
        %v4544 = vadd.f32 %v4238, %v4510
        %v4545 = vld [vmem:[%s3274 + $0x1] sm:$0xff]
        %v4546 = vld [vmem:[%s3274 + $0x9] sm:$0xff]
        %v4547 = vld [vmem:[%s3274 + $0x19] sm:$0xff]
        %v4548 = vld [vmem:[%s3274 + $0x21] sm:$0xff]
        %v4549 = vld [vmem:[%s3274 + $0x31] sm:$0xff]
        %v4550 = vld [vmem:[%s3274 + $0x39] sm:$0xff]
        %v4551 = vld [vmem:[%s3274 + $0x49] sm:$0xff]
        %v4552 = vld [vmem:[%s3274 + $0x51] sm:$0xff]
        %v4553 = vld [vmem:[%s3274 + $0x61] sm:$0xff]
        %v4554 = vld [vmem:[%s3274 + $0x69] sm:$0xff]
        %v4555 = vld [vmem:[%s3274 + $0x79] sm:$0xff]
        %v4556 = vld [vmem:[%s3274 + $0x81] sm:$0xff]
        %v4557 = vld [vmem:[%s3274 + $0x91] sm:$0xff]
        %v4558 = vld [vmem:[%s3274 + $0x99] sm:$0xff]
        %v4559 = vld [vmem:[%s3274 + $0xa9] sm:$0xff]
        %v4560 = vld [vmem:[%s3274 + $0xb1] sm:$0xff]
        %v4561 = vld [vmem:[%s3274 + $0xc1] sm:$0xff]
        %v4562 = vld [vmem:[%s3274 + $0xc9] sm:$0xff]
        %v4563 = vld [vmem:[%s3274 + $0xd9] sm:$0xff]
        %v4564 = vld [vmem:[%s3274 + $0xe1] sm:$0xff]
        %v4565 = vld [vmem:[%s3274 + $0xf1] sm:$0xff]
        %v4566 = vld [vmem:[%s3274 + $0xf9] sm:$0xff]
        %v4567 = vld [vmem:[%s3274 + $0x109] sm:$0xff]
        %v4568 = vld [vmem:[%s3274 + $0x111] sm:$0xff]
        %v4569 = vld [vmem:[%s3274 + $0x121] sm:$0xff]
        %v4570 = vld [vmem:[%s3274 + $0x129] sm:$0xff]
        %v4571 = vld [vmem:[%s3274 + $0x139] sm:$0xff]
        %v4572 = vld [vmem:[%s3274 + $0x141] sm:$0xff]
        %v4573 = vld [vmem:[%s3274 + $0x151] sm:$0xff]
        %v4574 = vld [vmem:[%s3274 + $0x159] sm:$0xff]
        %v4575 = vld [vmem:[%s3274 + $0x169] sm:$0xff]
        %v4576 = vld [vmem:[%s3274 + $0x171] sm:$0xff]
        %v4577 = vpack.c.bf16 %v4546, %v4545
        %v4578 = vpack.c.bf16 %v4548, %v4547
        %v4579 = vpack.c.bf16 %v4550, %v4549
        %v4580 = vpack.c.bf16 %v4552, %v4551
        %v4581 = vpack.c.bf16 %v4554, %v4553
        %v4582 = vpack.c.bf16 %v4556, %v4555
        %v4583 = vpack.c.bf16 %v4558, %v4557
        %v4584 = vpack.c.bf16 %v4560, %v4559
        %v4585 = vpack.c.bf16 %v4562, %v4561
        %v4586 = vpack.c.bf16 %v4564, %v4563
        %v4587 = vpack.c.bf16 %v4566, %v4565
        %v4588 = vpack.c.bf16 %v4568, %v4567
        %v4589 = vpack.c.bf16 %v4570, %v4569
        %v4590 = vpack.c.bf16 %v4572, %v4571
        %v4591 = vpack.c.bf16 %v4574, %v4573
        %v4592 = vpack.c.bf16 %v4576, %v4575
        %s4593 = scalar_lea.vmem [#allocation6], 64
        %v4594 = vld [vmem:[%s4593] sm:$0xf]
        %v4595 = vld [vmem:[%s4593 + $0x4] sm:$0xf]
        %v4596 = vld [vmem:[%s4593 + $0x8] sm:$0xf]
        %v4597 = vld [vmem:[%s4593 + $0xc] sm:$0xf]
        %v4602 = vunpack.c.l.b16 %v4594
        %v4603 = vunpack.c.l.b16 %v4595
        %v4604 = vunpack.c.l.b16 %v4596
        %v4605 = vunpack.c.l.b16 %v4597
        %v4606 = vpack.c.b16 %v4603, %v4602
        %v4607 = vpack.c.b16 %v4605, %v4604
        %v4611 = vsel %vm3275, %v4577, 0
        %v4614 = vsel %vm3275, %v4578, 0
        %v4617 = vsel %vm3275, %v4579, 0
        %v4620 = vsel %vm3275, %v4580, 0
        %v4623 = vsel %vm3275, %v4581, 0
        %v4626 = vsel %vm3275, %v4582, 0
        %v4629 = vsel %vm3275, %v4583, 0
        %v4632 = vsel %vm3275, %v4584, 0
        %v4635 = vsel %vm3275, %v4585, 0
        %v4638 = vsel %vm3275, %v4586, 0
        %v4641 = vsel %vm3275, %v4587, 0
        %v4644 = vsel %vm3275, %v4588, 0
        %v4647 = vsel %vm3275, %v4589, 0
        %v4650 = vsel %vm3275, %v4590, 0
        %v4653 = vsel %vm3275, %v4591, 0
        %v4656 = vsel %vm3275, %v4592, 0
        %4658 = vmatprep.subr.bf16.mxu0 0
        %4659 = vmatpush1.bf16.msra.mxu0 %v4606
        %4660 = vmatprep.subr.bf16.mxu0 0
        %4661 = vmatpush1.bf16.msra.mxu0 %v4607
        %4662 = vmatprep.subr.bf16.mxu0 0
        %4663 = vmatpush1.bf16.msra.mxu0 0
        %4664 = vmatprep.subr.bf16.mxu0 0
        %4665 = vmatpush1.bf16.msra.mxu0 0
        %4666 = vmatprep.subr.bf16.mxu0 0
        %4667 = vmatpush1.bf16.msra.mxu0 0
        %4668 = vmatprep.subr.bf16.mxu0 0
        %4669 = vmatpush1.bf16.msra.mxu0 0
        %4670 = vmatprep.subr.bf16.mxu0 0
        %4671 = vmatpush1.bf16.msra.mxu0 0
        %4672 = vmatprep.subr.bf16.mxu0 0
        %4673 = vmatpush1.bf16.msra.mxu0 0
        %4674 = vmatprep.subr.bf16.mxu0 0
        %4675 = vmatpush1.bf16.msra.mxu0 0
        %4676 = vmatprep.subr.bf16.mxu0 0
        %4677 = vmatpush1.bf16.msra.mxu0 0
        %4678 = vmatprep.subr.bf16.mxu0 0
        %4679 = vmatpush1.bf16.msra.mxu0 0
        %4680 = vmatprep.subr.bf16.mxu0 0
        %4681 = vmatpush1.bf16.msra.mxu0 0
        %4682 = vmatprep.subr.bf16.mxu0 0
        %4683 = vmatpush1.bf16.msra.mxu0 0
        %4684 = vmatprep.subr.bf16.mxu0 0
        %4685 = vmatpush1.bf16.msra.mxu0 0
        %4686 = vmatprep.subr.bf16.mxu0 0
        %4687 = vmatpush1.bf16.msra.mxu0 0
        %4688 = vmatprep.subr.bf16.mxu0 0
        %4689 = vmatpush1.bf16.msra.mxu0 0
        %4690 = vmatprep.mubr.bf16.mxu0 0
        %4691 = vmatmul.mubr.bf16.gmra.mrb[0].mxu0 %v4611
        %v4692 = vpop.f32.mrb[0].mxu0
        %v4693 = vadd.f32 0.0, %v4692
        %v4694 = vpop.f32.mrb[0].mxu0
        %v4695 = vpop.f32.mrb[0].mxu0
        %v4696 = vadd.f32 0.0, %v4695
        %v4697 = vpop.f32.mrb[0].mxu0
        %4698 = vmatprep.mubr.bf16.mxu0 0
        %4699 = vmatmul.mubr.bf16.gmra.mrb[0].mxu0 %v4614
        %v4700 = vpop.f32.mrb[0].mxu0
        %v4701 = vadd.f32 0.0, %v4700
        %v4702 = vpop.f32.mrb[0].mxu0
        %v4703 = vpop.f32.mrb[0].mxu0
        %v4704 = vadd.f32 0.0, %v4703
        %v4705 = vpop.f32.mrb[0].mxu0
        %4706 = vmatprep.mubr.bf16.mxu0 0
        %4707 = vmatmul.mubr.bf16.gmra.mrb[0].mxu0 %v4617
        %v4708 = vpop.f32.mrb[0].mxu0
        %v4709 = vadd.f32 0.0, %v4708
        %v4710 = vpop.f32.mrb[0].mxu0
        %v4711 = vpop.f32.mrb[0].mxu0
        %v4712 = vadd.f32 0.0, %v4711
        %v4713 = vpop.f32.mrb[0].mxu0
        %4714 = vmatprep.mubr.bf16.mxu0 0
        %4715 = vmatmul.mubr.bf16.gmra.mrb[0].mxu0 %v4620
        %v4716 = vpop.f32.mrb[0].mxu0
        %v4717 = vadd.f32 0.0, %v4716
        %v4718 = vpop.f32.mrb[0].mxu0
        %v4719 = vpop.f32.mrb[0].mxu0
        %v4720 = vadd.f32 0.0, %v4719
        %v4721 = vpop.f32.mrb[0].mxu0
        %4722 = vmatprep.mubr.bf16.mxu0 0
        %4723 = vmatmul.mubr.bf16.gmra.mrb[0].mxu0 %v4623
        %v4724 = vpop.f32.mrb[0].mxu0
        %v4725 = vadd.f32 0.0, %v4724
        %v4726 = vpop.f32.mrb[0].mxu0
        %v4727 = vpop.f32.mrb[0].mxu0
        %v4728 = vadd.f32 0.0, %v4727
        %v4729 = vpop.f32.mrb[0].mxu0
        %4730 = vmatprep.mubr.bf16.mxu0 0
        %4731 = vmatmul.mubr.bf16.gmra.mrb[0].mxu0 %v4626
        %v4732 = vpop.f32.mrb[0].mxu0
        %v4733 = vadd.f32 0.0, %v4732
        %v4734 = vpop.f32.mrb[0].mxu0
        %v4735 = vpop.f32.mrb[0].mxu0
        %v4736 = vadd.f32 0.0, %v4735
        %v4737 = vpop.f32.mrb[0].mxu0
        %4738 = vmatprep.mubr.bf16.mxu0 0
        %4739 = vmatmul.mubr.bf16.gmra.mrb[0].mxu0 %v4629
        %v4740 = vpop.f32.mrb[0].mxu0
        %v4741 = vadd.f32 0.0, %v4740
        %v4742 = vpop.f32.mrb[0].mxu0
        %v4743 = vpop.f32.mrb[0].mxu0
        %v4744 = vadd.f32 0.0, %v4743
        %v4745 = vpop.f32.mrb[0].mxu0
        %4746 = vmatprep.mubr.bf16.mxu0 0
        %4747 = vmatmul.mubr.bf16.gmra.mrb[0].mxu0 %v4632
        %v4748 = vpop.f32.mrb[0].mxu0
        %v4749 = vadd.f32 0.0, %v4748
        %v4750 = vpop.f32.mrb[0].mxu0
        %v4751 = vpop.f32.mrb[0].mxu0
        %v4752 = vadd.f32 0.0, %v4751
        %v4753 = vpop.f32.mrb[0].mxu0
        %4754 = vmatprep.mubr.bf16.mxu0 0
        %4755 = vmatmul.mubr.bf16.gmra.mrb[0].mxu0 %v4635
        %v4756 = vpop.f32.mrb[0].mxu0
        %v4757 = vadd.f32 0.0, %v4756
        %v4758 = vpop.f32.mrb[0].mxu0
        %v4759 = vpop.f32.mrb[0].mxu0
        %v4760 = vadd.f32 0.0, %v4759
        %v4761 = vpop.f32.mrb[0].mxu0
        %4762 = vmatprep.mubr.bf16.mxu0 0
        %4763 = vmatmul.mubr.bf16.gmra.mrb[0].mxu0 %v4638
        %v4764 = vpop.f32.mrb[0].mxu0
        %v4765 = vadd.f32 0.0, %v4764
        %v4766 = vpop.f32.mrb[0].mxu0
        %v4767 = vpop.f32.mrb[0].mxu0
        %v4768 = vadd.f32 0.0, %v4767
        %v4769 = vpop.f32.mrb[0].mxu0
        %4770 = vmatprep.mubr.bf16.mxu0 0
        %4771 = vmatmul.mubr.bf16.gmra.mrb[0].mxu0 %v4641
        %v4772 = vpop.f32.mrb[0].mxu0
        %v4773 = vadd.f32 0.0, %v4772
        %v4774 = vpop.f32.mrb[0].mxu0
        %v4775 = vpop.f32.mrb[0].mxu0
        %v4776 = vadd.f32 0.0, %v4775
        %v4777 = vpop.f32.mrb[0].mxu0
        %4778 = vmatprep.mubr.bf16.mxu0 0
        %4779 = vmatmul.mubr.bf16.gmra.mrb[0].mxu0 %v4644
        %v4780 = vpop.f32.mrb[0].mxu0
        %v4781 = vadd.f32 0.0, %v4780
        %v4782 = vpop.f32.mrb[0].mxu0
        %v4783 = vpop.f32.mrb[0].mxu0
        %v4784 = vadd.f32 0.0, %v4783
        %v4785 = vpop.f32.mrb[0].mxu0
        %4786 = vmatprep.mubr.bf16.mxu0 0
        %4787 = vmatmul.mubr.bf16.gmra.mrb[0].mxu0 %v4647
        %v4788 = vpop.f32.mrb[0].mxu0
        %v4789 = vadd.f32 0.0, %v4788
        %v4790 = vpop.f32.mrb[0].mxu0
        %v4791 = vpop.f32.mrb[0].mxu0
        %v4792 = vadd.f32 0.0, %v4791
        %v4793 = vpop.f32.mrb[0].mxu0
        %4794 = vmatprep.mubr.bf16.mxu0 0
        %4795 = vmatmul.mubr.bf16.gmra.mrb[0].mxu0 %v4650
        %v4796 = vpop.f32.mrb[0].mxu0
        %v4797 = vadd.f32 0.0, %v4796
        %v4798 = vpop.f32.mrb[0].mxu0
        %v4799 = vpop.f32.mrb[0].mxu0
        %v4800 = vadd.f32 0.0, %v4799
        %v4801 = vpop.f32.mrb[0].mxu0
        %4802 = vmatprep.mubr.bf16.mxu0 0
        %4803 = vmatmul.mubr.bf16.gmra.mrb[0].mxu0 %v4653
        %v4804 = vpop.f32.mrb[0].mxu0
        %v4805 = vadd.f32 0.0, %v4804
        %v4806 = vpop.f32.mrb[0].mxu0
        %v4807 = vpop.f32.mrb[0].mxu0
        %v4808 = vadd.f32 0.0, %v4807
        %v4809 = vpop.f32.mrb[0].mxu0
        %4810 = vmatprep.mubr.bf16.mxu0 0
        %4811 = vmatmul.mubr.bf16.gmra.mrb[0].mxu0 %v4656
        %v4812 = vpop.f32.mrb[0].mxu0
        %v4813 = vadd.f32 0.0, %v4812
        %v4814 = vpop.f32.mrb[0].mxu0
        %v4815 = vpop.f32.mrb[0].mxu0
        %v4816 = vadd.f32 0.0, %v4815
        %v4817 = vpop.f32.mrb[0].mxu0
        %4818 = vdwg.mxu0
        %v4819 = vadd.f32 %v4513, %v4693
        %v4820 = vadd.f32 %v4514, %v4696
        %v4821 = vadd.f32 %v4515, %v4701
        %v4822 = vadd.f32 %v4516, %v4704
        %v4823 = vadd.f32 %v4517, %v4709
        %v4824 = vadd.f32 %v4518, %v4712
        %v4825 = vadd.f32 %v4519, %v4717
        %v4826 = vadd.f32 %v4520, %v4720
        %v4827 = vadd.f32 %v4521, %v4725
        %v4828 = vadd.f32 %v4522, %v4728
        %v4829 = vadd.f32 %v4523, %v4733
        %v4830 = vadd.f32 %v4524, %v4736
        %v4831 = vadd.f32 %v4525, %v4741
        %v4832 = vadd.f32 %v4526, %v4744
        %v4833 = vadd.f32 %v4527, %v4749
        %v4834 = vadd.f32 %v4528, %v4752
        %v4835 = vadd.f32 %v4529, %v4757
        %v4836 = vadd.f32 %v4530, %v4760
        %v4837 = vadd.f32 %v4531, %v4765
        %v4838 = vadd.f32 %v4532, %v4768
        %v4839 = vadd.f32 %v4533, %v4773
        %v4840 = vadd.f32 %v4534, %v4776
        %v4841 = vadd.f32 %v4535, %v4781
        %v4842 = vadd.f32 %v4536, %v4784
        %v4843 = vadd.f32 %v4537, %v4789
        %v4844 = vadd.f32 %v4538, %v4792
        %v4845 = vadd.f32 %v4539, %v4797
        %v4846 = vadd.f32 %v4540, %v4800
        %v4847 = vadd.f32 %v4541, %v4805
        %v4848 = vadd.f32 %v4542, %v4808
        %v4849 = vadd.f32 %v4543, %v4813
        %v4850 = vadd.f32 %v4544, %v4816
        %v4851 = vld [vmem:[%s3274 + $0x2] sm:$0xff]
        %v4852 = vld [vmem:[%s3274 + $0xa] sm:$0xff]
        %v4853 = vld [vmem:[%s3274 + $0x1a] sm:$0xff]
        %v4854 = vld [vmem:[%s3274 + $0x22] sm:$0xff]
        %v4855 = vld [vmem:[%s3274 + $0x32] sm:$0xff]
        %v4856 = vld [vmem:[%s3274 + $0x3a] sm:$0xff]
        %v4857 = vld [vmem:[%s3274 + $0x4a] sm:$0xff]
        %v4858 = vld [vmem:[%s3274 + $0x52] sm:$0xff]
        %v4859 = vld [vmem:[%s3274 + $0x62] sm:$0xff]
        %v4860 = vld [vmem:[%s3274 + $0x6a] sm:$0xff]
        %v4861 = vld [vmem:[%s3274 + $0x7a] sm:$0xff]
        %v4862 = vld [vmem:[%s3274 + $0x82] sm:$0xff]
        %v4863 = vld [vmem:[%s3274 + $0x92] sm:$0xff]
        %v4864 = vld [vmem:[%s3274 + $0x9a] sm:$0xff]
        %v4865 = vld [vmem:[%s3274 + $0xaa] sm:$0xff]
        %v4866 = vld [vmem:[%s3274 + $0xb2] sm:$0xff]
        %v4867 = vld [vmem:[%s3274 + $0xc2] sm:$0xff]
        %v4868 = vld [vmem:[%s3274 + $0xca] sm:$0xff]
        %v4869 = vld [vmem:[%s3274 + $0xda] sm:$0xff]
        %v4870 = vld [vmem:[%s3274 + $0xe2] sm:$0xff]
        %v4871 = vld [vmem:[%s3274 + $0xf2] sm:$0xff]
        %v4872 = vld [vmem:[%s3274 + $0xfa] sm:$0xff]
        %v4873 = vld [vmem:[%s3274 + $0x10a] sm:$0xff]
        %v4874 = vld [vmem:[%s3274 + $0x112] sm:$0xff]
        %v4875 = vld [vmem:[%s3274 + $0x122] sm:$0xff]
        %v4876 = vld [vmem:[%s3274 + $0x12a] sm:$0xff]
        %v4877 = vld [vmem:[%s3274 + $0x13a] sm:$0xff]
        %v4878 = vld [vmem:[%s3274 + $0x142] sm:$0xff]
        %v4879 = vld [vmem:[%s3274 + $0x152] sm:$0xff]
        %v4880 = vld [vmem:[%s3274 + $0x15a] sm:$0xff]
        %v4881 = vld [vmem:[%s3274 + $0x16a] sm:$0xff]
        %v4882 = vld [vmem:[%s3274 + $0x172] sm:$0xff]
        %v4883 = vpack.c.bf16 %v4852, %v4851
        %v4884 = vpack.c.bf16 %v4854, %v4853
        %v4885 = vpack.c.bf16 %v4856, %v4855
        %v4886 = vpack.c.bf16 %v4858, %v4857
        %v4887 = vpack.c.bf16 %v4860, %v4859
        %v4888 = vpack.c.bf16 %v4862, %v4861
        %v4889 = vpack.c.bf16 %v4864, %v4863
        %v4890 = vpack.c.bf16 %v4866, %v4865
        %v4891 = vpack.c.bf16 %v4868, %v4867
        %v4892 = vpack.c.bf16 %v4870, %v4869
        %v4893 = vpack.c.bf16 %v4872, %v4871
        %v4894 = vpack.c.bf16 %v4874, %v4873
        %v4895 = vpack.c.bf16 %v4876, %v4875
        %v4896 = vpack.c.bf16 %v4878, %v4877
        %v4897 = vpack.c.bf16 %v4880, %v4879
        %v4898 = vpack.c.bf16 %v4882, %v4881
        %s4899 = scalar_lea.vmem [#allocation6], 80
        %v4900 = vld [vmem:[%s4899] sm:$0xf]
        %v4901 = vld [vmem:[%s4899 + $0x4] sm:$0xf]
        %v4902 = vld [vmem:[%s4899 + $0x8] sm:$0xf]
        %v4903 = vld [vmem:[%s4899 + $0xc] sm:$0xf]
        %v4908 = vunpack.c.l.b16 %v4900
        %v4909 = vunpack.c.l.b16 %v4901
        %v4910 = vunpack.c.l.b16 %v4902
        %v4911 = vunpack.c.l.b16 %v4903
        %v4912 = vpack.c.b16 %v4909, %v4908
        %v4913 = vpack.c.b16 %v4911, %v4910
        %v4917 = vsel %vm3275, %v4883, 0
        %v4920 = vsel %vm3275, %v4884, 0
        %v4923 = vsel %vm3275, %v4885, 0
        %v4926 = vsel %vm3275, %v4886, 0
        %v4929 = vsel %vm3275, %v4887, 0
        %v4932 = vsel %vm3275, %v4888, 0
        %v4935 = vsel %vm3275, %v4889, 0
        %v4938 = vsel %vm3275, %v4890, 0
        %v4941 = vsel %vm3275, %v4891, 0
        %v4944 = vsel %vm3275, %v4892, 0
        %v4947 = vsel %vm3275, %v4893, 0
        %v4950 = vsel %vm3275, %v4894, 0
        %v4953 = vsel %vm3275, %v4895, 0
        %v4956 = vsel %vm3275, %v4896, 0
        %v4959 = vsel %vm3275, %v4897, 0
        %v4962 = vsel %vm3275, %v4898, 0
        %4964 = vmatprep.subr.bf16.mxu0 0
        %4965 = vmatpush1.bf16.msra.mxu0 %v4912
        %4966 = vmatprep.subr.bf16.mxu0 0
        %4967 = vmatpush1.bf16.msra.mxu0 %v4913
        %4968 = vmatprep.subr.bf16.mxu0 0
        %4969 = vmatpush1.bf16.msra.mxu0 0
        %4970 = vmatprep.subr.bf16.mxu0 0
        %4971 = vmatpush1.bf16.msra.mxu0 0
        %4972 = vmatprep.subr.bf16.mxu0 0
        %4973 = vmatpush1.bf16.msra.mxu0 0
        %4974 = vmatprep.subr.bf16.mxu0 0
        %4975 = vmatpush1.bf16.msra.mxu0 0
        %4976 = vmatprep.subr.bf16.mxu0 0
        %4977 = vmatpush1.bf16.msra.mxu0 0
        %4978 = vmatprep.subr.bf16.mxu0 0
        %4979 = vmatpush1.bf16.msra.mxu0 0
        %4980 = vmatprep.subr.bf16.mxu0 0
        %4981 = vmatpush1.bf16.msra.mxu0 0
        %4982 = vmatprep.subr.bf16.mxu0 0
        %4983 = vmatpush1.bf16.msra.mxu0 0
        %4984 = vmatprep.subr.bf16.mxu0 0
        %4985 = vmatpush1.bf16.msra.mxu0 0
        %4986 = vmatprep.subr.bf16.mxu0 0
        %4987 = vmatpush1.bf16.msra.mxu0 0
        %4988 = vmatprep.subr.bf16.mxu0 0
        %4989 = vmatpush1.bf16.msra.mxu0 0
        %4990 = vmatprep.subr.bf16.mxu0 0
        %4991 = vmatpush1.bf16.msra.mxu0 0
        %4992 = vmatprep.subr.bf16.mxu0 0
        %4993 = vmatpush1.bf16.msra.mxu0 0
        %4994 = vmatprep.subr.bf16.mxu0 0
        %4995 = vmatpush1.bf16.msra.mxu0 0
        %4996 = vmatprep.mubr.bf16.mxu0 0
        %4997 = vmatmul.mubr.bf16.gmra.mrb[0].mxu0 %v4917
        %v4998 = vpop.f32.mrb[0].mxu0
        %v4999 = vadd.f32 0.0, %v4998
        %v5000 = vpop.f32.mrb[0].mxu0
        %v5001 = vpop.f32.mrb[0].mxu0
        %v5002 = vadd.f32 0.0, %v5001
        %v5003 = vpop.f32.mrb[0].mxu0
        %5004 = vmatprep.mubr.bf16.mxu0 0
        %5005 = vmatmul.mubr.bf16.gmra.mrb[0].mxu0 %v4920
        %v5006 = vpop.f32.mrb[0].mxu0
        %v5007 = vadd.f32 0.0, %v5006
        %v5008 = vpop.f32.mrb[0].mxu0
        %v5009 = vpop.f32.mrb[0].mxu0
        %v5010 = vadd.f32 0.0, %v5009
        %v5011 = vpop.f32.mrb[0].mxu0
        %5012 = vmatprep.mubr.bf16.mxu0 0
        %5013 = vmatmul.mubr.bf16.gmra.mrb[0].mxu0 %v4923
        %v5014 = vpop.f32.mrb[0].mxu0
        %v5015 = vadd.f32 0.0, %v5014
        %v5016 = vpop.f32.mrb[0].mxu0
        %v5017 = vpop.f32.mrb[0].mxu0
        %v5018 = vadd.f32 0.0, %v5017
        %v5019 = vpop.f32.mrb[0].mxu0
        %5020 = vmatprep.mubr.bf16.mxu0 0
        %5021 = vmatmul.mubr.bf16.gmra.mrb[0].mxu0 %v4926
        %v5022 = vpop.f32.mrb[0].mxu0
        %v5023 = vadd.f32 0.0, %v5022
        %v5024 = vpop.f32.mrb[0].mxu0
        %v5025 = vpop.f32.mrb[0].mxu0
        %v5026 = vadd.f32 0.0, %v5025
        %v5027 = vpop.f32.mrb[0].mxu0
        %5028 = vmatprep.mubr.bf16.mxu0 0
        %5029 = vmatmul.mubr.bf16.gmra.mrb[0].mxu0 %v4929
        %v5030 = vpop.f32.mrb[0].mxu0
        %v5031 = vadd.f32 0.0, %v5030
        %v5032 = vpop.f32.mrb[0].mxu0
        %v5033 = vpop.f32.mrb[0].mxu0
        %v5034 = vadd.f32 0.0, %v5033
        %v5035 = vpop.f32.mrb[0].mxu0
        %5036 = vmatprep.mubr.bf16.mxu0 0
        %5037 = vmatmul.mubr.bf16.gmra.mrb[0].mxu0 %v4932
        %v5038 = vpop.f32.mrb[0].mxu0
        %v5039 = vadd.f32 0.0, %v5038
        %v5040 = vpop.f32.mrb[0].mxu0
        %v5041 = vpop.f32.mrb[0].mxu0
        %v5042 = vadd.f32 0.0, %v5041
        %v5043 = vpop.f32.mrb[0].mxu0
        %5044 = vmatprep.mubr.bf16.mxu0 0
        %5045 = vmatmul.mubr.bf16.gmra.mrb[0].mxu0 %v4935
        %v5046 = vpop.f32.mrb[0].mxu0
        %v5047 = vadd.f32 0.0, %v5046
        %v5048 = vpop.f32.mrb[0].mxu0
        %v5049 = vpop.f32.mrb[0].mxu0
        %v5050 = vadd.f32 0.0, %v5049
        %v5051 = vpop.f32.mrb[0].mxu0
        %5052 = vmatprep.mubr.bf16.mxu0 0
        %5053 = vmatmul.mubr.bf16.gmra.mrb[0].mxu0 %v4938
        %v5054 = vpop.f32.mrb[0].mxu0
        %v5055 = vadd.f32 0.0, %v5054
        %v5056 = vpop.f32.mrb[0].mxu0
        %v5057 = vpop.f32.mrb[0].mxu0
        %v5058 = vadd.f32 0.0, %v5057
        %v5059 = vpop.f32.mrb[0].mxu0
        %5060 = vmatprep.mubr.bf16.mxu0 0
        %5061 = vmatmul.mubr.bf16.gmra.mrb[0].mxu0 %v4941
        %v5062 = vpop.f32.mrb[0].mxu0
        %v5063 = vadd.f32 0.0, %v5062
        %v5064 = vpop.f32.mrb[0].mxu0
        %v5065 = vpop.f32.mrb[0].mxu0
        %v5066 = vadd.f32 0.0, %v5065
        %v5067 = vpop.f32.mrb[0].mxu0
        %5068 = vmatprep.mubr.bf16.mxu0 0
        %5069 = vmatmul.mubr.bf16.gmra.mrb[0].mxu0 %v4944
        %v5070 = vpop.f32.mrb[0].mxu0
        %v5071 = vadd.f32 0.0, %v5070
        %v5072 = vpop.f32.mrb[0].mxu0
        %v5073 = vpop.f32.mrb[0].mxu0
        %v5074 = vadd.f32 0.0, %v5073
        %v5075 = vpop.f32.mrb[0].mxu0
        %5076 = vmatprep.mubr.bf16.mxu0 0
        %5077 = vmatmul.mubr.bf16.gmra.mrb[0].mxu0 %v4947
        %v5078 = vpop.f32.mrb[0].mxu0
        %v5079 = vadd.f32 0.0, %v5078
        %v5080 = vpop.f32.mrb[0].mxu0
        %v5081 = vpop.f32.mrb[0].mxu0
        %v5082 = vadd.f32 0.0, %v5081
        %v5083 = vpop.f32.mrb[0].mxu0
        %5084 = vmatprep.mubr.bf16.mxu0 0
        %5085 = vmatmul.mubr.bf16.gmra.mrb[0].mxu0 %v4950
        %v5086 = vpop.f32.mrb[0].mxu0
        %v5087 = vadd.f32 0.0, %v5086
        %v5088 = vpop.f32.mrb[0].mxu0
        %v5089 = vpop.f32.mrb[0].mxu0
        %v5090 = vadd.f32 0.0, %v5089
        %v5091 = vpop.f32.mrb[0].mxu0
        %5092 = vmatprep.mubr.bf16.mxu0 0
        %5093 = vmatmul.mubr.bf16.gmra.mrb[0].mxu0 %v4953
        %v5094 = vpop.f32.mrb[0].mxu0
        %v5095 = vadd.f32 0.0, %v5094
        %v5096 = vpop.f32.mrb[0].mxu0
        %v5097 = vpop.f32.mrb[0].mxu0
        %v5098 = vadd.f32 0.0, %v5097
        %v5099 = vpop.f32.mrb[0].mxu0
        %5100 = vmatprep.mubr.bf16.mxu0 0
        %5101 = vmatmul.mubr.bf16.gmra.mrb[0].mxu0 %v4956
        %v5102 = vpop.f32.mrb[0].mxu0
        %v5103 = vadd.f32 0.0, %v5102
        %v5104 = vpop.f32.mrb[0].mxu0
        %v5105 = vpop.f32.mrb[0].mxu0
        %v5106 = vadd.f32 0.0, %v5105
        %v5107 = vpop.f32.mrb[0].mxu0
        %5108 = vmatprep.mubr.bf16.mxu0 0
        %5109 = vmatmul.mubr.bf16.gmra.mrb[0].mxu0 %v4959
        %v5110 = vpop.f32.mrb[0].mxu0
        %v5111 = vadd.f32 0.0, %v5110
        %v5112 = vpop.f32.mrb[0].mxu0
        %v5113 = vpop.f32.mrb[0].mxu0
        %v5114 = vadd.f32 0.0, %v5113
        %v5115 = vpop.f32.mrb[0].mxu0
        %5116 = vmatprep.mubr.bf16.mxu0 0
        %5117 = vmatmul.mubr.bf16.gmra.mrb[0].mxu0 %v4962
        %v5118 = vpop.f32.mrb[0].mxu0
        %v5119 = vadd.f32 0.0, %v5118
        %v5120 = vpop.f32.mrb[0].mxu0
        %v5121 = vpop.f32.mrb[0].mxu0
        %v5122 = vadd.f32 0.0, %v5121
        %v5123 = vpop.f32.mrb[0].mxu0
        %5124 = vdwg.mxu0
        %v5125 = vadd.f32 %v4819, %v4999
        %v5126 = vadd.f32 %v4820, %v5002
        %v5127 = vadd.f32 %v4821, %v5007
        %v5128 = vadd.f32 %v4822, %v5010
        %v5129 = vadd.f32 %v4823, %v5015
        %v5130 = vadd.f32 %v4824, %v5018
        %v5131 = vadd.f32 %v4825, %v5023
        %v5132 = vadd.f32 %v4826, %v5026
        %v5133 = vadd.f32 %v4827, %v5031
        %v5134 = vadd.f32 %v4828, %v5034
        %v5135 = vadd.f32 %v4829, %v5039
        %v5136 = vadd.f32 %v4830, %v5042
        %v5137 = vadd.f32 %v4831, %v5047
        %v5138 = vadd.f32 %v4832, %v5050
        %v5139 = vadd.f32 %v4833, %v5055
        %v5140 = vadd.f32 %v4834, %v5058
        %v5141 = vadd.f32 %v4835, %v5063
        %v5142 = vadd.f32 %v4836, %v5066
        %v5143 = vadd.f32 %v4837, %v5071
        %v5144 = vadd.f32 %v4838, %v5074
        %v5145 = vadd.f32 %v4839, %v5079
        %v5146 = vadd.f32 %v4840, %v5082
        %v5147 = vadd.f32 %v4841, %v5087
        %v5148 = vadd.f32 %v4842, %v5090
        %v5149 = vadd.f32 %v4843, %v5095
        %v5150 = vadd.f32 %v4844, %v5098
        %v5151 = vadd.f32 %v4845, %v5103
        %v5152 = vadd.f32 %v4846, %v5106
        %v5153 = vadd.f32 %v4847, %v5111
        %v5154 = vadd.f32 %v4848, %v5114
        %v5155 = vadd.f32 %v4849, %v5119
        %v5156 = vadd.f32 %v4850, %v5122
        %s5157 = scalar_lea.vmem [#allocation3], 48
        %v5158 = vld [vmem:[%s5157] sm:$0xff]
        %v5159 = vld [vmem:[%s5157 + $0x8] sm:$0xff]
        %v5160 = vld [vmem:[%s5157 + $0x18] sm:$0xff]
        %v5161 = vld [vmem:[%s5157 + $0x20] sm:$0xff]
        %v5162 = vld [vmem:[%s5157 + $0x30] sm:$0xff]
        %v5163 = vld [vmem:[%s5157 + $0x38] sm:$0xff]
        %v5164 = vld [vmem:[%s5157 + $0x48] sm:$0xff]
        %v5165 = vld [vmem:[%s5157 + $0x50] sm:$0xff]
        %v5166 = vld [vmem:[%s5157 + $0x60] sm:$0xff]
        %v5167 = vld [vmem:[%s5157 + $0x68] sm:$0xff]
        %v5168 = vld [vmem:[%s5157 + $0x78] sm:$0xff]
        %v5169 = vld [vmem:[%s5157 + $0x80] sm:$0xff]
        %v5170 = vld [vmem:[%s5157 + $0x90] sm:$0xff]
        %v5171 = vld [vmem:[%s5157 + $0x98] sm:$0xff]
        %v5172 = vld [vmem:[%s5157 + $0xa8] sm:$0xff]
        %v5173 = vld [vmem:[%s5157 + $0xb0] sm:$0xff]
        %v5174 = vld [vmem:[%s5157 + $0xc0] sm:$0xff]
        %v5175 = vld [vmem:[%s5157 + $0xc8] sm:$0xff]
        %v5176 = vld [vmem:[%s5157 + $0xd8] sm:$0xff]
        %v5177 = vld [vmem:[%s5157 + $0xe0] sm:$0xff]
        %v5178 = vld [vmem:[%s5157 + $0xf0] sm:$0xff]
        %v5179 = vld [vmem:[%s5157 + $0xf8] sm:$0xff]
        %v5180 = vld [vmem:[%s5157 + $0x108] sm:$0xff]
        %v5181 = vld [vmem:[%s5157 + $0x110] sm:$0xff]
        %v5182 = vld [vmem:[%s5157 + $0x120] sm:$0xff]
        %v5183 = vld [vmem:[%s5157 + $0x128] sm:$0xff]
        %v5184 = vld [vmem:[%s5157 + $0x138] sm:$0xff]
        %v5185 = vld [vmem:[%s5157 + $0x140] sm:$0xff]
        %v5186 = vld [vmem:[%s5157 + $0x150] sm:$0xff]
        %v5187 = vld [vmem:[%s5157 + $0x158] sm:$0xff]
        %v5188 = vld [vmem:[%s5157 + $0x168] sm:$0xff]
        %v5189 = vld [vmem:[%s5157 + $0x170] sm:$0xff]
        %v5190 = vpack.c.bf16 %v5159, %v5158
        %v5191 = vpack.c.bf16 %v5161, %v5160
        %v5192 = vpack.c.bf16 %v5163, %v5162
        %v5193 = vpack.c.bf16 %v5165, %v5164
        %v5194 = vpack.c.bf16 %v5167, %v5166
        %v5195 = vpack.c.bf16 %v5169, %v5168
        %v5196 = vpack.c.bf16 %v5171, %v5170
        %v5197 = vpack.c.bf16 %v5173, %v5172
        %v5198 = vpack.c.bf16 %v5175, %v5174
        %v5199 = vpack.c.bf16 %v5177, %v5176
        %v5200 = vpack.c.bf16 %v5179, %v5178
        %v5201 = vpack.c.bf16 %v5181, %v5180
        %v5202 = vpack.c.bf16 %v5183, %v5182
        %v5203 = vpack.c.bf16 %v5185, %v5184
        %v5204 = vpack.c.bf16 %v5187, %v5186
        %v5205 = vpack.c.bf16 %v5189, %v5188
        %s5206 = scalar_lea.vmem [#allocation6], 96
        %v5207 = vld [vmem:[%s5206] sm:$0xf]
        %v5208 = vld [vmem:[%s5206 + $0x4] sm:$0xf]
        %v5209 = vld [vmem:[%s5206 + $0x8] sm:$0xf]
        %v5210 = vld [vmem:[%s5206 + $0xc] sm:$0xf]
        %v5215 = vunpack.c.l.b16 %v5207
        %v5216 = vunpack.c.l.b16 %v5208
        %v5217 = vunpack.c.l.b16 %v5209
        %v5218 = vunpack.c.l.b16 %v5210
        %v5219 = vpack.c.b16 %v5216, %v5215
        %v5220 = vpack.c.b16 %v5218, %v5217
        %v5224 = vsel %vm3275, %v5190, 0
        %v5227 = vsel %vm3275, %v5191, 0
        %v5230 = vsel %vm3275, %v5192, 0
        %v5233 = vsel %vm3275, %v5193, 0
        %v5236 = vsel %vm3275, %v5194, 0
        %v5239 = vsel %vm3275, %v5195, 0
        %v5242 = vsel %vm3275, %v5196, 0
        %v5245 = vsel %vm3275, %v5197, 0
        %v5248 = vsel %vm3275, %v5198, 0
        %v5251 = vsel %vm3275, %v5199, 0
        %v5254 = vsel %vm3275, %v5200, 0
        %v5257 = vsel %vm3275, %v5201, 0
        %v5260 = vsel %vm3275, %v5202, 0
        %v5263 = vsel %vm3275, %v5203, 0
        %v5266 = vsel %vm3275, %v5204, 0
        %v5269 = vsel %vm3275, %v5205, 0
        %5271 = vmatprep.subr.bf16.mxu0 0
        %5272 = vmatpush1.bf16.msra.mxu0 %v5219
        %5273 = vmatprep.subr.bf16.mxu0 0
        %5274 = vmatpush1.bf16.msra.mxu0 %v5220
        %5275 = vmatprep.subr.bf16.mxu0 0
        %5276 = vmatpush1.bf16.msra.mxu0 0
        %5277 = vmatprep.subr.bf16.mxu0 0
        %5278 = vmatpush1.bf16.msra.mxu0 0
        %5279 = vmatprep.subr.bf16.mxu0 0
        %5280 = vmatpush1.bf16.msra.mxu0 0
        %5281 = vmatprep.subr.bf16.mxu0 0
        %5282 = vmatpush1.bf16.msra.mxu0 0
        %5283 = vmatprep.subr.bf16.mxu0 0
        %5284 = vmatpush1.bf16.msra.mxu0 0
        %5285 = vmatprep.subr.bf16.mxu0 0
        %5286 = vmatpush1.bf16.msra.mxu0 0
        %5287 = vmatprep.subr.bf16.mxu0 0
        %5288 = vmatpush1.bf16.msra.mxu0 0
        %5289 = vmatprep.subr.bf16.mxu0 0
        %5290 = vmatpush1.bf16.msra.mxu0 0
        %5291 = vmatprep.subr.bf16.mxu0 0
        %5292 = vmatpush1.bf16.msra.mxu0 0
        %5293 = vmatprep.subr.bf16.mxu0 0
        %5294 = vmatpush1.bf16.msra.mxu0 0
        %5295 = vmatprep.subr.bf16.mxu0 0
        %5296 = vmatpush1.bf16.msra.mxu0 0
        %5297 = vmatprep.subr.bf16.mxu0 0
        %5298 = vmatpush1.bf16.msra.mxu0 0
        %5299 = vmatprep.subr.bf16.mxu0 0
        %5300 = vmatpush1.bf16.msra.mxu0 0
        %5301 = vmatprep.subr.bf16.mxu0 0
        %5302 = vmatpush1.bf16.msra.mxu0 0
        %5303 = vmatprep.mubr.bf16.mxu0 0
        %5304 = vmatmul.mubr.bf16.gmra.mrb[0].mxu0 %v5224
        %v5305 = vpop.f32.mrb[0].mxu0
        %v5306 = vadd.f32 0.0, %v5305
        %v5307 = vpop.f32.mrb[0].mxu0
        %v5308 = vpop.f32.mrb[0].mxu0
        %v5309 = vadd.f32 0.0, %v5308
        %v5310 = vpop.f32.mrb[0].mxu0
        %5311 = vmatprep.mubr.bf16.mxu0 0
        %5312 = vmatmul.mubr.bf16.gmra.mrb[0].mxu0 %v5227
        %v5313 = vpop.f32.mrb[0].mxu0
        %v5314 = vadd.f32 0.0, %v5313
        %v5315 = vpop.f32.mrb[0].mxu0
        %v5316 = vpop.f32.mrb[0].mxu0
        %v5317 = vadd.f32 0.0, %v5316
        %v5318 = vpop.f32.mrb[0].mxu0
        %5319 = vmatprep.mubr.bf16.mxu0 0
        %5320 = vmatmul.mubr.bf16.gmra.mrb[0].mxu0 %v5230
        %v5321 = vpop.f32.mrb[0].mxu0
        %v5322 = vadd.f32 0.0, %v5321
        %v5323 = vpop.f32.mrb[0].mxu0
        %v5324 = vpop.f32.mrb[0].mxu0
        %v5325 = vadd.f32 0.0, %v5324
        %v5326 = vpop.f32.mrb[0].mxu0
        %5327 = vmatprep.mubr.bf16.mxu0 0
        %5328 = vmatmul.mubr.bf16.gmra.mrb[0].mxu0 %v5233
        %v5329 = vpop.f32.mrb[0].mxu0
        %v5330 = vadd.f32 0.0, %v5329
        %v5331 = vpop.f32.mrb[0].mxu0
        %v5332 = vpop.f32.mrb[0].mxu0
        %v5333 = vadd.f32 0.0, %v5332
        %v5334 = vpop.f32.mrb[0].mxu0
        %5335 = vmatprep.mubr.bf16.mxu0 0
        %5336 = vmatmul.mubr.bf16.gmra.mrb[0].mxu0 %v5236
        %v5337 = vpop.f32.mrb[0].mxu0
        %v5338 = vadd.f32 0.0, %v5337
        %v5339 = vpop.f32.mrb[0].mxu0
        %v5340 = vpop.f32.mrb[0].mxu0
        %v5341 = vadd.f32 0.0, %v5340
        %v5342 = vpop.f32.mrb[0].mxu0
        %5343 = vmatprep.mubr.bf16.mxu0 0
        %5344 = vmatmul.mubr.bf16.gmra.mrb[0].mxu0 %v5239
        %v5345 = vpop.f32.mrb[0].mxu0
        %v5346 = vadd.f32 0.0, %v5345
        %v5347 = vpop.f32.mrb[0].mxu0
        %v5348 = vpop.f32.mrb[0].mxu0
        %v5349 = vadd.f32 0.0, %v5348
        %v5350 = vpop.f32.mrb[0].mxu0
        %5351 = vmatprep.mubr.bf16.mxu0 0
        %5352 = vmatmul.mubr.bf16.gmra.mrb[0].mxu0 %v5242
        %v5353 = vpop.f32.mrb[0].mxu0
        %v5354 = vadd.f32 0.0, %v5353
        %v5355 = vpop.f32.mrb[0].mxu0
        %v5356 = vpop.f32.mrb[0].mxu0
        %v5357 = vadd.f32 0.0, %v5356
        %v5358 = vpop.f32.mrb[0].mxu0
        %5359 = vmatprep.mubr.bf16.mxu0 0
        %5360 = vmatmul.mubr.bf16.gmra.mrb[0].mxu0 %v5245
        %v5361 = vpop.f32.mrb[0].mxu0
        %v5362 = vadd.f32 0.0, %v5361
        %v5363 = vpop.f32.mrb[0].mxu0
        %v5364 = vpop.f32.mrb[0].mxu0
        %v5365 = vadd.f32 0.0, %v5364
        %v5366 = vpop.f32.mrb[0].mxu0
        %5367 = vmatprep.mubr.bf16.mxu0 0
        %5368 = vmatmul.mubr.bf16.gmra.mrb[0].mxu0 %v5248
        %v5369 = vpop.f32.mrb[0].mxu0
        %v5370 = vadd.f32 0.0, %v5369
        %v5371 = vpop.f32.mrb[0].mxu0
        %v5372 = vpop.f32.mrb[0].mxu0
        %v5373 = vadd.f32 0.0, %v5372
        %v5374 = vpop.f32.mrb[0].mxu0
        %5375 = vmatprep.mubr.bf16.mxu0 0
        %5376 = vmatmul.mubr.bf16.gmra.mrb[0].mxu0 %v5251
        %v5377 = vpop.f32.mrb[0].mxu0
        %v5378 = vadd.f32 0.0, %v5377
        %v5379 = vpop.f32.mrb[0].mxu0
        %v5380 = vpop.f32.mrb[0].mxu0
        %v5381 = vadd.f32 0.0, %v5380
        %v5382 = vpop.f32.mrb[0].mxu0
        %5383 = vmatprep.mubr.bf16.mxu0 0
        %5384 = vmatmul.mubr.bf16.gmra.mrb[0].mxu0 %v5254
        %v5385 = vpop.f32.mrb[0].mxu0
        %v5386 = vadd.f32 0.0, %v5385
        %v5387 = vpop.f32.mrb[0].mxu0
        %v5388 = vpop.f32.mrb[0].mxu0
        %v5389 = vadd.f32 0.0, %v5388
        %v5390 = vpop.f32.mrb[0].mxu0
        %5391 = vmatprep.mubr.bf16.mxu0 0
        %5392 = vmatmul.mubr.bf16.gmra.mrb[0].mxu0 %v5257
        %v5393 = vpop.f32.mrb[0].mxu0
        %v5394 = vadd.f32 0.0, %v5393
        %v5395 = vpop.f32.mrb[0].mxu0
        %v5396 = vpop.f32.mrb[0].mxu0
        %v5397 = vadd.f32 0.0, %v5396
        %v5398 = vpop.f32.mrb[0].mxu0
        %5399 = vmatprep.mubr.bf16.mxu0 0
        %5400 = vmatmul.mubr.bf16.gmra.mrb[0].mxu0 %v5260
        %v5401 = vpop.f32.mrb[0].mxu0
        %v5402 = vadd.f32 0.0, %v5401
        %v5403 = vpop.f32.mrb[0].mxu0
        %v5404 = vpop.f32.mrb[0].mxu0
        %v5405 = vadd.f32 0.0, %v5404
        %v5406 = vpop.f32.mrb[0].mxu0
        %5407 = vmatprep.mubr.bf16.mxu0 0
        %5408 = vmatmul.mubr.bf16.gmra.mrb[0].mxu0 %v5263
        %v5409 = vpop.f32.mrb[0].mxu0
        %v5410 = vadd.f32 0.0, %v5409
        %v5411 = vpop.f32.mrb[0].mxu0
        %v5412 = vpop.f32.mrb[0].mxu0
        %v5413 = vadd.f32 0.0, %v5412
        %v5414 = vpop.f32.mrb[0].mxu0
        %5415 = vmatprep.mubr.bf16.mxu0 0
        %5416 = vmatmul.mubr.bf16.gmra.mrb[0].mxu0 %v5266
        %v5417 = vpop.f32.mrb[0].mxu0
        %v5418 = vadd.f32 0.0, %v5417
        %v5419 = vpop.f32.mrb[0].mxu0
        %v5420 = vpop.f32.mrb[0].mxu0
        %v5421 = vadd.f32 0.0, %v5420
        %v5422 = vpop.f32.mrb[0].mxu0
        %5423 = vmatprep.mubr.bf16.mxu0 0
        %5424 = vmatmul.mubr.bf16.gmra.mrb[0].mxu0 %v5269
        %v5425 = vpop.f32.mrb[0].mxu0
        %v5426 = vadd.f32 0.0, %v5425
        %v5427 = vpop.f32.mrb[0].mxu0
        %v5428 = vpop.f32.mrb[0].mxu0
        %v5429 = vadd.f32 0.0, %v5428
        %v5430 = vpop.f32.mrb[0].mxu0
        %5431 = vdwg.mxu0
        %v5432 = vadd.f32 %v5125, %v5306
        %v5433 = vadd.f32 %v5126, %v5309
        %v5434 = vadd.f32 %v5127, %v5314
        %v5435 = vadd.f32 %v5128, %v5317
        %v5436 = vadd.f32 %v5129, %v5322
        %v5437 = vadd.f32 %v5130, %v5325
        %v5438 = vadd.f32 %v5131, %v5330
        %v5439 = vadd.f32 %v5132, %v5333
        %v5440 = vadd.f32 %v5133, %v5338
        %v5441 = vadd.f32 %v5134, %v5341
        %v5442 = vadd.f32 %v5135, %v5346
        %v5443 = vadd.f32 %v5136, %v5349
        %v5444 = vadd.f32 %v5137, %v5354
        %v5445 = vadd.f32 %v5138, %v5357
        %v5446 = vadd.f32 %v5139, %v5362
        %v5447 = vadd.f32 %v5140, %v5365
        %v5448 = vadd.f32 %v5141, %v5370
        %v5449 = vadd.f32 %v5142, %v5373
        %v5450 = vadd.f32 %v5143, %v5378
        %v5451 = vadd.f32 %v5144, %v5381
        %v5452 = vadd.f32 %v5145, %v5386
        %v5453 = vadd.f32 %v5146, %v5389
        %v5454 = vadd.f32 %v5147, %v5394
        %v5455 = vadd.f32 %v5148, %v5397
        %v5456 = vadd.f32 %v5149, %v5402
        %v5457 = vadd.f32 %v5150, %v5405
        %v5458 = vadd.f32 %v5151, %v5410
        %v5459 = vadd.f32 %v5152, %v5413
        %v5460 = vadd.f32 %v5153, %v5418
        %v5461 = vadd.f32 %v5154, %v5421
        %v5462 = vadd.f32 %v5155, %v5426
        %v5463 = vadd.f32 %v5156, %v5429
        %v5464 = vld [vmem:[%s5157 + $0x1] sm:$0xff]
        %v5465 = vld [vmem:[%s5157 + $0x9] sm:$0xff]
        %v5466 = vld [vmem:[%s5157 + $0x19] sm:$0xff]
        %v5467 = vld [vmem:[%s5157 + $0x21] sm:$0xff]
        %v5468 = vld [vmem:[%s5157 + $0x31] sm:$0xff]
        %v5469 = vld [vmem:[%s5157 + $0x39] sm:$0xff]
        %v5470 = vld [vmem:[%s5157 + $0x49] sm:$0xff]
        %v5471 = vld [vmem:[%s5157 + $0x51] sm:$0xff]
        %v5472 = vld [vmem:[%s5157 + $0x61] sm:$0xff]
        %v5473 = vld [vmem:[%s5157 + $0x69] sm:$0xff]
        %v5474 = vld [vmem:[%s5157 + $0x79] sm:$0xff]
        %v5475 = vld [vmem:[%s5157 + $0x81] sm:$0xff]
        %v5476 = vld [vmem:[%s5157 + $0x91] sm:$0xff]
        %v5477 = vld [vmem:[%s5157 + $0x99] sm:$0xff]
        %v5478 = vld [vmem:[%s5157 + $0xa9] sm:$0xff]
        %v5479 = vld [vmem:[%s5157 + $0xb1] sm:$0xff]
        %v5480 = vld [vmem:[%s5157 + $0xc1] sm:$0xff]
        %v5481 = vld [vmem:[%s5157 + $0xc9] sm:$0xff]
        %v5482 = vld [vmem:[%s5157 + $0xd9] sm:$0xff]
        %v5483 = vld [vmem:[%s5157 + $0xe1] sm:$0xff]
        %v5484 = vld [vmem:[%s5157 + $0xf1] sm:$0xff]
        %v5485 = vld [vmem:[%s5157 + $0xf9] sm:$0xff]
        %v5486 = vld [vmem:[%s5157 + $0x109] sm:$0xff]
        %v5487 = vld [vmem:[%s5157 + $0x111] sm:$0xff]
        %v5488 = vld [vmem:[%s5157 + $0x121] sm:$0xff]
        %v5489 = vld [vmem:[%s5157 + $0x129] sm:$0xff]
        %v5490 = vld [vmem:[%s5157 + $0x139] sm:$0xff]
        %v5491 = vld [vmem:[%s5157 + $0x141] sm:$0xff]
        %v5492 = vld [vmem:[%s5157 + $0x151] sm:$0xff]
        %v5493 = vld [vmem:[%s5157 + $0x159] sm:$0xff]
        %v5494 = vld [vmem:[%s5157 + $0x169] sm:$0xff]
        %v5495 = vld [vmem:[%s5157 + $0x171] sm:$0xff]
        %v5496 = vpack.c.bf16 %v5465, %v5464
        %v5497 = vpack.c.bf16 %v5467, %v5466
        %v5498 = vpack.c.bf16 %v5469, %v5468
        %v5499 = vpack.c.bf16 %v5471, %v5470
        %v5500 = vpack.c.bf16 %v5473, %v5472
        %v5501 = vpack.c.bf16 %v5475, %v5474
        %v5502 = vpack.c.bf16 %v5477, %v5476
        %v5503 = vpack.c.bf16 %v5479, %v5478
        %v5504 = vpack.c.bf16 %v5481, %v5480
        %v5505 = vpack.c.bf16 %v5483, %v5482
        %v5506 = vpack.c.bf16 %v5485, %v5484
        %v5507 = vpack.c.bf16 %v5487, %v5486
        %v5508 = vpack.c.bf16 %v5489, %v5488
        %v5509 = vpack.c.bf16 %v5491, %v5490
        %v5510 = vpack.c.bf16 %v5493, %v5492
        %v5511 = vpack.c.bf16 %v5495, %v5494
        %s5512 = scalar_lea.vmem [#allocation6], 112
        %v5513 = vld [vmem:[%s5512] sm:$0xf]
        %v5514 = vld [vmem:[%s5512 + $0x4] sm:$0xf]
        %v5515 = vld [vmem:[%s5512 + $0x8] sm:$0xf]
        %v5516 = vld [vmem:[%s5512 + $0xc] sm:$0xf]
        %v5521 = vunpack.c.l.b16 %v5513
        %v5522 = vunpack.c.l.b16 %v5514
        %v5523 = vunpack.c.l.b16 %v5515
        %v5524 = vunpack.c.l.b16 %v5516
        %v5525 = vpack.c.b16 %v5522, %v5521
        %v5526 = vpack.c.b16 %v5524, %v5523
        %v5530 = vsel %vm3275, %v5496, 0
        %v5533 = vsel %vm3275, %v5497, 0
        %v5536 = vsel %vm3275, %v5498, 0
        %v5539 = vsel %vm3275, %v5499, 0
        %v5542 = vsel %vm3275, %v5500, 0
        %v5545 = vsel %vm3275, %v5501, 0
        %v5548 = vsel %vm3275, %v5502, 0
        %v5551 = vsel %vm3275, %v5503, 0
        %v5554 = vsel %vm3275, %v5504, 0
        %v5557 = vsel %vm3275, %v5505, 0
        %v5560 = vsel %vm3275, %v5506, 0
        %v5563 = vsel %vm3275, %v5507, 0
        %v5566 = vsel %vm3275, %v5508, 0
        %v5569 = vsel %vm3275, %v5509, 0
        %v5572 = vsel %vm3275, %v5510, 0
        %v5575 = vsel %vm3275, %v5511, 0
        %5577 = vmatprep.subr.bf16.mxu0 0
        %5578 = vmatpush1.bf16.msra.mxu0 %v5525
        %5579 = vmatprep.subr.bf16.mxu0 0
        %5580 = vmatpush1.bf16.msra.mxu0 %v5526
        %5581 = vmatprep.subr.bf16.mxu0 0
        %5582 = vmatpush1.bf16.msra.mxu0 0
        %5583 = vmatprep.subr.bf16.mxu0 0
        %5584 = vmatpush1.bf16.msra.mxu0 0
        %5585 = vmatprep.subr.bf16.mxu0 0
        %5586 = vmatpush1.bf16.msra.mxu0 0
        %5587 = vmatprep.subr.bf16.mxu0 0
        %5588 = vmatpush1.bf16.msra.mxu0 0
        %5589 = vmatprep.subr.bf16.mxu0 0
        %5590 = vmatpush1.bf16.msra.mxu0 0
        %5591 = vmatprep.subr.bf16.mxu0 0
        %5592 = vmatpush1.bf16.msra.mxu0 0
        %5593 = vmatprep.subr.bf16.mxu0 0
        %5594 = vmatpush1.bf16.msra.mxu0 0
        %5595 = vmatprep.subr.bf16.mxu0 0
        %5596 = vmatpush1.bf16.msra.mxu0 0
        %5597 = vmatprep.subr.bf16.mxu0 0
        %5598 = vmatpush1.bf16.msra.mxu0 0
        %5599 = vmatprep.subr.bf16.mxu0 0
        %5600 = vmatpush1.bf16.msra.mxu0 0
        %5601 = vmatprep.subr.bf16.mxu0 0
        %5602 = vmatpush1.bf16.msra.mxu0 0
        %5603 = vmatprep.subr.bf16.mxu0 0
        %5604 = vmatpush1.bf16.msra.mxu0 0
        %5605 = vmatprep.subr.bf16.mxu0 0
        %5606 = vmatpush1.bf16.msra.mxu0 0
        %5607 = vmatprep.subr.bf16.mxu0 0
        %5608 = vmatpush1.bf16.msra.mxu0 0
        %5609 = vmatprep.mubr.bf16.mxu0 0
        %5610 = vmatmul.mubr.bf16.gmra.mrb[0].mxu0 %v5530
        %v5611 = vpop.f32.mrb[0].mxu0
        %v5612 = vadd.f32 0.0, %v5611
        %v5613 = vpop.f32.mrb[0].mxu0
        %v5614 = vpop.f32.mrb[0].mxu0
        %v5615 = vadd.f32 0.0, %v5614
        %v5616 = vpop.f32.mrb[0].mxu0
        %5617 = vmatprep.mubr.bf16.mxu0 0
        %5618 = vmatmul.mubr.bf16.gmra.mrb[0].mxu0 %v5533
        %v5619 = vpop.f32.mrb[0].mxu0
        %v5620 = vadd.f32 0.0, %v5619
        %v5621 = vpop.f32.mrb[0].mxu0
        %v5622 = vpop.f32.mrb[0].mxu0
        %v5623 = vadd.f32 0.0, %v5622
        %v5624 = vpop.f32.mrb[0].mxu0
        %5625 = vmatprep.mubr.bf16.mxu0 0
        %5626 = vmatmul.mubr.bf16.gmra.mrb[0].mxu0 %v5536
        %v5627 = vpop.f32.mrb[0].mxu0
        %v5628 = vadd.f32 0.0, %v5627
        %v5629 = vpop.f32.mrb[0].mxu0
        %v5630 = vpop.f32.mrb[0].mxu0
        %v5631 = vadd.f32 0.0, %v5630
        %v5632 = vpop.f32.mrb[0].mxu0
        %5633 = vmatprep.mubr.bf16.mxu0 0
        %5634 = vmatmul.mubr.bf16.gmra.mrb[0].mxu0 %v5539
        %v5635 = vpop.f32.mrb[0].mxu0
        %v5636 = vadd.f32 0.0, %v5635
        %v5637 = vpop.f32.mrb[0].mxu0
        %v5638 = vpop.f32.mrb[0].mxu0
        %v5639 = vadd.f32 0.0, %v5638
        %v5640 = vpop.f32.mrb[0].mxu0
        %5641 = vmatprep.mubr.bf16.mxu0 0
        %5642 = vmatmul.mubr.bf16.gmra.mrb[0].mxu0 %v5542
        %v5643 = vpop.f32.mrb[0].mxu0
        %v5644 = vadd.f32 0.0, %v5643
        %v5645 = vpop.f32.mrb[0].mxu0
        %v5646 = vpop.f32.mrb[0].mxu0
        %v5647 = vadd.f32 0.0, %v5646
        %v5648 = vpop.f32.mrb[0].mxu0
        %5649 = vmatprep.mubr.bf16.mxu0 0
        %5650 = vmatmul.mubr.bf16.gmra.mrb[0].mxu0 %v5545
        %v5651 = vpop.f32.mrb[0].mxu0
        %v5652 = vadd.f32 0.0, %v5651
        %v5653 = vpop.f32.mrb[0].mxu0
        %v5654 = vpop.f32.mrb[0].mxu0
        %v5655 = vadd.f32 0.0, %v5654
        %v5656 = vpop.f32.mrb[0].mxu0
        %5657 = vmatprep.mubr.bf16.mxu0 0
        %5658 = vmatmul.mubr.bf16.gmra.mrb[0].mxu0 %v5548
        %v5659 = vpop.f32.mrb[0].mxu0
        %v5660 = vadd.f32 0.0, %v5659
        %v5661 = vpop.f32.mrb[0].mxu0
        %v5662 = vpop.f32.mrb[0].mxu0
        %v5663 = vadd.f32 0.0, %v5662
        %v5664 = vpop.f32.mrb[0].mxu0
        %5665 = vmatprep.mubr.bf16.mxu0 0
        %5666 = vmatmul.mubr.bf16.gmra.mrb[0].mxu0 %v5551
        %v5667 = vpop.f32.mrb[0].mxu0
        %v5668 = vadd.f32 0.0, %v5667
        %v5669 = vpop.f32.mrb[0].mxu0
        %v5670 = vpop.f32.mrb[0].mxu0
        %v5671 = vadd.f32 0.0, %v5670
        %v5672 = vpop.f32.mrb[0].mxu0
        %5673 = vmatprep.mubr.bf16.mxu0 0
        %5674 = vmatmul.mubr.bf16.gmra.mrb[0].mxu0 %v5554
        %v5675 = vpop.f32.mrb[0].mxu0
        %v5676 = vadd.f32 0.0, %v5675
        %v5677 = vpop.f32.mrb[0].mxu0
        %v5678 = vpop.f32.mrb[0].mxu0
        %v5679 = vadd.f32 0.0, %v5678
        %v5680 = vpop.f32.mrb[0].mxu0
        %5681 = vmatprep.mubr.bf16.mxu0 0
        %5682 = vmatmul.mubr.bf16.gmra.mrb[0].mxu0 %v5557
        %v5683 = vpop.f32.mrb[0].mxu0
        %v5684 = vadd.f32 0.0, %v5683
        %v5685 = vpop.f32.mrb[0].mxu0
        %v5686 = vpop.f32.mrb[0].mxu0
        %v5687 = vadd.f32 0.0, %v5686
        %v5688 = vpop.f32.mrb[0].mxu0
        %5689 = vmatprep.mubr.bf16.mxu0 0
        %5690 = vmatmul.mubr.bf16.gmra.mrb[0].mxu0 %v5560
        %v5691 = vpop.f32.mrb[0].mxu0
        %v5692 = vadd.f32 0.0, %v5691
        %v5693 = vpop.f32.mrb[0].mxu0
        %v5694 = vpop.f32.mrb[0].mxu0
        %v5695 = vadd.f32 0.0, %v5694
        %v5696 = vpop.f32.mrb[0].mxu0
        %5697 = vmatprep.mubr.bf16.mxu0 0
        %5698 = vmatmul.mubr.bf16.gmra.mrb[0].mxu0 %v5563
        %v5699 = vpop.f32.mrb[0].mxu0
        %v5700 = vadd.f32 0.0, %v5699
        %v5701 = vpop.f32.mrb[0].mxu0
        %v5702 = vpop.f32.mrb[0].mxu0
        %v5703 = vadd.f32 0.0, %v5702
        %v5704 = vpop.f32.mrb[0].mxu0
        %5705 = vmatprep.mubr.bf16.mxu0 0
        %5706 = vmatmul.mubr.bf16.gmra.mrb[0].mxu0 %v5566
        %v5707 = vpop.f32.mrb[0].mxu0
        %v5708 = vadd.f32 0.0, %v5707
        %v5709 = vpop.f32.mrb[0].mxu0
        %v5710 = vpop.f32.mrb[0].mxu0
        %v5711 = vadd.f32 0.0, %v5710
        %v5712 = vpop.f32.mrb[0].mxu0
        %5713 = vmatprep.mubr.bf16.mxu0 0
        %5714 = vmatmul.mubr.bf16.gmra.mrb[0].mxu0 %v5569
        %v5715 = vpop.f32.mrb[0].mxu0
        %v5716 = vadd.f32 0.0, %v5715
        %v5717 = vpop.f32.mrb[0].mxu0
        %v5718 = vpop.f32.mrb[0].mxu0
        %v5719 = vadd.f32 0.0, %v5718
        %v5720 = vpop.f32.mrb[0].mxu0
        %5721 = vmatprep.mubr.bf16.mxu0 0
        %5722 = vmatmul.mubr.bf16.gmra.mrb[0].mxu0 %v5572
        %v5723 = vpop.f32.mrb[0].mxu0
        %v5724 = vadd.f32 0.0, %v5723
        %v5725 = vpop.f32.mrb[0].mxu0
        %v5726 = vpop.f32.mrb[0].mxu0
        %v5727 = vadd.f32 0.0, %v5726
        %v5728 = vpop.f32.mrb[0].mxu0
        %5729 = vmatprep.mubr.bf16.mxu0 0
        %5730 = vmatmul.mubr.bf16.gmra.mrb[0].mxu0 %v5575
        %v5731 = vpop.f32.mrb[0].mxu0
        %v5732 = vadd.f32 0.0, %v5731
        %v5733 = vpop.f32.mrb[0].mxu0
        %v5734 = vpop.f32.mrb[0].mxu0
        %v5735 = vadd.f32 0.0, %v5734
        %v5736 = vpop.f32.mrb[0].mxu0
        %5737 = vdwg.mxu0
        %v5738 = vadd.f32 %v5432, %v5612
        %v5739 = vadd.f32 %v5433, %v5615
        %v5740 = vadd.f32 %v5434, %v5620
        %v5741 = vadd.f32 %v5435, %v5623
        %v5742 = vadd.f32 %v5436, %v5628
        %v5743 = vadd.f32 %v5437, %v5631
        %v5744 = vadd.f32 %v5438, %v5636
        %v5745 = vadd.f32 %v5439, %v5639
        %v5746 = vadd.f32 %v5440, %v5644
        %v5747 = vadd.f32 %v5441, %v5647
        %v5748 = vadd.f32 %v5442, %v5652
        %v5749 = vadd.f32 %v5443, %v5655
        %v5750 = vadd.f32 %v5444, %v5660
        %v5751 = vadd.f32 %v5445, %v5663
        %v5752 = vadd.f32 %v5446, %v5668
        %v5753 = vadd.f32 %v5447, %v5671
        %v5754 = vadd.f32 %v5448, %v5676
        %v5755 = vadd.f32 %v5449, %v5679
        %v5756 = vadd.f32 %v5450, %v5684
        %v5757 = vadd.f32 %v5451, %v5687
        %v5758 = vadd.f32 %v5452, %v5692
        %v5759 = vadd.f32 %v5453, %v5695
        %v5760 = vadd.f32 %v5454, %v5700
        %v5761 = vadd.f32 %v5455, %v5703
        %v5762 = vadd.f32 %v5456, %v5708
        %v5763 = vadd.f32 %v5457, %v5711
        %v5764 = vadd.f32 %v5458, %v5716
        %v5765 = vadd.f32 %v5459, %v5719
        %v5766 = vadd.f32 %v5460, %v5724
        %v5767 = vadd.f32 %v5461, %v5727
        %v5768 = vadd.f32 %v5462, %v5732
        %v5769 = vadd.f32 %v5463, %v5735
        %v5770 = vld [vmem:[%s5157 + $0x2] sm:$0xff]
        %v5771 = vld [vmem:[%s5157 + $0xa] sm:$0xff]
        %v5772 = vld [vmem:[%s5157 + $0x1a] sm:$0xff]
        %v5773 = vld [vmem:[%s5157 + $0x22] sm:$0xff]
        %v5774 = vld [vmem:[%s5157 + $0x32] sm:$0xff]
        %v5775 = vld [vmem:[%s5157 + $0x3a] sm:$0xff]
        %v5776 = vld [vmem:[%s5157 + $0x4a] sm:$0xff]
        %v5777 = vld [vmem:[%s5157 + $0x52] sm:$0xff]
        %v5778 = vld [vmem:[%s5157 + $0x62] sm:$0xff]
        %v5779 = vld [vmem:[%s5157 + $0x6a] sm:$0xff]
        %v5780 = vld [vmem:[%s5157 + $0x7a] sm:$0xff]
        %v5781 = vld [vmem:[%s5157 + $0x82] sm:$0xff]
        %v5782 = vld [vmem:[%s5157 + $0x92] sm:$0xff]
        %v5783 = vld [vmem:[%s5157 + $0x9a] sm:$0xff]
        %v5784 = vld [vmem:[%s5157 + $0xaa] sm:$0xff]
        %v5785 = vld [vmem:[%s5157 + $0xb2] sm:$0xff]
        %v5786 = vld [vmem:[%s5157 + $0xc2] sm:$0xff]
        %v5787 = vld [vmem:[%s5157 + $0xca] sm:$0xff]
        %v5788 = vld [vmem:[%s5157 + $0xda] sm:$0xff]
        %v5789 = vld [vmem:[%s5157 + $0xe2] sm:$0xff]
        %v5790 = vld [vmem:[%s5157 + $0xf2] sm:$0xff]
        %v5791 = vld [vmem:[%s5157 + $0xfa] sm:$0xff]
        %v5792 = vld [vmem:[%s5157 + $0x10a] sm:$0xff]
        %v5793 = vld [vmem:[%s5157 + $0x112] sm:$0xff]
        %v5794 = vld [vmem:[%s5157 + $0x122] sm:$0xff]
        %v5795 = vld [vmem:[%s5157 + $0x12a] sm:$0xff]
        %v5796 = vld [vmem:[%s5157 + $0x13a] sm:$0xff]
        %v5797 = vld [vmem:[%s5157 + $0x142] sm:$0xff]
        %v5798 = vld [vmem:[%s5157 + $0x152] sm:$0xff]
        %v5799 = vld [vmem:[%s5157 + $0x15a] sm:$0xff]
        %v5800 = vld [vmem:[%s5157 + $0x16a] sm:$0xff]
        %v5801 = vld [vmem:[%s5157 + $0x172] sm:$0xff]
        %v5802 = vpack.c.bf16 %v5771, %v5770
        %v5803 = vpack.c.bf16 %v5773, %v5772
        %v5804 = vpack.c.bf16 %v5775, %v5774
        %v5805 = vpack.c.bf16 %v5777, %v5776
        %v5806 = vpack.c.bf16 %v5779, %v5778
        %v5807 = vpack.c.bf16 %v5781, %v5780
        %v5808 = vpack.c.bf16 %v5783, %v5782
        %v5809 = vpack.c.bf16 %v5785, %v5784
        %v5810 = vpack.c.bf16 %v5787, %v5786
        %v5811 = vpack.c.bf16 %v5789, %v5788
        %v5812 = vpack.c.bf16 %v5791, %v5790
        %v5813 = vpack.c.bf16 %v5793, %v5792
        %v5814 = vpack.c.bf16 %v5795, %v5794
        %v5815 = vpack.c.bf16 %v5797, %v5796
        %v5816 = vpack.c.bf16 %v5799, %v5798
        %v5817 = vpack.c.bf16 %v5801, %v5800
        %s5818 = scalar_lea.vmem [#allocation6], 128
        %v5819 = vld [vmem:[%s5818] sm:$0xf]
        %v5820 = vld [vmem:[%s5818 + $0x4] sm:$0xf]
        %v5821 = vld [vmem:[%s5818 + $0x8] sm:$0xf]
        %v5822 = vld [vmem:[%s5818 + $0xc] sm:$0xf]
        %v5827 = vunpack.c.l.b16 %v5819
        %v5828 = vunpack.c.l.b16 %v5820
        %v5829 = vunpack.c.l.b16 %v5821
        %v5830 = vunpack.c.l.b16 %v5822
        %v5831 = vpack.c.b16 %v5828, %v5827
        %v5832 = vpack.c.b16 %v5830, %v5829
        %v5836 = vsel %vm3275, %v5802, 0
        %v5839 = vsel %vm3275, %v5803, 0
        %v5842 = vsel %vm3275, %v5804, 0
        %v5845 = vsel %vm3275, %v5805, 0
        %v5848 = vsel %vm3275, %v5806, 0
        %v5851 = vsel %vm3275, %v5807, 0
        %v5854 = vsel %vm3275, %v5808, 0
        %v5857 = vsel %vm3275, %v5809, 0
        %v5860 = vsel %vm3275, %v5810, 0
        %v5863 = vsel %vm3275, %v5811, 0
        %v5866 = vsel %vm3275, %v5812, 0
        %v5869 = vsel %vm3275, %v5813, 0
        %v5872 = vsel %vm3275, %v5814, 0
        %v5875 = vsel %vm3275, %v5815, 0
        %v5878 = vsel %vm3275, %v5816, 0
        %v5881 = vsel %vm3275, %v5817, 0
        %5883 = vmatprep.subr.bf16.mxu0 0
        %5884 = vmatpush1.bf16.msra.mxu0 %v5831
        %5885 = vmatprep.subr.bf16.mxu0 0
        %5886 = vmatpush1.bf16.msra.mxu0 %v5832
        %5887 = vmatprep.subr.bf16.mxu0 0
        %5888 = vmatpush1.bf16.msra.mxu0 0
        %5889 = vmatprep.subr.bf16.mxu0 0
        %5890 = vmatpush1.bf16.msra.mxu0 0
        %5891 = vmatprep.subr.bf16.mxu0 0
        %5892 = vmatpush1.bf16.msra.mxu0 0
        %5893 = vmatprep.subr.bf16.mxu0 0
        %5894 = vmatpush1.bf16.msra.mxu0 0
        %5895 = vmatprep.subr.bf16.mxu0 0
        %5896 = vmatpush1.bf16.msra.mxu0 0
        %5897 = vmatprep.subr.bf16.mxu0 0
        %5898 = vmatpush1.bf16.msra.mxu0 0
        %5899 = vmatprep.subr.bf16.mxu0 0
        %5900 = vmatpush1.bf16.msra.mxu0 0
        %5901 = vmatprep.subr.bf16.mxu0 0
        %5902 = vmatpush1.bf16.msra.mxu0 0
        %5903 = vmatprep.subr.bf16.mxu0 0
        %5904 = vmatpush1.bf16.msra.mxu0 0
        %5905 = vmatprep.subr.bf16.mxu0 0
        %5906 = vmatpush1.bf16.msra.mxu0 0
        %5907 = vmatprep.subr.bf16.mxu0 0
        %5908 = vmatpush1.bf16.msra.mxu0 0
        %5909 = vmatprep.subr.bf16.mxu0 0
        %5910 = vmatpush1.bf16.msra.mxu0 0
        %5911 = vmatprep.subr.bf16.mxu0 0
        %5912 = vmatpush1.bf16.msra.mxu0 0
        %5913 = vmatprep.subr.bf16.mxu0 0
        %5914 = vmatpush1.bf16.msra.mxu0 0
        %5915 = vmatprep.mubr.bf16.mxu0 0
        %5916 = vmatmul.mubr.bf16.gmra.mrb[0].mxu0 %v5836
        %v5917 = vpop.f32.mrb[0].mxu0
        %v5918 = vadd.f32 0.0, %v5917
        %v5919 = vpop.f32.mrb[0].mxu0
        %v5920 = vpop.f32.mrb[0].mxu0
        %v5921 = vadd.f32 0.0, %v5920
        %v5922 = vpop.f32.mrb[0].mxu0
        %5923 = vmatprep.mubr.bf16.mxu0 0
        %5924 = vmatmul.mubr.bf16.gmra.mrb[0].mxu0 %v5839
        %v5925 = vpop.f32.mrb[0].mxu0
        %v5926 = vadd.f32 0.0, %v5925
        %v5927 = vpop.f32.mrb[0].mxu0
        %v5928 = vpop.f32.mrb[0].mxu0
        %v5929 = vadd.f32 0.0, %v5928
        %v5930 = vpop.f32.mrb[0].mxu0
        %5931 = vmatprep.mubr.bf16.mxu0 0
        %5932 = vmatmul.mubr.bf16.gmra.mrb[0].mxu0 %v5842
        %v5933 = vpop.f32.mrb[0].mxu0
        %v5934 = vadd.f32 0.0, %v5933
        %v5935 = vpop.f32.mrb[0].mxu0
        %v5936 = vpop.f32.mrb[0].mxu0
        %v5937 = vadd.f32 0.0, %v5936
        %v5938 = vpop.f32.mrb[0].mxu0
        %5939 = vmatprep.mubr.bf16.mxu0 0
        %5940 = vmatmul.mubr.bf16.gmra.mrb[0].mxu0 %v5845
        %v5941 = vpop.f32.mrb[0].mxu0
        %v5942 = vadd.f32 0.0, %v5941
        %v5943 = vpop.f32.mrb[0].mxu0
        %v5944 = vpop.f32.mrb[0].mxu0
        %v5945 = vadd.f32 0.0, %v5944
        %v5946 = vpop.f32.mrb[0].mxu0
        %5947 = vmatprep.mubr.bf16.mxu0 0
        %5948 = vmatmul.mubr.bf16.gmra.mrb[0].mxu0 %v5848
        %v5949 = vpop.f32.mrb[0].mxu0
        %v5950 = vadd.f32 0.0, %v5949
        %v5951 = vpop.f32.mrb[0].mxu0
        %v5952 = vpop.f32.mrb[0].mxu0
        %v5953 = vadd.f32 0.0, %v5952
        %v5954 = vpop.f32.mrb[0].mxu0
        %5955 = vmatprep.mubr.bf16.mxu0 0
        %5956 = vmatmul.mubr.bf16.gmra.mrb[0].mxu0 %v5851
        %v5957 = vpop.f32.mrb[0].mxu0
        %v5958 = vadd.f32 0.0, %v5957
        %v5959 = vpop.f32.mrb[0].mxu0
        %v5960 = vpop.f32.mrb[0].mxu0
        %v5961 = vadd.f32 0.0, %v5960
        %v5962 = vpop.f32.mrb[0].mxu0
        %5963 = vmatprep.mubr.bf16.mxu0 0
        %5964 = vmatmul.mubr.bf16.gmra.mrb[0].mxu0 %v5854
        %v5965 = vpop.f32.mrb[0].mxu0
        %v5966 = vadd.f32 0.0, %v5965
        %v5967 = vpop.f32.mrb[0].mxu0
        %v5968 = vpop.f32.mrb[0].mxu0
        %v5969 = vadd.f32 0.0, %v5968
        %v5970 = vpop.f32.mrb[0].mxu0
        %5971 = vmatprep.mubr.bf16.mxu0 0
        %5972 = vmatmul.mubr.bf16.gmra.mrb[0].mxu0 %v5857
        %v5973 = vpop.f32.mrb[0].mxu0
        %v5974 = vadd.f32 0.0, %v5973
        %v5975 = vpop.f32.mrb[0].mxu0
        %v5976 = vpop.f32.mrb[0].mxu0
        %v5977 = vadd.f32 0.0, %v5976
        %v5978 = vpop.f32.mrb[0].mxu0
        %5979 = vmatprep.mubr.bf16.mxu0 0
        %5980 = vmatmul.mubr.bf16.gmra.mrb[0].mxu0 %v5860
        %v5981 = vpop.f32.mrb[0].mxu0
        %v5982 = vadd.f32 0.0, %v5981
        %v5983 = vpop.f32.mrb[0].mxu0
        %v5984 = vpop.f32.mrb[0].mxu0
        %v5985 = vadd.f32 0.0, %v5984
        %v5986 = vpop.f32.mrb[0].mxu0
        %5987 = vmatprep.mubr.bf16.mxu0 0
        %5988 = vmatmul.mubr.bf16.gmra.mrb[0].mxu0 %v5863
        %v5989 = vpop.f32.mrb[0].mxu0
        %v5990 = vadd.f32 0.0, %v5989
        %v5991 = vpop.f32.mrb[0].mxu0
        %v5992 = vpop.f32.mrb[0].mxu0
        %v5993 = vadd.f32 0.0, %v5992
        %v5994 = vpop.f32.mrb[0].mxu0
        %5995 = vmatprep.mubr.bf16.mxu0 0
        %5996 = vmatmul.mubr.bf16.gmra.mrb[0].mxu0 %v5866
        %v5997 = vpop.f32.mrb[0].mxu0
        %v5998 = vadd.f32 0.0, %v5997
        %v5999 = vpop.f32.mrb[0].mxu0
        %v6000 = vpop.f32.mrb[0].mxu0
        %v6001 = vadd.f32 0.0, %v6000
        %v6002 = vpop.f32.mrb[0].mxu0
        %6003 = vmatprep.mubr.bf16.mxu0 0
        %6004 = vmatmul.mubr.bf16.gmra.mrb[0].mxu0 %v5869
        %v6005 = vpop.f32.mrb[0].mxu0
        %v6006 = vadd.f32 0.0, %v6005
        %v6007 = vpop.f32.mrb[0].mxu0
        %v6008 = vpop.f32.mrb[0].mxu0
        %v6009 = vadd.f32 0.0, %v6008
        %v6010 = vpop.f32.mrb[0].mxu0
        %6011 = vmatprep.mubr.bf16.mxu0 0
        %6012 = vmatmul.mubr.bf16.gmra.mrb[0].mxu0 %v5872
        %v6013 = vpop.f32.mrb[0].mxu0
        %v6014 = vadd.f32 0.0, %v6013
        %v6015 = vpop.f32.mrb[0].mxu0
        %v6016 = vpop.f32.mrb[0].mxu0
        %v6017 = vadd.f32 0.0, %v6016
        %v6018 = vpop.f32.mrb[0].mxu0
        %6019 = vmatprep.mubr.bf16.mxu0 0
        %6020 = vmatmul.mubr.bf16.gmra.mrb[0].mxu0 %v5875
        %v6021 = vpop.f32.mrb[0].mxu0
        %v6022 = vadd.f32 0.0, %v6021
        %v6023 = vpop.f32.mrb[0].mxu0
        %v6024 = vpop.f32.mrb[0].mxu0
        %v6025 = vadd.f32 0.0, %v6024
        %v6026 = vpop.f32.mrb[0].mxu0
        %6027 = vmatprep.mubr.bf16.mxu0 0
        %6028 = vmatmul.mubr.bf16.gmra.mrb[0].mxu0 %v5878
        %v6029 = vpop.f32.mrb[0].mxu0
        %v6030 = vadd.f32 0.0, %v6029
        %v6031 = vpop.f32.mrb[0].mxu0
        %v6032 = vpop.f32.mrb[0].mxu0
        %v6033 = vadd.f32 0.0, %v6032
        %v6034 = vpop.f32.mrb[0].mxu0
        %6035 = vmatprep.mubr.bf16.mxu0 0
        %6036 = vmatmul.mubr.bf16.gmra.mrb[0].mxu0 %v5881
        %v6037 = vpop.f32.mrb[0].mxu0
        %v6038 = vadd.f32 0.0, %v6037
        %v6039 = vpop.f32.mrb[0].mxu0
        %v6040 = vpop.f32.mrb[0].mxu0
        %v6041 = vadd.f32 0.0, %v6040
        %v6042 = vpop.f32.mrb[0].mxu0
        %6043 = vdwg.mxu0
        %v6044 = vadd.f32 %v5738, %v5918
        %v6045 = vadd.f32 %v5739, %v5921
        %v6046 = vadd.f32 %v5740, %v5926
        %v6047 = vadd.f32 %v5741, %v5929
        %v6048 = vadd.f32 %v5742, %v5934
        %v6049 = vadd.f32 %v5743, %v5937
        %v6050 = vadd.f32 %v5744, %v5942
        %v6051 = vadd.f32 %v5745, %v5945
        %v6052 = vadd.f32 %v5746, %v5950
        %v6053 = vadd.f32 %v5747, %v5953
        %v6054 = vadd.f32 %v5748, %v5958
        %v6055 = vadd.f32 %v5749, %v5961
        %v6056 = vadd.f32 %v5750, %v5966
        %v6057 = vadd.f32 %v5751, %v5969
        %v6058 = vadd.f32 %v5752, %v5974
        %v6059 = vadd.f32 %v5753, %v5977
        %v6060 = vadd.f32 %v5754, %v5982
        %v6061 = vadd.f32 %v5755, %v5985
        %v6062 = vadd.f32 %v5756, %v5990
        %v6063 = vadd.f32 %v5757, %v5993
        %v6064 = vadd.f32 %v5758, %v5998
        %v6065 = vadd.f32 %v5759, %v6001
        %v6066 = vadd.f32 %v5760, %v6006
        %v6067 = vadd.f32 %v5761, %v6009
        %v6068 = vadd.f32 %v5762, %v6014
        %v6069 = vadd.f32 %v5763, %v6017
        %v6070 = vadd.f32 %v5764, %v6022
        %v6071 = vadd.f32 %v5765, %v6025
        %v6072 = vadd.f32 %v5766, %v6030
        %v6073 = vadd.f32 %v5767, %v6033
        %v6074 = vadd.f32 %v5768, %v6038
        %v6075 = vadd.f32 %v5769, %v6041
        %v6076 = vld [vmem:[%s5] sm:$0x1]
        %v6078 = vlaneseq
        %v6079 = vshrl.u32 %v6078, 7
        %v6080 = vsub.s32 0, %v6079
        %v6081 = vrot.slane %v6076, %v6080
        %v6083 = vadd.f32 %v6044, %v6081
        %v6084 = vadd.f32 %v6045, %v6081
        %v6085 = vadd.f32 %v6046, %v6081
        %v6086 = vadd.f32 %v6047, %v6081
        %v6087 = vadd.f32 %v6048, %v6081
        %v6088 = vadd.f32 %v6049, %v6081
        %v6089 = vadd.f32 %v6050, %v6081
        %v6090 = vadd.f32 %v6051, %v6081
        %v6091 = vadd.f32 %v6052, %v6081
        %v6092 = vadd.f32 %v6053, %v6081
        %v6093 = vadd.f32 %v6054, %v6081
        %v6094 = vadd.f32 %v6055, %v6081
        %v6095 = vadd.f32 %v6056, %v6081
        %v6096 = vadd.f32 %v6057, %v6081
        %v6097 = vadd.f32 %v6058, %v6081
        %v6098 = vadd.f32 %v6059, %v6081
        %v6099 = vadd.f32 %v6060, %v6081
        %v6100 = vadd.f32 %v6061, %v6081
        %v6101 = vadd.f32 %v6062, %v6081
        %v6102 = vadd.f32 %v6063, %v6081
        %v6103 = vadd.f32 %v6064, %v6081
        %v6104 = vadd.f32 %v6065, %v6081
        %v6105 = vadd.f32 %v6066, %v6081
        %v6106 = vadd.f32 %v6067, %v6081
        %v6107 = vadd.f32 %v6068, %v6081
        %v6108 = vadd.f32 %v6069, %v6081
        %v6109 = vadd.f32 %v6070, %v6081
        %v6110 = vadd.f32 %v6071, %v6081
        %v6111 = vadd.f32 %v6072, %v6081
        %v6112 = vadd.f32 %v6073, %v6081
        %v6113 = vadd.f32 %v6074, %v6081
        %v6114 = vadd.f32 %v6075, %v6081
        %v6115 = vmax.f32 %v6083, 0.0
        %v6116 = vmax.f32 %v6084, 0.0
        %v6117 = vmax.f32 %v6085, 0.0
        %v6118 = vmax.f32 %v6086, 0.0
        %v6119 = vmax.f32 %v6087, 0.0
        %v6120 = vmax.f32 %v6088, 0.0
        %v6121 = vmax.f32 %v6089, 0.0
        %v6122 = vmax.f32 %v6090, 0.0
        %v6123 = vmax.f32 %v6091, 0.0
        %v6124 = vmax.f32 %v6092, 0.0
        %v6125 = vmax.f32 %v6093, 0.0
        %v6126 = vmax.f32 %v6094, 0.0
        %v6127 = vmax.f32 %v6095, 0.0
        %v6128 = vmax.f32 %v6096, 0.0
        %v6129 = vmax.f32 %v6097, 0.0
        %v6130 = vmax.f32 %v6098, 0.0
        %v6131 = vmax.f32 %v6099, 0.0
        %v6132 = vmax.f32 %v6100, 0.0
        %v6133 = vmax.f32 %v6101, 0.0
        %v6134 = vmax.f32 %v6102, 0.0
        %v6135 = vmax.f32 %v6103, 0.0
        %v6136 = vmax.f32 %v6104, 0.0
        %v6137 = vmax.f32 %v6105, 0.0
        %v6138 = vmax.f32 %v6106, 0.0
        %v6139 = vmax.f32 %v6107, 0.0
        %v6140 = vmax.f32 %v6108, 0.0
        %v6141 = vmax.f32 %v6109, 0.0
        %v6142 = vmax.f32 %v6110, 0.0
        %v6143 = vmax.f32 %v6111, 0.0
        %v6144 = vmax.f32 %v6112, 0.0
        %v6145 = vmax.f32 %v6113, 0.0
        %v6146 = vmax.f32 %v6114, 0.0
        %6147 = vst.msk [vmem:[%s3274 + $0x1] sm:$0xff] %vm3275, %v6115
        %6148 = vst.msk [vmem:[%s3274 + $0x9] sm:$0xff] %vm3275, %v6116
        %6149 = vst.msk [vmem:[%s3274 + $0x19] sm:$0xff] %vm3275, %v6117
        %6150 = vst.msk [vmem:[%s3274 + $0x21] sm:$0xff] %vm3275, %v6118
        %6151 = vst.msk [vmem:[%s3274 + $0x31] sm:$0xff] %vm3275, %v6119
        %6152 = vst.msk [vmem:[%s3274 + $0x39] sm:$0xff] %vm3275, %v6120
        %6153 = vst.msk [vmem:[%s3274 + $0x49] sm:$0xff] %vm3275, %v6121
        %6154 = vst.msk [vmem:[%s3274 + $0x51] sm:$0xff] %vm3275, %v6122
        %6155 = vst.msk [vmem:[%s3274 + $0x61] sm:$0xff] %vm3275, %v6123
        %6156 = vst.msk [vmem:[%s3274 + $0x69] sm:$0xff] %vm3275, %v6124
        %6157 = vst.msk [vmem:[%s3274 + $0x79] sm:$0xff] %vm3275, %v6125
        %6158 = vst.msk [vmem:[%s3274 + $0x81] sm:$0xff] %vm3275, %v6126
        %6159 = vst.msk [vmem:[%s3274 + $0x91] sm:$0xff] %vm3275, %v6127
        %6160 = vst.msk [vmem:[%s3274 + $0x99] sm:$0xff] %vm3275, %v6128
        %6161 = vst.msk [vmem:[%s3274 + $0xa9] sm:$0xff] %vm3275, %v6129
        %6162 = vst.msk [vmem:[%s3274 + $0xb1] sm:$0xff] %vm3275, %v6130
        %6163 = vst.msk [vmem:[%s3274 + $0xc1] sm:$0xff] %vm3275, %v6131
        %6164 = vst.msk [vmem:[%s3274 + $0xc9] sm:$0xff] %vm3275, %v6132
        %6165 = vst.msk [vmem:[%s3274 + $0xd9] sm:$0xff] %vm3275, %v6133
        %6166 = vst.msk [vmem:[%s3274 + $0xe1] sm:$0xff] %vm3275, %v6134
        %6167 = vst.msk [vmem:[%s3274 + $0xf1] sm:$0xff] %vm3275, %v6135
        %6168 = vst.msk [vmem:[%s3274 + $0xf9] sm:$0xff] %vm3275, %v6136
        %6169 = vst.msk [vmem:[%s3274 + $0x109] sm:$0xff] %vm3275, %v6137
        %6170 = vst.msk [vmem:[%s3274 + $0x111] sm:$0xff] %vm3275, %v6138
        %6171 = vst.msk [vmem:[%s3274 + $0x121] sm:$0xff] %vm3275, %v6139
        %6172 = vst.msk [vmem:[%s3274 + $0x129] sm:$0xff] %vm3275, %v6140
        %6173 = vst.msk [vmem:[%s3274 + $0x139] sm:$0xff] %vm3275, %v6141
        %6174 = vst.msk [vmem:[%s3274 + $0x141] sm:$0xff] %vm3275, %v6142
        %6175 = vst.msk [vmem:[%s3274 + $0x151] sm:$0xff] %vm3275, %v6143
        %6176 = vst.msk [vmem:[%s3274 + $0x159] sm:$0xff] %vm3275, %v6144
        %6177 = vst.msk [vmem:[%s3274 + $0x169] sm:$0xff] %vm3275, %v6145
        %6178 = vst.msk [vmem:[%s3274 + $0x171] sm:$0xff] %vm3275, %v6146
        %6179 = vst.msk [vmem:[#allocation3 + $0x1] sm:$0xff] %vm3275, %v6117
        %6180 = vst.msk [vmem:[#allocation3 + $0x9] sm:$0xff] %vm3275, %v6118
        %6181 = vst.msk [vmem:[%s3310 + $0x1] sm:$0xff] %vm3275, %v6143
        %6182 = vst.msk [vmem:[%s3310 + $0x9] sm:$0xff] %vm3275, %v6144
        %v6183 = vld [vmem:[#allocation3 + $0x2] sm:$0x1]
        %v6184 = vld [vmem:[#allocation3 + $0x1a] sm:$0x1]
        %v6185 = vld [vmem:[#allocation3 + $0x32] sm:$0x1]
        %v6186 = vld [vmem:[#allocation3 + $0x4a] sm:$0x1]
        %v6187 = vld [vmem:[#allocation3 + $0x62] sm:$0x1]
        %v6188 = vld [vmem:[#allocation3 + $0x7a] sm:$0x1]
        %v6189 = vld [vmem:[#allocation3 + $0x92] sm:$0x1]
        %v6190 = vld [vmem:[#allocation3 + $0xaa] sm:$0x1]
        %v6191 = vld [vmem:[#allocation3 + $0xc2] sm:$0x1]
        %v6192 = vld [vmem:[#allocation3 + $0xda] sm:$0x1]
        %v6193 = vld [vmem:[#allocation3 + $0xf2] sm:$0x1]
        %v6194 = vld [vmem:[#allocation3 + $0x10a] sm:$0x1]
        %v6195 = vld [vmem:[#allocation3 + $0x122] sm:$0x1]
        %v6196 = vld [vmem:[#allocation3 + $0x13a] sm:$0x1]
        %v6197 = vld [vmem:[#allocation3 + $0x152] sm:$0x1]
        %v6198 = vld [vmem:[#allocation3 + $0x16a] sm:$0x1]
        %v6199 = vld [vmem:[#allocation3 + $0x182] sm:$0x1]
        %v6200 = vld [vmem:[#allocation3 + $0x19a] sm:$0x1]
        %6201 = vst.msk [vmem:[#allocation3] sm:$0x1] %vm3331, %v6183
        %6202 = vst.msk [vmem:[#allocation3 + $0x18] sm:$0x1] %vm3331, %v6184
        %6203 = vst.msk [vmem:[#allocation3 + $0x30] sm:$0x1] %vm3331, %v6185
        %6204 = vst.msk [vmem:[#allocation3 + $0x48] sm:$0x1] %vm3331, %v6186
        %6205 = vst.msk [vmem:[#allocation3 + $0x60] sm:$0x1] %vm3331, %v6187
        %6206 = vst.msk [vmem:[#allocation3 + $0x78] sm:$0x1] %vm3331, %v6188
        %6207 = vst.msk [vmem:[#allocation3 + $0x90] sm:$0x1] %vm3331, %v6189
        %6208 = vst.msk [vmem:[#allocation3 + $0xa8] sm:$0x1] %vm3331, %v6190
        %6209 = vst.msk [vmem:[#allocation3 + $0xc0] sm:$0x1] %vm3331, %v6191
        %6210 = vst.msk [vmem:[#allocation3 + $0xd8] sm:$0x1] %vm3331, %v6192
        %6211 = vst.msk [vmem:[#allocation3 + $0xf0] sm:$0x1] %vm3331, %v6193
        %6212 = vst.msk [vmem:[#allocation3 + $0x108] sm:$0x1] %vm3331, %v6194
        %6213 = vst.msk [vmem:[#allocation3 + $0x120] sm:$0x1] %vm3331, %v6195
        %6214 = vst.msk [vmem:[#allocation3 + $0x138] sm:$0x1] %vm3331, %v6196
        %6215 = vst.msk [vmem:[#allocation3 + $0x150] sm:$0x1] %vm3331, %v6197
        %6216 = vst.msk [vmem:[#allocation3 + $0x168] sm:$0x1] %vm3331, %v6198
        %6217 = vst.msk [vmem:[#allocation3 + $0x180] sm:$0x1] %vm3331, %v6199
        %6218 = vst.msk [vmem:[#allocation3 + $0x198] sm:$0x1] %vm3331, %v6200
        %v6219 = vld [vmem:[#allocation3 + $0xf] sm:$0x1]
        %v6220 = vld [vmem:[#allocation3 + $0x27] sm:$0x1]
        %v6221 = vld [vmem:[#allocation3 + $0x3f] sm:$0x1]
        %v6222 = vld [vmem:[#allocation3 + $0x57] sm:$0x1]
        %v6223 = vld [vmem:[#allocation3 + $0x6f] sm:$0x1]
        %v6224 = vld [vmem:[#allocation3 + $0x87] sm:$0x1]
        %v6225 = vld [vmem:[#allocation3 + $0x9f] sm:$0x1]
        %v6226 = vld [vmem:[#allocation3 + $0xb7] sm:$0x1]
        %v6227 = vld [vmem:[#allocation3 + $0xcf] sm:$0x1]
        %v6228 = vld [vmem:[#allocation3 + $0xe7] sm:$0x1]
        %v6229 = vld [vmem:[#allocation3 + $0xff] sm:$0x1]
        %v6230 = vld [vmem:[#allocation3 + $0x117] sm:$0x1]
        %v6231 = vld [vmem:[#allocation3 + $0x12f] sm:$0x1]
        %v6232 = vld [vmem:[#allocation3 + $0x147] sm:$0x1]
        %v6233 = vld [vmem:[#allocation3 + $0x15f] sm:$0x1]
        %v6234 = vld [vmem:[#allocation3 + $0x177] sm:$0x1]
        %v6235 = vld [vmem:[#allocation3 + $0x18f] sm:$0x1]
        %v6236 = vld [vmem:[#allocation3 + $0x1a7] sm:$0x1]
        %6237 = vst.msk [vmem:[#allocation3 + $0x11] sm:$0x1] %vm3331, %v6219
        %6238 = vst.msk [vmem:[#allocation3 + $0x29] sm:$0x1] %vm3331, %v6220
        %6239 = vst.msk [vmem:[#allocation3 + $0x41] sm:$0x1] %vm3331, %v6221
        %6240 = vst.msk [vmem:[#allocation3 + $0x59] sm:$0x1] %vm3331, %v6222
        %6241 = vst.msk [vmem:[#allocation3 + $0x71] sm:$0x1] %vm3331, %v6223
        %6242 = vst.msk [vmem:[#allocation3 + $0x89] sm:$0x1] %vm3331, %v6224
        %6243 = vst.msk [vmem:[#allocation3 + $0xa1] sm:$0x1] %vm3331, %v6225
        %6244 = vst.msk [vmem:[#allocation3 + $0xb9] sm:$0x1] %vm3331, %v6226
        %6245 = vst.msk [vmem:[#allocation3 + $0xd1] sm:$0x1] %vm3331, %v6227
        %6246 = vst.msk [vmem:[#allocation3 + $0xe9] sm:$0x1] %vm3331, %v6228
        %6247 = vst.msk [vmem:[#allocation3 + $0x101] sm:$0x1] %vm3331, %v6229
        %6248 = vst.msk [vmem:[#allocation3 + $0x119] sm:$0x1] %vm3331, %v6230
        %6249 = vst.msk [vmem:[#allocation3 + $0x131] sm:$0x1] %vm3331, %v6231
        %6250 = vst.msk [vmem:[#allocation3 + $0x149] sm:$0x1] %vm3331, %v6232
        %6251 = vst.msk [vmem:[#allocation3 + $0x161] sm:$0x1] %vm3331, %v6233
        %6252 = vst.msk [vmem:[#allocation3 + $0x179] sm:$0x1] %vm3331, %v6234
        %6253 = vst.msk [vmem:[#allocation3 + $0x191] sm:$0x1] %vm3331, %v6235
        %6254 = vst.msk [vmem:[#allocation3 + $0x1a9] sm:$0x1] %vm3331, %v6236
        %v6255 = vld [vmem:[#allocation3] sm:$0xff]
        %v6256 = vld [vmem:[#allocation3 + $0x8] sm:$0xff]
        %v6257 = vld [vmem:[#allocation3 + $0x18] sm:$0xff]
        %v6258 = vld [vmem:[#allocation3 + $0x20] sm:$0xff]
        %v6259 = vld [vmem:[#allocation3 + $0x30] sm:$0xff]
        %v6260 = vld [vmem:[#allocation3 + $0x38] sm:$0xff]
        %v6261 = vld [vmem:[#allocation3 + $0x48] sm:$0xff]
        %v6262 = vld [vmem:[#allocation3 + $0x50] sm:$0xff]
        %v6263 = vld [vmem:[#allocation3 + $0x60] sm:$0xff]
        %v6264 = vld [vmem:[#allocation3 + $0x68] sm:$0xff]
        %v6265 = vld [vmem:[#allocation3 + $0x78] sm:$0xff]
        %v6266 = vld [vmem:[#allocation3 + $0x80] sm:$0xff]
        %v6267 = vld [vmem:[#allocation3 + $0x90] sm:$0xff]
        %v6268 = vld [vmem:[#allocation3 + $0x98] sm:$0xff]
        %v6269 = vld [vmem:[#allocation3 + $0xa8] sm:$0xff]
        %v6270 = vld [vmem:[#allocation3 + $0xb0] sm:$0xff]
        %v6271 = vld [vmem:[#allocation3 + $0xc0] sm:$0xff]
        %v6272 = vld [vmem:[#allocation3 + $0xc8] sm:$0xff]
        %v6273 = vld [vmem:[#allocation3 + $0xd8] sm:$0xff]
        %v6274 = vld [vmem:[#allocation3 + $0xe0] sm:$0xff]
        %v6275 = vld [vmem:[#allocation3 + $0xf0] sm:$0xff]
        %v6276 = vld [vmem:[#allocation3 + $0xf8] sm:$0xff]
        %v6277 = vld [vmem:[#allocation3 + $0x108] sm:$0xff]
        %v6278 = vld [vmem:[#allocation3 + $0x110] sm:$0xff]
        %v6279 = vld [vmem:[#allocation3 + $0x120] sm:$0xff]
        %v6280 = vld [vmem:[#allocation3 + $0x128] sm:$0xff]
        %v6281 = vld [vmem:[#allocation3 + $0x138] sm:$0xff]
        %v6282 = vld [vmem:[#allocation3 + $0x140] sm:$0xff]
        %v6283 = vld [vmem:[#allocation3 + $0x150] sm:$0xff]
        %v6284 = vld [vmem:[#allocation3 + $0x158] sm:$0xff]
        %v6285 = vld [vmem:[#allocation3 + $0x168] sm:$0xff]
        %v6286 = vld [vmem:[#allocation3 + $0x170] sm:$0xff]
        %v6287 = vpack.c.bf16 %v6256, %v6255
        %v6288 = vpack.c.bf16 %v6258, %v6257
        %v6289 = vpack.c.bf16 %v6260, %v6259
        %v6290 = vpack.c.bf16 %v6262, %v6261
        %v6291 = vpack.c.bf16 %v6264, %v6263
        %v6292 = vpack.c.bf16 %v6266, %v6265
        %v6293 = vpack.c.bf16 %v6268, %v6267
        %v6294 = vpack.c.bf16 %v6270, %v6269
        %v6295 = vpack.c.bf16 %v6272, %v6271
        %v6296 = vpack.c.bf16 %v6274, %v6273
        %v6297 = vpack.c.bf16 %v6276, %v6275
        %v6298 = vpack.c.bf16 %v6278, %v6277
        %v6299 = vpack.c.bf16 %v6280, %v6279
        %v6300 = vpack.c.bf16 %v6282, %v6281
        %v6301 = vpack.c.bf16 %v6284, %v6283
        %v6302 = vpack.c.bf16 %v6286, %v6285
        %v6303 = vld [vmem:[#allocation8] sm:$0xf]
        %v6304 = vld [vmem:[#allocation8 + $0x4] sm:$0xf]
        %v6305 = vld [vmem:[#allocation8 + $0x8] sm:$0xf]
        %v6306 = vld [vmem:[#allocation8 + $0xc] sm:$0xf]
        %v6307 = vld [vmem:[#allocation3 + $0x1] sm:$0xff]
        %v6308 = vld [vmem:[#allocation3 + $0x9] sm:$0xff]
        %v6309 = vld [vmem:[#allocation3 + $0x19] sm:$0xff]
        %v6310 = vld [vmem:[#allocation3 + $0x21] sm:$0xff]
        %v6311 = vld [vmem:[#allocation3 + $0x31] sm:$0xff]
        %v6312 = vld [vmem:[#allocation3 + $0x39] sm:$0xff]
        %v6313 = vld [vmem:[#allocation3 + $0x49] sm:$0xff]
        %v6314 = vld [vmem:[#allocation3 + $0x51] sm:$0xff]
        %v6315 = vld [vmem:[#allocation3 + $0x61] sm:$0xff]
        %v6316 = vld [vmem:[#allocation3 + $0x69] sm:$0xff]
        %v6317 = vld [vmem:[#allocation3 + $0x79] sm:$0xff]
        %v6318 = vld [vmem:[#allocation3 + $0x81] sm:$0xff]
        %v6319 = vld [vmem:[#allocation3 + $0x91] sm:$0xff]
        %v6320 = vld [vmem:[#allocation3 + $0x99] sm:$0xff]
        %v6321 = vld [vmem:[#allocation3 + $0xa9] sm:$0xff]
        %v6322 = vld [vmem:[#allocation3 + $0xb1] sm:$0xff]
        %v6323 = vld [vmem:[#allocation3 + $0xc1] sm:$0xff]
        %v6324 = vld [vmem:[#allocation3 + $0xc9] sm:$0xff]
        %v6325 = vld [vmem:[#allocation3 + $0xd9] sm:$0xff]
        %v6326 = vld [vmem:[#allocation3 + $0xe1] sm:$0xff]
        %v6327 = vld [vmem:[#allocation3 + $0xf1] sm:$0xff]
        %v6328 = vld [vmem:[#allocation3 + $0xf9] sm:$0xff]
        %v6329 = vld [vmem:[#allocation3 + $0x109] sm:$0xff]
        %v6330 = vld [vmem:[#allocation3 + $0x111] sm:$0xff]
        %v6331 = vld [vmem:[#allocation3 + $0x121] sm:$0xff]
        %v6332 = vld [vmem:[#allocation3 + $0x129] sm:$0xff]
        %v6333 = vld [vmem:[#allocation3 + $0x139] sm:$0xff]
        %v6334 = vld [vmem:[#allocation3 + $0x141] sm:$0xff]
        %v6335 = vld [vmem:[#allocation3 + $0x151] sm:$0xff]
        %v6336 = vld [vmem:[#allocation3 + $0x159] sm:$0xff]
        %v6337 = vld [vmem:[#allocation3 + $0x169] sm:$0xff]
        %v6338 = vld [vmem:[#allocation3 + $0x171] sm:$0xff]
        %v6339 = vpack.c.bf16 %v6308, %v6307
        %v6340 = vpack.c.bf16 %v6310, %v6309
        %v6341 = vpack.c.bf16 %v6312, %v6311
        %v6342 = vpack.c.bf16 %v6314, %v6313
        %v6343 = vpack.c.bf16 %v6316, %v6315
        %v6344 = vpack.c.bf16 %v6318, %v6317
        %v6345 = vpack.c.bf16 %v6320, %v6319
        %v6346 = vpack.c.bf16 %v6322, %v6321
        %v6347 = vpack.c.bf16 %v6324, %v6323
        %v6348 = vpack.c.bf16 %v6326, %v6325
        %v6349 = vpack.c.bf16 %v6328, %v6327
        %v6350 = vpack.c.bf16 %v6330, %v6329
        %v6351 = vpack.c.bf16 %v6332, %v6331
        %v6352 = vpack.c.bf16 %v6334, %v6333
        %v6353 = vpack.c.bf16 %v6336, %v6335
        %v6354 = vpack.c.bf16 %v6338, %v6337
        %s6355 = scalar_lea.vmem [#allocation8], 16
        %v6356 = vld [vmem:[%s6355] sm:$0xf]
        %v6357 = vld [vmem:[%s6355 + $0x4] sm:$0xf]
        %v6358 = vld [vmem:[%s6355 + $0x8] sm:$0xf]
        %v6359 = vld [vmem:[%s6355 + $0xc] sm:$0xf]
        %v6364 = vunpack.c.l.b16 %v6356
        %v6365 = vunpack.c.l.b16 %v6357
        %v6366 = vunpack.c.l.b16 %v6358
        %v6367 = vunpack.c.l.b16 %v6359
        %v6368 = vpack.c.b16 %v6365, %v6364
        %v6369 = vpack.c.b16 %v6367, %v6366
        %v6373 = vsel %vm3275, %v6339, 0
        %v6376 = vsel %vm3275, %v6340, 0
        %v6379 = vsel %vm3275, %v6341, 0
        %v6382 = vsel %vm3275, %v6342, 0
        %v6385 = vsel %vm3275, %v6343, 0
        %v6388 = vsel %vm3275, %v6344, 0
        %v6391 = vsel %vm3275, %v6345, 0
        %v6394 = vsel %vm3275, %v6346, 0
        %v6397 = vsel %vm3275, %v6347, 0
        %v6400 = vsel %vm3275, %v6348, 0
        %v6403 = vsel %vm3275, %v6349, 0
        %v6406 = vsel %vm3275, %v6350, 0
        %v6409 = vsel %vm3275, %v6351, 0
        %v6412 = vsel %vm3275, %v6352, 0
        %v6415 = vsel %vm3275, %v6353, 0
        %v6418 = vsel %vm3275, %v6354, 0
        %6420 = vmatprep.subr.bf16.mxu0 0
        %6421 = vmatpush1.bf16.msra.mxu0 %v6368
        %6422 = vmatprep.subr.bf16.mxu0 0
        %6423 = vmatpush1.bf16.msra.mxu0 %v6369
        %6424 = vmatprep.subr.bf16.mxu0 0
        %6425 = vmatpush1.bf16.msra.mxu0 0
        %6426 = vmatprep.subr.bf16.mxu0 0
        %6427 = vmatpush1.bf16.msra.mxu0 0
        %6428 = vmatprep.subr.bf16.mxu0 0
        %6429 = vmatpush1.bf16.msra.mxu0 0
        %6430 = vmatprep.subr.bf16.mxu0 0
        %6431 = vmatpush1.bf16.msra.mxu0 0
        %6432 = vmatprep.subr.bf16.mxu0 0
        %6433 = vmatpush1.bf16.msra.mxu0 0
        %6434 = vmatprep.subr.bf16.mxu0 0
        %6435 = vmatpush1.bf16.msra.mxu0 0
        %6436 = vmatprep.subr.bf16.mxu0 0
        %6437 = vmatpush1.bf16.msra.mxu0 0
        %6438 = vmatprep.subr.bf16.mxu0 0
        %6439 = vmatpush1.bf16.msra.mxu0 0
        %6440 = vmatprep.subr.bf16.mxu0 0
        %6441 = vmatpush1.bf16.msra.mxu0 0
        %6442 = vmatprep.subr.bf16.mxu0 0
        %6443 = vmatpush1.bf16.msra.mxu0 0
        %6444 = vmatprep.subr.bf16.mxu0 0
        %6445 = vmatpush1.bf16.msra.mxu0 0
        %6446 = vmatprep.subr.bf16.mxu0 0
        %6447 = vmatpush1.bf16.msra.mxu0 0
        %6448 = vmatprep.subr.bf16.mxu0 0
        %6449 = vmatpush1.bf16.msra.mxu0 0
        %6450 = vmatprep.subr.bf16.mxu0 0
        %6451 = vmatpush1.bf16.msra.mxu0 0
        %6452 = vmatprep.mubr.bf16.mxu0 0
        %6453 = vmatmul.mubr.bf16.gmra.mrb[0].mxu0 %v6373
        %v6454 = vpop.f32.mrb[0].mxu0
        %v6455 = vadd.f32 0.0, %v6454
        %v6456 = vpop.f32.mrb[0].mxu0
        %v6457 = vpop.f32.mrb[0].mxu0
        %v6458 = vadd.f32 0.0, %v6457
        %v6459 = vpop.f32.mrb[0].mxu0
        %6460 = vmatprep.mubr.bf16.mxu0 0
        %6461 = vmatmul.mubr.bf16.gmra.mrb[0].mxu0 %v6376
        %v6462 = vpop.f32.mrb[0].mxu0
        %v6463 = vadd.f32 0.0, %v6462
        %v6464 = vpop.f32.mrb[0].mxu0
        %v6465 = vpop.f32.mrb[0].mxu0
        %v6466 = vadd.f32 0.0, %v6465
        %v6467 = vpop.f32.mrb[0].mxu0
        %6468 = vmatprep.mubr.bf16.mxu0 0
        %6469 = vmatmul.mubr.bf16.gmra.mrb[0].mxu0 %v6379
        %v6470 = vpop.f32.mrb[0].mxu0
        %v6471 = vadd.f32 0.0, %v6470
        %v6472 = vpop.f32.mrb[0].mxu0
        %v6473 = vpop.f32.mrb[0].mxu0
        %v6474 = vadd.f32 0.0, %v6473
        %v6475 = vpop.f32.mrb[0].mxu0
        %6476 = vmatprep.mubr.bf16.mxu0 0
        %6477 = vmatmul.mubr.bf16.gmra.mrb[0].mxu0 %v6382
        %v6478 = vpop.f32.mrb[0].mxu0
        %v6479 = vadd.f32 0.0, %v6478
        %v6480 = vpop.f32.mrb[0].mxu0
        %v6481 = vpop.f32.mrb[0].mxu0
        %v6482 = vadd.f32 0.0, %v6481
        %v6483 = vpop.f32.mrb[0].mxu0
        %6484 = vmatprep.mubr.bf16.mxu0 0
        %6485 = vmatmul.mubr.bf16.gmra.mrb[0].mxu0 %v6385
        %v6486 = vpop.f32.mrb[0].mxu0
        %v6487 = vadd.f32 0.0, %v6486
        %v6488 = vpop.f32.mrb[0].mxu0
        %v6489 = vpop.f32.mrb[0].mxu0
        %v6490 = vadd.f32 0.0, %v6489
        %v6491 = vpop.f32.mrb[0].mxu0
        %6492 = vmatprep.mubr.bf16.mxu0 0
        %6493 = vmatmul.mubr.bf16.gmra.mrb[0].mxu0 %v6388
        %v6494 = vpop.f32.mrb[0].mxu0
        %v6495 = vadd.f32 0.0, %v6494
        %v6496 = vpop.f32.mrb[0].mxu0
        %v6497 = vpop.f32.mrb[0].mxu0
        %v6498 = vadd.f32 0.0, %v6497
        %v6499 = vpop.f32.mrb[0].mxu0
        %6500 = vmatprep.mubr.bf16.mxu0 0
        %6501 = vmatmul.mubr.bf16.gmra.mrb[0].mxu0 %v6391
        %v6502 = vpop.f32.mrb[0].mxu0
        %v6503 = vadd.f32 0.0, %v6502
        %v6504 = vpop.f32.mrb[0].mxu0
        %v6505 = vpop.f32.mrb[0].mxu0
        %v6506 = vadd.f32 0.0, %v6505
        %v6507 = vpop.f32.mrb[0].mxu0
        %6508 = vmatprep.mubr.bf16.mxu0 0
        %6509 = vmatmul.mubr.bf16.gmra.mrb[0].mxu0 %v6394
        %v6510 = vpop.f32.mrb[0].mxu0
        %v6511 = vadd.f32 0.0, %v6510
        %v6512 = vpop.f32.mrb[0].mxu0
        %v6513 = vpop.f32.mrb[0].mxu0
        %v6514 = vadd.f32 0.0, %v6513
        %v6515 = vpop.f32.mrb[0].mxu0
        %6516 = vmatprep.mubr.bf16.mxu0 0
        %6517 = vmatmul.mubr.bf16.gmra.mrb[0].mxu0 %v6397
        %v6518 = vpop.f32.mrb[0].mxu0
        %v6519 = vadd.f32 0.0, %v6518
        %v6520 = vpop.f32.mrb[0].mxu0
        %v6521 = vpop.f32.mrb[0].mxu0
        %v6522 = vadd.f32 0.0, %v6521
        %v6523 = vpop.f32.mrb[0].mxu0
        %6524 = vmatprep.mubr.bf16.mxu0 0
        %6525 = vmatmul.mubr.bf16.gmra.mrb[0].mxu0 %v6400
        %v6526 = vpop.f32.mrb[0].mxu0
        %v6527 = vadd.f32 0.0, %v6526
        %v6528 = vpop.f32.mrb[0].mxu0
        %v6529 = vpop.f32.mrb[0].mxu0
        %v6530 = vadd.f32 0.0, %v6529
        %v6531 = vpop.f32.mrb[0].mxu0
        %6532 = vmatprep.mubr.bf16.mxu0 0
        %6533 = vmatmul.mubr.bf16.gmra.mrb[0].mxu0 %v6403
        %v6534 = vpop.f32.mrb[0].mxu0
        %v6535 = vadd.f32 0.0, %v6534
        %v6536 = vpop.f32.mrb[0].mxu0
        %v6537 = vpop.f32.mrb[0].mxu0
        %v6538 = vadd.f32 0.0, %v6537
        %v6539 = vpop.f32.mrb[0].mxu0
        %6540 = vmatprep.mubr.bf16.mxu0 0
        %6541 = vmatmul.mubr.bf16.gmra.mrb[0].mxu0 %v6406
        %v6542 = vpop.f32.mrb[0].mxu0
        %v6543 = vadd.f32 0.0, %v6542
        %v6544 = vpop.f32.mrb[0].mxu0
        %v6545 = vpop.f32.mrb[0].mxu0
        %v6546 = vadd.f32 0.0, %v6545
        %v6547 = vpop.f32.mrb[0].mxu0
        %6548 = vmatprep.mubr.bf16.mxu0 0
        %6549 = vmatmul.mubr.bf16.gmra.mrb[0].mxu0 %v6409
        %v6550 = vpop.f32.mrb[0].mxu0
        %v6551 = vadd.f32 0.0, %v6550
        %v6552 = vpop.f32.mrb[0].mxu0
        %v6553 = vpop.f32.mrb[0].mxu0
        %v6554 = vadd.f32 0.0, %v6553
        %v6555 = vpop.f32.mrb[0].mxu0
        %6556 = vmatprep.mubr.bf16.mxu0 0
        %6557 = vmatmul.mubr.bf16.gmra.mrb[0].mxu0 %v6412
        %v6558 = vpop.f32.mrb[0].mxu0
        %v6559 = vadd.f32 0.0, %v6558
        %v6560 = vpop.f32.mrb[0].mxu0
        %v6561 = vpop.f32.mrb[0].mxu0
        %v6562 = vadd.f32 0.0, %v6561
        %v6563 = vpop.f32.mrb[0].mxu0
        %6564 = vmatprep.mubr.bf16.mxu0 0
        %6565 = vmatmul.mubr.bf16.gmra.mrb[0].mxu0 %v6415
        %v6566 = vpop.f32.mrb[0].mxu0
        %v6567 = vadd.f32 0.0, %v6566
        %v6568 = vpop.f32.mrb[0].mxu0
        %v6569 = vpop.f32.mrb[0].mxu0
        %v6570 = vadd.f32 0.0, %v6569
        %v6571 = vpop.f32.mrb[0].mxu0
        %6572 = vmatprep.mubr.bf16.mxu0 0
        %6573 = vmatmul.mubr.bf16.gmra.mrb[0].mxu0 %v6418
        %v6574 = vpop.f32.mrb[0].mxu0
        %v6575 = vadd.f32 0.0, %v6574
        %v6576 = vpop.f32.mrb[0].mxu0
        %v6577 = vpop.f32.mrb[0].mxu0
        %v6578 = vadd.f32 0.0, %v6577
        %v6579 = vpop.f32.mrb[0].mxu0
        %6580 = vdwg.mxu0
        %v6585 = vunpack.c.l.b16 %v6303
        %v6586 = vunpack.c.l.b16 %v6304
        %v6587 = vunpack.c.l.b16 %v6305
        %v6588 = vunpack.c.l.b16 %v6306
        %v6589 = vpack.c.b16 %v6586, %v6585
        %v6590 = vpack.c.b16 %v6588, %v6587
        %v6594 = vsel %vm3275, %v6287, 0
        %v6597 = vsel %vm3275, %v6288, 0
        %v6600 = vsel %vm3275, %v6289, 0
        %v6603 = vsel %vm3275, %v6290, 0
        %v6606 = vsel %vm3275, %v6291, 0
        %v6609 = vsel %vm3275, %v6292, 0
        %v6612 = vsel %vm3275, %v6293, 0
        %v6615 = vsel %vm3275, %v6294, 0
        %v6618 = vsel %vm3275, %v6295, 0
        %v6621 = vsel %vm3275, %v6296, 0
        %v6624 = vsel %vm3275, %v6297, 0
        %v6627 = vsel %vm3275, %v6298, 0
        %v6630 = vsel %vm3275, %v6299, 0
        %v6633 = vsel %vm3275, %v6300, 0
        %v6636 = vsel %vm3275, %v6301, 0
        %v6639 = vsel %vm3275, %v6302, 0
        %6641 = vmatprep.subr.bf16.mxu0 0
        %6642 = vmatpush1.bf16.msra.mxu0 %v6589
        %6643 = vmatprep.subr.bf16.mxu0 0
        %6644 = vmatpush1.bf16.msra.mxu0 %v6590
        %6645 = vmatprep.subr.bf16.mxu0 0
        %6646 = vmatpush1.bf16.msra.mxu0 0
        %6647 = vmatprep.subr.bf16.mxu0 0
        %6648 = vmatpush1.bf16.msra.mxu0 0
        %6649 = vmatprep.subr.bf16.mxu0 0
        %6650 = vmatpush1.bf16.msra.mxu0 0
        %6651 = vmatprep.subr.bf16.mxu0 0
        %6652 = vmatpush1.bf16.msra.mxu0 0
        %6653 = vmatprep.subr.bf16.mxu0 0
        %6654 = vmatpush1.bf16.msra.mxu0 0
        %6655 = vmatprep.subr.bf16.mxu0 0
        %6656 = vmatpush1.bf16.msra.mxu0 0
        %6657 = vmatprep.subr.bf16.mxu0 0
        %6658 = vmatpush1.bf16.msra.mxu0 0
        %6659 = vmatprep.subr.bf16.mxu0 0
        %6660 = vmatpush1.bf16.msra.mxu0 0
        %6661 = vmatprep.subr.bf16.mxu0 0
        %6662 = vmatpush1.bf16.msra.mxu0 0
        %6663 = vmatprep.subr.bf16.mxu0 0
        %6664 = vmatpush1.bf16.msra.mxu0 0
        %6665 = vmatprep.subr.bf16.mxu0 0
        %6666 = vmatpush1.bf16.msra.mxu0 0
        %6667 = vmatprep.subr.bf16.mxu0 0
        %6668 = vmatpush1.bf16.msra.mxu0 0
        %6669 = vmatprep.subr.bf16.mxu0 0
        %6670 = vmatpush1.bf16.msra.mxu0 0
        %6671 = vmatprep.subr.bf16.mxu0 0
        %6672 = vmatpush1.bf16.msra.mxu0 0
        %6673 = vmatprep.mubr.bf16.mxu0 0
        %6674 = vmatmul.mubr.bf16.gmra.mrb[0].mxu0 %v6594
        %v6675 = vpop.f32.mrb[0].mxu0
        %v6676 = vadd.f32 %v6455, %v6675
        %v6677 = vpop.f32.mrb[0].mxu0
        %v6678 = vpop.f32.mrb[0].mxu0
        %v6679 = vadd.f32 %v6458, %v6678
        %v6680 = vpop.f32.mrb[0].mxu0
        %6681 = vmatprep.mubr.bf16.mxu0 0
        %6682 = vmatmul.mubr.bf16.gmra.mrb[0].mxu0 %v6597
        %v6683 = vpop.f32.mrb[0].mxu0
        %v6684 = vadd.f32 %v6463, %v6683
        %v6685 = vpop.f32.mrb[0].mxu0
        %v6686 = vpop.f32.mrb[0].mxu0
        %v6687 = vadd.f32 %v6466, %v6686
        %v6688 = vpop.f32.mrb[0].mxu0
        %6689 = vmatprep.mubr.bf16.mxu0 0
        %6690 = vmatmul.mubr.bf16.gmra.mrb[0].mxu0 %v6600
        %v6691 = vpop.f32.mrb[0].mxu0
        %v6692 = vadd.f32 %v6471, %v6691
        %v6693 = vpop.f32.mrb[0].mxu0
        %v6694 = vpop.f32.mrb[0].mxu0
        %v6695 = vadd.f32 %v6474, %v6694
        %v6696 = vpop.f32.mrb[0].mxu0
        %6697 = vmatprep.mubr.bf16.mxu0 0
        %6698 = vmatmul.mubr.bf16.gmra.mrb[0].mxu0 %v6603
        %v6699 = vpop.f32.mrb[0].mxu0
        %v6700 = vadd.f32 %v6479, %v6699
        %v6701 = vpop.f32.mrb[0].mxu0
        %v6702 = vpop.f32.mrb[0].mxu0
        %v6703 = vadd.f32 %v6482, %v6702
        %v6704 = vpop.f32.mrb[0].mxu0
        %6705 = vmatprep.mubr.bf16.mxu0 0
        %6706 = vmatmul.mubr.bf16.gmra.mrb[0].mxu0 %v6606
        %v6707 = vpop.f32.mrb[0].mxu0
        %v6708 = vadd.f32 %v6487, %v6707
        %v6709 = vpop.f32.mrb[0].mxu0
        %v6710 = vpop.f32.mrb[0].mxu0
        %v6711 = vadd.f32 %v6490, %v6710
        %v6712 = vpop.f32.mrb[0].mxu0
        %6713 = vmatprep.mubr.bf16.mxu0 0
        %6714 = vmatmul.mubr.bf16.gmra.mrb[0].mxu0 %v6609
        %v6715 = vpop.f32.mrb[0].mxu0
        %v6716 = vadd.f32 %v6495, %v6715
        %v6717 = vpop.f32.mrb[0].mxu0
        %v6718 = vpop.f32.mrb[0].mxu0
        %v6719 = vadd.f32 %v6498, %v6718
        %v6720 = vpop.f32.mrb[0].mxu0
        %6721 = vmatprep.mubr.bf16.mxu0 0
        %6722 = vmatmul.mubr.bf16.gmra.mrb[0].mxu0 %v6612
        %v6723 = vpop.f32.mrb[0].mxu0
        %v6724 = vadd.f32 %v6503, %v6723
        %v6725 = vpop.f32.mrb[0].mxu0
        %v6726 = vpop.f32.mrb[0].mxu0
        %v6727 = vadd.f32 %v6506, %v6726
        %v6728 = vpop.f32.mrb[0].mxu0
        %6729 = vmatprep.mubr.bf16.mxu0 0
        %6730 = vmatmul.mubr.bf16.gmra.mrb[0].mxu0 %v6615
        %v6731 = vpop.f32.mrb[0].mxu0
        %v6732 = vadd.f32 %v6511, %v6731
        %v6733 = vpop.f32.mrb[0].mxu0
        %v6734 = vpop.f32.mrb[0].mxu0
        %v6735 = vadd.f32 %v6514, %v6734
        %v6736 = vpop.f32.mrb[0].mxu0
        %6737 = vmatprep.mubr.bf16.mxu0 0
        %6738 = vmatmul.mubr.bf16.gmra.mrb[0].mxu0 %v6618
        %v6739 = vpop.f32.mrb[0].mxu0
        %v6740 = vadd.f32 %v6519, %v6739
        %v6741 = vpop.f32.mrb[0].mxu0
        %v6742 = vpop.f32.mrb[0].mxu0
        %v6743 = vadd.f32 %v6522, %v6742
        %v6744 = vpop.f32.mrb[0].mxu0
        %6745 = vmatprep.mubr.bf16.mxu0 0
        %6746 = vmatmul.mubr.bf16.gmra.mrb[0].mxu0 %v6621
        %v6747 = vpop.f32.mrb[0].mxu0
        %v6748 = vadd.f32 %v6527, %v6747
        %v6749 = vpop.f32.mrb[0].mxu0
        %v6750 = vpop.f32.mrb[0].mxu0
        %v6751 = vadd.f32 %v6530, %v6750
        %v6752 = vpop.f32.mrb[0].mxu0
        %6753 = vmatprep.mubr.bf16.mxu0 0
        %6754 = vmatmul.mubr.bf16.gmra.mrb[0].mxu0 %v6624
        %v6755 = vpop.f32.mrb[0].mxu0
        %v6756 = vadd.f32 %v6535, %v6755
        %v6757 = vpop.f32.mrb[0].mxu0
        %v6758 = vpop.f32.mrb[0].mxu0
        %v6759 = vadd.f32 %v6538, %v6758
        %v6760 = vpop.f32.mrb[0].mxu0
        %6761 = vmatprep.mubr.bf16.mxu0 0
        %6762 = vmatmul.mubr.bf16.gmra.mrb[0].mxu0 %v6627
        %v6763 = vpop.f32.mrb[0].mxu0
        %v6764 = vadd.f32 %v6543, %v6763
        %v6765 = vpop.f32.mrb[0].mxu0
        %v6766 = vpop.f32.mrb[0].mxu0
        %v6767 = vadd.f32 %v6546, %v6766
        %v6768 = vpop.f32.mrb[0].mxu0
        %6769 = vmatprep.mubr.bf16.mxu0 0
        %6770 = vmatmul.mubr.bf16.gmra.mrb[0].mxu0 %v6630
        %v6771 = vpop.f32.mrb[0].mxu0
        %v6772 = vadd.f32 %v6551, %v6771
        %v6773 = vpop.f32.mrb[0].mxu0
        %v6774 = vpop.f32.mrb[0].mxu0
        %v6775 = vadd.f32 %v6554, %v6774
        %v6776 = vpop.f32.mrb[0].mxu0
        %6777 = vmatprep.mubr.bf16.mxu0 0
        %6778 = vmatmul.mubr.bf16.gmra.mrb[0].mxu0 %v6633
        %v6779 = vpop.f32.mrb[0].mxu0
        %v6780 = vadd.f32 %v6559, %v6779
        %v6781 = vpop.f32.mrb[0].mxu0
        %v6782 = vpop.f32.mrb[0].mxu0
        %v6783 = vadd.f32 %v6562, %v6782
        %v6784 = vpop.f32.mrb[0].mxu0
        %6785 = vmatprep.mubr.bf16.mxu0 0
        %6786 = vmatmul.mubr.bf16.gmra.mrb[0].mxu0 %v6636
        %v6787 = vpop.f32.mrb[0].mxu0
        %v6788 = vadd.f32 %v6567, %v6787
        %v6789 = vpop.f32.mrb[0].mxu0
        %v6790 = vpop.f32.mrb[0].mxu0
        %v6791 = vadd.f32 %v6570, %v6790
        %v6792 = vpop.f32.mrb[0].mxu0
        %6793 = vmatprep.mubr.bf16.mxu0 0
        %6794 = vmatmul.mubr.bf16.gmra.mrb[0].mxu0 %v6639
        %v6795 = vpop.f32.mrb[0].mxu0
        %v6796 = vadd.f32 %v6575, %v6795
        %v6797 = vpop.f32.mrb[0].mxu0
        %v6798 = vpop.f32.mrb[0].mxu0
        %v6799 = vadd.f32 %v6578, %v6798
        %v6800 = vpop.f32.mrb[0].mxu0
        %6801 = vdwg.mxu0
        %v6802 = vld [vmem:[#allocation3 + $0x2] sm:$0xff]
        %v6803 = vld [vmem:[#allocation3 + $0xa] sm:$0xff]
        %v6804 = vld [vmem:[#allocation3 + $0x1a] sm:$0xff]
        %v6805 = vld [vmem:[#allocation3 + $0x22] sm:$0xff]
        %v6806 = vld [vmem:[#allocation3 + $0x32] sm:$0xff]
        %v6807 = vld [vmem:[#allocation3 + $0x3a] sm:$0xff]
        %v6808 = vld [vmem:[#allocation3 + $0x4a] sm:$0xff]
        %v6809 = vld [vmem:[#allocation3 + $0x52] sm:$0xff]
        %v6810 = vld [vmem:[#allocation3 + $0x62] sm:$0xff]
        %v6811 = vld [vmem:[#allocation3 + $0x6a] sm:$0xff]
        %v6812 = vld [vmem:[#allocation3 + $0x7a] sm:$0xff]
        %v6813 = vld [vmem:[#allocation3 + $0x82] sm:$0xff]
        %v6814 = vld [vmem:[#allocation3 + $0x92] sm:$0xff]
        %v6815 = vld [vmem:[#allocation3 + $0x9a] sm:$0xff]
        %v6816 = vld [vmem:[#allocation3 + $0xaa] sm:$0xff]
        %v6817 = vld [vmem:[#allocation3 + $0xb2] sm:$0xff]
        %v6818 = vld [vmem:[#allocation3 + $0xc2] sm:$0xff]
        %v6819 = vld [vmem:[#allocation3 + $0xca] sm:$0xff]
        %v6820 = vld [vmem:[#allocation3 + $0xda] sm:$0xff]
        %v6821 = vld [vmem:[#allocation3 + $0xe2] sm:$0xff]
        %v6822 = vld [vmem:[#allocation3 + $0xf2] sm:$0xff]
        %v6823 = vld [vmem:[#allocation3 + $0xfa] sm:$0xff]
        %v6824 = vld [vmem:[#allocation3 + $0x10a] sm:$0xff]
        %v6825 = vld [vmem:[#allocation3 + $0x112] sm:$0xff]
        %v6826 = vld [vmem:[#allocation3 + $0x122] sm:$0xff]
        %v6827 = vld [vmem:[#allocation3 + $0x12a] sm:$0xff]
        %v6828 = vld [vmem:[#allocation3 + $0x13a] sm:$0xff]
        %v6829 = vld [vmem:[#allocation3 + $0x142] sm:$0xff]
        %v6830 = vld [vmem:[#allocation3 + $0x152] sm:$0xff]
        %v6831 = vld [vmem:[#allocation3 + $0x15a] sm:$0xff]
        %v6832 = vld [vmem:[#allocation3 + $0x16a] sm:$0xff]
        %v6833 = vld [vmem:[#allocation3 + $0x172] sm:$0xff]
        %v6834 = vpack.c.bf16 %v6803, %v6802
        %v6835 = vpack.c.bf16 %v6805, %v6804
        %v6836 = vpack.c.bf16 %v6807, %v6806
        %v6837 = vpack.c.bf16 %v6809, %v6808
        %v6838 = vpack.c.bf16 %v6811, %v6810
        %v6839 = vpack.c.bf16 %v6813, %v6812
        %v6840 = vpack.c.bf16 %v6815, %v6814
        %v6841 = vpack.c.bf16 %v6817, %v6816
        %v6842 = vpack.c.bf16 %v6819, %v6818
        %v6843 = vpack.c.bf16 %v6821, %v6820
        %v6844 = vpack.c.bf16 %v6823, %v6822
        %v6845 = vpack.c.bf16 %v6825, %v6824
        %v6846 = vpack.c.bf16 %v6827, %v6826
        %v6847 = vpack.c.bf16 %v6829, %v6828
        %v6848 = vpack.c.bf16 %v6831, %v6830
        %v6849 = vpack.c.bf16 %v6833, %v6832
        %s6850 = scalar_lea.vmem [#allocation8], 32
        %v6851 = vld [vmem:[%s6850] sm:$0xf]
        %v6852 = vld [vmem:[%s6850 + $0x4] sm:$0xf]
        %v6853 = vld [vmem:[%s6850 + $0x8] sm:$0xf]
        %v6854 = vld [vmem:[%s6850 + $0xc] sm:$0xf]
        %v6859 = vunpack.c.l.b16 %v6851
        %v6860 = vunpack.c.l.b16 %v6852
        %v6861 = vunpack.c.l.b16 %v6853
        %v6862 = vunpack.c.l.b16 %v6854
        %v6863 = vpack.c.b16 %v6860, %v6859
        %v6864 = vpack.c.b16 %v6862, %v6861
        %v6868 = vsel %vm3275, %v6834, 0
        %v6871 = vsel %vm3275, %v6835, 0
        %v6874 = vsel %vm3275, %v6836, 0
        %v6877 = vsel %vm3275, %v6837, 0
        %v6880 = vsel %vm3275, %v6838, 0
        %v6883 = vsel %vm3275, %v6839, 0
        %v6886 = vsel %vm3275, %v6840, 0
        %v6889 = vsel %vm3275, %v6841, 0
        %v6892 = vsel %vm3275, %v6842, 0
        %v6895 = vsel %vm3275, %v6843, 0
        %v6898 = vsel %vm3275, %v6844, 0
        %v6901 = vsel %vm3275, %v6845, 0
        %v6904 = vsel %vm3275, %v6846, 0
        %v6907 = vsel %vm3275, %v6847, 0
        %v6910 = vsel %vm3275, %v6848, 0
        %v6913 = vsel %vm3275, %v6849, 0
        %6915 = vmatprep.subr.bf16.mxu0 0
        %6916 = vmatpush1.bf16.msra.mxu0 %v6863
        %6917 = vmatprep.subr.bf16.mxu0 0
        %6918 = vmatpush1.bf16.msra.mxu0 %v6864
        %6919 = vmatprep.subr.bf16.mxu0 0
        %6920 = vmatpush1.bf16.msra.mxu0 0
        %6921 = vmatprep.subr.bf16.mxu0 0
        %6922 = vmatpush1.bf16.msra.mxu0 0
        %6923 = vmatprep.subr.bf16.mxu0 0
        %6924 = vmatpush1.bf16.msra.mxu0 0
        %6925 = vmatprep.subr.bf16.mxu0 0
        %6926 = vmatpush1.bf16.msra.mxu0 0
        %6927 = vmatprep.subr.bf16.mxu0 0
        %6928 = vmatpush1.bf16.msra.mxu0 0
        %6929 = vmatprep.subr.bf16.mxu0 0
        %6930 = vmatpush1.bf16.msra.mxu0 0
        %6931 = vmatprep.subr.bf16.mxu0 0
        %6932 = vmatpush1.bf16.msra.mxu0 0
        %6933 = vmatprep.subr.bf16.mxu0 0
        %6934 = vmatpush1.bf16.msra.mxu0 0
        %6935 = vmatprep.subr.bf16.mxu0 0
        %6936 = vmatpush1.bf16.msra.mxu0 0
        %6937 = vmatprep.subr.bf16.mxu0 0
        %6938 = vmatpush1.bf16.msra.mxu0 0
        %6939 = vmatprep.subr.bf16.mxu0 0
        %6940 = vmatpush1.bf16.msra.mxu0 0
        %6941 = vmatprep.subr.bf16.mxu0 0
        %6942 = vmatpush1.bf16.msra.mxu0 0
        %6943 = vmatprep.subr.bf16.mxu0 0
        %6944 = vmatpush1.bf16.msra.mxu0 0
        %6945 = vmatprep.subr.bf16.mxu0 0
        %6946 = vmatpush1.bf16.msra.mxu0 0
        %6947 = vmatprep.mubr.bf16.mxu0 0
        %6948 = vmatmul.mubr.bf16.gmra.mrb[0].mxu0 %v6868
        %v6949 = vpop.f32.mrb[0].mxu0
        %v6950 = vadd.f32 0.0, %v6949
        %v6951 = vpop.f32.mrb[0].mxu0
        %v6952 = vpop.f32.mrb[0].mxu0
        %v6953 = vadd.f32 0.0, %v6952
        %v6954 = vpop.f32.mrb[0].mxu0
        %6955 = vmatprep.mubr.bf16.mxu0 0
        %6956 = vmatmul.mubr.bf16.gmra.mrb[0].mxu0 %v6871
        %v6957 = vpop.f32.mrb[0].mxu0
        %v6958 = vadd.f32 0.0, %v6957
        %v6959 = vpop.f32.mrb[0].mxu0
        %v6960 = vpop.f32.mrb[0].mxu0
        %v6961 = vadd.f32 0.0, %v6960
        %v6962 = vpop.f32.mrb[0].mxu0
        %6963 = vmatprep.mubr.bf16.mxu0 0
        %6964 = vmatmul.mubr.bf16.gmra.mrb[0].mxu0 %v6874
        %v6965 = vpop.f32.mrb[0].mxu0
        %v6966 = vadd.f32 0.0, %v6965
        %v6967 = vpop.f32.mrb[0].mxu0
        %v6968 = vpop.f32.mrb[0].mxu0
        %v6969 = vadd.f32 0.0, %v6968
        %v6970 = vpop.f32.mrb[0].mxu0
        %6971 = vmatprep.mubr.bf16.mxu0 0
        %6972 = vmatmul.mubr.bf16.gmra.mrb[0].mxu0 %v6877
        %v6973 = vpop.f32.mrb[0].mxu0
        %v6974 = vadd.f32 0.0, %v6973
        %v6975 = vpop.f32.mrb[0].mxu0
        %v6976 = vpop.f32.mrb[0].mxu0
        %v6977 = vadd.f32 0.0, %v6976
        %v6978 = vpop.f32.mrb[0].mxu0
        %6979 = vmatprep.mubr.bf16.mxu0 0
        %6980 = vmatmul.mubr.bf16.gmra.mrb[0].mxu0 %v6880
        %v6981 = vpop.f32.mrb[0].mxu0
        %v6982 = vadd.f32 0.0, %v6981
        %v6983 = vpop.f32.mrb[0].mxu0
        %v6984 = vpop.f32.mrb[0].mxu0
        %v6985 = vadd.f32 0.0, %v6984
        %v6986 = vpop.f32.mrb[0].mxu0
        %6987 = vmatprep.mubr.bf16.mxu0 0
        %6988 = vmatmul.mubr.bf16.gmra.mrb[0].mxu0 %v6883
        %v6989 = vpop.f32.mrb[0].mxu0
        %v6990 = vadd.f32 0.0, %v6989
        %v6991 = vpop.f32.mrb[0].mxu0
        %v6992 = vpop.f32.mrb[0].mxu0
        %v6993 = vadd.f32 0.0, %v6992
        %v6994 = vpop.f32.mrb[0].mxu0
        %6995 = vmatprep.mubr.bf16.mxu0 0
        %6996 = vmatmul.mubr.bf16.gmra.mrb[0].mxu0 %v6886
        %v6997 = vpop.f32.mrb[0].mxu0
        %v6998 = vadd.f32 0.0, %v6997
        %v6999 = vpop.f32.mrb[0].mxu0
        %v7000 = vpop.f32.mrb[0].mxu0
        %v7001 = vadd.f32 0.0, %v7000
        %v7002 = vpop.f32.mrb[0].mxu0
        %7003 = vmatprep.mubr.bf16.mxu0 0
        %7004 = vmatmul.mubr.bf16.gmra.mrb[0].mxu0 %v6889
        %v7005 = vpop.f32.mrb[0].mxu0
        %v7006 = vadd.f32 0.0, %v7005
        %v7007 = vpop.f32.mrb[0].mxu0
        %v7008 = vpop.f32.mrb[0].mxu0
        %v7009 = vadd.f32 0.0, %v7008
        %v7010 = vpop.f32.mrb[0].mxu0
        %7011 = vmatprep.mubr.bf16.mxu0 0
        %7012 = vmatmul.mubr.bf16.gmra.mrb[0].mxu0 %v6892
        %v7013 = vpop.f32.mrb[0].mxu0
        %v7014 = vadd.f32 0.0, %v7013
        %v7015 = vpop.f32.mrb[0].mxu0
        %v7016 = vpop.f32.mrb[0].mxu0
        %v7017 = vadd.f32 0.0, %v7016
        %v7018 = vpop.f32.mrb[0].mxu0
        %7019 = vmatprep.mubr.bf16.mxu0 0
        %7020 = vmatmul.mubr.bf16.gmra.mrb[0].mxu0 %v6895
        %v7021 = vpop.f32.mrb[0].mxu0
        %v7022 = vadd.f32 0.0, %v7021
        %v7023 = vpop.f32.mrb[0].mxu0
        %v7024 = vpop.f32.mrb[0].mxu0
        %v7025 = vadd.f32 0.0, %v7024
        %v7026 = vpop.f32.mrb[0].mxu0
        %7027 = vmatprep.mubr.bf16.mxu0 0
        %7028 = vmatmul.mubr.bf16.gmra.mrb[0].mxu0 %v6898
        %v7029 = vpop.f32.mrb[0].mxu0
        %v7030 = vadd.f32 0.0, %v7029
        %v7031 = vpop.f32.mrb[0].mxu0
        %v7032 = vpop.f32.mrb[0].mxu0
        %v7033 = vadd.f32 0.0, %v7032
        %v7034 = vpop.f32.mrb[0].mxu0
        %7035 = vmatprep.mubr.bf16.mxu0 0
        %7036 = vmatmul.mubr.bf16.gmra.mrb[0].mxu0 %v6901
        %v7037 = vpop.f32.mrb[0].mxu0
        %v7038 = vadd.f32 0.0, %v7037
        %v7039 = vpop.f32.mrb[0].mxu0
        %v7040 = vpop.f32.mrb[0].mxu0
        %v7041 = vadd.f32 0.0, %v7040
        %v7042 = vpop.f32.mrb[0].mxu0
        %7043 = vmatprep.mubr.bf16.mxu0 0
        %7044 = vmatmul.mubr.bf16.gmra.mrb[0].mxu0 %v6904
        %v7045 = vpop.f32.mrb[0].mxu0
        %v7046 = vadd.f32 0.0, %v7045
        %v7047 = vpop.f32.mrb[0].mxu0
        %v7048 = vpop.f32.mrb[0].mxu0
        %v7049 = vadd.f32 0.0, %v7048
        %v7050 = vpop.f32.mrb[0].mxu0
        %7051 = vmatprep.mubr.bf16.mxu0 0
        %7052 = vmatmul.mubr.bf16.gmra.mrb[0].mxu0 %v6907
        %v7053 = vpop.f32.mrb[0].mxu0
        %v7054 = vadd.f32 0.0, %v7053
        %v7055 = vpop.f32.mrb[0].mxu0
        %v7056 = vpop.f32.mrb[0].mxu0
        %v7057 = vadd.f32 0.0, %v7056
        %v7058 = vpop.f32.mrb[0].mxu0
        %7059 = vmatprep.mubr.bf16.mxu0 0
        %7060 = vmatmul.mubr.bf16.gmra.mrb[0].mxu0 %v6910
        %v7061 = vpop.f32.mrb[0].mxu0
        %v7062 = vadd.f32 0.0, %v7061
        %v7063 = vpop.f32.mrb[0].mxu0
        %v7064 = vpop.f32.mrb[0].mxu0
        %v7065 = vadd.f32 0.0, %v7064
        %v7066 = vpop.f32.mrb[0].mxu0
        %7067 = vmatprep.mubr.bf16.mxu0 0
        %7068 = vmatmul.mubr.bf16.gmra.mrb[0].mxu0 %v6913
        %v7069 = vpop.f32.mrb[0].mxu0
        %v7070 = vadd.f32 0.0, %v7069
        %v7071 = vpop.f32.mrb[0].mxu0
        %v7072 = vpop.f32.mrb[0].mxu0
        %v7073 = vadd.f32 0.0, %v7072
        %v7074 = vpop.f32.mrb[0].mxu0
        %7075 = vdwg.mxu0
        %v7076 = vadd.f32 %v6676, %v6950
        %v7077 = vadd.f32 %v6679, %v6953
        %v7078 = vadd.f32 %v6684, %v6958
        %v7079 = vadd.f32 %v6687, %v6961
        %v7080 = vadd.f32 %v6692, %v6966
        %v7081 = vadd.f32 %v6695, %v6969
        %v7082 = vadd.f32 %v6700, %v6974
        %v7083 = vadd.f32 %v6703, %v6977
        %v7084 = vadd.f32 %v6708, %v6982
        %v7085 = vadd.f32 %v6711, %v6985
        %v7086 = vadd.f32 %v6716, %v6990
        %v7087 = vadd.f32 %v6719, %v6993
        %v7088 = vadd.f32 %v6724, %v6998
        %v7089 = vadd.f32 %v6727, %v7001
        %v7090 = vadd.f32 %v6732, %v7006
        %v7091 = vadd.f32 %v6735, %v7009
        %v7092 = vadd.f32 %v6740, %v7014
        %v7093 = vadd.f32 %v6743, %v7017
        %v7094 = vadd.f32 %v6748, %v7022
        %v7095 = vadd.f32 %v6751, %v7025
        %v7096 = vadd.f32 %v6756, %v7030
        %v7097 = vadd.f32 %v6759, %v7033
        %v7098 = vadd.f32 %v6764, %v7038
        %v7099 = vadd.f32 %v6767, %v7041
        %v7100 = vadd.f32 %v6772, %v7046
        %v7101 = vadd.f32 %v6775, %v7049
        %v7102 = vadd.f32 %v6780, %v7054
        %v7103 = vadd.f32 %v6783, %v7057
        %v7104 = vadd.f32 %v6788, %v7062
        %v7105 = vadd.f32 %v6791, %v7065
        %v7106 = vadd.f32 %v6796, %v7070
        %v7107 = vadd.f32 %v6799, %v7073
        %v7108 = vld [vmem:[%s3274] sm:$0xff]
        %v7109 = vld [vmem:[%s3274 + $0x8] sm:$0xff]
        %v7110 = vld [vmem:[%s3274 + $0x18] sm:$0xff]
        %v7111 = vld [vmem:[%s3274 + $0x20] sm:$0xff]
        %v7112 = vld [vmem:[%s3274 + $0x30] sm:$0xff]
        %v7113 = vld [vmem:[%s3274 + $0x38] sm:$0xff]
        %v7114 = vld [vmem:[%s3274 + $0x48] sm:$0xff]
        %v7115 = vld [vmem:[%s3274 + $0x50] sm:$0xff]
        %v7116 = vld [vmem:[%s3274 + $0x60] sm:$0xff]
        %v7117 = vld [vmem:[%s3274 + $0x68] sm:$0xff]
        %v7118 = vld [vmem:[%s3274 + $0x78] sm:$0xff]
        %v7119 = vld [vmem:[%s3274 + $0x80] sm:$0xff]
        %v7120 = vld [vmem:[%s3274 + $0x90] sm:$0xff]
        %v7121 = vld [vmem:[%s3274 + $0x98] sm:$0xff]
        %v7122 = vld [vmem:[%s3274 + $0xa8] sm:$0xff]
        %v7123 = vld [vmem:[%s3274 + $0xb0] sm:$0xff]
        %v7124 = vld [vmem:[%s3274 + $0xc0] sm:$0xff]
        %v7125 = vld [vmem:[%s3274 + $0xc8] sm:$0xff]
        %v7126 = vld [vmem:[%s3274 + $0xd8] sm:$0xff]
        %v7127 = vld [vmem:[%s3274 + $0xe0] sm:$0xff]
        %v7128 = vld [vmem:[%s3274 + $0xf0] sm:$0xff]
        %v7129 = vld [vmem:[%s3274 + $0xf8] sm:$0xff]
        %v7130 = vld [vmem:[%s3274 + $0x108] sm:$0xff]
        %v7131 = vld [vmem:[%s3274 + $0x110] sm:$0xff]
        %v7132 = vld [vmem:[%s3274 + $0x120] sm:$0xff]
        %v7133 = vld [vmem:[%s3274 + $0x128] sm:$0xff]
        %v7134 = vld [vmem:[%s3274 + $0x138] sm:$0xff]
        %v7135 = vld [vmem:[%s3274 + $0x140] sm:$0xff]
        %v7136 = vld [vmem:[%s3274 + $0x150] sm:$0xff]
        %v7137 = vld [vmem:[%s3274 + $0x158] sm:$0xff]
        %v7138 = vld [vmem:[%s3274 + $0x168] sm:$0xff]
        %v7139 = vld [vmem:[%s3274 + $0x170] sm:$0xff]
        %v7140 = vpack.c.bf16 %v7109, %v7108
        %v7141 = vpack.c.bf16 %v7111, %v7110
        %v7142 = vpack.c.bf16 %v7113, %v7112
        %v7143 = vpack.c.bf16 %v7115, %v7114
        %v7144 = vpack.c.bf16 %v7117, %v7116
        %v7145 = vpack.c.bf16 %v7119, %v7118
        %v7146 = vpack.c.bf16 %v7121, %v7120
        %v7147 = vpack.c.bf16 %v7123, %v7122
        %v7148 = vpack.c.bf16 %v7125, %v7124
        %v7149 = vpack.c.bf16 %v7127, %v7126
        %v7150 = vpack.c.bf16 %v7129, %v7128
        %v7151 = vpack.c.bf16 %v7131, %v7130
        %v7152 = vpack.c.bf16 %v7133, %v7132
        %v7153 = vpack.c.bf16 %v7135, %v7134
        %v7154 = vpack.c.bf16 %v7137, %v7136
        %v7155 = vpack.c.bf16 %v7139, %v7138
        %s7156 = scalar_lea.vmem [#allocation8], 48
        %v7157 = vld [vmem:[%s7156] sm:$0xf]
        %v7158 = vld [vmem:[%s7156 + $0x4] sm:$0xf]
        %v7159 = vld [vmem:[%s7156 + $0x8] sm:$0xf]
        %v7160 = vld [vmem:[%s7156 + $0xc] sm:$0xf]
        %v7165 = vunpack.c.l.b16 %v7157
        %v7166 = vunpack.c.l.b16 %v7158
        %v7167 = vunpack.c.l.b16 %v7159
        %v7168 = vunpack.c.l.b16 %v7160
        %v7169 = vpack.c.b16 %v7166, %v7165
        %v7170 = vpack.c.b16 %v7168, %v7167
        %v7174 = vsel %vm3275, %v7140, 0
        %v7177 = vsel %vm3275, %v7141, 0
        %v7180 = vsel %vm3275, %v7142, 0
        %v7183 = vsel %vm3275, %v7143, 0
        %v7186 = vsel %vm3275, %v7144, 0
        %v7189 = vsel %vm3275, %v7145, 0
        %v7192 = vsel %vm3275, %v7146, 0
        %v7195 = vsel %vm3275, %v7147, 0
        %v7198 = vsel %vm3275, %v7148, 0
        %v7201 = vsel %vm3275, %v7149, 0
        %v7204 = vsel %vm3275, %v7150, 0
        %v7207 = vsel %vm3275, %v7151, 0
        %v7210 = vsel %vm3275, %v7152, 0
        %v7213 = vsel %vm3275, %v7153, 0
        %v7216 = vsel %vm3275, %v7154, 0
        %v7219 = vsel %vm3275, %v7155, 0
        %7221 = vmatprep.subr.bf16.mxu0 0
        %7222 = vmatpush1.bf16.msra.mxu0 %v7169
        %7223 = vmatprep.subr.bf16.mxu0 0
        %7224 = vmatpush1.bf16.msra.mxu0 %v7170
        %7225 = vmatprep.subr.bf16.mxu0 0
        %7226 = vmatpush1.bf16.msra.mxu0 0
        %7227 = vmatprep.subr.bf16.mxu0 0
        %7228 = vmatpush1.bf16.msra.mxu0 0
        %7229 = vmatprep.subr.bf16.mxu0 0
        %7230 = vmatpush1.bf16.msra.mxu0 0
        %7231 = vmatprep.subr.bf16.mxu0 0
        %7232 = vmatpush1.bf16.msra.mxu0 0
        %7233 = vmatprep.subr.bf16.mxu0 0
        %7234 = vmatpush1.bf16.msra.mxu0 0
        %7235 = vmatprep.subr.bf16.mxu0 0
        %7236 = vmatpush1.bf16.msra.mxu0 0
        %7237 = vmatprep.subr.bf16.mxu0 0
        %7238 = vmatpush1.bf16.msra.mxu0 0
        %7239 = vmatprep.subr.bf16.mxu0 0
        %7240 = vmatpush1.bf16.msra.mxu0 0
        %7241 = vmatprep.subr.bf16.mxu0 0
        %7242 = vmatpush1.bf16.msra.mxu0 0
        %7243 = vmatprep.subr.bf16.mxu0 0
        %7244 = vmatpush1.bf16.msra.mxu0 0
        %7245 = vmatprep.subr.bf16.mxu0 0
        %7246 = vmatpush1.bf16.msra.mxu0 0
        %7247 = vmatprep.subr.bf16.mxu0 0
        %7248 = vmatpush1.bf16.msra.mxu0 0
        %7249 = vmatprep.subr.bf16.mxu0 0
        %7250 = vmatpush1.bf16.msra.mxu0 0
        %7251 = vmatprep.subr.bf16.mxu0 0
        %7252 = vmatpush1.bf16.msra.mxu0 0
        %7253 = vmatprep.mubr.bf16.mxu0 0
        %7254 = vmatmul.mubr.bf16.gmra.mrb[0].mxu0 %v7174
        %v7255 = vpop.f32.mrb[0].mxu0
        %v7256 = vadd.f32 0.0, %v7255
        %v7257 = vpop.f32.mrb[0].mxu0
        %v7258 = vpop.f32.mrb[0].mxu0
        %v7259 = vadd.f32 0.0, %v7258
        %v7260 = vpop.f32.mrb[0].mxu0
        %7261 = vmatprep.mubr.bf16.mxu0 0
        %7262 = vmatmul.mubr.bf16.gmra.mrb[0].mxu0 %v7177
        %v7263 = vpop.f32.mrb[0].mxu0
        %v7264 = vadd.f32 0.0, %v7263
        %v7265 = vpop.f32.mrb[0].mxu0
        %v7266 = vpop.f32.mrb[0].mxu0
        %v7267 = vadd.f32 0.0, %v7266
        %v7268 = vpop.f32.mrb[0].mxu0
        %7269 = vmatprep.mubr.bf16.mxu0 0
        %7270 = vmatmul.mubr.bf16.gmra.mrb[0].mxu0 %v7180
        %v7271 = vpop.f32.mrb[0].mxu0
        %v7272 = vadd.f32 0.0, %v7271
        %v7273 = vpop.f32.mrb[0].mxu0
        %v7274 = vpop.f32.mrb[0].mxu0
        %v7275 = vadd.f32 0.0, %v7274
        %v7276 = vpop.f32.mrb[0].mxu0
        %7277 = vmatprep.mubr.bf16.mxu0 0
        %7278 = vmatmul.mubr.bf16.gmra.mrb[0].mxu0 %v7183
        %v7279 = vpop.f32.mrb[0].mxu0
        %v7280 = vadd.f32 0.0, %v7279
        %v7281 = vpop.f32.mrb[0].mxu0
        %v7282 = vpop.f32.mrb[0].mxu0
        %v7283 = vadd.f32 0.0, %v7282
        %v7284 = vpop.f32.mrb[0].mxu0
        %7285 = vmatprep.mubr.bf16.mxu0 0
        %7286 = vmatmul.mubr.bf16.gmra.mrb[0].mxu0 %v7186
        %v7287 = vpop.f32.mrb[0].mxu0
        %v7288 = vadd.f32 0.0, %v7287
        %v7289 = vpop.f32.mrb[0].mxu0
        %v7290 = vpop.f32.mrb[0].mxu0
        %v7291 = vadd.f32 0.0, %v7290
        %v7292 = vpop.f32.mrb[0].mxu0
        %7293 = vmatprep.mubr.bf16.mxu0 0
        %7294 = vmatmul.mubr.bf16.gmra.mrb[0].mxu0 %v7189
        %v7295 = vpop.f32.mrb[0].mxu0
        %v7296 = vadd.f32 0.0, %v7295
        %v7297 = vpop.f32.mrb[0].mxu0
        %v7298 = vpop.f32.mrb[0].mxu0
        %v7299 = vadd.f32 0.0, %v7298
        %v7300 = vpop.f32.mrb[0].mxu0
        %7301 = vmatprep.mubr.bf16.mxu0 0
        %7302 = vmatmul.mubr.bf16.gmra.mrb[0].mxu0 %v7192
        %v7303 = vpop.f32.mrb[0].mxu0
        %v7304 = vadd.f32 0.0, %v7303
        %v7305 = vpop.f32.mrb[0].mxu0
        %v7306 = vpop.f32.mrb[0].mxu0
        %v7307 = vadd.f32 0.0, %v7306
        %v7308 = vpop.f32.mrb[0].mxu0
        %7309 = vmatprep.mubr.bf16.mxu0 0
        %7310 = vmatmul.mubr.bf16.gmra.mrb[0].mxu0 %v7195
        %v7311 = vpop.f32.mrb[0].mxu0
        %v7312 = vadd.f32 0.0, %v7311
        %v7313 = vpop.f32.mrb[0].mxu0
        %v7314 = vpop.f32.mrb[0].mxu0
        %v7315 = vadd.f32 0.0, %v7314
        %v7316 = vpop.f32.mrb[0].mxu0
        %7317 = vmatprep.mubr.bf16.mxu0 0
        %7318 = vmatmul.mubr.bf16.gmra.mrb[0].mxu0 %v7198
        %v7319 = vpop.f32.mrb[0].mxu0
        %v7320 = vadd.f32 0.0, %v7319
        %v7321 = vpop.f32.mrb[0].mxu0
        %v7322 = vpop.f32.mrb[0].mxu0
        %v7323 = vadd.f32 0.0, %v7322
        %v7324 = vpop.f32.mrb[0].mxu0
        %7325 = vmatprep.mubr.bf16.mxu0 0
        %7326 = vmatmul.mubr.bf16.gmra.mrb[0].mxu0 %v7201
        %v7327 = vpop.f32.mrb[0].mxu0
        %v7328 = vadd.f32 0.0, %v7327
        %v7329 = vpop.f32.mrb[0].mxu0
        %v7330 = vpop.f32.mrb[0].mxu0
        %v7331 = vadd.f32 0.0, %v7330
        %v7332 = vpop.f32.mrb[0].mxu0
        %7333 = vmatprep.mubr.bf16.mxu0 0
        %7334 = vmatmul.mubr.bf16.gmra.mrb[0].mxu0 %v7204
        %v7335 = vpop.f32.mrb[0].mxu0
        %v7336 = vadd.f32 0.0, %v7335
        %v7337 = vpop.f32.mrb[0].mxu0
        %v7338 = vpop.f32.mrb[0].mxu0
        %v7339 = vadd.f32 0.0, %v7338
        %v7340 = vpop.f32.mrb[0].mxu0
        %7341 = vmatprep.mubr.bf16.mxu0 0
        %7342 = vmatmul.mubr.bf16.gmra.mrb[0].mxu0 %v7207
        %v7343 = vpop.f32.mrb[0].mxu0
        %v7344 = vadd.f32 0.0, %v7343
        %v7345 = vpop.f32.mrb[0].mxu0
        %v7346 = vpop.f32.mrb[0].mxu0
        %v7347 = vadd.f32 0.0, %v7346
        %v7348 = vpop.f32.mrb[0].mxu0
        %7349 = vmatprep.mubr.bf16.mxu0 0
        %7350 = vmatmul.mubr.bf16.gmra.mrb[0].mxu0 %v7210
        %v7351 = vpop.f32.mrb[0].mxu0
        %v7352 = vadd.f32 0.0, %v7351
        %v7353 = vpop.f32.mrb[0].mxu0
        %v7354 = vpop.f32.mrb[0].mxu0
        %v7355 = vadd.f32 0.0, %v7354
        %v7356 = vpop.f32.mrb[0].mxu0
        %7357 = vmatprep.mubr.bf16.mxu0 0
        %7358 = vmatmul.mubr.bf16.gmra.mrb[0].mxu0 %v7213
        %v7359 = vpop.f32.mrb[0].mxu0
        %v7360 = vadd.f32 0.0, %v7359
        %v7361 = vpop.f32.mrb[0].mxu0
        %v7362 = vpop.f32.mrb[0].mxu0
        %v7363 = vadd.f32 0.0, %v7362
        %v7364 = vpop.f32.mrb[0].mxu0
        %7365 = vmatprep.mubr.bf16.mxu0 0
        %7366 = vmatmul.mubr.bf16.gmra.mrb[0].mxu0 %v7216
        %v7367 = vpop.f32.mrb[0].mxu0
        %v7368 = vadd.f32 0.0, %v7367
        %v7369 = vpop.f32.mrb[0].mxu0
        %v7370 = vpop.f32.mrb[0].mxu0
        %v7371 = vadd.f32 0.0, %v7370
        %v7372 = vpop.f32.mrb[0].mxu0
        %7373 = vmatprep.mubr.bf16.mxu0 0
        %7374 = vmatmul.mubr.bf16.gmra.mrb[0].mxu0 %v7219
        %v7375 = vpop.f32.mrb[0].mxu0
        %v7376 = vadd.f32 0.0, %v7375
        %v7377 = vpop.f32.mrb[0].mxu0
        %v7378 = vpop.f32.mrb[0].mxu0
        %v7379 = vadd.f32 0.0, %v7378
        %v7380 = vpop.f32.mrb[0].mxu0
        %7381 = vdwg.mxu0
        %v7382 = vadd.f32 %v7076, %v7256
        %v7383 = vadd.f32 %v7077, %v7259
        %v7384 = vadd.f32 %v7078, %v7264
        %v7385 = vadd.f32 %v7079, %v7267
        %v7386 = vadd.f32 %v7080, %v7272
        %v7387 = vadd.f32 %v7081, %v7275
        %v7388 = vadd.f32 %v7082, %v7280
        %v7389 = vadd.f32 %v7083, %v7283
        %v7390 = vadd.f32 %v7084, %v7288
        %v7391 = vadd.f32 %v7085, %v7291
        %v7392 = vadd.f32 %v7086, %v7296
        %v7393 = vadd.f32 %v7087, %v7299
        %v7394 = vadd.f32 %v7088, %v7304
        %v7395 = vadd.f32 %v7089, %v7307
        %v7396 = vadd.f32 %v7090, %v7312
        %v7397 = vadd.f32 %v7091, %v7315
        %v7398 = vadd.f32 %v7092, %v7320
        %v7399 = vadd.f32 %v7093, %v7323
        %v7400 = vadd.f32 %v7094, %v7328
        %v7401 = vadd.f32 %v7095, %v7331
        %v7402 = vadd.f32 %v7096, %v7336
        %v7403 = vadd.f32 %v7097, %v7339
        %v7404 = vadd.f32 %v7098, %v7344
        %v7405 = vadd.f32 %v7099, %v7347
        %v7406 = vadd.f32 %v7100, %v7352
        %v7407 = vadd.f32 %v7101, %v7355
        %v7408 = vadd.f32 %v7102, %v7360
        %v7409 = vadd.f32 %v7103, %v7363
        %v7410 = vadd.f32 %v7104, %v7368
        %v7411 = vadd.f32 %v7105, %v7371
        %v7412 = vadd.f32 %v7106, %v7376
        %v7413 = vadd.f32 %v7107, %v7379
        %v7414 = vld [vmem:[%s3274 + $0x1] sm:$0xff]
        %v7415 = vld [vmem:[%s3274 + $0x9] sm:$0xff]
        %v7416 = vld [vmem:[%s3274 + $0x19] sm:$0xff]
        %v7417 = vld [vmem:[%s3274 + $0x21] sm:$0xff]
        %v7418 = vld [vmem:[%s3274 + $0x31] sm:$0xff]
        %v7419 = vld [vmem:[%s3274 + $0x39] sm:$0xff]
        %v7420 = vld [vmem:[%s3274 + $0x49] sm:$0xff]
        %v7421 = vld [vmem:[%s3274 + $0x51] sm:$0xff]
        %v7422 = vld [vmem:[%s3274 + $0x61] sm:$0xff]
        %v7423 = vld [vmem:[%s3274 + $0x69] sm:$0xff]
        %v7424 = vld [vmem:[%s3274 + $0x79] sm:$0xff]
        %v7425 = vld [vmem:[%s3274 + $0x81] sm:$0xff]
        %v7426 = vld [vmem:[%s3274 + $0x91] sm:$0xff]
        %v7427 = vld [vmem:[%s3274 + $0x99] sm:$0xff]
        %v7428 = vld [vmem:[%s3274 + $0xa9] sm:$0xff]
        %v7429 = vld [vmem:[%s3274 + $0xb1] sm:$0xff]
        %v7430 = vld [vmem:[%s3274 + $0xc1] sm:$0xff]
        %v7431 = vld [vmem:[%s3274 + $0xc9] sm:$0xff]
        %v7432 = vld [vmem:[%s3274 + $0xd9] sm:$0xff]
        %v7433 = vld [vmem:[%s3274 + $0xe1] sm:$0xff]
        %v7434 = vld [vmem:[%s3274 + $0xf1] sm:$0xff]
        %v7435 = vld [vmem:[%s3274 + $0xf9] sm:$0xff]
        %v7436 = vld [vmem:[%s3274 + $0x109] sm:$0xff]
        %v7437 = vld [vmem:[%s3274 + $0x111] sm:$0xff]
        %v7438 = vld [vmem:[%s3274 + $0x121] sm:$0xff]
        %v7439 = vld [vmem:[%s3274 + $0x129] sm:$0xff]
        %v7440 = vld [vmem:[%s3274 + $0x139] sm:$0xff]
        %v7441 = vld [vmem:[%s3274 + $0x141] sm:$0xff]
        %v7442 = vld [vmem:[%s3274 + $0x151] sm:$0xff]
        %v7443 = vld [vmem:[%s3274 + $0x159] sm:$0xff]
        %v7444 = vld [vmem:[%s3274 + $0x169] sm:$0xff]
        %v7445 = vld [vmem:[%s3274 + $0x171] sm:$0xff]
        %v7446 = vpack.c.bf16 %v7415, %v7414
        %v7447 = vpack.c.bf16 %v7417, %v7416
        %v7448 = vpack.c.bf16 %v7419, %v7418
        %v7449 = vpack.c.bf16 %v7421, %v7420
        %v7450 = vpack.c.bf16 %v7423, %v7422
        %v7451 = vpack.c.bf16 %v7425, %v7424
        %v7452 = vpack.c.bf16 %v7427, %v7426
        %v7453 = vpack.c.bf16 %v7429, %v7428
        %v7454 = vpack.c.bf16 %v7431, %v7430
        %v7455 = vpack.c.bf16 %v7433, %v7432
        %v7456 = vpack.c.bf16 %v7435, %v7434
        %v7457 = vpack.c.bf16 %v7437, %v7436
        %v7458 = vpack.c.bf16 %v7439, %v7438
        %v7459 = vpack.c.bf16 %v7441, %v7440
        %v7460 = vpack.c.bf16 %v7443, %v7442
        %v7461 = vpack.c.bf16 %v7445, %v7444
        %s7462 = scalar_lea.vmem [#allocation8], 64
        %v7463 = vld [vmem:[%s7462] sm:$0xf]
        %v7464 = vld [vmem:[%s7462 + $0x4] sm:$0xf]
        %v7465 = vld [vmem:[%s7462 + $0x8] sm:$0xf]
        %v7466 = vld [vmem:[%s7462 + $0xc] sm:$0xf]
        %v7471 = vunpack.c.l.b16 %v7463
        %v7472 = vunpack.c.l.b16 %v7464
        %v7473 = vunpack.c.l.b16 %v7465
        %v7474 = vunpack.c.l.b16 %v7466
        %v7475 = vpack.c.b16 %v7472, %v7471
        %v7476 = vpack.c.b16 %v7474, %v7473
        %v7480 = vsel %vm3275, %v7446, 0
        %v7483 = vsel %vm3275, %v7447, 0
        %v7486 = vsel %vm3275, %v7448, 0
        %v7489 = vsel %vm3275, %v7449, 0
        %v7492 = vsel %vm3275, %v7450, 0
        %v7495 = vsel %vm3275, %v7451, 0
        %v7498 = vsel %vm3275, %v7452, 0
        %v7501 = vsel %vm3275, %v7453, 0
        %v7504 = vsel %vm3275, %v7454, 0
        %v7507 = vsel %vm3275, %v7455, 0
        %v7510 = vsel %vm3275, %v7456, 0
        %v7513 = vsel %vm3275, %v7457, 0
        %v7516 = vsel %vm3275, %v7458, 0
        %v7519 = vsel %vm3275, %v7459, 0
        %v7522 = vsel %vm3275, %v7460, 0
        %v7525 = vsel %vm3275, %v7461, 0
        %7527 = vmatprep.subr.bf16.mxu0 0
        %7528 = vmatpush1.bf16.msra.mxu0 %v7475
        %7529 = vmatprep.subr.bf16.mxu0 0
        %7530 = vmatpush1.bf16.msra.mxu0 %v7476
        %7531 = vmatprep.subr.bf16.mxu0 0
        %7532 = vmatpush1.bf16.msra.mxu0 0
        %7533 = vmatprep.subr.bf16.mxu0 0
        %7534 = vmatpush1.bf16.msra.mxu0 0
        %7535 = vmatprep.subr.bf16.mxu0 0
        %7536 = vmatpush1.bf16.msra.mxu0 0
        %7537 = vmatprep.subr.bf16.mxu0 0
        %7538 = vmatpush1.bf16.msra.mxu0 0
        %7539 = vmatprep.subr.bf16.mxu0 0
        %7540 = vmatpush1.bf16.msra.mxu0 0
        %7541 = vmatprep.subr.bf16.mxu0 0
        %7542 = vmatpush1.bf16.msra.mxu0 0
        %7543 = vmatprep.subr.bf16.mxu0 0
        %7544 = vmatpush1.bf16.msra.mxu0 0
        %7545 = vmatprep.subr.bf16.mxu0 0
        %7546 = vmatpush1.bf16.msra.mxu0 0
        %7547 = vmatprep.subr.bf16.mxu0 0
        %7548 = vmatpush1.bf16.msra.mxu0 0
        %7549 = vmatprep.subr.bf16.mxu0 0
        %7550 = vmatpush1.bf16.msra.mxu0 0
        %7551 = vmatprep.subr.bf16.mxu0 0
        %7552 = vmatpush1.bf16.msra.mxu0 0
        %7553 = vmatprep.subr.bf16.mxu0 0
        %7554 = vmatpush1.bf16.msra.mxu0 0
        %7555 = vmatprep.subr.bf16.mxu0 0
        %7556 = vmatpush1.bf16.msra.mxu0 0
        %7557 = vmatprep.subr.bf16.mxu0 0
        %7558 = vmatpush1.bf16.msra.mxu0 0
        %7559 = vmatprep.mubr.bf16.mxu0 0
        %7560 = vmatmul.mubr.bf16.gmra.mrb[0].mxu0 %v7480
        %v7561 = vpop.f32.mrb[0].mxu0
        %v7562 = vadd.f32 0.0, %v7561
        %v7563 = vpop.f32.mrb[0].mxu0
        %v7564 = vpop.f32.mrb[0].mxu0
        %v7565 = vadd.f32 0.0, %v7564
        %v7566 = vpop.f32.mrb[0].mxu0
        %7567 = vmatprep.mubr.bf16.mxu0 0
        %7568 = vmatmul.mubr.bf16.gmra.mrb[0].mxu0 %v7483
        %v7569 = vpop.f32.mrb[0].mxu0
        %v7570 = vadd.f32 0.0, %v7569
        %v7571 = vpop.f32.mrb[0].mxu0
        %v7572 = vpop.f32.mrb[0].mxu0
        %v7573 = vadd.f32 0.0, %v7572
        %v7574 = vpop.f32.mrb[0].mxu0
        %7575 = vmatprep.mubr.bf16.mxu0 0
        %7576 = vmatmul.mubr.bf16.gmra.mrb[0].mxu0 %v7486
        %v7577 = vpop.f32.mrb[0].mxu0
        %v7578 = vadd.f32 0.0, %v7577
        %v7579 = vpop.f32.mrb[0].mxu0
        %v7580 = vpop.f32.mrb[0].mxu0
        %v7581 = vadd.f32 0.0, %v7580
        %v7582 = vpop.f32.mrb[0].mxu0
        %7583 = vmatprep.mubr.bf16.mxu0 0
        %7584 = vmatmul.mubr.bf16.gmra.mrb[0].mxu0 %v7489
        %v7585 = vpop.f32.mrb[0].mxu0
        %v7586 = vadd.f32 0.0, %v7585
        %v7587 = vpop.f32.mrb[0].mxu0
        %v7588 = vpop.f32.mrb[0].mxu0
        %v7589 = vadd.f32 0.0, %v7588
        %v7590 = vpop.f32.mrb[0].mxu0
        %7591 = vmatprep.mubr.bf16.mxu0 0
        %7592 = vmatmul.mubr.bf16.gmra.mrb[0].mxu0 %v7492
        %v7593 = vpop.f32.mrb[0].mxu0
        %v7594 = vadd.f32 0.0, %v7593
        %v7595 = vpop.f32.mrb[0].mxu0
        %v7596 = vpop.f32.mrb[0].mxu0
        %v7597 = vadd.f32 0.0, %v7596
        %v7598 = vpop.f32.mrb[0].mxu0
        %7599 = vmatprep.mubr.bf16.mxu0 0
        %7600 = vmatmul.mubr.bf16.gmra.mrb[0].mxu0 %v7495
        %v7601 = vpop.f32.mrb[0].mxu0
        %v7602 = vadd.f32 0.0, %v7601
        %v7603 = vpop.f32.mrb[0].mxu0
        %v7604 = vpop.f32.mrb[0].mxu0
        %v7605 = vadd.f32 0.0, %v7604
        %v7606 = vpop.f32.mrb[0].mxu0
        %7607 = vmatprep.mubr.bf16.mxu0 0
        %7608 = vmatmul.mubr.bf16.gmra.mrb[0].mxu0 %v7498
        %v7609 = vpop.f32.mrb[0].mxu0
        %v7610 = vadd.f32 0.0, %v7609
        %v7611 = vpop.f32.mrb[0].mxu0
        %v7612 = vpop.f32.mrb[0].mxu0
        %v7613 = vadd.f32 0.0, %v7612
        %v7614 = vpop.f32.mrb[0].mxu0
        %7615 = vmatprep.mubr.bf16.mxu0 0
        %7616 = vmatmul.mubr.bf16.gmra.mrb[0].mxu0 %v7501
        %v7617 = vpop.f32.mrb[0].mxu0
        %v7618 = vadd.f32 0.0, %v7617
        %v7619 = vpop.f32.mrb[0].mxu0
        %v7620 = vpop.f32.mrb[0].mxu0
        %v7621 = vadd.f32 0.0, %v7620
        %v7622 = vpop.f32.mrb[0].mxu0
        %7623 = vmatprep.mubr.bf16.mxu0 0
        %7624 = vmatmul.mubr.bf16.gmra.mrb[0].mxu0 %v7504
        %v7625 = vpop.f32.mrb[0].mxu0
        %v7626 = vadd.f32 0.0, %v7625
        %v7627 = vpop.f32.mrb[0].mxu0
        %v7628 = vpop.f32.mrb[0].mxu0
        %v7629 = vadd.f32 0.0, %v7628
        %v7630 = vpop.f32.mrb[0].mxu0
        %7631 = vmatprep.mubr.bf16.mxu0 0
        %7632 = vmatmul.mubr.bf16.gmra.mrb[0].mxu0 %v7507
        %v7633 = vpop.f32.mrb[0].mxu0
        %v7634 = vadd.f32 0.0, %v7633
        %v7635 = vpop.f32.mrb[0].mxu0
        %v7636 = vpop.f32.mrb[0].mxu0
        %v7637 = vadd.f32 0.0, %v7636
        %v7638 = vpop.f32.mrb[0].mxu0
        %7639 = vmatprep.mubr.bf16.mxu0 0
        %7640 = vmatmul.mubr.bf16.gmra.mrb[0].mxu0 %v7510
        %v7641 = vpop.f32.mrb[0].mxu0
        %v7642 = vadd.f32 0.0, %v7641
        %v7643 = vpop.f32.mrb[0].mxu0
        %v7644 = vpop.f32.mrb[0].mxu0
        %v7645 = vadd.f32 0.0, %v7644
        %v7646 = vpop.f32.mrb[0].mxu0
        %7647 = vmatprep.mubr.bf16.mxu0 0
        %7648 = vmatmul.mubr.bf16.gmra.mrb[0].mxu0 %v7513
        %v7649 = vpop.f32.mrb[0].mxu0
        %v7650 = vadd.f32 0.0, %v7649
        %v7651 = vpop.f32.mrb[0].mxu0
        %v7652 = vpop.f32.mrb[0].mxu0
        %v7653 = vadd.f32 0.0, %v7652
        %v7654 = vpop.f32.mrb[0].mxu0
        %7655 = vmatprep.mubr.bf16.mxu0 0
        %7656 = vmatmul.mubr.bf16.gmra.mrb[0].mxu0 %v7516
        %v7657 = vpop.f32.mrb[0].mxu0
        %v7658 = vadd.f32 0.0, %v7657
        %v7659 = vpop.f32.mrb[0].mxu0
        %v7660 = vpop.f32.mrb[0].mxu0
        %v7661 = vadd.f32 0.0, %v7660
        %v7662 = vpop.f32.mrb[0].mxu0
        %7663 = vmatprep.mubr.bf16.mxu0 0
        %7664 = vmatmul.mubr.bf16.gmra.mrb[0].mxu0 %v7519
        %v7665 = vpop.f32.mrb[0].mxu0
        %v7666 = vadd.f32 0.0, %v7665
        %v7667 = vpop.f32.mrb[0].mxu0
        %v7668 = vpop.f32.mrb[0].mxu0
        %v7669 = vadd.f32 0.0, %v7668
        %v7670 = vpop.f32.mrb[0].mxu0
        %7671 = vmatprep.mubr.bf16.mxu0 0
        %7672 = vmatmul.mubr.bf16.gmra.mrb[0].mxu0 %v7522
        %v7673 = vpop.f32.mrb[0].mxu0
        %v7674 = vadd.f32 0.0, %v7673
        %v7675 = vpop.f32.mrb[0].mxu0
        %v7676 = vpop.f32.mrb[0].mxu0
        %v7677 = vadd.f32 0.0, %v7676
        %v7678 = vpop.f32.mrb[0].mxu0
        %7679 = vmatprep.mubr.bf16.mxu0 0
        %7680 = vmatmul.mubr.bf16.gmra.mrb[0].mxu0 %v7525
        %v7681 = vpop.f32.mrb[0].mxu0
        %v7682 = vadd.f32 0.0, %v7681
        %v7683 = vpop.f32.mrb[0].mxu0
        %v7684 = vpop.f32.mrb[0].mxu0
        %v7685 = vadd.f32 0.0, %v7684
        %v7686 = vpop.f32.mrb[0].mxu0
        %7687 = vdwg.mxu0
        %v7688 = vadd.f32 %v7382, %v7562
        %v7689 = vadd.f32 %v7383, %v7565
        %v7690 = vadd.f32 %v7384, %v7570
        %v7691 = vadd.f32 %v7385, %v7573
        %v7692 = vadd.f32 %v7386, %v7578
        %v7693 = vadd.f32 %v7387, %v7581
        %v7694 = vadd.f32 %v7388, %v7586
        %v7695 = vadd.f32 %v7389, %v7589
        %v7696 = vadd.f32 %v7390, %v7594
        %v7697 = vadd.f32 %v7391, %v7597
        %v7698 = vadd.f32 %v7392, %v7602
        %v7699 = vadd.f32 %v7393, %v7605
        %v7700 = vadd.f32 %v7394, %v7610
        %v7701 = vadd.f32 %v7395, %v7613
        %v7702 = vadd.f32 %v7396, %v7618
        %v7703 = vadd.f32 %v7397, %v7621
        %v7704 = vadd.f32 %v7398, %v7626
        %v7705 = vadd.f32 %v7399, %v7629
        %v7706 = vadd.f32 %v7400, %v7634
        %v7707 = vadd.f32 %v7401, %v7637
        %v7708 = vadd.f32 %v7402, %v7642
        %v7709 = vadd.f32 %v7403, %v7645
        %v7710 = vadd.f32 %v7404, %v7650
        %v7711 = vadd.f32 %v7405, %v7653
        %v7712 = vadd.f32 %v7406, %v7658
        %v7713 = vadd.f32 %v7407, %v7661
        %v7714 = vadd.f32 %v7408, %v7666
        %v7715 = vadd.f32 %v7409, %v7669
        %v7716 = vadd.f32 %v7410, %v7674
        %v7717 = vadd.f32 %v7411, %v7677
        %v7718 = vadd.f32 %v7412, %v7682
        %v7719 = vadd.f32 %v7413, %v7685
        %v7720 = vld [vmem:[%s3274 + $0x2] sm:$0xff]
        %v7721 = vld [vmem:[%s3274 + $0xa] sm:$0xff]
        %v7722 = vld [vmem:[%s3274 + $0x1a] sm:$0xff]
        %v7723 = vld [vmem:[%s3274 + $0x22] sm:$0xff]
        %v7724 = vld [vmem:[%s3274 + $0x32] sm:$0xff]
        %v7725 = vld [vmem:[%s3274 + $0x3a] sm:$0xff]
        %v7726 = vld [vmem:[%s3274 + $0x4a] sm:$0xff]
        %v7727 = vld [vmem:[%s3274 + $0x52] sm:$0xff]
        %v7728 = vld [vmem:[%s3274 + $0x62] sm:$0xff]
        %v7729 = vld [vmem:[%s3274 + $0x6a] sm:$0xff]
        %v7730 = vld [vmem:[%s3274 + $0x7a] sm:$0xff]
        %v7731 = vld [vmem:[%s3274 + $0x82] sm:$0xff]
        %v7732 = vld [vmem:[%s3274 + $0x92] sm:$0xff]
        %v7733 = vld [vmem:[%s3274 + $0x9a] sm:$0xff]
        %v7734 = vld [vmem:[%s3274 + $0xaa] sm:$0xff]
        %v7735 = vld [vmem:[%s3274 + $0xb2] sm:$0xff]
        %v7736 = vld [vmem:[%s3274 + $0xc2] sm:$0xff]
        %v7737 = vld [vmem:[%s3274 + $0xca] sm:$0xff]
        %v7738 = vld [vmem:[%s3274 + $0xda] sm:$0xff]
        %v7739 = vld [vmem:[%s3274 + $0xe2] sm:$0xff]
        %v7740 = vld [vmem:[%s3274 + $0xf2] sm:$0xff]
        %v7741 = vld [vmem:[%s3274 + $0xfa] sm:$0xff]
        %v7742 = vld [vmem:[%s3274 + $0x10a] sm:$0xff]
        %v7743 = vld [vmem:[%s3274 + $0x112] sm:$0xff]
        %v7744 = vld [vmem:[%s3274 + $0x122] sm:$0xff]
        %v7745 = vld [vmem:[%s3274 + $0x12a] sm:$0xff]
        %v7746 = vld [vmem:[%s3274 + $0x13a] sm:$0xff]
        %v7747 = vld [vmem:[%s3274 + $0x142] sm:$0xff]
        %v7748 = vld [vmem:[%s3274 + $0x152] sm:$0xff]
        %v7749 = vld [vmem:[%s3274 + $0x15a] sm:$0xff]
        %v7750 = vld [vmem:[%s3274 + $0x16a] sm:$0xff]
        %v7751 = vld [vmem:[%s3274 + $0x172] sm:$0xff]
        %v7752 = vpack.c.bf16 %v7721, %v7720
        %v7753 = vpack.c.bf16 %v7723, %v7722
        %v7754 = vpack.c.bf16 %v7725, %v7724
        %v7755 = vpack.c.bf16 %v7727, %v7726
        %v7756 = vpack.c.bf16 %v7729, %v7728
        %v7757 = vpack.c.bf16 %v7731, %v7730
        %v7758 = vpack.c.bf16 %v7733, %v7732
        %v7759 = vpack.c.bf16 %v7735, %v7734
        %v7760 = vpack.c.bf16 %v7737, %v7736
        %v7761 = vpack.c.bf16 %v7739, %v7738
        %v7762 = vpack.c.bf16 %v7741, %v7740
        %v7763 = vpack.c.bf16 %v7743, %v7742
        %v7764 = vpack.c.bf16 %v7745, %v7744
        %v7765 = vpack.c.bf16 %v7747, %v7746
        %v7766 = vpack.c.bf16 %v7749, %v7748
        %v7767 = vpack.c.bf16 %v7751, %v7750
        %s7768 = scalar_lea.vmem [#allocation8], 80
        %v7769 = vld [vmem:[%s7768] sm:$0xf]
        %v7770 = vld [vmem:[%s7768 + $0x4] sm:$0xf]
        %v7771 = vld [vmem:[%s7768 + $0x8] sm:$0xf]
        %v7772 = vld [vmem:[%s7768 + $0xc] sm:$0xf]
        %v7777 = vunpack.c.l.b16 %v7769
        %v7778 = vunpack.c.l.b16 %v7770
        %v7779 = vunpack.c.l.b16 %v7771
        %v7780 = vunpack.c.l.b16 %v7772
        %v7781 = vpack.c.b16 %v7778, %v7777
        %v7782 = vpack.c.b16 %v7780, %v7779
        %v7786 = vsel %vm3275, %v7752, 0
        %v7789 = vsel %vm3275, %v7753, 0
        %v7792 = vsel %vm3275, %v7754, 0
        %v7795 = vsel %vm3275, %v7755, 0
        %v7798 = vsel %vm3275, %v7756, 0
        %v7801 = vsel %vm3275, %v7757, 0
        %v7804 = vsel %vm3275, %v7758, 0
        %v7807 = vsel %vm3275, %v7759, 0
        %v7810 = vsel %vm3275, %v7760, 0
        %v7813 = vsel %vm3275, %v7761, 0
        %v7816 = vsel %vm3275, %v7762, 0
        %v7819 = vsel %vm3275, %v7763, 0
        %v7822 = vsel %vm3275, %v7764, 0
        %v7825 = vsel %vm3275, %v7765, 0
        %v7828 = vsel %vm3275, %v7766, 0
        %v7831 = vsel %vm3275, %v7767, 0
        %7833 = vmatprep.subr.bf16.mxu0 0
        %7834 = vmatpush1.bf16.msra.mxu0 %v7781
        %7835 = vmatprep.subr.bf16.mxu0 0
        %7836 = vmatpush1.bf16.msra.mxu0 %v7782
        %7837 = vmatprep.subr.bf16.mxu0 0
        %7838 = vmatpush1.bf16.msra.mxu0 0
        %7839 = vmatprep.subr.bf16.mxu0 0
        %7840 = vmatpush1.bf16.msra.mxu0 0
        %7841 = vmatprep.subr.bf16.mxu0 0
        %7842 = vmatpush1.bf16.msra.mxu0 0
        %7843 = vmatprep.subr.bf16.mxu0 0
        %7844 = vmatpush1.bf16.msra.mxu0 0
        %7845 = vmatprep.subr.bf16.mxu0 0
        %7846 = vmatpush1.bf16.msra.mxu0 0
        %7847 = vmatprep.subr.bf16.mxu0 0
        %7848 = vmatpush1.bf16.msra.mxu0 0
        %7849 = vmatprep.subr.bf16.mxu0 0
        %7850 = vmatpush1.bf16.msra.mxu0 0
        %7851 = vmatprep.subr.bf16.mxu0 0
        %7852 = vmatpush1.bf16.msra.mxu0 0
        %7853 = vmatprep.subr.bf16.mxu0 0
        %7854 = vmatpush1.bf16.msra.mxu0 0
        %7855 = vmatprep.subr.bf16.mxu0 0
        %7856 = vmatpush1.bf16.msra.mxu0 0
        %7857 = vmatprep.subr.bf16.mxu0 0
        %7858 = vmatpush1.bf16.msra.mxu0 0
        %7859 = vmatprep.subr.bf16.mxu0 0
        %7860 = vmatpush1.bf16.msra.mxu0 0
        %7861 = vmatprep.subr.bf16.mxu0 0
        %7862 = vmatpush1.bf16.msra.mxu0 0
        %7863 = vmatprep.subr.bf16.mxu0 0
        %7864 = vmatpush1.bf16.msra.mxu0 0
        %7865 = vmatprep.mubr.bf16.mxu0 0
        %7866 = vmatmul.mubr.bf16.gmra.mrb[0].mxu0 %v7786
        %v7867 = vpop.f32.mrb[0].mxu0
        %v7868 = vadd.f32 0.0, %v7867
        %v7869 = vpop.f32.mrb[0].mxu0
        %v7870 = vpop.f32.mrb[0].mxu0
        %v7871 = vadd.f32 0.0, %v7870
        %v7872 = vpop.f32.mrb[0].mxu0
        %7873 = vmatprep.mubr.bf16.mxu0 0
        %7874 = vmatmul.mubr.bf16.gmra.mrb[0].mxu0 %v7789
        %v7875 = vpop.f32.mrb[0].mxu0
        %v7876 = vadd.f32 0.0, %v7875
        %v7877 = vpop.f32.mrb[0].mxu0
        %v7878 = vpop.f32.mrb[0].mxu0
        %v7879 = vadd.f32 0.0, %v7878
        %v7880 = vpop.f32.mrb[0].mxu0
        %7881 = vmatprep.mubr.bf16.mxu0 0
        %7882 = vmatmul.mubr.bf16.gmra.mrb[0].mxu0 %v7792
        %v7883 = vpop.f32.mrb[0].mxu0
        %v7884 = vadd.f32 0.0, %v7883
        %v7885 = vpop.f32.mrb[0].mxu0
        %v7886 = vpop.f32.mrb[0].mxu0
        %v7887 = vadd.f32 0.0, %v7886
        %v7888 = vpop.f32.mrb[0].mxu0
        %7889 = vmatprep.mubr.bf16.mxu0 0
        %7890 = vmatmul.mubr.bf16.gmra.mrb[0].mxu0 %v7795
        %v7891 = vpop.f32.mrb[0].mxu0
        %v7892 = vadd.f32 0.0, %v7891
        %v7893 = vpop.f32.mrb[0].mxu0
        %v7894 = vpop.f32.mrb[0].mxu0
        %v7895 = vadd.f32 0.0, %v7894
        %v7896 = vpop.f32.mrb[0].mxu0
        %7897 = vmatprep.mubr.bf16.mxu0 0
        %7898 = vmatmul.mubr.bf16.gmra.mrb[0].mxu0 %v7798
        %v7899 = vpop.f32.mrb[0].mxu0
        %v7900 = vadd.f32 0.0, %v7899
        %v7901 = vpop.f32.mrb[0].mxu0
        %v7902 = vpop.f32.mrb[0].mxu0
        %v7903 = vadd.f32 0.0, %v7902
        %v7904 = vpop.f32.mrb[0].mxu0
        %7905 = vmatprep.mubr.bf16.mxu0 0
        %7906 = vmatmul.mubr.bf16.gmra.mrb[0].mxu0 %v7801
        %v7907 = vpop.f32.mrb[0].mxu0
        %v7908 = vadd.f32 0.0, %v7907
        %v7909 = vpop.f32.mrb[0].mxu0
        %v7910 = vpop.f32.mrb[0].mxu0
        %v7911 = vadd.f32 0.0, %v7910
        %v7912 = vpop.f32.mrb[0].mxu0
        %7913 = vmatprep.mubr.bf16.mxu0 0
        %7914 = vmatmul.mubr.bf16.gmra.mrb[0].mxu0 %v7804
        %v7915 = vpop.f32.mrb[0].mxu0
        %v7916 = vadd.f32 0.0, %v7915
        %v7917 = vpop.f32.mrb[0].mxu0
        %v7918 = vpop.f32.mrb[0].mxu0
        %v7919 = vadd.f32 0.0, %v7918
        %v7920 = vpop.f32.mrb[0].mxu0
        %7921 = vmatprep.mubr.bf16.mxu0 0
        %7922 = vmatmul.mubr.bf16.gmra.mrb[0].mxu0 %v7807
        %v7923 = vpop.f32.mrb[0].mxu0
        %v7924 = vadd.f32 0.0, %v7923
        %v7925 = vpop.f32.mrb[0].mxu0
        %v7926 = vpop.f32.mrb[0].mxu0
        %v7927 = vadd.f32 0.0, %v7926
        %v7928 = vpop.f32.mrb[0].mxu0
        %7929 = vmatprep.mubr.bf16.mxu0 0
        %7930 = vmatmul.mubr.bf16.gmra.mrb[0].mxu0 %v7810
        %v7931 = vpop.f32.mrb[0].mxu0
        %v7932 = vadd.f32 0.0, %v7931
        %v7933 = vpop.f32.mrb[0].mxu0
        %v7934 = vpop.f32.mrb[0].mxu0
        %v7935 = vadd.f32 0.0, %v7934
        %v7936 = vpop.f32.mrb[0].mxu0
        %7937 = vmatprep.mubr.bf16.mxu0 0
        %7938 = vmatmul.mubr.bf16.gmra.mrb[0].mxu0 %v7813
        %v7939 = vpop.f32.mrb[0].mxu0
        %v7940 = vadd.f32 0.0, %v7939
        %v7941 = vpop.f32.mrb[0].mxu0
        %v7942 = vpop.f32.mrb[0].mxu0
        %v7943 = vadd.f32 0.0, %v7942
        %v7944 = vpop.f32.mrb[0].mxu0
        %7945 = vmatprep.mubr.bf16.mxu0 0
        %7946 = vmatmul.mubr.bf16.gmra.mrb[0].mxu0 %v7816
        %v7947 = vpop.f32.mrb[0].mxu0
        %v7948 = vadd.f32 0.0, %v7947
        %v7949 = vpop.f32.mrb[0].mxu0
        %v7950 = vpop.f32.mrb[0].mxu0
        %v7951 = vadd.f32 0.0, %v7950
        %v7952 = vpop.f32.mrb[0].mxu0
        %7953 = vmatprep.mubr.bf16.mxu0 0
        %7954 = vmatmul.mubr.bf16.gmra.mrb[0].mxu0 %v7819
        %v7955 = vpop.f32.mrb[0].mxu0
        %v7956 = vadd.f32 0.0, %v7955
        %v7957 = vpop.f32.mrb[0].mxu0
        %v7958 = vpop.f32.mrb[0].mxu0
        %v7959 = vadd.f32 0.0, %v7958
        %v7960 = vpop.f32.mrb[0].mxu0
        %7961 = vmatprep.mubr.bf16.mxu0 0
        %7962 = vmatmul.mubr.bf16.gmra.mrb[0].mxu0 %v7822
        %v7963 = vpop.f32.mrb[0].mxu0
        %v7964 = vadd.f32 0.0, %v7963
        %v7965 = vpop.f32.mrb[0].mxu0
        %v7966 = vpop.f32.mrb[0].mxu0
        %v7967 = vadd.f32 0.0, %v7966
        %v7968 = vpop.f32.mrb[0].mxu0
        %7969 = vmatprep.mubr.bf16.mxu0 0
        %7970 = vmatmul.mubr.bf16.gmra.mrb[0].mxu0 %v7825
        %v7971 = vpop.f32.mrb[0].mxu0
        %v7972 = vadd.f32 0.0, %v7971
        %v7973 = vpop.f32.mrb[0].mxu0
        %v7974 = vpop.f32.mrb[0].mxu0
        %v7975 = vadd.f32 0.0, %v7974
        %v7976 = vpop.f32.mrb[0].mxu0
        %7977 = vmatprep.mubr.bf16.mxu0 0
        %7978 = vmatmul.mubr.bf16.gmra.mrb[0].mxu0 %v7828
        %v7979 = vpop.f32.mrb[0].mxu0
        %v7980 = vadd.f32 0.0, %v7979
        %v7981 = vpop.f32.mrb[0].mxu0
        %v7982 = vpop.f32.mrb[0].mxu0
        %v7983 = vadd.f32 0.0, %v7982
        %v7984 = vpop.f32.mrb[0].mxu0
        %7985 = vmatprep.mubr.bf16.mxu0 0
        %7986 = vmatmul.mubr.bf16.gmra.mrb[0].mxu0 %v7831
        %v7987 = vpop.f32.mrb[0].mxu0
        %v7988 = vadd.f32 0.0, %v7987
        %v7989 = vpop.f32.mrb[0].mxu0
        %v7990 = vpop.f32.mrb[0].mxu0
        %v7991 = vadd.f32 0.0, %v7990
        %v7992 = vpop.f32.mrb[0].mxu0
        %7993 = vdwg.mxu0
        %v7994 = vadd.f32 %v7688, %v7868
        %v7995 = vadd.f32 %v7689, %v7871
        %v7996 = vadd.f32 %v7690, %v7876
        %v7997 = vadd.f32 %v7691, %v7879
        %v7998 = vadd.f32 %v7692, %v7884
        %v7999 = vadd.f32 %v7693, %v7887
        %v8000 = vadd.f32 %v7694, %v7892
        %v8001 = vadd.f32 %v7695, %v7895
        %v8002 = vadd.f32 %v7696, %v7900
        %v8003 = vadd.f32 %v7697, %v7903
        %v8004 = vadd.f32 %v7698, %v7908
        %v8005 = vadd.f32 %v7699, %v7911
        %v8006 = vadd.f32 %v7700, %v7916
        %v8007 = vadd.f32 %v7701, %v7919
        %v8008 = vadd.f32 %v7702, %v7924
        %v8009 = vadd.f32 %v7703, %v7927
        %v8010 = vadd.f32 %v7704, %v7932
        %v8011 = vadd.f32 %v7705, %v7935
        %v8012 = vadd.f32 %v7706, %v7940
        %v8013 = vadd.f32 %v7707, %v7943
        %v8014 = vadd.f32 %v7708, %v7948
        %v8015 = vadd.f32 %v7709, %v7951
        %v8016 = vadd.f32 %v7710, %v7956
        %v8017 = vadd.f32 %v7711, %v7959
        %v8018 = vadd.f32 %v7712, %v7964
        %v8019 = vadd.f32 %v7713, %v7967
        %v8020 = vadd.f32 %v7714, %v7972
        %v8021 = vadd.f32 %v7715, %v7975
        %v8022 = vadd.f32 %v7716, %v7980
        %v8023 = vadd.f32 %v7717, %v7983
        %v8024 = vadd.f32 %v7718, %v7988
        %v8025 = vadd.f32 %v7719, %v7991
        %v8026 = vld [vmem:[%s5157] sm:$0xff]
        %v8027 = vld [vmem:[%s5157 + $0x8] sm:$0xff]
        %v8028 = vld [vmem:[%s5157 + $0x18] sm:$0xff]
        %v8029 = vld [vmem:[%s5157 + $0x20] sm:$0xff]
        %v8030 = vld [vmem:[%s5157 + $0x30] sm:$0xff]
        %v8031 = vld [vmem:[%s5157 + $0x38] sm:$0xff]
        %v8032 = vld [vmem:[%s5157 + $0x48] sm:$0xff]
        %v8033 = vld [vmem:[%s5157 + $0x50] sm:$0xff]
        %v8034 = vld [vmem:[%s5157 + $0x60] sm:$0xff]
        %v8035 = vld [vmem:[%s5157 + $0x68] sm:$0xff]
        %v8036 = vld [vmem:[%s5157 + $0x78] sm:$0xff]
        %v8037 = vld [vmem:[%s5157 + $0x80] sm:$0xff]
        %v8038 = vld [vmem:[%s5157 + $0x90] sm:$0xff]
        %v8039 = vld [vmem:[%s5157 + $0x98] sm:$0xff]
        %v8040 = vld [vmem:[%s5157 + $0xa8] sm:$0xff]
        %v8041 = vld [vmem:[%s5157 + $0xb0] sm:$0xff]
        %v8042 = vld [vmem:[%s5157 + $0xc0] sm:$0xff]
        %v8043 = vld [vmem:[%s5157 + $0xc8] sm:$0xff]
        %v8044 = vld [vmem:[%s5157 + $0xd8] sm:$0xff]
        %v8045 = vld [vmem:[%s5157 + $0xe0] sm:$0xff]
        %v8046 = vld [vmem:[%s5157 + $0xf0] sm:$0xff]
        %v8047 = vld [vmem:[%s5157 + $0xf8] sm:$0xff]
        %v8048 = vld [vmem:[%s5157 + $0x108] sm:$0xff]
        %v8049 = vld [vmem:[%s5157 + $0x110] sm:$0xff]
        %v8050 = vld [vmem:[%s5157 + $0x120] sm:$0xff]
        %v8051 = vld [vmem:[%s5157 + $0x128] sm:$0xff]
        %v8052 = vld [vmem:[%s5157 + $0x138] sm:$0xff]
        %v8053 = vld [vmem:[%s5157 + $0x140] sm:$0xff]
        %v8054 = vld [vmem:[%s5157 + $0x150] sm:$0xff]
        %v8055 = vld [vmem:[%s5157 + $0x158] sm:$0xff]
        %v8056 = vld [vmem:[%s5157 + $0x168] sm:$0xff]
        %v8057 = vld [vmem:[%s5157 + $0x170] sm:$0xff]
        %v8058 = vpack.c.bf16 %v8027, %v8026
        %v8059 = vpack.c.bf16 %v8029, %v8028
        %v8060 = vpack.c.bf16 %v8031, %v8030
        %v8061 = vpack.c.bf16 %v8033, %v8032
        %v8062 = vpack.c.bf16 %v8035, %v8034
        %v8063 = vpack.c.bf16 %v8037, %v8036
        %v8064 = vpack.c.bf16 %v8039, %v8038
        %v8065 = vpack.c.bf16 %v8041, %v8040
        %v8066 = vpack.c.bf16 %v8043, %v8042
        %v8067 = vpack.c.bf16 %v8045, %v8044
        %v8068 = vpack.c.bf16 %v8047, %v8046
        %v8069 = vpack.c.bf16 %v8049, %v8048
        %v8070 = vpack.c.bf16 %v8051, %v8050
        %v8071 = vpack.c.bf16 %v8053, %v8052
        %v8072 = vpack.c.bf16 %v8055, %v8054
        %v8073 = vpack.c.bf16 %v8057, %v8056
        %s8074 = scalar_lea.vmem [#allocation8], 96
        %v8075 = vld [vmem:[%s8074] sm:$0xf]
        %v8076 = vld [vmem:[%s8074 + $0x4] sm:$0xf]
        %v8077 = vld [vmem:[%s8074 + $0x8] sm:$0xf]
        %v8078 = vld [vmem:[%s8074 + $0xc] sm:$0xf]
        %v8083 = vunpack.c.l.b16 %v8075
        %v8084 = vunpack.c.l.b16 %v8076
        %v8085 = vunpack.c.l.b16 %v8077
        %v8086 = vunpack.c.l.b16 %v8078
        %v8087 = vpack.c.b16 %v8084, %v8083
        %v8088 = vpack.c.b16 %v8086, %v8085
        %v8092 = vsel %vm3275, %v8058, 0
        %v8095 = vsel %vm3275, %v8059, 0
        %v8098 = vsel %vm3275, %v8060, 0
        %v8101 = vsel %vm3275, %v8061, 0
        %v8104 = vsel %vm3275, %v8062, 0
        %v8107 = vsel %vm3275, %v8063, 0
        %v8110 = vsel %vm3275, %v8064, 0
        %v8113 = vsel %vm3275, %v8065, 0
        %v8116 = vsel %vm3275, %v8066, 0
        %v8119 = vsel %vm3275, %v8067, 0
        %v8122 = vsel %vm3275, %v8068, 0
        %v8125 = vsel %vm3275, %v8069, 0
        %v8128 = vsel %vm3275, %v8070, 0
        %v8131 = vsel %vm3275, %v8071, 0
        %v8134 = vsel %vm3275, %v8072, 0
        %v8137 = vsel %vm3275, %v8073, 0
        %8139 = vmatprep.subr.bf16.mxu0 0
        %8140 = vmatpush1.bf16.msra.mxu0 %v8087
        %8141 = vmatprep.subr.bf16.mxu0 0
        %8142 = vmatpush1.bf16.msra.mxu0 %v8088
        %8143 = vmatprep.subr.bf16.mxu0 0
        %8144 = vmatpush1.bf16.msra.mxu0 0
        %8145 = vmatprep.subr.bf16.mxu0 0
        %8146 = vmatpush1.bf16.msra.mxu0 0
        %8147 = vmatprep.subr.bf16.mxu0 0
        %8148 = vmatpush1.bf16.msra.mxu0 0
        %8149 = vmatprep.subr.bf16.mxu0 0
        %8150 = vmatpush1.bf16.msra.mxu0 0
        %8151 = vmatprep.subr.bf16.mxu0 0
        %8152 = vmatpush1.bf16.msra.mxu0 0
        %8153 = vmatprep.subr.bf16.mxu0 0
        %8154 = vmatpush1.bf16.msra.mxu0 0
        %8155 = vmatprep.subr.bf16.mxu0 0
        %8156 = vmatpush1.bf16.msra.mxu0 0
        %8157 = vmatprep.subr.bf16.mxu0 0
        %8158 = vmatpush1.bf16.msra.mxu0 0
        %8159 = vmatprep.subr.bf16.mxu0 0
        %8160 = vmatpush1.bf16.msra.mxu0 0
        %8161 = vmatprep.subr.bf16.mxu0 0
        %8162 = vmatpush1.bf16.msra.mxu0 0
        %8163 = vmatprep.subr.bf16.mxu0 0
        %8164 = vmatpush1.bf16.msra.mxu0 0
        %8165 = vmatprep.subr.bf16.mxu0 0
        %8166 = vmatpush1.bf16.msra.mxu0 0
        %8167 = vmatprep.subr.bf16.mxu0 0
        %8168 = vmatpush1.bf16.msra.mxu0 0
        %8169 = vmatprep.subr.bf16.mxu0 0
        %8170 = vmatpush1.bf16.msra.mxu0 0
        %8171 = vmatprep.mubr.bf16.mxu0 0
        %8172 = vmatmul.mubr.bf16.gmra.mrb[0].mxu0 %v8092
        %v8173 = vpop.f32.mrb[0].mxu0
        %v8174 = vadd.f32 0.0, %v8173
        %v8175 = vpop.f32.mrb[0].mxu0
        %v8176 = vpop.f32.mrb[0].mxu0
        %v8177 = vadd.f32 0.0, %v8176
        %v8178 = vpop.f32.mrb[0].mxu0
        %8179 = vmatprep.mubr.bf16.mxu0 0
        %8180 = vmatmul.mubr.bf16.gmra.mrb[0].mxu0 %v8095
        %v8181 = vpop.f32.mrb[0].mxu0
        %v8182 = vadd.f32 0.0, %v8181
        %v8183 = vpop.f32.mrb[0].mxu0
        %v8184 = vpop.f32.mrb[0].mxu0
        %v8185 = vadd.f32 0.0, %v8184
        %v8186 = vpop.f32.mrb[0].mxu0
        %8187 = vmatprep.mubr.bf16.mxu0 0
        %8188 = vmatmul.mubr.bf16.gmra.mrb[0].mxu0 %v8098
        %v8189 = vpop.f32.mrb[0].mxu0
        %v8190 = vadd.f32 0.0, %v8189
        %v8191 = vpop.f32.mrb[0].mxu0
        %v8192 = vpop.f32.mrb[0].mxu0
        %v8193 = vadd.f32 0.0, %v8192
        %v8194 = vpop.f32.mrb[0].mxu0
        %8195 = vmatprep.mubr.bf16.mxu0 0
        %8196 = vmatmul.mubr.bf16.gmra.mrb[0].mxu0 %v8101
        %v8197 = vpop.f32.mrb[0].mxu0
        %v8198 = vadd.f32 0.0, %v8197
        %v8199 = vpop.f32.mrb[0].mxu0
        %v8200 = vpop.f32.mrb[0].mxu0
        %v8201 = vadd.f32 0.0, %v8200
        %v8202 = vpop.f32.mrb[0].mxu0
        %8203 = vmatprep.mubr.bf16.mxu0 0
        %8204 = vmatmul.mubr.bf16.gmra.mrb[0].mxu0 %v8104
        %v8205 = vpop.f32.mrb[0].mxu0
        %v8206 = vadd.f32 0.0, %v8205
        %v8207 = vpop.f32.mrb[0].mxu0
        %v8208 = vpop.f32.mrb[0].mxu0
        %v8209 = vadd.f32 0.0, %v8208
        %v8210 = vpop.f32.mrb[0].mxu0
        %8211 = vmatprep.mubr.bf16.mxu0 0
        %8212 = vmatmul.mubr.bf16.gmra.mrb[0].mxu0 %v8107
        %v8213 = vpop.f32.mrb[0].mxu0
        %v8214 = vadd.f32 0.0, %v8213
        %v8215 = vpop.f32.mrb[0].mxu0
        %v8216 = vpop.f32.mrb[0].mxu0
        %v8217 = vadd.f32 0.0, %v8216
        %v8218 = vpop.f32.mrb[0].mxu0
        %8219 = vmatprep.mubr.bf16.mxu0 0
        %8220 = vmatmul.mubr.bf16.gmra.mrb[0].mxu0 %v8110
        %v8221 = vpop.f32.mrb[0].mxu0
        %v8222 = vadd.f32 0.0, %v8221
        %v8223 = vpop.f32.mrb[0].mxu0
        %v8224 = vpop.f32.mrb[0].mxu0
        %v8225 = vadd.f32 0.0, %v8224
        %v8226 = vpop.f32.mrb[0].mxu0
        %8227 = vmatprep.mubr.bf16.mxu0 0
        %8228 = vmatmul.mubr.bf16.gmra.mrb[0].mxu0 %v8113
        %v8229 = vpop.f32.mrb[0].mxu0
        %v8230 = vadd.f32 0.0, %v8229
        %v8231 = vpop.f32.mrb[0].mxu0
        %v8232 = vpop.f32.mrb[0].mxu0
        %v8233 = vadd.f32 0.0, %v8232
        %v8234 = vpop.f32.mrb[0].mxu0
        %8235 = vmatprep.mubr.bf16.mxu0 0
        %8236 = vmatmul.mubr.bf16.gmra.mrb[0].mxu0 %v8116
        %v8237 = vpop.f32.mrb[0].mxu0
        %v8238 = vadd.f32 0.0, %v8237
        %v8239 = vpop.f32.mrb[0].mxu0
        %v8240 = vpop.f32.mrb[0].mxu0
        %v8241 = vadd.f32 0.0, %v8240
        %v8242 = vpop.f32.mrb[0].mxu0
        %8243 = vmatprep.mubr.bf16.mxu0 0
        %8244 = vmatmul.mubr.bf16.gmra.mrb[0].mxu0 %v8119
        %v8245 = vpop.f32.mrb[0].mxu0
        %v8246 = vadd.f32 0.0, %v8245
        %v8247 = vpop.f32.mrb[0].mxu0
        %v8248 = vpop.f32.mrb[0].mxu0
        %v8249 = vadd.f32 0.0, %v8248
        %v8250 = vpop.f32.mrb[0].mxu0
        %8251 = vmatprep.mubr.bf16.mxu0 0
        %8252 = vmatmul.mubr.bf16.gmra.mrb[0].mxu0 %v8122
        %v8253 = vpop.f32.mrb[0].mxu0
        %v8254 = vadd.f32 0.0, %v8253
        %v8255 = vpop.f32.mrb[0].mxu0
        %v8256 = vpop.f32.mrb[0].mxu0
        %v8257 = vadd.f32 0.0, %v8256
        %v8258 = vpop.f32.mrb[0].mxu0
        %8259 = vmatprep.mubr.bf16.mxu0 0
        %8260 = vmatmul.mubr.bf16.gmra.mrb[0].mxu0 %v8125
        %v8261 = vpop.f32.mrb[0].mxu0
        %v8262 = vadd.f32 0.0, %v8261
        %v8263 = vpop.f32.mrb[0].mxu0
        %v8264 = vpop.f32.mrb[0].mxu0
        %v8265 = vadd.f32 0.0, %v8264
        %v8266 = vpop.f32.mrb[0].mxu0
        %8267 = vmatprep.mubr.bf16.mxu0 0
        %8268 = vmatmul.mubr.bf16.gmra.mrb[0].mxu0 %v8128
        %v8269 = vpop.f32.mrb[0].mxu0
        %v8270 = vadd.f32 0.0, %v8269
        %v8271 = vpop.f32.mrb[0].mxu0
        %v8272 = vpop.f32.mrb[0].mxu0
        %v8273 = vadd.f32 0.0, %v8272
        %v8274 = vpop.f32.mrb[0].mxu0
        %8275 = vmatprep.mubr.bf16.mxu0 0
        %8276 = vmatmul.mubr.bf16.gmra.mrb[0].mxu0 %v8131
        %v8277 = vpop.f32.mrb[0].mxu0
        %v8278 = vadd.f32 0.0, %v8277
        %v8279 = vpop.f32.mrb[0].mxu0
        %v8280 = vpop.f32.mrb[0].mxu0
        %v8281 = vadd.f32 0.0, %v8280
        %v8282 = vpop.f32.mrb[0].mxu0
        %8283 = vmatprep.mubr.bf16.mxu0 0
        %8284 = vmatmul.mubr.bf16.gmra.mrb[0].mxu0 %v8134
        %v8285 = vpop.f32.mrb[0].mxu0
        %v8286 = vadd.f32 0.0, %v8285
        %v8287 = vpop.f32.mrb[0].mxu0
        %v8288 = vpop.f32.mrb[0].mxu0
        %v8289 = vadd.f32 0.0, %v8288
        %v8290 = vpop.f32.mrb[0].mxu0
        %8291 = vmatprep.mubr.bf16.mxu0 0
        %8292 = vmatmul.mubr.bf16.gmra.mrb[0].mxu0 %v8137
        %v8293 = vpop.f32.mrb[0].mxu0
        %v8294 = vadd.f32 0.0, %v8293
        %v8295 = vpop.f32.mrb[0].mxu0
        %v8296 = vpop.f32.mrb[0].mxu0
        %v8297 = vadd.f32 0.0, %v8296
        %v8298 = vpop.f32.mrb[0].mxu0
        %8299 = vdwg.mxu0
        %v8300 = vadd.f32 %v7994, %v8174
        %v8301 = vadd.f32 %v7995, %v8177
        %v8302 = vadd.f32 %v7996, %v8182
        %v8303 = vadd.f32 %v7997, %v8185
        %v8304 = vadd.f32 %v7998, %v8190
        %v8305 = vadd.f32 %v7999, %v8193
        %v8306 = vadd.f32 %v8000, %v8198
        %v8307 = vadd.f32 %v8001, %v8201
        %v8308 = vadd.f32 %v8002, %v8206
        %v8309 = vadd.f32 %v8003, %v8209
        %v8310 = vadd.f32 %v8004, %v8214
        %v8311 = vadd.f32 %v8005, %v8217
        %v8312 = vadd.f32 %v8006, %v8222
        %v8313 = vadd.f32 %v8007, %v8225
        %v8314 = vadd.f32 %v8008, %v8230
        %v8315 = vadd.f32 %v8009, %v8233
        %v8316 = vadd.f32 %v8010, %v8238
        %v8317 = vadd.f32 %v8011, %v8241
        %v8318 = vadd.f32 %v8012, %v8246
        %v8319 = vadd.f32 %v8013, %v8249
        %v8320 = vadd.f32 %v8014, %v8254
        %v8321 = vadd.f32 %v8015, %v8257
        %v8322 = vadd.f32 %v8016, %v8262
        %v8323 = vadd.f32 %v8017, %v8265
        %v8324 = vadd.f32 %v8018, %v8270
        %v8325 = vadd.f32 %v8019, %v8273
        %v8326 = vadd.f32 %v8020, %v8278
        %v8327 = vadd.f32 %v8021, %v8281
        %v8328 = vadd.f32 %v8022, %v8286
        %v8329 = vadd.f32 %v8023, %v8289
        %v8330 = vadd.f32 %v8024, %v8294
        %v8331 = vadd.f32 %v8025, %v8297
        %v8332 = vld [vmem:[%s5157 + $0x1] sm:$0xff]
        %v8333 = vld [vmem:[%s5157 + $0x9] sm:$0xff]
        %v8334 = vld [vmem:[%s5157 + $0x19] sm:$0xff]
        %v8335 = vld [vmem:[%s5157 + $0x21] sm:$0xff]
        %v8336 = vld [vmem:[%s5157 + $0x31] sm:$0xff]
        %v8337 = vld [vmem:[%s5157 + $0x39] sm:$0xff]
        %v8338 = vld [vmem:[%s5157 + $0x49] sm:$0xff]
        %v8339 = vld [vmem:[%s5157 + $0x51] sm:$0xff]
        %v8340 = vld [vmem:[%s5157 + $0x61] sm:$0xff]
        %v8341 = vld [vmem:[%s5157 + $0x69] sm:$0xff]
        %v8342 = vld [vmem:[%s5157 + $0x79] sm:$0xff]
        %v8343 = vld [vmem:[%s5157 + $0x81] sm:$0xff]
        %v8344 = vld [vmem:[%s5157 + $0x91] sm:$0xff]
        %v8345 = vld [vmem:[%s5157 + $0x99] sm:$0xff]
        %v8346 = vld [vmem:[%s5157 + $0xa9] sm:$0xff]
        %v8347 = vld [vmem:[%s5157 + $0xb1] sm:$0xff]
        %v8348 = vld [vmem:[%s5157 + $0xc1] sm:$0xff]
        %v8349 = vld [vmem:[%s5157 + $0xc9] sm:$0xff]
        %v8350 = vld [vmem:[%s5157 + $0xd9] sm:$0xff]
        %v8351 = vld [vmem:[%s5157 + $0xe1] sm:$0xff]
        %v8352 = vld [vmem:[%s5157 + $0xf1] sm:$0xff]
        %v8353 = vld [vmem:[%s5157 + $0xf9] sm:$0xff]
        %v8354 = vld [vmem:[%s5157 + $0x109] sm:$0xff]
        %v8355 = vld [vmem:[%s5157 + $0x111] sm:$0xff]
        %v8356 = vld [vmem:[%s5157 + $0x121] sm:$0xff]
        %v8357 = vld [vmem:[%s5157 + $0x129] sm:$0xff]
        %v8358 = vld [vmem:[%s5157 + $0x139] sm:$0xff]
        %v8359 = vld [vmem:[%s5157 + $0x141] sm:$0xff]
        %v8360 = vld [vmem:[%s5157 + $0x151] sm:$0xff]
        %v8361 = vld [vmem:[%s5157 + $0x159] sm:$0xff]
        %v8362 = vld [vmem:[%s5157 + $0x169] sm:$0xff]
        %v8363 = vld [vmem:[%s5157 + $0x171] sm:$0xff]
        %v8364 = vpack.c.bf16 %v8333, %v8332
        %v8365 = vpack.c.bf16 %v8335, %v8334
        %v8366 = vpack.c.bf16 %v8337, %v8336
        %v8367 = vpack.c.bf16 %v8339, %v8338
        %v8368 = vpack.c.bf16 %v8341, %v8340
        %v8369 = vpack.c.bf16 %v8343, %v8342
        %v8370 = vpack.c.bf16 %v8345, %v8344
        %v8371 = vpack.c.bf16 %v8347, %v8346
        %v8372 = vpack.c.bf16 %v8349, %v8348
        %v8373 = vpack.c.bf16 %v8351, %v8350
        %v8374 = vpack.c.bf16 %v8353, %v8352
        %v8375 = vpack.c.bf16 %v8355, %v8354
        %v8376 = vpack.c.bf16 %v8357, %v8356
        %v8377 = vpack.c.bf16 %v8359, %v8358
        %v8378 = vpack.c.bf16 %v8361, %v8360
        %v8379 = vpack.c.bf16 %v8363, %v8362
        %s8380 = scalar_lea.vmem [#allocation8], 112
        %v8381 = vld [vmem:[%s8380] sm:$0xf]
        %v8382 = vld [vmem:[%s8380 + $0x4] sm:$0xf]
        %v8383 = vld [vmem:[%s8380 + $0x8] sm:$0xf]
        %v8384 = vld [vmem:[%s8380 + $0xc] sm:$0xf]
        %v8389 = vunpack.c.l.b16 %v8381
        %v8390 = vunpack.c.l.b16 %v8382
        %v8391 = vunpack.c.l.b16 %v8383
        %v8392 = vunpack.c.l.b16 %v8384
        %v8393 = vpack.c.b16 %v8390, %v8389
        %v8394 = vpack.c.b16 %v8392, %v8391
        %v8398 = vsel %vm3275, %v8364, 0
        %v8401 = vsel %vm3275, %v8365, 0
        %v8404 = vsel %vm3275, %v8366, 0
        %v8407 = vsel %vm3275, %v8367, 0
        %v8410 = vsel %vm3275, %v8368, 0
        %v8413 = vsel %vm3275, %v8369, 0
        %v8416 = vsel %vm3275, %v8370, 0
        %v8419 = vsel %vm3275, %v8371, 0
        %v8422 = vsel %vm3275, %v8372, 0
        %v8425 = vsel %vm3275, %v8373, 0
        %v8428 = vsel %vm3275, %v8374, 0
        %v8431 = vsel %vm3275, %v8375, 0
        %v8434 = vsel %vm3275, %v8376, 0
        %v8437 = vsel %vm3275, %v8377, 0
        %v8440 = vsel %vm3275, %v8378, 0
        %v8443 = vsel %vm3275, %v8379, 0
        %8445 = vmatprep.subr.bf16.mxu0 0
        %8446 = vmatpush1.bf16.msra.mxu0 %v8393
        %8447 = vmatprep.subr.bf16.mxu0 0
        %8448 = vmatpush1.bf16.msra.mxu0 %v8394
        %8449 = vmatprep.subr.bf16.mxu0 0
        %8450 = vmatpush1.bf16.msra.mxu0 0
        %8451 = vmatprep.subr.bf16.mxu0 0
        %8452 = vmatpush1.bf16.msra.mxu0 0
        %8453 = vmatprep.subr.bf16.mxu0 0
        %8454 = vmatpush1.bf16.msra.mxu0 0
        %8455 = vmatprep.subr.bf16.mxu0 0
        %8456 = vmatpush1.bf16.msra.mxu0 0
        %8457 = vmatprep.subr.bf16.mxu0 0
        %8458 = vmatpush1.bf16.msra.mxu0 0
        %8459 = vmatprep.subr.bf16.mxu0 0
        %8460 = vmatpush1.bf16.msra.mxu0 0
        %8461 = vmatprep.subr.bf16.mxu0 0
        %8462 = vmatpush1.bf16.msra.mxu0 0
        %8463 = vmatprep.subr.bf16.mxu0 0
        %8464 = vmatpush1.bf16.msra.mxu0 0
        %8465 = vmatprep.subr.bf16.mxu0 0
        %8466 = vmatpush1.bf16.msra.mxu0 0
        %8467 = vmatprep.subr.bf16.mxu0 0
        %8468 = vmatpush1.bf16.msra.mxu0 0
        %8469 = vmatprep.subr.bf16.mxu0 0
        %8470 = vmatpush1.bf16.msra.mxu0 0
        %8471 = vmatprep.subr.bf16.mxu0 0
        %8472 = vmatpush1.bf16.msra.mxu0 0
        %8473 = vmatprep.subr.bf16.mxu0 0
        %8474 = vmatpush1.bf16.msra.mxu0 0
        %8475 = vmatprep.subr.bf16.mxu0 0
        %8476 = vmatpush1.bf16.msra.mxu0 0
        %8477 = vmatprep.mubr.bf16.mxu0 0
        %8478 = vmatmul.mubr.bf16.gmra.mrb[0].mxu0 %v8398
        %v8479 = vpop.f32.mrb[0].mxu0
        %v8480 = vadd.f32 0.0, %v8479
        %v8481 = vpop.f32.mrb[0].mxu0
        %v8482 = vpop.f32.mrb[0].mxu0
        %v8483 = vadd.f32 0.0, %v8482
        %v8484 = vpop.f32.mrb[0].mxu0
        %8485 = vmatprep.mubr.bf16.mxu0 0
        %8486 = vmatmul.mubr.bf16.gmra.mrb[0].mxu0 %v8401
        %v8487 = vpop.f32.mrb[0].mxu0
        %v8488 = vadd.f32 0.0, %v8487
        %v8489 = vpop.f32.mrb[0].mxu0
        %v8490 = vpop.f32.mrb[0].mxu0
        %v8491 = vadd.f32 0.0, %v8490
        %v8492 = vpop.f32.mrb[0].mxu0
        %8493 = vmatprep.mubr.bf16.mxu0 0
        %8494 = vmatmul.mubr.bf16.gmra.mrb[0].mxu0 %v8404
        %v8495 = vpop.f32.mrb[0].mxu0
        %v8496 = vadd.f32 0.0, %v8495
        %v8497 = vpop.f32.mrb[0].mxu0
        %v8498 = vpop.f32.mrb[0].mxu0
        %v8499 = vadd.f32 0.0, %v8498
        %v8500 = vpop.f32.mrb[0].mxu0
        %8501 = vmatprep.mubr.bf16.mxu0 0
        %8502 = vmatmul.mubr.bf16.gmra.mrb[0].mxu0 %v8407
        %v8503 = vpop.f32.mrb[0].mxu0
        %v8504 = vadd.f32 0.0, %v8503
        %v8505 = vpop.f32.mrb[0].mxu0
        %v8506 = vpop.f32.mrb[0].mxu0
        %v8507 = vadd.f32 0.0, %v8506
        %v8508 = vpop.f32.mrb[0].mxu0
        %8509 = vmatprep.mubr.bf16.mxu0 0
        %8510 = vmatmul.mubr.bf16.gmra.mrb[0].mxu0 %v8410
        %v8511 = vpop.f32.mrb[0].mxu0
        %v8512 = vadd.f32 0.0, %v8511
        %v8513 = vpop.f32.mrb[0].mxu0
        %v8514 = vpop.f32.mrb[0].mxu0
        %v8515 = vadd.f32 0.0, %v8514
        %v8516 = vpop.f32.mrb[0].mxu0
        %8517 = vmatprep.mubr.bf16.mxu0 0
        %8518 = vmatmul.mubr.bf16.gmra.mrb[0].mxu0 %v8413
        %v8519 = vpop.f32.mrb[0].mxu0
        %v8520 = vadd.f32 0.0, %v8519
        %v8521 = vpop.f32.mrb[0].mxu0
        %v8522 = vpop.f32.mrb[0].mxu0
        %v8523 = vadd.f32 0.0, %v8522
        %v8524 = vpop.f32.mrb[0].mxu0
        %8525 = vmatprep.mubr.bf16.mxu0 0
        %8526 = vmatmul.mubr.bf16.gmra.mrb[0].mxu0 %v8416
        %v8527 = vpop.f32.mrb[0].mxu0
        %v8528 = vadd.f32 0.0, %v8527
        %v8529 = vpop.f32.mrb[0].mxu0
        %v8530 = vpop.f32.mrb[0].mxu0
        %v8531 = vadd.f32 0.0, %v8530
        %v8532 = vpop.f32.mrb[0].mxu0
        %8533 = vmatprep.mubr.bf16.mxu0 0
        %8534 = vmatmul.mubr.bf16.gmra.mrb[0].mxu0 %v8419
        %v8535 = vpop.f32.mrb[0].mxu0
        %v8536 = vadd.f32 0.0, %v8535
        %v8537 = vpop.f32.mrb[0].mxu0
        %v8538 = vpop.f32.mrb[0].mxu0
        %v8539 = vadd.f32 0.0, %v8538
        %v8540 = vpop.f32.mrb[0].mxu0
        %8541 = vmatprep.mubr.bf16.mxu0 0
        %8542 = vmatmul.mubr.bf16.gmra.mrb[0].mxu0 %v8422
        %v8543 = vpop.f32.mrb[0].mxu0
        %v8544 = vadd.f32 0.0, %v8543
        %v8545 = vpop.f32.mrb[0].mxu0
        %v8546 = vpop.f32.mrb[0].mxu0
        %v8547 = vadd.f32 0.0, %v8546
        %v8548 = vpop.f32.mrb[0].mxu0
        %8549 = vmatprep.mubr.bf16.mxu0 0
        %8550 = vmatmul.mubr.bf16.gmra.mrb[0].mxu0 %v8425
        %v8551 = vpop.f32.mrb[0].mxu0
        %v8552 = vadd.f32 0.0, %v8551
        %v8553 = vpop.f32.mrb[0].mxu0
        %v8554 = vpop.f32.mrb[0].mxu0
        %v8555 = vadd.f32 0.0, %v8554
        %v8556 = vpop.f32.mrb[0].mxu0
        %8557 = vmatprep.mubr.bf16.mxu0 0
        %8558 = vmatmul.mubr.bf16.gmra.mrb[0].mxu0 %v8428
        %v8559 = vpop.f32.mrb[0].mxu0
        %v8560 = vadd.f32 0.0, %v8559
        %v8561 = vpop.f32.mrb[0].mxu0
        %v8562 = vpop.f32.mrb[0].mxu0
        %v8563 = vadd.f32 0.0, %v8562
        %v8564 = vpop.f32.mrb[0].mxu0
        %8565 = vmatprep.mubr.bf16.mxu0 0
        %8566 = vmatmul.mubr.bf16.gmra.mrb[0].mxu0 %v8431
        %v8567 = vpop.f32.mrb[0].mxu0
        %v8568 = vadd.f32 0.0, %v8567
        %v8569 = vpop.f32.mrb[0].mxu0
        %v8570 = vpop.f32.mrb[0].mxu0
        %v8571 = vadd.f32 0.0, %v8570
        %v8572 = vpop.f32.mrb[0].mxu0
        %8573 = vmatprep.mubr.bf16.mxu0 0
        %8574 = vmatmul.mubr.bf16.gmra.mrb[0].mxu0 %v8434
        %v8575 = vpop.f32.mrb[0].mxu0
        %v8576 = vadd.f32 0.0, %v8575
        %v8577 = vpop.f32.mrb[0].mxu0
        %v8578 = vpop.f32.mrb[0].mxu0
        %v8579 = vadd.f32 0.0, %v8578
        %v8580 = vpop.f32.mrb[0].mxu0
        %8581 = vmatprep.mubr.bf16.mxu0 0
        %8582 = vmatmul.mubr.bf16.gmra.mrb[0].mxu0 %v8437
        %v8583 = vpop.f32.mrb[0].mxu0
        %v8584 = vadd.f32 0.0, %v8583
        %v8585 = vpop.f32.mrb[0].mxu0
        %v8586 = vpop.f32.mrb[0].mxu0
        %v8587 = vadd.f32 0.0, %v8586
        %v8588 = vpop.f32.mrb[0].mxu0
        %8589 = vmatprep.mubr.bf16.mxu0 0
        %8590 = vmatmul.mubr.bf16.gmra.mrb[0].mxu0 %v8440
        %v8591 = vpop.f32.mrb[0].mxu0
        %v8592 = vadd.f32 0.0, %v8591
        %v8593 = vpop.f32.mrb[0].mxu0
        %v8594 = vpop.f32.mrb[0].mxu0
        %v8595 = vadd.f32 0.0, %v8594
        %v8596 = vpop.f32.mrb[0].mxu0
        %8597 = vmatprep.mubr.bf16.mxu0 0
        %8598 = vmatmul.mubr.bf16.gmra.mrb[0].mxu0 %v8443
        %v8599 = vpop.f32.mrb[0].mxu0
        %v8600 = vadd.f32 0.0, %v8599
        %v8601 = vpop.f32.mrb[0].mxu0
        %v8602 = vpop.f32.mrb[0].mxu0
        %v8603 = vadd.f32 0.0, %v8602
        %v8604 = vpop.f32.mrb[0].mxu0
        %8605 = vdwg.mxu0
        %v8606 = vadd.f32 %v8300, %v8480
        %v8607 = vadd.f32 %v8301, %v8483
        %v8608 = vadd.f32 %v8302, %v8488
        %v8609 = vadd.f32 %v8303, %v8491
        %v8610 = vadd.f32 %v8304, %v8496
        %v8611 = vadd.f32 %v8305, %v8499
        %v8612 = vadd.f32 %v8306, %v8504
        %v8613 = vadd.f32 %v8307, %v8507
        %v8614 = vadd.f32 %v8308, %v8512
        %v8615 = vadd.f32 %v8309, %v8515
        %v8616 = vadd.f32 %v8310, %v8520
        %v8617 = vadd.f32 %v8311, %v8523
        %v8618 = vadd.f32 %v8312, %v8528
        %v8619 = vadd.f32 %v8313, %v8531
        %v8620 = vadd.f32 %v8314, %v8536
        %v8621 = vadd.f32 %v8315, %v8539
        %v8622 = vadd.f32 %v8316, %v8544
        %v8623 = vadd.f32 %v8317, %v8547
        %v8624 = vadd.f32 %v8318, %v8552
        %v8625 = vadd.f32 %v8319, %v8555
        %v8626 = vadd.f32 %v8320, %v8560
        %v8627 = vadd.f32 %v8321, %v8563
        %v8628 = vadd.f32 %v8322, %v8568
        %v8629 = vadd.f32 %v8323, %v8571
        %v8630 = vadd.f32 %v8324, %v8576
        %v8631 = vadd.f32 %v8325, %v8579
        %v8632 = vadd.f32 %v8326, %v8584
        %v8633 = vadd.f32 %v8327, %v8587
        %v8634 = vadd.f32 %v8328, %v8592
        %v8635 = vadd.f32 %v8329, %v8595
        %v8636 = vadd.f32 %v8330, %v8600
        %v8637 = vadd.f32 %v8331, %v8603
        %v8638 = vld [vmem:[%s5157 + $0x2] sm:$0xff]
        %v8639 = vld [vmem:[%s5157 + $0xa] sm:$0xff]
        %v8640 = vld [vmem:[%s5157 + $0x1a] sm:$0xff]
        %v8641 = vld [vmem:[%s5157 + $0x22] sm:$0xff]
        %v8642 = vld [vmem:[%s5157 + $0x32] sm:$0xff]
        %v8643 = vld [vmem:[%s5157 + $0x3a] sm:$0xff]
        %v8644 = vld [vmem:[%s5157 + $0x4a] sm:$0xff]
        %v8645 = vld [vmem:[%s5157 + $0x52] sm:$0xff]
        %v8646 = vld [vmem:[%s5157 + $0x62] sm:$0xff]
        %v8647 = vld [vmem:[%s5157 + $0x6a] sm:$0xff]
        %v8648 = vld [vmem:[%s5157 + $0x7a] sm:$0xff]
        %v8649 = vld [vmem:[%s5157 + $0x82] sm:$0xff]
        %v8650 = vld [vmem:[%s5157 + $0x92] sm:$0xff]
        %v8651 = vld [vmem:[%s5157 + $0x9a] sm:$0xff]
        %v8652 = vld [vmem:[%s5157 + $0xaa] sm:$0xff]
        %v8653 = vld [vmem:[%s5157 + $0xb2] sm:$0xff]
        %v8654 = vld [vmem:[%s5157 + $0xc2] sm:$0xff]
        %v8655 = vld [vmem:[%s5157 + $0xca] sm:$0xff]
        %v8656 = vld [vmem:[%s5157 + $0xda] sm:$0xff]
        %v8657 = vld [vmem:[%s5157 + $0xe2] sm:$0xff]
        %v8658 = vld [vmem:[%s5157 + $0xf2] sm:$0xff]
        %v8659 = vld [vmem:[%s5157 + $0xfa] sm:$0xff]
        %v8660 = vld [vmem:[%s5157 + $0x10a] sm:$0xff]
        %v8661 = vld [vmem:[%s5157 + $0x112] sm:$0xff]
        %v8662 = vld [vmem:[%s5157 + $0x122] sm:$0xff]
        %v8663 = vld [vmem:[%s5157 + $0x12a] sm:$0xff]
        %v8664 = vld [vmem:[%s5157 + $0x13a] sm:$0xff]
        %v8665 = vld [vmem:[%s5157 + $0x142] sm:$0xff]
        %v8666 = vld [vmem:[%s5157 + $0x152] sm:$0xff]
        %v8667 = vld [vmem:[%s5157 + $0x15a] sm:$0xff]
        %v8668 = vld [vmem:[%s5157 + $0x16a] sm:$0xff]
        %v8669 = vld [vmem:[%s5157 + $0x172] sm:$0xff]
        %v8670 = vpack.c.bf16 %v8639, %v8638
        %v8671 = vpack.c.bf16 %v8641, %v8640
        %v8672 = vpack.c.bf16 %v8643, %v8642
        %v8673 = vpack.c.bf16 %v8645, %v8644
        %v8674 = vpack.c.bf16 %v8647, %v8646
        %v8675 = vpack.c.bf16 %v8649, %v8648
        %v8676 = vpack.c.bf16 %v8651, %v8650
        %v8677 = vpack.c.bf16 %v8653, %v8652
        %v8678 = vpack.c.bf16 %v8655, %v8654
        %v8679 = vpack.c.bf16 %v8657, %v8656
        %v8680 = vpack.c.bf16 %v8659, %v8658
        %v8681 = vpack.c.bf16 %v8661, %v8660
        %v8682 = vpack.c.bf16 %v8663, %v8662
        %v8683 = vpack.c.bf16 %v8665, %v8664
        %v8684 = vpack.c.bf16 %v8667, %v8666
        %v8685 = vpack.c.bf16 %v8669, %v8668
        %s8686 = scalar_lea.vmem [#allocation8], 128
        %v8687 = vld [vmem:[%s8686] sm:$0xf]
        %v8688 = vld [vmem:[%s8686 + $0x4] sm:$0xf]
        %v8689 = vld [vmem:[%s8686 + $0x8] sm:$0xf]
        %v8690 = vld [vmem:[%s8686 + $0xc] sm:$0xf]
        %v8695 = vunpack.c.l.b16 %v8687
        %v8696 = vunpack.c.l.b16 %v8688
        %v8697 = vunpack.c.l.b16 %v8689
        %v8698 = vunpack.c.l.b16 %v8690
        %v8699 = vpack.c.b16 %v8696, %v8695
        %v8700 = vpack.c.b16 %v8698, %v8697
        %v8704 = vsel %vm3275, %v8670, 0
        %v8707 = vsel %vm3275, %v8671, 0
        %v8710 = vsel %vm3275, %v8672, 0
        %v8713 = vsel %vm3275, %v8673, 0
        %v8716 = vsel %vm3275, %v8674, 0
        %v8719 = vsel %vm3275, %v8675, 0
        %v8722 = vsel %vm3275, %v8676, 0
        %v8725 = vsel %vm3275, %v8677, 0
        %v8728 = vsel %vm3275, %v8678, 0
        %v8731 = vsel %vm3275, %v8679, 0
        %v8734 = vsel %vm3275, %v8680, 0
        %v8737 = vsel %vm3275, %v8681, 0
        %v8740 = vsel %vm3275, %v8682, 0
        %v8743 = vsel %vm3275, %v8683, 0
        %v8746 = vsel %vm3275, %v8684, 0
        %v8749 = vsel %vm3275, %v8685, 0
        %8751 = vmatprep.subr.bf16.mxu0 0
        %8752 = vmatpush1.bf16.msra.mxu0 %v8699
        %8753 = vmatprep.subr.bf16.mxu0 0
        %8754 = vmatpush1.bf16.msra.mxu0 %v8700
        %8755 = vmatprep.subr.bf16.mxu0 0
        %8756 = vmatpush1.bf16.msra.mxu0 0
        %8757 = vmatprep.subr.bf16.mxu0 0
        %8758 = vmatpush1.bf16.msra.mxu0 0
        %8759 = vmatprep.subr.bf16.mxu0 0
        %8760 = vmatpush1.bf16.msra.mxu0 0
        %8761 = vmatprep.subr.bf16.mxu0 0
        %8762 = vmatpush1.bf16.msra.mxu0 0
        %8763 = vmatprep.subr.bf16.mxu0 0
        %8764 = vmatpush1.bf16.msra.mxu0 0
        %8765 = vmatprep.subr.bf16.mxu0 0
        %8766 = vmatpush1.bf16.msra.mxu0 0
        %8767 = vmatprep.subr.bf16.mxu0 0
        %8768 = vmatpush1.bf16.msra.mxu0 0
        %8769 = vmatprep.subr.bf16.mxu0 0
        %8770 = vmatpush1.bf16.msra.mxu0 0
        %8771 = vmatprep.subr.bf16.mxu0 0
        %8772 = vmatpush1.bf16.msra.mxu0 0
        %8773 = vmatprep.subr.bf16.mxu0 0
        %8774 = vmatpush1.bf16.msra.mxu0 0
        %8775 = vmatprep.subr.bf16.mxu0 0
        %8776 = vmatpush1.bf16.msra.mxu0 0
        %8777 = vmatprep.subr.bf16.mxu0 0
        %8778 = vmatpush1.bf16.msra.mxu0 0
        %8779 = vmatprep.subr.bf16.mxu0 0
        %8780 = vmatpush1.bf16.msra.mxu0 0
        %8781 = vmatprep.subr.bf16.mxu0 0
        %8782 = vmatpush1.bf16.msra.mxu0 0
        %8783 = vmatprep.mubr.bf16.mxu0 0
        %8784 = vmatmul.mubr.bf16.gmra.mrb[0].mxu0 %v8704
        %v8785 = vpop.f32.mrb[0].mxu0
        %v8786 = vadd.f32 0.0, %v8785
        %v8787 = vpop.f32.mrb[0].mxu0
        %v8788 = vpop.f32.mrb[0].mxu0
        %v8789 = vadd.f32 0.0, %v8788
        %v8790 = vpop.f32.mrb[0].mxu0
        %8791 = vmatprep.mubr.bf16.mxu0 0
        %8792 = vmatmul.mubr.bf16.gmra.mrb[0].mxu0 %v8707
        %v8793 = vpop.f32.mrb[0].mxu0
        %v8794 = vadd.f32 0.0, %v8793
        %v8795 = vpop.f32.mrb[0].mxu0
        %v8796 = vpop.f32.mrb[0].mxu0
        %v8797 = vadd.f32 0.0, %v8796
        %v8798 = vpop.f32.mrb[0].mxu0
        %8799 = vmatprep.mubr.bf16.mxu0 0
        %8800 = vmatmul.mubr.bf16.gmra.mrb[0].mxu0 %v8710
        %v8801 = vpop.f32.mrb[0].mxu0
        %v8802 = vadd.f32 0.0, %v8801
        %v8803 = vpop.f32.mrb[0].mxu0
        %v8804 = vpop.f32.mrb[0].mxu0
        %v8805 = vadd.f32 0.0, %v8804
        %v8806 = vpop.f32.mrb[0].mxu0
        %8807 = vmatprep.mubr.bf16.mxu0 0
        %8808 = vmatmul.mubr.bf16.gmra.mrb[0].mxu0 %v8713
        %v8809 = vpop.f32.mrb[0].mxu0
        %v8810 = vadd.f32 0.0, %v8809
        %v8811 = vpop.f32.mrb[0].mxu0
        %v8812 = vpop.f32.mrb[0].mxu0
        %v8813 = vadd.f32 0.0, %v8812
        %v8814 = vpop.f32.mrb[0].mxu0
        %8815 = vmatprep.mubr.bf16.mxu0 0
        %8816 = vmatmul.mubr.bf16.gmra.mrb[0].mxu0 %v8716
        %v8817 = vpop.f32.mrb[0].mxu0
        %v8818 = vadd.f32 0.0, %v8817
        %v8819 = vpop.f32.mrb[0].mxu0
        %v8820 = vpop.f32.mrb[0].mxu0
        %v8821 = vadd.f32 0.0, %v8820
        %v8822 = vpop.f32.mrb[0].mxu0
        %8823 = vmatprep.mubr.bf16.mxu0 0
        %8824 = vmatmul.mubr.bf16.gmra.mrb[0].mxu0 %v8719
        %v8825 = vpop.f32.mrb[0].mxu0
        %v8826 = vadd.f32 0.0, %v8825
        %v8827 = vpop.f32.mrb[0].mxu0
        %v8828 = vpop.f32.mrb[0].mxu0
        %v8829 = vadd.f32 0.0, %v8828
        %v8830 = vpop.f32.mrb[0].mxu0
        %8831 = vmatprep.mubr.bf16.mxu0 0
        %8832 = vmatmul.mubr.bf16.gmra.mrb[0].mxu0 %v8722
        %v8833 = vpop.f32.mrb[0].mxu0
        %v8834 = vadd.f32 0.0, %v8833
        %v8835 = vpop.f32.mrb[0].mxu0
        %v8836 = vpop.f32.mrb[0].mxu0
        %v8837 = vadd.f32 0.0, %v8836
        %v8838 = vpop.f32.mrb[0].mxu0
        %8839 = vmatprep.mubr.bf16.mxu0 0
        %8840 = vmatmul.mubr.bf16.gmra.mrb[0].mxu0 %v8725
        %v8841 = vpop.f32.mrb[0].mxu0
        %v8842 = vadd.f32 0.0, %v8841
        %v8843 = vpop.f32.mrb[0].mxu0
        %v8844 = vpop.f32.mrb[0].mxu0
        %v8845 = vadd.f32 0.0, %v8844
        %v8846 = vpop.f32.mrb[0].mxu0
        %8847 = vmatprep.mubr.bf16.mxu0 0
        %8848 = vmatmul.mubr.bf16.gmra.mrb[0].mxu0 %v8728
        %v8849 = vpop.f32.mrb[0].mxu0
        %v8850 = vadd.f32 0.0, %v8849
        %v8851 = vpop.f32.mrb[0].mxu0
        %v8852 = vpop.f32.mrb[0].mxu0
        %v8853 = vadd.f32 0.0, %v8852
        %v8854 = vpop.f32.mrb[0].mxu0
        %8855 = vmatprep.mubr.bf16.mxu0 0
        %8856 = vmatmul.mubr.bf16.gmra.mrb[0].mxu0 %v8731
        %v8857 = vpop.f32.mrb[0].mxu0
        %v8858 = vadd.f32 0.0, %v8857
        %v8859 = vpop.f32.mrb[0].mxu0
        %v8860 = vpop.f32.mrb[0].mxu0
        %v8861 = vadd.f32 0.0, %v8860
        %v8862 = vpop.f32.mrb[0].mxu0
        %8863 = vmatprep.mubr.bf16.mxu0 0
        %8864 = vmatmul.mubr.bf16.gmra.mrb[0].mxu0 %v8734
        %v8865 = vpop.f32.mrb[0].mxu0
        %v8866 = vadd.f32 0.0, %v8865
        %v8867 = vpop.f32.mrb[0].mxu0
        %v8868 = vpop.f32.mrb[0].mxu0
        %v8869 = vadd.f32 0.0, %v8868
        %v8870 = vpop.f32.mrb[0].mxu0
        %8871 = vmatprep.mubr.bf16.mxu0 0
        %8872 = vmatmul.mubr.bf16.gmra.mrb[0].mxu0 %v8737
        %v8873 = vpop.f32.mrb[0].mxu0
        %v8874 = vadd.f32 0.0, %v8873
        %v8875 = vpop.f32.mrb[0].mxu0
        %v8876 = vpop.f32.mrb[0].mxu0
        %v8877 = vadd.f32 0.0, %v8876
        %v8878 = vpop.f32.mrb[0].mxu0
        %8879 = vmatprep.mubr.bf16.mxu0 0
        %8880 = vmatmul.mubr.bf16.gmra.mrb[0].mxu0 %v8740
        %v8881 = vpop.f32.mrb[0].mxu0
        %v8882 = vadd.f32 0.0, %v8881
        %v8883 = vpop.f32.mrb[0].mxu0
        %v8884 = vpop.f32.mrb[0].mxu0
        %v8885 = vadd.f32 0.0, %v8884
        %v8886 = vpop.f32.mrb[0].mxu0
        %8887 = vmatprep.mubr.bf16.mxu0 0
        %8888 = vmatmul.mubr.bf16.gmra.mrb[0].mxu0 %v8743
        %v8889 = vpop.f32.mrb[0].mxu0
        %v8890 = vadd.f32 0.0, %v8889
        %v8891 = vpop.f32.mrb[0].mxu0
        %v8892 = vpop.f32.mrb[0].mxu0
        %v8893 = vadd.f32 0.0, %v8892
        %v8894 = vpop.f32.mrb[0].mxu0
        %8895 = vmatprep.mubr.bf16.mxu0 0
        %8896 = vmatmul.mubr.bf16.gmra.mrb[0].mxu0 %v8746
        %v8897 = vpop.f32.mrb[0].mxu0
        %v8898 = vadd.f32 0.0, %v8897
        %v8899 = vpop.f32.mrb[0].mxu0
        %v8900 = vpop.f32.mrb[0].mxu0
        %v8901 = vadd.f32 0.0, %v8900
        %v8902 = vpop.f32.mrb[0].mxu0
        %8903 = vmatprep.mubr.bf16.mxu0 0
        %8904 = vmatmul.mubr.bf16.gmra.mrb[0].mxu0 %v8749
        %v8905 = vpop.f32.mrb[0].mxu0
        %v8906 = vadd.f32 0.0, %v8905
        %v8907 = vpop.f32.mrb[0].mxu0
        %v8908 = vpop.f32.mrb[0].mxu0
        %v8909 = vadd.f32 0.0, %v8908
        %v8910 = vpop.f32.mrb[0].mxu0
        %8911 = vdwg.mxu0
        %v8912 = vadd.f32 %v8606, %v8786
        %v8913 = vadd.f32 %v8607, %v8789
        %v8914 = vadd.f32 %v8608, %v8794
        %v8915 = vadd.f32 %v8609, %v8797
        %v8916 = vadd.f32 %v8610, %v8802
        %v8917 = vadd.f32 %v8611, %v8805
        %v8918 = vadd.f32 %v8612, %v8810
        %v8919 = vadd.f32 %v8613, %v8813
        %v8920 = vadd.f32 %v8614, %v8818
        %v8921 = vadd.f32 %v8615, %v8821
        %v8922 = vadd.f32 %v8616, %v8826
        %v8923 = vadd.f32 %v8617, %v8829
        %v8924 = vadd.f32 %v8618, %v8834
        %v8925 = vadd.f32 %v8619, %v8837
        %v8926 = vadd.f32 %v8620, %v8842
        %v8927 = vadd.f32 %v8621, %v8845
        %v8928 = vadd.f32 %v8622, %v8850
        %v8929 = vadd.f32 %v8623, %v8853
        %v8930 = vadd.f32 %v8624, %v8858
        %v8931 = vadd.f32 %v8625, %v8861
        %v8932 = vadd.f32 %v8626, %v8866
        %v8933 = vadd.f32 %v8627, %v8869
        %v8934 = vadd.f32 %v8628, %v8874
        %v8935 = vadd.f32 %v8629, %v8877
        %v8936 = vadd.f32 %v8630, %v8882
        %v8937 = vadd.f32 %v8631, %v8885
        %v8938 = vadd.f32 %v8632, %v8890
        %v8939 = vadd.f32 %v8633, %v8893
        %v8940 = vadd.f32 %v8634, %v8898
        %v8941 = vadd.f32 %v8635, %v8901
        %v8942 = vadd.f32 %v8636, %v8906
        %v8943 = vadd.f32 %v8637, %v8909
        %v8944 = vld [vmem:[%s7] sm:$0x1]
        %v8946 = vlaneseq
        %v8947 = vshrl.u32 %v8946, 7
        %v8948 = vsub.s32 0, %v8947
        %v8949 = vrot.slane %v8944, %v8948
        %v8951 = vadd.f32 %v8912, %v8949
        %v8952 = vadd.f32 %v8913, %v8949
        %v8953 = vadd.f32 %v8914, %v8949
        %v8954 = vadd.f32 %v8915, %v8949
        %v8955 = vadd.f32 %v8916, %v8949
        %v8956 = vadd.f32 %v8917, %v8949
        %v8957 = vadd.f32 %v8918, %v8949
        %v8958 = vadd.f32 %v8919, %v8949
        %v8959 = vadd.f32 %v8920, %v8949
        %v8960 = vadd.f32 %v8921, %v8949
        %v8961 = vadd.f32 %v8922, %v8949
        %v8962 = vadd.f32 %v8923, %v8949
        %v8963 = vadd.f32 %v8924, %v8949
        %v8964 = vadd.f32 %v8925, %v8949
        %v8965 = vadd.f32 %v8926, %v8949
        %v8966 = vadd.f32 %v8927, %v8949
        %v8967 = vadd.f32 %v8928, %v8949
        %v8968 = vadd.f32 %v8929, %v8949
        %v8969 = vadd.f32 %v8930, %v8949
        %v8970 = vadd.f32 %v8931, %v8949
        %v8971 = vadd.f32 %v8932, %v8949
        %v8972 = vadd.f32 %v8933, %v8949
        %v8973 = vadd.f32 %v8934, %v8949
        %v8974 = vadd.f32 %v8935, %v8949
        %v8975 = vadd.f32 %v8936, %v8949
        %v8976 = vadd.f32 %v8937, %v8949
        %v8977 = vadd.f32 %v8938, %v8949
        %v8978 = vadd.f32 %v8939, %v8949
        %v8979 = vadd.f32 %v8940, %v8949
        %v8980 = vadd.f32 %v8941, %v8949
        %v8981 = vadd.f32 %v8942, %v8949
        %v8982 = vadd.f32 %v8943, %v8949
        %v8983 = vld [vmem:[%s359] sm:$0xff]
        %v8984 = vld [vmem:[%s359 + $0x8] sm:$0xff]
        %v8985 = vld [vmem:[%s359 + $0x10] sm:$0xff]
        %v8986 = vld [vmem:[%s359 + $0x18] sm:$0xff]
        %v8987 = vld [vmem:[%s359 + $0x20] sm:$0xff]
        %v8988 = vld [vmem:[%s359 + $0x28] sm:$0xff]
        %v8989 = vld [vmem:[%s359 + $0x30] sm:$0xff]
        %v8990 = vld [vmem:[%s359 + $0x38] sm:$0xff]
        %v8991 = vld [vmem:[%s359 + $0x40] sm:$0xff]
        %v8992 = vld [vmem:[%s359 + $0x48] sm:$0xff]
        %v8993 = vld [vmem:[%s359 + $0x50] sm:$0xff]
        %v8994 = vld [vmem:[%s359 + $0x58] sm:$0xff]
        %v8995 = vld [vmem:[%s359 + $0x60] sm:$0xff]
        %v8996 = vld [vmem:[%s359 + $0x68] sm:$0xff]
        %v8997 = vld [vmem:[%s359 + $0x70] sm:$0xff]
        %v8998 = vld [vmem:[%s359 + $0x78] sm:$0xff]
        %v8999 = vld [vmem:[%s359 + $0x80] sm:$0xff]
        %v9000 = vld [vmem:[%s359 + $0x88] sm:$0xff]
        %v9001 = vld [vmem:[%s359 + $0x90] sm:$0xff]
        %v9002 = vld [vmem:[%s359 + $0x98] sm:$0xff]
        %v9003 = vld [vmem:[%s359 + $0xa0] sm:$0xff]
        %v9004 = vld [vmem:[%s359 + $0xa8] sm:$0xff]
        %v9005 = vld [vmem:[%s359 + $0xb0] sm:$0xff]
        %v9006 = vld [vmem:[%s359 + $0xb8] sm:$0xff]
        %v9007 = vld [vmem:[%s359 + $0xc0] sm:$0xff]
        %v9008 = vld [vmem:[%s359 + $0xc8] sm:$0xff]
        %v9009 = vld [vmem:[%s359 + $0xd0] sm:$0xff]
        %v9010 = vld [vmem:[%s359 + $0xd8] sm:$0xff]
        %v9011 = vld [vmem:[%s359 + $0xe0] sm:$0xff]
        %v9012 = vld [vmem:[%s359 + $0xe8] sm:$0xff]
        %v9013 = vld [vmem:[%s359 + $0xf0] sm:$0xff]
        %v9014 = vld [vmem:[%s359 + $0xf8] sm:$0xff]
        %v9015 = vadd.f32 %v8951, %v8983
        %v9016 = vadd.f32 %v8952, %v8984
        %v9017 = vadd.f32 %v8953, %v8985
        %v9018 = vadd.f32 %v8954, %v8986
        %v9019 = vadd.f32 %v8955, %v8987
        %v9020 = vadd.f32 %v8956, %v8988
        %v9021 = vadd.f32 %v8957, %v8989
        %v9022 = vadd.f32 %v8958, %v8990
        %v9023 = vadd.f32 %v8959, %v8991
        %v9024 = vadd.f32 %v8960, %v8992
        %v9025 = vadd.f32 %v8961, %v8993
        %v9026 = vadd.f32 %v8962, %v8994
        %v9027 = vadd.f32 %v8963, %v8995
        %v9028 = vadd.f32 %v8964, %v8996
        %v9029 = vadd.f32 %v8965, %v8997
        %v9030 = vadd.f32 %v8966, %v8998
        %v9031 = vadd.f32 %v8967, %v8999
        %v9032 = vadd.f32 %v8968, %v9000
        %v9033 = vadd.f32 %v8969, %v9001
        %v9034 = vadd.f32 %v8970, %v9002
        %v9035 = vadd.f32 %v8971, %v9003
        %v9036 = vadd.f32 %v8972, %v9004
        %v9037 = vadd.f32 %v8973, %v9005
        %v9038 = vadd.f32 %v8974, %v9006
        %v9039 = vadd.f32 %v8975, %v9007
        %v9040 = vadd.f32 %v8976, %v9008
        %v9041 = vadd.f32 %v8977, %v9009
        %v9042 = vadd.f32 %v8978, %v9010
        %v9043 = vadd.f32 %v8979, %v9011
        %v9044 = vadd.f32 %v8980, %v9012
        %v9045 = vadd.f32 %v8981, %v9013
        %v9046 = vadd.f32 %v8982, %v9014
        %9047 = vst [vmem:[%s369] sm:$0xff] %v9015
        %9048 = vst [vmem:[%s369 + $0x8] sm:$0xff] %v9016
        %9049 = vst [vmem:[%s369 + $0x10] sm:$0xff] %v9017
        %9050 = vst [vmem:[%s369 + $0x18] sm:$0xff] %v9018
        %9051 = vst [vmem:[%s369 + $0x20] sm:$0xff] %v9019
        %9052 = vst [vmem:[%s369 + $0x28] sm:$0xff] %v9020
        %9053 = vst [vmem:[%s369 + $0x30] sm:$0xff] %v9021
        %9054 = vst [vmem:[%s369 + $0x38] sm:$0xff] %v9022
        %9055 = vst [vmem:[%s369 + $0x40] sm:$0xff] %v9023
        %9056 = vst [vmem:[%s369 + $0x48] sm:$0xff] %v9024
        %9057 = vst [vmem:[%s369 + $0x50] sm:$0xff] %v9025
        %9058 = vst [vmem:[%s369 + $0x58] sm:$0xff] %v9026
        %9059 = vst [vmem:[%s369 + $0x60] sm:$0xff] %v9027
        %9060 = vst [vmem:[%s369 + $0x68] sm:$0xff] %v9028
        %9061 = vst [vmem:[%s369 + $0x70] sm:$0xff] %v9029
        %9062 = vst [vmem:[%s369 + $0x78] sm:$0xff] %v9030
        %9063 = vst [vmem:[%s369 + $0x80] sm:$0xff] %v9031
        %9064 = vst [vmem:[%s369 + $0x88] sm:$0xff] %v9032
        %9065 = vst [vmem:[%s369 + $0x90] sm:$0xff] %v9033
        %9066 = vst [vmem:[%s369 + $0x98] sm:$0xff] %v9034
        %9067 = vst [vmem:[%s369 + $0xa0] sm:$0xff] %v9035
        %9068 = vst [vmem:[%s369 + $0xa8] sm:$0xff] %v9036
        %9069 = vst [vmem:[%s369 + $0xb0] sm:$0xff] %v9037
        %9070 = vst [vmem:[%s369 + $0xb8] sm:$0xff] %v9038
        %9071 = vst [vmem:[%s369 + $0xc0] sm:$0xff] %v9039
        %9072 = vst [vmem:[%s369 + $0xc8] sm:$0xff] %v9040
        %9073 = vst [vmem:[%s369 + $0xd0] sm:$0xff] %v9041
        %9074 = vst [vmem:[%s369 + $0xd8] sm:$0xff] %v9042
        %9075 = vst [vmem:[%s369 + $0xe0] sm:$0xff] %v9043
        %9076 = vst [vmem:[%s369 + $0xe8] sm:$0xff] %v9044
        %9077 = vst [vmem:[%s369 + $0xf0] sm:$0xff] %v9045
        %9078 = vst [vmem:[%s369 + $0xf8] sm:$0xff] %v9046
        %p9079 = scmp.lt.s32.totalorder %s21, 1
        %s9080 = scalar_select %p9079, %s21, 1
        %s9081 = smul.addr %s9080, 32
        %s9082 = smul.addr %s9081, 8
        %s9083 = scalar_lea.vmem %s8, %s9082
        // Predicated region
        $region65: #{channel_reduction_forward.2} parent=51 // pred_check
          %p9084 = pneg %p217
        $region66: #{channel_reduction_forward.2} parent=51 // pred_check_branch
          %9086 = sbr.rel (%p9084) target = $region68
        $region67: #{channel_reduction_forward.2} parent=51 // pred_region
          _
        $region68: #{channel_reduction_forward.2} parent=51 // pred_fallthru
          _
      $region52: #{channel_reduction_forward.2} parent=5 // pred_fallthru
        _
      %p9087 = scmp.le.s32.totalorder 2, %s16
      // Predicated region
      $region69: #{channel_reduction_forward.2} parent=5 // pred_check
        %p9088 = pneg %p9087
      $region70: #{channel_reduction_forward.2} parent=5 // pred_check_branch
        %9090 = sbr.rel (%p9088) target = $region72
      $region71: #{channel_reduction_forward.2} parent=5 // pred_region
        %s9091 = ssub.s32 %s16, 2
        // Predicated region
        $region73: #{channel_reduction_forward.2} parent=71 // pred_check
          %p9092 = pneg %p223
        $region74: #{channel_reduction_forward.2} parent=71 // pred_check_branch
          %9094 = sbr.rel (%p9092) target = $region76
        $region75: #{channel_reduction_forward.2} parent=71 // pred_region
          %p9095 = scmp.lt.s32.totalorder %s22, 1
          %s9096 = scalar_select %p9095, %s22, 1
          %s9097 = smul.addr %s9096, 32
          %s9098 = smul.addr %s9097, 8
          %s9099 = scalar_lea.vmem %s8, %s9098
        $region76: #{channel_reduction_forward.2} parent=71 // pred_fallthru
          _
      $region72: #{channel_reduction_forward.2} parent=5 // pred_fallthru
        _
    $region6: #{channel_reduction_forward.2} parent=1 // loop_footer
      %s20 = sadd.s32 1, %s16
    $region7: #{channel_reduction_forward.2} parent=1 // loop_footer_branch
      %15 = sbr.rel target = $region3
    $region8: #{channel_reduction_forward.2} parent=1 // loop_exit
      _
    %9100 = vsyncpa [#allocation5], 1
    %s9101 = scalar_lea.sflag [#allocation5], 1
    %9102 = vsyncpa %s9101, 1
    %9103 = vsyncpa [#allocation7], 1

</llo_original>
